<compile_context>
chip_gen: v7x
topology: tpu7x:2x2x1
jax: 0.10.0
libtpu: 0.0.40
codegen_flags: <defaults>
</compile_context>

<pallas_src>
import functools

import jax
import jax.numpy as jnp
from jax import lax
from jax.experimental import pallas as pl
from jax.experimental.pallas import tpu as pltpu

# -------------------- configuration (small, consistent with the module) -----
STATE_DIM = 16          # unused by forward (kept for parity with __init__)
ACTION_DIM = 4
LATENT_DIM = 32
SEQ_LEN = 8
BATCH = 2
BEV_HW = 64             # conv stack (4/4, 4/4, 4/2) -> 16x16 -> 4x4 -> 1x1
EPS = 1e-5
N_BLOCKS = 16           # 4x4 grid of conv2 outputs (= conv3 patch positions)


# ============================================================================
# The single fused Pallas kernel
# ============================================================================
def _decoder_kernel(p1_ref, z_ref,
                    w1_ref, b1_ref,        # (768,128) block-diag conv1, (1,128)
                    w2_ref, b2_ref,        # (128,16), (1,16)
                    w3_ref, b3_ref,        # (16,16,32), (1,32)
                    wl_ref, bl_ref,        # (32,32) pool-folded linear, (1,32)
                    wif_ref, wil_ref,      # (3,32,32) input-gate weights (feat / z)
                    wh_ref, bi_ref, bh_ref,  # (3,32,32), (3,1,32), (3,1,32)
                    wd_ref, bd_ref,        # (32,4), (1,4)
                    out_ref,               # (T, B, A)
                    *, seq_len, n_blocks, latent):
    f32 = jnp.float32
    B = z_ref.shape[0]
    n3 = b3_ref.shape[-1]                  # conv3 output channels (32)

    b1 = b1_ref[...]
    w2 = w2_ref[...]
    b2 = b2_ref[...]

    # ---- conv1 -> conv2 -> conv3 accumulation, per 16x16 input block -------
    acc = jnp.zeros((B, n3), f32)
    for k in range(n_blocks):
        pblk = p1_ref[k]                                              # (B, 768)
        # conv1 (block-diagonal over the 4x4 conv1 positions) + BN1 + ReLU
        a1 = jnp.maximum(
            jnp.dot(pblk, w1_ref[...], preferred_element_type=f32) + b1, 0.0)
        # conv2 + BN2 + ReLU   (a1 is already conv2's patch row)
        y2 = jnp.maximum(
            jnp.dot(a1, w2, preferred_element_type=f32) + b2, 0.0)
        # conv3 partial sum for this (kh3, kw3) position (BN3 folded in w3)
        acc = acc + jnp.dot(y2, w3_ref[k], preferred_element_type=f32)
    y3 = jnp.maximum(acc + b3_ref[...], 0.0)                          # (B, 32)

    # ---- (pool folded) Linear + ReLU + nan_to_num ---------------------------
    feat = jnp.maximum(
        jnp.dot(y3, wl_ref[...], preferred_element_type=f32) + bl_ref[...], 0.0)
    feat = jnp.where(jnp.isnan(feat), 0.0, feat)
    feat = jnp.where(feat == jnp.inf, 1.0, feat)
    feat = jnp.where(feat == -jnp.inf, -1.0, feat)

    # ---- GRUCell decode loop (gates r, z, n; torch ordering) ----------------
    z = z_ref[...]
    # gru_input = cat([feat, z]) is constant over time -> precompute x-gates
    xg = [jnp.dot(feat, wif_ref[g], preferred_element_type=f32)
          + jnp.dot(z, wil_ref[g], preferred_element_type=f32)
          + bi_ref[g]
          for g in range(3)]
    whr, whz, whn = wh_ref[0], wh_ref[1], wh_ref[2]
    bhr, bhz, bhn = bh_ref[0], bh_ref[1], bh_ref[2]
    wd = wd_ref[...]
    bd = bd_ref[...]

    h = jnp.zeros((B, latent), f32)
    for t in range(seq_len):                      # fully unrolled (seq_len=8)
        r = jax.nn.sigmoid(xg[0] + jnp.dot(h, whr, preferred_element_type=f32) + bhr)
        u = jax.nn.sigmoid(xg[1] + jnp.dot(h, whz, preferred_element_type=f32) + bhz)
        n = jnp.tanh(xg[2] + r * (jnp.dot(h, whn, preferred_element_type=f32) + bhn))
        h = (1.0 - u) * n + u * h
        out_ref[t] = jnp.dot(h, wd, preferred_element_type=f32) + bd


def _vmem_spec():
    return pl.BlockSpec(memory_space=pltpu.MemorySpace.VMEM)


def fused_decoder_call(patches, z, pp):
    B = z.shape[0]
    args = (patches, z,
            pp['w1'], pp['b1'], pp['w2'], pp['b2'], pp['w3'], pp['b3'],
            pp['wl'], pp['bl'],
            pp['wif'], pp['wil'], pp['wh'], pp['bi'], pp['bh'],
            pp['wd'], pp['bd'])
    out = pl.pallas_call(
        functools.partial(_decoder_kernel, seq_len=SEQ_LEN,
                          n_blocks=N_BLOCKS, latent=LATENT_DIM),
        out_shape=jax.ShapeDtypeStruct((SEQ_LEN, B, ACTION_DIM), jnp.float32),
        in_specs=[_vmem_spec() for _ in args],
        out_specs=_vmem_spec(),
    )(*args)
    return jnp.transpose(out, (1, 0, 2))          # (T,B,A) -> (B,T,A)


# ============================================================================
# Plain-JAX glue: weight folding (one-time) and input patch layout
# ============================================================================
def bn_scale_shift(bnp):
    g, b, m, v = bnp
    s = g / jnp.sqrt(v + EPS)
    return s, b - m * s


def conv_w_to_mat(w):
    """torch conv weight (Cout, Cin, KH, KW) -> matmul weight (KH*KW*Cin, Cout)."""
    co, ci, kh, kw = w.shape
    return jnp.transpose(w, (2, 3, 1, 0)).reshape(kh * kw * ci, co)


def prepare_params(p):
    """Fold BN affines / pool broadcast into the matmul weights (done once)."""
    f32 = jnp.float32
    s0, t0 = bn_scale_shift(p['bn0'])
    sc1, sh1 = bn_scale_shift(p['bn1'])
    sc2, sh2 = bn_scale_shift(p['bn2'])
    sc3, sh3 = bn_scale_shift(p['bn3'])

    # conv1: fold input BN0 (per-cin scale/shift on patch rows) and output BN1
    w1 = conv_w_to_mat(p['w1'])                            # (48, 8), rows (kh,kw,cin)
    s_in, t_in = jnp.tile(s0, 16), jnp.tile(t0, 16)
    w1f = (w1 * s_in[:, None]) * sc1[None, :]
    b1f = (p['b1'] + t_in @ w1) * sc1 + sh1
    # block-diagonal over the 4x4 conv1 positions inside one conv2 patch:
    # (B,768) @ (768,128) yields conv2's patch row directly (cols = kh2,kw2,cout)
    w1_big = jnp.kron(jnp.eye(N_BLOCKS, dtype=f32), w1f)   # (768, 128)
    b1_big = jnp.tile(b1f, N_BLOCKS)                       # (128,)

    w2f = conv_w_to_mat(p['w2']) * sc2[None, :]            # (128, 16)
    b2f = p['b2'] * sc2 + sh2
    w3f = conv_w_to_mat(p['w3']) * sc3[None, :]            # (256, 32)
    b3f = p['b3'] * sc3 + sh3

    # conv3 output is spatially 1x1 (BEV_HW == 64), so AdaptiveAvgPool2d((4,4))
    # is a 16-way broadcast: fold it into the linear weight (K: 512 -> 32).
    wl_eff = p['wl'].reshape(32, 16, LATENT_DIM).sum(axis=1)

    L = LATENT_DIM
    wif = jnp.stack([p['wir'][:L], p['wiz'][:L], p['win'][:L]])   # feat part
    wil = jnp.stack([p['wir'][L:], p['wiz'][L:], p['win'][L:]])   # z part
    wh = jnp.stack([p['whr'], p['whz'], p['whn']])
    bi = jnp.stack([p['bir'], p['biz'], p['bin']]).reshape(3, 1, L)
    bh = jnp.stack([p['bhr'], p['bhz'], p['bhn']]).reshape(3, 1, L)

    return dict(
        w1=w1_big, b1=b1_big.reshape(1, -1),
        w2=w2f, b2=b2f.reshape(1, -1),
        w3=w3f.reshape(N_BLOCKS, 16, 32), b3=b3f.reshape(1, -1),
        wl=wl_eff, bl=p['bl'].reshape(1, -1),
        wif=wif, wil=wil, wh=wh, bi=bi, bh=bh,
        wd=p['wdec'], bd=p['bdec'].reshape(1, -1),
    )


def build_patches(bev_nchw):
    """NCHW bev -> (16, B, 768) hierarchical patch blocks.

    Block index = (oh2, ow2) conv2/conv3 position; columns ordered
    (kh2, kw2, kh1, kw1, cin) to match the block-diagonal conv1 weight.
    Stride == kernel for conv1/conv2, so this is a pure space-to-depth
    reshape/transpose (no overlapping windows, no concatenate)."""
    B = bev_nchw.shape[0]
    x = jnp.transpose(bev_nchw, (0, 2, 3, 1)).astype(jnp.float32)   # (B,64,64,3)
    x = x.reshape(B, 4, 4, 4, 4, 4, 4, 3)   # (b, oh2, kh2, kh1, ow2, kw2, kw1, c)
    x = jnp.transpose(x, (1, 4, 0, 2, 5, 3, 6, 7))  # (oh2,ow2,b,kh2,kw2,kh1,kw1,c)
    return x.reshape(N_BLOCKS, B, 768)


@jax.jit
def decoder_forward(bev_nchw, z, pp):
    B, C, H, W = bev_nchw.shape
    # Guard: the pool-folding / single-conv3-patch structure requires 64x64 bev.
    assert C == 3 and H == BEV_HW and W == BEV_HW, (C, H, W)
    patches = build_patches(bev_nchw)
    return fused_decoder_call(patches, z.astype(jnp.float32), pp)


# ============================================================================
# Pure-JAX reference (mirrors the PyTorch forward, eval-mode BN)
# ============================================================================
def adaptive_avg_pool_nhwc(x, out_h, out_w):
    B, H, W, C = x.shape
    rows = []
    for i in range(out_h):
        hs, he = (i * H) // out_h, -(-((i + 1) * H) // out_h)
        cols = []
        for j in range(out_w):
            ws, we = (j * W) // out_w, -(-((j + 1) * W) // out_w)
            cols.append(jnp.mean(x[:, hs:he, ws:we, :], axis=(1, 2)))
        rows.append(jnp.stack(cols, axis=1))
    return jnp.stack(rows, axis=1)


def adaptive_avg_pool_nchw(x, out_h, out_w):
    y = adaptive_avg_pool_nhwc(jnp.transpose(x, (0, 2, 3, 1)), out_h, out_w)
    return jnp.transpose(y, (0, 3, 1, 2))


def reference_forward(bev_nchw, z, p):
    def bn_nchw(x, bnp):
        s, t = bn_scale_shift(bnp)
        return x * s[None, :, None, None] + t[None, :, None, None]

    def conv(x, w, b, stride):
        y = lax.conv_general_dilated(
            x, w, (stride, stride), 'VALID',
            dimension_numbers=('NCHW', 'OIHW', 'NCHW'),
            precision=lax.Precision.HIGHEST)
        return y + b[None, :, None, None]

    x = bev_nchw.astype(jnp.float32)
    x = bn_nchw(x, p['bn0'])
    x = jnp.maximum(bn_nchw(conv(x, p['w1'], p['b1'], 4), p['bn1']), 0.0)
    x = jnp.maximum(bn_nchw(conv(x, p['w2'], p['b2'], 4), p['bn2']), 0.0)
    x = jnp.maximum(bn_nchw(conv(x, p['w3'], p['b3'], 2), p['bn3']), 0.0)
    x = adaptive_avg_pool_nchw(x, 4, 4)
    flat = x.reshape(x.shape[0], -1)
    feats = jnp.maximum(flat @ p['wl'] + p['bl'], 0.0)
    feats = jnp.nan_to_num(feats, nan=0.0, posinf=1.0, neginf=-1.0)

    gin = jnp.concatenate([feats, z.astype(jnp.float32)], axis=-1)
    h = jnp.zeros((bev_nchw.shape[0], LATENT_DIM), jnp.float32)
    actions = []
    for _ in range(SEQ_LEN):
        r = jax.nn.sigmoid(gin @ p['wir'] + p['bir'] + h @ p['whr'] + p['bhr'])
        u = jax.nn.sigmoid(gin @ p['wiz'] + p['biz'] + h @ p['whz'] + p['bhz'])
        n = jnp.tanh(gin @ p['win'] + p['bin'] + r * (h @ p['whn'] + p['bhn']))
        h = (1.0 - u) * n + u * h
        actions.append(h @ p['wdec'] + p['bdec'])
    return jnp.stack(actions, axis=1)


# ============================================================================
# Deterministic synthetic parameters
# ============================================================================
def init_params(key):
    ks = list(jax.random.split(key, 40))
    nxt = iter(ks)

    def nrm(shape, scale=0.1):
        return (scale * jax.random.normal(next(nxt), shape)).astype(jnp.float32)

    def bn_params(c):
        gamma = (1.0 + 0.1 * jax.random.normal(next(nxt), (c,))).astype(jnp.float32)
        beta = (0.1 * jax.random.normal(next(nxt), (c,))).astype(jnp.float32)
        mean = (0.1 * jax.random.normal(next(nxt), (c,))).astype(jnp.float32)
        var = (1.0 + 0.1 * jax.random.uniform(next(nxt), (c,))).astype(jnp.float32)
        return (gamma, beta, mean, var)

    p = {}
    p['bn0'] = bn_params(3)
    p['w1'] = nrm((8, 3, 4, 4));   p['b1'] = nrm((8,))
    p['bn1'] = bn_params(8)
    p['w2'] = nrm((16, 8, 4, 4));  p['b2'] = nrm((16,))
    p['bn2'] = bn_params(16)
    p['w3'] = nrm((32, 16, 4, 4)); p['b3'] = nrm((32,))
    p['bn3'] = bn_params(32)
    p['wl'] = nrm((32 * 4 * 4, LATENT_DIM)); p['bl'] = nrm((LATENT_DIM,))
    # GRUCell: gates r, z, n (torch ordering), weights pre-transposed for x @ W
    for g in ('r', 'z', 'n'):
        p['wi' + g] = nrm((2 * LATENT_DIM, LATENT_DIM))
        p['wh' + g] = nrm((LATENT_DIM, LATENT_DIM))
        p['bi' + g] = nrm((LATENT_DIM,))
        p['bh' + g] = nrm((LATENT_DIM,))
    p['wdec'] = nrm((LATENT_DIM, ACTION_DIM)); p['bdec'] = nrm((ACTION_DIM,))
    return p


# ============================================================================
if __name__ == "__main__":
    key = jax.random.PRNGKey(0)
    kp, kb, kz = jax.random.split(key, 3)
    params = init_params(kp)
    bev = jax.random.normal(kb, (BATCH, 3, BEV_HW, BEV_HW), jnp.float32)  # NCHW
    z = jax.random.normal(kz, (BATCH, LATENT_DIM), jnp.float32)

    pp = prepare_params(params)            # one-time weight folding
    actions = decoder_forward(bev, z, pp)
    actions = jax.block_until_ready(actions)
    assert actions.shape == (BATCH, SEQ_LEN, ACTION_DIM), actions.shape
    assert bool(jnp.all(jnp.isfinite(actions)))

    with jax.default_matmul_precision("float32"):
        ref = jax.block_until_ready(reference_forward(bev, z, params))
    max_err = float(jnp.max(jnp.abs(actions - ref)))
    assert jnp.allclose(actions, ref, atol=5e-3, rtol=5e-3), max_err

    print("KERNEL_OK")
</pallas_src>

<mosaic_0001>
module attributes {stable_mosaic.version = 11 : i64} {
  func.func @_decoder_kernel(%arg0: memref<16x2x768xf32, #tpu.memory_space<vmem>>, %arg1: memref<2x32xf32, #tpu.memory_space<vmem>>, %arg2: memref<768x128xf32, #tpu.memory_space<vmem>>, %arg3: memref<1x128xf32, #tpu.memory_space<vmem>>, %arg4: memref<128x16xf32, #tpu.memory_space<vmem>>, %arg5: memref<1x16xf32, #tpu.memory_space<vmem>>, %arg6: memref<16x16x32xf32, #tpu.memory_space<vmem>>, %arg7: memref<1x32xf32, #tpu.memory_space<vmem>>, %arg8: memref<32x32xf32, #tpu.memory_space<vmem>>, %arg9: memref<1x32xf32, #tpu.memory_space<vmem>>, %arg10: memref<3x32x32xf32, #tpu.memory_space<vmem>>, %arg11: memref<3x32x32xf32, #tpu.memory_space<vmem>>, %arg12: memref<3x32x32xf32, #tpu.memory_space<vmem>>, %arg13: memref<3x1x32xf32, #tpu.memory_space<vmem>>, %arg14: memref<3x1x32xf32, #tpu.memory_space<vmem>>, %arg15: memref<32x4xf32, #tpu.memory_space<vmem>>, %arg16: memref<1x4xf32, #tpu.memory_space<vmem>>, %arg17: memref<8x2x4xf32, #tpu.memory_space<vmem>>) attributes {dimension_semantics = [], scalar_prefetch = 0 : i64, scratch_operands = 0 : i64, tpu.core_type = #tpu.core_type<tc>} {
    %c0 = arith.constant 0 : index
    %c0_0 = arith.constant 0 : index
    %0 = vector.load %arg3[%c0, %c0_0] : memref<1x128xf32, #tpu.memory_space<vmem>>, vector<1x128xf32>
    %c0_1 = arith.constant 0 : index
    %c0_2 = arith.constant 0 : index
    %1 = vector.load %arg4[%c0_1, %c0_2] : memref<128x16xf32, #tpu.memory_space<vmem>>, vector<128x16xf32>
    %c0_3 = arith.constant 0 : index
    %c0_4 = arith.constant 0 : index
    %2 = vector.load %arg5[%c0_3, %c0_4] : memref<1x16xf32, #tpu.memory_space<vmem>>, vector<1x16xf32>
    %cst = arith.constant 0.000000e+00 : f32
    %3 = vector.broadcast %cst : f32 to vector<2x32xf32>
    %c0_5 = arith.constant 0 : index
    %c0_6 = arith.constant 0 : index
    %c0_7 = arith.constant 0 : index
    %4 = vector.load %arg0[%c0_5, %c0_6, %c0_7] : memref<16x2x768xf32, #tpu.memory_space<vmem>>, vector<1x2x768xf32>
    %5 = vector.shape_cast %4 : vector<1x2x768xf32> to vector<2x768xf32>
    %c0_8 = arith.constant 0 : index
    %c0_9 = arith.constant 0 : index
    %6 = vector.load %arg2[%c0_8, %c0_9] : memref<768x128xf32, #tpu.memory_space<vmem>>, vector<768x128xf32>
    %cst_10 = arith.constant dense<0.000000e+00> : vector<2x128xf32>
    %7 = tpu.matmul %5, %6, %cst_10 {dimension_numbers = #tpu.dot_dimension_numbers<[1], [0], [0], [1], [0, 0, 1, 1], [], []>} : vector<2x768xf32>, vector<768x128xf32>, vector<2x128xf32> -> vector<2x128xf32>
    %8 = vector.broadcast %0 : vector<1x128xf32> to vector<2x128xf32>
    %9 = arith.addf %7, %8 : vector<2x128xf32>
    %cst_11 = arith.constant 0.000000e+00 : f32
    %10 = vector.broadcast %cst_11 : f32 to vector<2x128xf32>
    %11 = arith.maximumf %9, %10 : vector<2x128xf32>
    %cst_12 = arith.constant dense<0.000000e+00> : vector<2x16xf32>
    %12 = tpu.matmul %11, %1, %cst_12 {dimension_numbers = #tpu.dot_dimension_numbers<[1], [0], [0], [1], [0, 0, 1, 1], [], []>} : vector<2x128xf32>, vector<128x16xf32>, vector<2x16xf32> -> vector<2x16xf32>
    %13 = vector.broadcast %2 : vector<1x16xf32> to vector<2x16xf32>
    %14 = arith.addf %12, %13 : vector<2x16xf32>
    %cst_13 = arith.constant 0.000000e+00 : f32
    %15 = vector.broadcast %cst_13 : f32 to vector<2x16xf32>
    %16 = arith.maximumf %14, %15 : vector<2x16xf32>
    %c0_14 = arith.constant 0 : index
    %c0_15 = arith.constant 0 : index
    %c0_16 = arith.constant 0 : index
    %17 = vector.load %arg6[%c0_14, %c0_15, %c0_16] : memref<16x16x32xf32, #tpu.memory_space<vmem>>, vector<1x16x32xf32>
    %18 = vector.shape_cast %17 : vector<1x16x32xf32> to vector<16x32xf32>
    %cst_17 = arith.constant dense<0.000000e+00> : vector<2x32xf32>
    %19 = tpu.matmul %16, %18, %cst_17 {dimension_numbers = #tpu.dot_dimension_numbers<[1], [0], [0], [1], [0, 0, 1, 1], [], []>} : vector<2x16xf32>, vector<16x32xf32>, vector<2x32xf32> -> vector<2x32xf32>
    %20 = arith.addf %3, %19 : vector<2x32xf32>
    %c1 = arith.constant 1 : index
    %c0_18 = arith.constant 0 : index
    %c0_19 = arith.constant 0 : index
    %21 = vector.load %arg0[%c1, %c0_18, %c0_19] : memref<16x2x768xf32, #tpu.memory_space<vmem>>, vector<1x2x768xf32>
    %22 = vector.shape_cast %21 : vector<1x2x768xf32> to vector<2x768xf32>
    %c0_20 = arith.constant 0 : index
    %c0_21 = arith.constant 0 : index
    %23 = vector.load %arg2[%c0_20, %c0_21] : memref<768x128xf32, #tpu.memory_space<vmem>>, vector<768x128xf32>
    %cst_22 = arith.constant dense<0.000000e+00> : vector<2x128xf32>
    %24 = tpu.matmul %22, %23, %cst_22 {dimension_numbers = #tpu.dot_dimension_numbers<[1], [0], [0], [1], [0, 0, 1, 1], [], []>} : vector<2x768xf32>, vector<768x128xf32>, vector<2x128xf32> -> vector<2x128xf32>
    %25 = vector.broadcast %0 : vector<1x128xf32> to vector<2x128xf32>
    %26 = arith.addf %24, %25 : vector<2x128xf32>
    %cst_23 = arith.constant 0.000000e+00 : f32
    %27 = vector.broadcast %cst_23 : f32 to vector<2x128xf32>
    %28 = arith.maximumf %26, %27 : vector<2x128xf32>
    %cst_24 = arith.constant dense<0.000000e+00> : vector<2x16xf32>
    %29 = tpu.matmul %28, %1, %cst_24 {dimension_numbers = #tpu.dot_dimension_numbers<[1], [0], [0], [1], [0, 0, 1, 1], [], []>} : vector<2x128xf32>, vector<128x16xf32>, vector<2x16xf32> -> vector<2x16xf32>
    %30 = vector.broadcast %2 : vector<1x16xf32> to vector<2x16xf32>
    %31 = arith.addf %29, %30 : vector<2x16xf32>
    %cst_25 = arith.constant 0.000000e+00 : f32
    %32 = vector.broadcast %cst_25 : f32 to vector<2x16xf32>
    %33 = arith.maximumf %31, %32 : vector<2x16xf32>
    %c1_26 = arith.constant 1 : index
    %c0_27 = arith.constant 0 : index
    %c0_28 = arith.constant 0 : index
    %34 = vector.load %arg6[%c1_26, %c0_27, %c0_28] : memref<16x16x32xf32, #tpu.memory_space<vmem>>, vector<1x16x32xf32>
    %35 = vector.shape_cast %34 : vector<1x16x32xf32> to vector<16x32xf32>
    %cst_29 = arith.constant dense<0.000000e+00> : vector<2x32xf32>
    %36 = tpu.matmul %33, %35, %cst_29 {dimension_numbers = #tpu.dot_dimension_numbers<[1], [0], [0], [1], [0, 0, 1, 1], [], []>} : vector<2x16xf32>, vector<16x32xf32>, vector<2x32xf32> -> vector<2x32xf32>
    %37 = arith.addf %20, %36 : vector<2x32xf32>
    %c2 = arith.constant 2 : index
    %c0_30 = arith.constant 0 : index
    %c0_31 = arith.constant 0 : index
    %38 = vector.load %arg0[%c2, %c0_30, %c0_31] : memref<16x2x768xf32, #tpu.memory_space<vmem>>, vector<1x2x768xf32>
    %39 = vector.shape_cast %38 : vector<1x2x768xf32> to vector<2x768xf32>
    %c0_32 = arith.constant 0 : index
    %c0_33 = arith.constant 0 : index
    %40 = vector.load %arg2[%c0_32, %c0_33] : memref<768x128xf32, #tpu.memory_space<vmem>>, vector<768x128xf32>
    %cst_34 = arith.constant dense<0.000000e+00> : vector<2x128xf32>
    %41 = tpu.matmul %39, %40, %cst_34 {dimension_numbers = #tpu.dot_dimension_numbers<[1], [0], [0], [1], [0, 0, 1, 1], [], []>} : vector<2x768xf32>, vector<768x128xf32>, vector<2x128xf32> -> vector<2x128xf32>
    %42 = vector.broadcast %0 : vector<1x128xf32> to vector<2x128xf32>
    %43 = arith.addf %41, %42 : vector<2x128xf32>
    %cst_35 = arith.constant 0.000000e+00 : f32
    %44 = vector.broadcast %cst_35 : f32 to vector<2x128xf32>
    %45 = arith.maximumf %43, %44 : vector<2x128xf32>
    %cst_36 = arith.constant dense<0.000000e+00> : vector<2x16xf32>
    %46 = tpu.matmul %45, %1, %cst_36 {dimension_numbers = #tpu.dot_dimension_numbers<[1], [0], [0], [1], [0, 0, 1, 1], [], []>} : vector<2x128xf32>, vector<128x16xf32>, vector<2x16xf32> -> vector<2x16xf32>
    %47 = vector.broadcast %2 : vector<1x16xf32> to vector<2x16xf32>
    %48 = arith.addf %46, %47 : vector<2x16xf32>
    %cst_37 = arith.constant 0.000000e+00 : f32
    %49 = vector.broadcast %cst_37 : f32 to vector<2x16xf32>
    %50 = arith.maximumf %48, %49 : vector<2x16xf32>
    %c2_38 = arith.constant 2 : index
    %c0_39 = arith.constant 0 : index
    %c0_40 = arith.constant 0 : index
    %51 = vector.load %arg6[%c2_38, %c0_39, %c0_40] : memref<16x16x32xf32, #tpu.memory_space<vmem>>, vector<1x16x32xf32>
    %52 = vector.shape_cast %51 : vector<1x16x32xf32> to vector<16x32xf32>
    %cst_41 = arith.constant dense<0.000000e+00> : vector<2x32xf32>
    %53 = tpu.matmul %50, %52, %cst_41 {dimension_numbers = #tpu.dot_dimension_numbers<[1], [0], [0], [1], [0, 0, 1, 1], [], []>} : vector<2x16xf32>, vector<16x32xf32>, vector<2x32xf32> -> vector<2x32xf32>
    %54 = arith.addf %37, %53 : vector<2x32xf32>
    %c3 = arith.constant 3 : index
    %c0_42 = arith.constant 0 : index
    %c0_43 = arith.constant 0 : index
    %55 = vector.load %arg0[%c3, %c0_42, %c0_43] : memref<16x2x768xf32, #tpu.memory_space<vmem>>, vector<1x2x768xf32>
    %56 = vector.shape_cast %55 : vector<1x2x768xf32> to vector<2x768xf32>
    %c0_44 = arith.constant 0 : index
    %c0_45 = arith.constant 0 : index
    %57 = vector.load %arg2[%c0_44, %c0_45] : memref<768x128xf32, #tpu.memory_space<vmem>>, vector<768x128xf32>
    %cst_46 = arith.constant dense<0.000000e+00> : vector<2x128xf32>
    %58 = tpu.matmul %56, %57, %cst_46 {dimension_numbers = #tpu.dot_dimension_numbers<[1], [0], [0], [1], [0, 0, 1, 1], [], []>} : vector<2x768xf32>, vector<768x128xf32>, vector<2x128xf32> -> vector<2x128xf32>
    %59 = vector.broadcast %0 : vector<1x128xf32> to vector<2x128xf32>
    %60 = arith.addf %58, %59 : vector<2x128xf32>
    %cst_47 = arith.constant 0.000000e+00 : f32
    %61 = vector.broadcast %cst_47 : f32 to vector<2x128xf32>
    %62 = arith.maximumf %60, %61 : vector<2x128xf32>
    %cst_48 = arith.constant dense<0.000000e+00> : vector<2x16xf32>
    %63 = tpu.matmul %62, %1, %cst_48 {dimension_numbers = #tpu.dot_dimension_numbers<[1], [0], [0], [1], [0, 0, 1, 1], [], []>} : vector<2x128xf32>, vector<128x16xf32>, vector<2x16xf32> -> vector<2x16xf32>
    %64 = vector.broadcast %2 : vector<1x16xf32> to vector<2x16xf32>
    %65 = arith.addf %63, %64 : vector<2x16xf32>
    %cst_49 = arith.constant 0.000000e+00 : f32
    %66 = vector.broadcast %cst_49 : f32 to vector<2x16xf32>
    %67 = arith.maximumf %65, %66 : vector<2x16xf32>
    %c3_50 = arith.constant 3 : index
    %c0_51 = arith.constant 0 : index
    %c0_52 = arith.constant 0 : index
    %68 = vector.load %arg6[%c3_50, %c0_51, %c0_52] : memref<16x16x32xf32, #tpu.memory_space<vmem>>, vector<1x16x32xf32>
    %69 = vector.shape_cast %68 : vector<1x16x32xf32> to vector<16x32xf32>
    %cst_53 = arith.constant dense<0.000000e+00> : vector<2x32xf32>
    %70 = tpu.matmul %67, %69, %cst_53 {dimension_numbers = #tpu.dot_dimension_numbers<[1], [0], [0], [1], [0, 0, 1, 1], [], []>} : vector<2x16xf32>, vector<16x32xf32>, vector<2x32xf32> -> vector<2x32xf32>
    %71 = arith.addf %54, %70 : vector<2x32xf32>
    %c4 = arith.constant 4 : index
    %c0_54 = arith.constant 0 : index
    %c0_55 = arith.constant 0 : index
    %72 = vector.load %arg0[%c4, %c0_54, %c0_55] : memref<16x2x768xf32, #tpu.memory_space<vmem>>, vector<1x2x768xf32>
    %73 = vector.shape_cast %72 : vector<1x2x768xf32> to vector<2x768xf32>
    %c0_56 = arith.constant 0 : index
    %c0_57 = arith.constant 0 : index
    %74 = vector.load %arg2[%c0_56, %c0_57] : memref<768x128xf32, #tpu.memory_space<vmem>>, vector<768x128xf32>
    %cst_58 = arith.constant dense<0.000000e+00> : vector<2x128xf32>
    %75 = tpu.matmul %73, %74, %cst_58 {dimension_numbers = #tpu.dot_dimension_numbers<[1], [0], [0], [1], [0, 0, 1, 1], [], []>} : vector<2x768xf32>, vector<768x128xf32>, vector<2x128xf32> -> vector<2x128xf32>
    %76 = vector.broadcast %0 : vector<1x128xf32> to vector<2x128xf32>
    %77 = arith.addf %75, %76 : vector<2x128xf32>
    %cst_59 = arith.constant 0.000000e+00 : f32
    %78 = vector.broadcast %cst_59 : f32 to vector<2x128xf32>
    %79 = arith.maximumf %77, %78 : vector<2x128xf32>
    %cst_60 = arith.constant dense<0.000000e+00> : vector<2x16xf32>
    %80 = tpu.matmul %79, %1, %cst_60 {dimension_numbers = #tpu.dot_dimension_numbers<[1], [0], [0], [1], [0, 0, 1, 1], [], []>} : vector<2x128xf32>, vector<128x16xf32>, vector<2x16xf32> -> vector<2x16xf32>
    %81 = vector.broadcast %2 : vector<1x16xf32> to vector<2x16xf32>
    %82 = arith.addf %80, %81 : vector<2x16xf32>
    %cst_61 = arith.constant 0.000000e+00 : f32
    %83 = vector.broadcast %cst_61 : f32 to vector<2x16xf32>
    %84 = arith.maximumf %82, %83 : vector<2x16xf32>
    %c4_62 = arith.constant 4 : index
    %c0_63 = arith.constant 0 : index
    %c0_64 = arith.constant 0 : index
    %85 = vector.load %arg6[%c4_62, %c0_63, %c0_64] : memref<16x16x32xf32, #tpu.memory_space<vmem>>, vector<1x16x32xf32>
    %86 = vector.shape_cast %85 : vector<1x16x32xf32> to vector<16x32xf32>
    %cst_65 = arith.constant dense<0.000000e+00> : vector<2x32xf32>
    %87 = tpu.matmul %84, %86, %cst_65 {dimension_numbers = #tpu.dot_dimension_numbers<[1], [0], [0], [1], [0, 0, 1, 1], [], []>} : vector<2x16xf32>, vector<16x32xf32>, vector<2x32xf32> -> vector<2x32xf32>
    %88 = arith.addf %71, %87 : vector<2x32xf32>
    %c5 = arith.constant 5 : index
    %c0_66 = arith.constant 0 : index
    %c0_67 = arith.constant 0 : index
    %89 = vector.load %arg0[%c5, %c0_66, %c0_67] : memref<16x2x768xf32, #tpu.memory_space<vmem>>, vector<1x2x768xf32>
    %90 = vector.shape_cast %89 : vector<1x2x768xf32> to vector<2x768xf32>
    %c0_68 = arith.constant 0 : index
    %c0_69 = arith.constant 0 : index
    %91 = vector.load %arg2[%c0_68, %c0_69] : memref<768x128xf32, #tpu.memory_space<vmem>>, vector<768x128xf32>
    %cst_70 = arith.constant dense<0.000000e+00> : vector<2x128xf32>
    %92 = tpu.matmul %90, %91, %cst_70 {dimension_numbers = #tpu.dot_dimension_numbers<[1], [0], [0], [1], [0, 0, 1, 1], [], []>} : vector<2x768xf32>, vector<768x128xf32>, vector<2x128xf32> -> vector<2x128xf32>
    %93 = vector.broadcast %0 : vector<1x128xf32> to vector<2x128xf32>
    %94 = arith.addf %92, %93 : vector<2x128xf32>
    %cst_71 = arith.constant 0.000000e+00 : f32
    %95 = vector.broadcast %cst_71 : f32 to vector<2x128xf32>
    %96 = arith.maximumf %94, %95 : vector<2x128xf32>
    %cst_72 = arith.constant dense<0.000000e+00> : vector<2x16xf32>
    %97 = tpu.matmul %96, %1, %cst_72 {dimension_numbers = #tpu.dot_dimension_numbers<[1], [0], [0], [1], [0, 0, 1, 1], [], []>} : vector<2x128xf32>, vector<128x16xf32>, vector<2x16xf32> -> vector<2x16xf32>
    %98 = vector.broadcast %2 : vector<1x16xf32> to vector<2x16xf32>
    %99 = arith.addf %97, %98 : vector<2x16xf32>
    %cst_73 = arith.constant 0.000000e+00 : f32
    %100 = vector.broadcast %cst_73 : f32 to vector<2x16xf32>
    %101 = arith.maximumf %99, %100 : vector<2x16xf32>
    %c5_74 = arith.constant 5 : index
    %c0_75 = arith.constant 0 : index
    %c0_76 = arith.constant 0 : index
    %102 = vector.load %arg6[%c5_74, %c0_75, %c0_76] : memref<16x16x32xf32, #tpu.memory_space<vmem>>, vector<1x16x32xf32>
    %103 = vector.shape_cast %102 : vector<1x16x32xf32> to vector<16x32xf32>
    %cst_77 = arith.constant dense<0.000000e+00> : vector<2x32xf32>
    %104 = tpu.matmul %101, %103, %cst_77 {dimension_numbers = #tpu.dot_dimension_numbers<[1], [0], [0], [1], [0, 0, 1, 1], [], []>} : vector<2x16xf32>, vector<16x32xf32>, vector<2x32xf32> -> vector<2x32xf32>
    %105 = arith.addf %88, %104 : vector<2x32xf32>
    %c6 = arith.constant 6 : index
    %c0_78 = arith.constant 0 : index
    %c0_79 = arith.constant 0 : index
    %106 = vector.load %arg0[%c6, %c0_78, %c0_79] : memref<16x2x768xf32, #tpu.memory_space<vmem>>, vector<1x2x768xf32>
    %107 = vector.shape_cast %106 : vector<1x2x768xf32> to vector<2x768xf32>
    %c0_80 = arith.constant 0 : index
    %c0_81 = arith.constant 0 : index
    %108 = vector.load %arg2[%c0_80, %c0_81] : memref<768x128xf32, #tpu.memory_space<vmem>>, vector<768x128xf32>
    %cst_82 = arith.constant dense<0.000000e+00> : vector<2x128xf32>
    %109 = tpu.matmul %107, %108, %cst_82 {dimension_numbers = #tpu.dot_dimension_numbers<[1], [0], [0], [1], [0, 0, 1, 1], [], []>} : vector<2x768xf32>, vector<768x128xf32>, vector<2x128xf32> -> vector<2x128xf32>
    %110 = vector.broadcast %0 : vector<1x128xf32> to vector<2x128xf32>
    %111 = arith.addf %109, %110 : vector<2x128xf32>
    %cst_83 = arith.constant 0.000000e+00 : f32
    %112 = vector.broadcast %cst_83 : f32 to vector<2x128xf32>
    %113 = arith.maximumf %111, %112 : vector<2x128xf32>
    %cst_84 = arith.constant dense<0.000000e+00> : vector<2x16xf32>
    %114 = tpu.matmul %113, %1, %cst_84 {dimension_numbers = #tpu.dot_dimension_numbers<[1], [0], [0], [1], [0, 0, 1, 1], [], []>} : vector<2x128xf32>, vector<128x16xf32>, vector<2x16xf32> -> vector<2x16xf32>
    %115 = vector.broadcast %2 : vector<1x16xf32> to vector<2x16xf32>
    %116 = arith.addf %114, %115 : vector<2x16xf32>
    %cst_85 = arith.constant 0.000000e+00 : f32
    %117 = vector.broadcast %cst_85 : f32 to vector<2x16xf32>
    %118 = arith.maximumf %116, %117 : vector<2x16xf32>
    %c6_86 = arith.constant 6 : index
    %c0_87 = arith.constant 0 : index
    %c0_88 = arith.constant 0 : index
    %119 = vector.load %arg6[%c6_86, %c0_87, %c0_88] : memref<16x16x32xf32, #tpu.memory_space<vmem>>, vector<1x16x32xf32>
    %120 = vector.shape_cast %119 : vector<1x16x32xf32> to vector<16x32xf32>
    %cst_89 = arith.constant dense<0.000000e+00> : vector<2x32xf32>
    %121 = tpu.matmul %118, %120, %cst_89 {dimension_numbers = #tpu.dot_dimension_numbers<[1], [0], [0], [1], [0, 0, 1, 1], [], []>} : vector<2x16xf32>, vector<16x32xf32>, vector<2x32xf32> -> vector<2x32xf32>
    %122 = arith.addf %105, %121 : vector<2x32xf32>
    %c7 = arith.constant 7 : index
    %c0_90 = arith.constant 0 : index
    %c0_91 = arith.constant 0 : index
    %123 = vector.load %arg0[%c7, %c0_90, %c0_91] : memref<16x2x768xf32, #tpu.memory_space<vmem>>, vector<1x2x768xf32>
    %124 = vector.shape_cast %123 : vector<1x2x768xf32> to vector<2x768xf32>
    %c0_92 = arith.constant 0 : index
    %c0_93 = arith.constant 0 : index
    %125 = vector.load %arg2[%c0_92, %c0_93] : memref<768x128xf32, #tpu.memory_space<vmem>>, vector<768x128xf32>
    %cst_94 = arith.constant dense<0.000000e+00> : vector<2x128xf32>
    %126 = tpu.matmul %124, %125, %cst_94 {dimension_numbers = #tpu.dot_dimension_numbers<[1], [0], [0], [1], [0, 0, 1, 1], [], []>} : vector<2x768xf32>, vector<768x128xf32>, vector<2x128xf32> -> vector<2x128xf32>
    %127 = vector.broadcast %0 : vector<1x128xf32> to vector<2x128xf32>
    %128 = arith.addf %126, %127 : vector<2x128xf32>
    %cst_95 = arith.constant 0.000000e+00 : f32
    %129 = vector.broadcast %cst_95 : f32 to vector<2x128xf32>
    %130 = arith.maximumf %128, %129 : vector<2x128xf32>
    %cst_96 = arith.constant dense<0.000000e+00> : vector<2x16xf32>
    %131 = tpu.matmul %130, %1, %cst_96 {dimension_numbers = #tpu.dot_dimension_numbers<[1], [0], [0], [1], [0, 0, 1, 1], [], []>} : vector<2x128xf32>, vector<128x16xf32>, vector<2x16xf32> -> vector<2x16xf32>
    %132 = vector.broadcast %2 : vector<1x16xf32> to vector<2x16xf32>
    %133 = arith.addf %131, %132 : vector<2x16xf32>
    %cst_97 = arith.constant 0.000000e+00 : f32
    %134 = vector.broadcast %cst_97 : f32 to vector<2x16xf32>
    %135 = arith.maximumf %133, %134 : vector<2x16xf32>
    %c7_98 = arith.constant 7 : index
    %c0_99 = arith.constant 0 : index
    %c0_100 = arith.constant 0 : index
    %136 = vector.load %arg6[%c7_98, %c0_99, %c0_100] : memref<16x16x32xf32, #tpu.memory_space<vmem>>, vector<1x16x32xf32>
    %137 = vector.shape_cast %136 : vector<1x16x32xf32> to vector<16x32xf32>
    %cst_101 = arith.constant dense<0.000000e+00> : vector<2x32xf32>
    %138 = tpu.matmul %135, %137, %cst_101 {dimension_numbers = #tpu.dot_dimension_numbers<[1], [0], [0], [1], [0, 0, 1, 1], [], []>} : vector<2x16xf32>, vector<16x32xf32>, vector<2x32xf32> -> vector<2x32xf32>
    %139 = arith.addf %122, %138 : vector<2x32xf32>
    %c8 = arith.constant 8 : index
    %c0_102 = arith.constant 0 : index
    %c0_103 = arith.constant 0 : index
    %140 = vector.load %arg0[%c8, %c0_102, %c0_103] : memref<16x2x768xf32, #tpu.memory_space<vmem>>, vector<1x2x768xf32>
    %141 = vector.shape_cast %140 : vector<1x2x768xf32> to vector<2x768xf32>
    %c0_104 = arith.constant 0 : index
    %c0_105 = arith.constant 0 : index
    %142 = vector.load %arg2[%c0_104, %c0_105] : memref<768x128xf32, #tpu.memory_space<vmem>>, vector<768x128xf32>
    %cst_106 = arith.constant dense<0.000000e+00> : vector<2x128xf32>
    %143 = tpu.matmul %141, %142, %cst_106 {dimension_numbers = #tpu.dot_dimension_numbers<[1], [0], [0], [1], [0, 0, 1, 1], [], []>} : vector<2x768xf32>, vector<768x128xf32>, vector<2x128xf32> -> vector<2x128xf32>
    %144 = vector.broadcast %0 : vector<1x128xf32> to vector<2x128xf32>
    %145 = arith.addf %143, %144 : vector<2x128xf32>
    %cst_107 = arith.constant 0.000000e+00 : f32
    %146 = vector.broadcast %cst_107 : f32 to vector<2x128xf32>
    %147 = arith.maximumf %145, %146 : vector<2x128xf32>
    %cst_108 = arith.constant dense<0.000000e+00> : vector<2x16xf32>
    %148 = tpu.matmul %147, %1, %cst_108 {dimension_numbers = #tpu.dot_dimension_numbers<[1], [0], [0], [1], [0, 0, 1, 1], [], []>} : vector<2x128xf32>, vector<128x16xf32>, vector<2x16xf32> -> vector<2x16xf32>
    %149 = vector.broadcast %2 : vector<1x16xf32> to vector<2x16xf32>
    %150 = arith.addf %148, %149 : vector<2x16xf32>
    %cst_109 = arith.constant 0.000000e+00 : f32
    %151 = vector.broadcast %cst_109 : f32 to vector<2x16xf32>
    %152 = arith.maximumf %150, %151 : vector<2x16xf32>
    %c8_110 = arith.constant 8 : index
    %c0_111 = arith.constant 0 : index
    %c0_112 = arith.constant 0 : index
    %153 = vector.load %arg6[%c8_110, %c0_111, %c0_112] : memref<16x16x32xf32, #tpu.memory_space<vmem>>, vector<1x16x32xf32>
    %154 = vector.shape_cast %153 : vector<1x16x32xf32> to vector<16x32xf32>
    %cst_113 = arith.constant dense<0.000000e+00> : vector<2x32xf32>
    %155 = tpu.matmul %152, %154, %cst_113 {dimension_numbers = #tpu.dot_dimension_numbers<[1], [0], [0], [1], [0, 0, 1, 1], [], []>} : vector<2x16xf32>, vector<16x32xf32>, vector<2x32xf32> -> vector<2x32xf32>
    %156 = arith.addf %139, %155 : vector<2x32xf32>
    %c9 = arith.constant 9 : index
    %c0_114 = arith.constant 0 : index
    %c0_115 = arith.constant 0 : index
    %157 = vector.load %arg0[%c9, %c0_114, %c0_115] : memref<16x2x768xf32, #tpu.memory_space<vmem>>, vector<1x2x768xf32>
    %158 = vector.shape_cast %157 : vector<1x2x768xf32> to vector<2x768xf32>
    %c0_116 = arith.constant 0 : index
    %c0_117 = arith.constant 0 : index
    %159 = vector.load %arg2[%c0_116, %c0_117] : memref<768x128xf32, #tpu.memory_space<vmem>>, vector<768x128xf32>
    %cst_118 = arith.constant dense<0.000000e+00> : vector<2x128xf32>
    %160 = tpu.matmul %158, %159, %cst_118 {dimension_numbers = #tpu.dot_dimension_numbers<[1], [0], [0], [1], [0, 0, 1, 1], [], []>} : vector<2x768xf32>, vector<768x128xf32>, vector<2x128xf32> -> vector<2x128xf32>
    %161 = vector.broadcast %0 : vector<1x128xf32> to vector<2x128xf32>
    %162 = arith.addf %160, %161 : vector<2x128xf32>
    %cst_119 = arith.constant 0.000000e+00 : f32
    %163 = vector.broadcast %cst_119 : f32 to vector<2x128xf32>
    %164 = arith.maximumf %162, %163 : vector<2x128xf32>
    %cst_120 = arith.constant dense<0.000000e+00> : vector<2x16xf32>
    %165 = tpu.matmul %164, %1, %cst_120 {dimension_numbers = #tpu.dot_dimension_numbers<[1], [0], [0], [1], [0, 0, 1, 1], [], []>} : vector<2x128xf32>, vector<128x16xf32>, vector<2x16xf32> -> vector<2x16xf32>
    %166 = vector.broadcast %2 : vector<1x16xf32> to vector<2x16xf32>
    %167 = arith.addf %165, %166 : vector<2x16xf32>
    %cst_121 = arith.constant 0.000000e+00 : f32
    %168 = vector.broadcast %cst_121 : f32 to vector<2x16xf32>
    %169 = arith.maximumf %167, %168 : vector<2x16xf32>
    %c9_122 = arith.constant 9 : index
    %c0_123 = arith.constant 0 : index
    %c0_124 = arith.constant 0 : index
    %170 = vector.load %arg6[%c9_122, %c0_123, %c0_124] : memref<16x16x32xf32, #tpu.memory_space<vmem>>, vector<1x16x32xf32>
    %171 = vector.shape_cast %170 : vector<1x16x32xf32> to vector<16x32xf32>
    %cst_125 = arith.constant dense<0.000000e+00> : vector<2x32xf32>
    %172 = tpu.matmul %169, %171, %cst_125 {dimension_numbers = #tpu.dot_dimension_numbers<[1], [0], [0], [1], [0, 0, 1, 1], [], []>} : vector<2x16xf32>, vector<16x32xf32>, vector<2x32xf32> -> vector<2x32xf32>
    %173 = arith.addf %156, %172 : vector<2x32xf32>
    %c10 = arith.constant 10 : index
    %c0_126 = arith.constant 0 : index
    %c0_127 = arith.constant 0 : index
    %174 = vector.load %arg0[%c10, %c0_126, %c0_127] : memref<16x2x768xf32, #tpu.memory_space<vmem>>, vector<1x2x768xf32>
    %175 = vector.shape_cast %174 : vector<1x2x768xf32> to vector<2x768xf32>
    %c0_128 = arith.constant 0 : index
    %c0_129 = arith.constant 0 : index
    %176 = vector.load %arg2[%c0_128, %c0_129] : memref<768x128xf32, #tpu.memory_space<vmem>>, vector<768x128xf32>
    %cst_130 = arith.constant dense<0.000000e+00> : vector<2x128xf32>
    %177 = tpu.matmul %175, %176, %cst_130 {dimension_numbers = #tpu.dot_dimension_numbers<[1], [0], [0], [1], [0, 0, 1, 1], [], []>} : vector<2x768xf32>, vector<768x128xf32>, vector<2x128xf32> -> vector<2x128xf32>
    %178 = vector.broadcast %0 : vector<1x128xf32> to vector<2x128xf32>
    %179 = arith.addf %177, %178 : vector<2x128xf32>
    %cst_131 = arith.constant 0.000000e+00 : f32
    %180 = vector.broadcast %cst_131 : f32 to vector<2x128xf32>
    %181 = arith.maximumf %179, %180 : vector<2x128xf32>
    %cst_132 = arith.constant dense<0.000000e+00> : vector<2x16xf32>
    %182 = tpu.matmul %181, %1, %cst_132 {dimension_numbers = #tpu.dot_dimension_numbers<[1], [0], [0], [1], [0, 0, 1, 1], [], []>} : vector<2x128xf32>, vector<128x16xf32>, vector<2x16xf32> -> vector<2x16xf32>
    %183 = vector.broadcast %2 : vector<1x16xf32> to vector<2x16xf32>
    %184 = arith.addf %182, %183 : vector<2x16xf32>
    %cst_133 = arith.constant 0.000000e+00 : f32
    %185 = vector.broadcast %cst_133 : f32 to vector<2x16xf32>
    %186 = arith.maximumf %184, %185 : vector<2x16xf32>
    %c10_134 = arith.constant 10 : index
    %c0_135 = arith.constant 0 : index
    %c0_136 = arith.constant 0 : index
    %187 = vector.load %arg6[%c10_134, %c0_135, %c0_136] : memref<16x16x32xf32, #tpu.memory_space<vmem>>, vector<1x16x32xf32>
    %188 = vector.shape_cast %187 : vector<1x16x32xf32> to vector<16x32xf32>
    %cst_137 = arith.constant dense<0.000000e+00> : vector<2x32xf32>
    %189 = tpu.matmul %186, %188, %cst_137 {dimension_numbers = #tpu.dot_dimension_numbers<[1], [0], [0], [1], [0, 0, 1, 1], [], []>} : vector<2x16xf32>, vector<16x32xf32>, vector<2x32xf32> -> vector<2x32xf32>
    %190 = arith.addf %173, %189 : vector<2x32xf32>
    %c11 = arith.constant 11 : index
    %c0_138 = arith.constant 0 : index
    %c0_139 = arith.constant 0 : index
    %191 = vector.load %arg0[%c11, %c0_138, %c0_139] : memref<16x2x768xf32, #tpu.memory_space<vmem>>, vector<1x2x768xf32>
    %192 = vector.shape_cast %191 : vector<1x2x768xf32> to vector<2x768xf32>
    %c0_140 = arith.constant 0 : index
    %c0_141 = arith.constant 0 : index
    %193 = vector.load %arg2[%c0_140, %c0_141] : memref<768x128xf32, #tpu.memory_space<vmem>>, vector<768x128xf32>
    %cst_142 = arith.constant dense<0.000000e+00> : vector<2x128xf32>
    %194 = tpu.matmul %192, %193, %cst_142 {dimension_numbers = #tpu.dot_dimension_numbers<[1], [0], [0], [1], [0, 0, 1, 1], [], []>} : vector<2x768xf32>, vector<768x128xf32>, vector<2x128xf32> -> vector<2x128xf32>
    %195 = vector.broadcast %0 : vector<1x128xf32> to vector<2x128xf32>
    %196 = arith.addf %194, %195 : vector<2x128xf32>
    %cst_143 = arith.constant 0.000000e+00 : f32
    %197 = vector.broadcast %cst_143 : f32 to vector<2x128xf32>
    %198 = arith.maximumf %196, %197 : vector<2x128xf32>
    %cst_144 = arith.constant dense<0.000000e+00> : vector<2x16xf32>
    %199 = tpu.matmul %198, %1, %cst_144 {dimension_numbers = #tpu.dot_dimension_numbers<[1], [0], [0], [1], [0, 0, 1, 1], [], []>} : vector<2x128xf32>, vector<128x16xf32>, vector<2x16xf32> -> vector<2x16xf32>
    %200 = vector.broadcast %2 : vector<1x16xf32> to vector<2x16xf32>
    %201 = arith.addf %199, %200 : vector<2x16xf32>
    %cst_145 = arith.constant 0.000000e+00 : f32
    %202 = vector.broadcast %cst_145 : f32 to vector<2x16xf32>
    %203 = arith.maximumf %201, %202 : vector<2x16xf32>
    %c11_146 = arith.constant 11 : index
    %c0_147 = arith.constant 0 : index
    %c0_148 = arith.constant 0 : index
    %204 = vector.load %arg6[%c11_146, %c0_147, %c0_148] : memref<16x16x32xf32, #tpu.memory_space<vmem>>, vector<1x16x32xf32>
    %205 = vector.shape_cast %204 : vector<1x16x32xf32> to vector<16x32xf32>
    %cst_149 = arith.constant dense<0.000000e+00> : vector<2x32xf32>
    %206 = tpu.matmul %203, %205, %cst_149 {dimension_numbers = #tpu.dot_dimension_numbers<[1], [0], [0], [1], [0, 0, 1, 1], [], []>} : vector<2x16xf32>, vector<16x32xf32>, vector<2x32xf32> -> vector<2x32xf32>
    %207 = arith.addf %190, %206 : vector<2x32xf32>
    %c12 = arith.constant 12 : index
    %c0_150 = arith.constant 0 : index
    %c0_151 = arith.constant 0 : index
    %208 = vector.load %arg0[%c12, %c0_150, %c0_151] : memref<16x2x768xf32, #tpu.memory_space<vmem>>, vector<1x2x768xf32>
    %209 = vector.shape_cast %208 : vector<1x2x768xf32> to vector<2x768xf32>
    %c0_152 = arith.constant 0 : index
    %c0_153 = arith.constant 0 : index
    %210 = vector.load %arg2[%c0_152, %c0_153] : memref<768x128xf32, #tpu.memory_space<vmem>>, vector<768x128xf32>
    %cst_154 = arith.constant dense<0.000000e+00> : vector<2x128xf32>
    %211 = tpu.matmul %209, %210, %cst_154 {dimension_numbers = #tpu.dot_dimension_numbers<[1], [0], [0], [1], [0, 0, 1, 1], [], []>} : vector<2x768xf32>, vector<768x128xf32>, vector<2x128xf32> -> vector<2x128xf32>
    %212 = vector.broadcast %0 : vector<1x128xf32> to vector<2x128xf32>
    %213 = arith.addf %211, %212 : vector<2x128xf32>
    %cst_155 = arith.constant 0.000000e+00 : f32
    %214 = vector.broadcast %cst_155 : f32 to vector<2x128xf32>
    %215 = arith.maximumf %213, %214 : vector<2x128xf32>
    %cst_156 = arith.constant dense<0.000000e+00> : vector<2x16xf32>
    %216 = tpu.matmul %215, %1, %cst_156 {dimension_numbers = #tpu.dot_dimension_numbers<[1], [0], [0], [1], [0, 0, 1, 1], [], []>} : vector<2x128xf32>, vector<128x16xf32>, vector<2x16xf32> -> vector<2x16xf32>
    %217 = vector.broadcast %2 : vector<1x16xf32> to vector<2x16xf32>
    %218 = arith.addf %216, %217 : vector<2x16xf32>
    %cst_157 = arith.constant 0.000000e+00 : f32
    %219 = vector.broadcast %cst_157 : f32 to vector<2x16xf32>
    %220 = arith.maximumf %218, %219 : vector<2x16xf32>
    %c12_158 = arith.constant 12 : index
    %c0_159 = arith.constant 0 : index
    %c0_160 = arith.constant 0 : index
    %221 = vector.load %arg6[%c12_158, %c0_159, %c0_160] : memref<16x16x32xf32, #tpu.memory_space<vmem>>, vector<1x16x32xf32>
    %222 = vector.shape_cast %221 : vector<1x16x32xf32> to vector<16x32xf32>
    %cst_161 = arith.constant dense<0.000000e+00> : vector<2x32xf32>
    %223 = tpu.matmul %220, %222, %cst_161 {dimension_numbers = #tpu.dot_dimension_numbers<[1], [0], [0], [1], [0, 0, 1, 1], [], []>} : vector<2x16xf32>, vector<16x32xf32>, vector<2x32xf32> -> vector<2x32xf32>
    %224 = arith.addf %207, %223 : vector<2x32xf32>
    %c13 = arith.constant 13 : index
    %c0_162 = arith.constant 0 : index
    %c0_163 = arith.constant 0 : index
    %225 = vector.load %arg0[%c13, %c0_162, %c0_163] : memref<16x2x768xf32, #tpu.memory_space<vmem>>, vector<1x2x768xf32>
    %226 = vector.shape_cast %225 : vector<1x2x768xf32> to vector<2x768xf32>
    %c0_164 = arith.constant 0 : index
    %c0_165 = arith.constant 0 : index
    %227 = vector.load %arg2[%c0_164, %c0_165] : memref<768x128xf32, #tpu.memory_space<vmem>>, vector<768x128xf32>
    %cst_166 = arith.constant dense<0.000000e+00> : vector<2x128xf32>
    %228 = tpu.matmul %226, %227, %cst_166 {dimension_numbers = #tpu.dot_dimension_numbers<[1], [0], [0], [1], [0, 0, 1, 1], [], []>} : vector<2x768xf32>, vector<768x128xf32>, vector<2x128xf32> -> vector<2x128xf32>
    %229 = vector.broadcast %0 : vector<1x128xf32> to vector<2x128xf32>
    %230 = arith.addf %228, %229 : vector<2x128xf32>
    %cst_167 = arith.constant 0.000000e+00 : f32
    %231 = vector.broadcast %cst_167 : f32 to vector<2x128xf32>
    %232 = arith.maximumf %230, %231 : vector<2x128xf32>
    %cst_168 = arith.constant dense<0.000000e+00> : vector<2x16xf32>
    %233 = tpu.matmul %232, %1, %cst_168 {dimension_numbers = #tpu.dot_dimension_numbers<[1], [0], [0], [1], [0, 0, 1, 1], [], []>} : vector<2x128xf32>, vector<128x16xf32>, vector<2x16xf32> -> vector<2x16xf32>
    %234 = vector.broadcast %2 : vector<1x16xf32> to vector<2x16xf32>
    %235 = arith.addf %233, %234 : vector<2x16xf32>
    %cst_169 = arith.constant 0.000000e+00 : f32
    %236 = vector.broadcast %cst_169 : f32 to vector<2x16xf32>
    %237 = arith.maximumf %235, %236 : vector<2x16xf32>
    %c13_170 = arith.constant 13 : index
    %c0_171 = arith.constant 0 : index
    %c0_172 = arith.constant 0 : index
    %238 = vector.load %arg6[%c13_170, %c0_171, %c0_172] : memref<16x16x32xf32, #tpu.memory_space<vmem>>, vector<1x16x32xf32>
    %239 = vector.shape_cast %238 : vector<1x16x32xf32> to vector<16x32xf32>
    %cst_173 = arith.constant dense<0.000000e+00> : vector<2x32xf32>
    %240 = tpu.matmul %237, %239, %cst_173 {dimension_numbers = #tpu.dot_dimension_numbers<[1], [0], [0], [1], [0, 0, 1, 1], [], []>} : vector<2x16xf32>, vector<16x32xf32>, vector<2x32xf32> -> vector<2x32xf32>
    %241 = arith.addf %224, %240 : vector<2x32xf32>
    %c14 = arith.constant 14 : index
    %c0_174 = arith.constant 0 : index
    %c0_175 = arith.constant 0 : index
    %242 = vector.load %arg0[%c14, %c0_174, %c0_175] : memref<16x2x768xf32, #tpu.memory_space<vmem>>, vector<1x2x768xf32>
    %243 = vector.shape_cast %242 : vector<1x2x768xf32> to vector<2x768xf32>
    %c0_176 = arith.constant 0 : index
    %c0_177 = arith.constant 0 : index
    %244 = vector.load %arg2[%c0_176, %c0_177] : memref<768x128xf32, #tpu.memory_space<vmem>>, vector<768x128xf32>
    %cst_178 = arith.constant dense<0.000000e+00> : vector<2x128xf32>
    %245 = tpu.matmul %243, %244, %cst_178 {dimension_numbers = #tpu.dot_dimension_numbers<[1], [0], [0], [1], [0, 0, 1, 1], [], []>} : vector<2x768xf32>, vector<768x128xf32>, vector<2x128xf32> -> vector<2x128xf32>
    %246 = vector.broadcast %0 : vector<1x128xf32> to vector<2x128xf32>
    %247 = arith.addf %245, %246 : vector<2x128xf32>
    %cst_179 = arith.constant 0.000000e+00 : f32
    %248 = vector.broadcast %cst_179 : f32 to vector<2x128xf32>
    %249 = arith.maximumf %247, %248 : vector<2x128xf32>
    %cst_180 = arith.constant dense<0.000000e+00> : vector<2x16xf32>
    %250 = tpu.matmul %249, %1, %cst_180 {dimension_numbers = #tpu.dot_dimension_numbers<[1], [0], [0], [1], [0, 0, 1, 1], [], []>} : vector<2x128xf32>, vector<128x16xf32>, vector<2x16xf32> -> vector<2x16xf32>
    %251 = vector.broadcast %2 : vector<1x16xf32> to vector<2x16xf32>
    %252 = arith.addf %250, %251 : vector<2x16xf32>
    %cst_181 = arith.constant 0.000000e+00 : f32
    %253 = vector.broadcast %cst_181 : f32 to vector<2x16xf32>
    %254 = arith.maximumf %252, %253 : vector<2x16xf32>
    %c14_182 = arith.constant 14 : index
    %c0_183 = arith.constant 0 : index
    %c0_184 = arith.constant 0 : index
    %255 = vector.load %arg6[%c14_182, %c0_183, %c0_184] : memref<16x16x32xf32, #tpu.memory_space<vmem>>, vector<1x16x32xf32>
    %256 = vector.shape_cast %255 : vector<1x16x32xf32> to vector<16x32xf32>
    %cst_185 = arith.constant dense<0.000000e+00> : vector<2x32xf32>
    %257 = tpu.matmul %254, %256, %cst_185 {dimension_numbers = #tpu.dot_dimension_numbers<[1], [0], [0], [1], [0, 0, 1, 1], [], []>} : vector<2x16xf32>, vector<16x32xf32>, vector<2x32xf32> -> vector<2x32xf32>
    %258 = arith.addf %241, %257 : vector<2x32xf32>
    %c15 = arith.constant 15 : index
    %c0_186 = arith.constant 0 : index
    %c0_187 = arith.constant 0 : index
    %259 = vector.load %arg0[%c15, %c0_186, %c0_187] : memref<16x2x768xf32, #tpu.memory_space<vmem>>, vector<1x2x768xf32>
    %260 = vector.shape_cast %259 : vector<1x2x768xf32> to vector<2x768xf32>
    %c0_188 = arith.constant 0 : index
    %c0_189 = arith.constant 0 : index
    %261 = vector.load %arg2[%c0_188, %c0_189] : memref<768x128xf32, #tpu.memory_space<vmem>>, vector<768x128xf32>
    %cst_190 = arith.constant dense<0.000000e+00> : vector<2x128xf32>
    %262 = tpu.matmul %260, %261, %cst_190 {dimension_numbers = #tpu.dot_dimension_numbers<[1], [0], [0], [1], [0, 0, 1, 1], [], []>} : vector<2x768xf32>, vector<768x128xf32>, vector<2x128xf32> -> vector<2x128xf32>
    %263 = vector.broadcast %0 : vector<1x128xf32> to vector<2x128xf32>
    %264 = arith.addf %262, %263 : vector<2x128xf32>
    %cst_191 = arith.constant 0.000000e+00 : f32
    %265 = vector.broadcast %cst_191 : f32 to vector<2x128xf32>
    %266 = arith.maximumf %264, %265 : vector<2x128xf32>
    %cst_192 = arith.constant dense<0.000000e+00> : vector<2x16xf32>
    %267 = tpu.matmul %266, %1, %cst_192 {dimension_numbers = #tpu.dot_dimension_numbers<[1], [0], [0], [1], [0, 0, 1, 1], [], []>} : vector<2x128xf32>, vector<128x16xf32>, vector<2x16xf32> -> vector<2x16xf32>
    %268 = vector.broadcast %2 : vector<1x16xf32> to vector<2x16xf32>
    %269 = arith.addf %267, %268 : vector<2x16xf32>
    %cst_193 = arith.constant 0.000000e+00 : f32
    %270 = vector.broadcast %cst_193 : f32 to vector<2x16xf32>
    %271 = arith.maximumf %269, %270 : vector<2x16xf32>
    %c15_194 = arith.constant 15 : index
    %c0_195 = arith.constant 0 : index
    %c0_196 = arith.constant 0 : index
    %272 = vector.load %arg6[%c15_194, %c0_195, %c0_196] : memref<16x16x32xf32, #tpu.memory_space<vmem>>, vector<1x16x32xf32>
    %273 = vector.shape_cast %272 : vector<1x16x32xf32> to vector<16x32xf32>
    %cst_197 = arith.constant dense<0.000000e+00> : vector<2x32xf32>
    %274 = tpu.matmul %271, %273, %cst_197 {dimension_numbers = #tpu.dot_dimension_numbers<[1], [0], [0], [1], [0, 0, 1, 1], [], []>} : vector<2x16xf32>, vector<16x32xf32>, vector<2x32xf32> -> vector<2x32xf32>
    %275 = arith.addf %258, %274 : vector<2x32xf32>
    %c0_198 = arith.constant 0 : index
    %c0_199 = arith.constant 0 : index
    %276 = vector.load %arg7[%c0_198, %c0_199] : memref<1x32xf32, #tpu.memory_space<vmem>>, vector<1x32xf32>
    %277 = vector.broadcast %276 : vector<1x32xf32> to vector<2x32xf32>
    %278 = arith.addf %275, %277 : vector<2x32xf32>
    %cst_200 = arith.constant 0.000000e+00 : f32
    %279 = vector.broadcast %cst_200 : f32 to vector<2x32xf32>
    %280 = arith.maximumf %278, %279 : vector<2x32xf32>
    %c0_201 = arith.constant 0 : index
    %c0_202 = arith.constant 0 : index
    %281 = vector.load %arg8[%c0_201, %c0_202] : memref<32x32xf32, #tpu.memory_space<vmem>>, vector<32x32xf32>
    %cst_203 = arith.constant dense<0.000000e+00> : vector<2x32xf32>
    %282 = tpu.matmul %280, %281, %cst_203 {dimension_numbers = #tpu.dot_dimension_numbers<[1], [0], [0], [1], [0, 0, 1, 1], [], []>} : vector<2x32xf32>, vector<32x32xf32>, vector<2x32xf32> -> vector<2x32xf32>
    %c0_204 = arith.constant 0 : index
    %c0_205 = arith.constant 0 : index
    %283 = vector.load %arg9[%c0_204, %c0_205] : memref<1x32xf32, #tpu.memory_space<vmem>>, vector<1x32xf32>
    %284 = vector.broadcast %283 : vector<1x32xf32> to vector<2x32xf32>
    %285 = arith.addf %282, %284 : vector<2x32xf32>
    %cst_206 = arith.constant 0.000000e+00 : f32
    %286 = vector.broadcast %cst_206 : f32 to vector<2x32xf32>
    %287 = arith.maximumf %285, %286 : vector<2x32xf32>
    %288 = arith.cmpf one, %287, %287 : vector<2x32xf32>
    %cst_207 = arith.constant 0.000000e+00 : f32
    %289 = vector.broadcast %cst_207 : f32 to vector<2x32xf32>
    %290 = arith.select %288, %289, %287 : vector<2x32xi1>, vector<2x32xf32>
    %cst_208 = arith.constant 0x7F800000 : f32
    %291 = vector.broadcast %cst_208 : f32 to vector<2x32xf32>
    %292 = arith.cmpf oeq, %290, %291 : vector<2x32xf32>
    %cst_209 = arith.constant 1.000000e+00 : f32
    %293 = vector.broadcast %cst_209 : f32 to vector<2x32xf32>
    %294 = arith.select %292, %293, %290 : vector<2x32xi1>, vector<2x32xf32>
    %cst_210 = arith.constant 0xFF800000 : f32
    %295 = vector.broadcast %cst_210 : f32 to vector<2x32xf32>
    %296 = arith.cmpf oeq, %294, %295 : vector<2x32xf32>
    %cst_211 = arith.constant -1.000000e+00 : f32
    %297 = vector.broadcast %cst_211 : f32 to vector<2x32xf32>
    %298 = arith.select %296, %297, %294 : vector<2x32xi1>, vector<2x32xf32>
    %c0_212 = arith.constant 0 : index
    %c0_213 = arith.constant 0 : index
    %299 = vector.load %arg1[%c0_212, %c0_213] : memref<2x32xf32, #tpu.memory_space<vmem>>, vector<2x32xf32>
    %c0_214 = arith.constant 0 : index
    %c0_215 = arith.constant 0 : index
    %c0_216 = arith.constant 0 : index
    %300 = vector.load %arg10[%c0_214, %c0_215, %c0_216] : memref<3x32x32xf32, #tpu.memory_space<vmem>>, vector<1x32x32xf32>
    %301 = vector.shape_cast %300 : vector<1x32x32xf32> to vector<32x32xf32>
    %cst_217 = arith.constant dense<0.000000e+00> : vector<2x32xf32>
    %302 = tpu.matmul %298, %301, %cst_217 {dimension_numbers = #tpu.dot_dimension_numbers<[1], [0], [0], [1], [0, 0, 1, 1], [], []>} : vector<2x32xf32>, vector<32x32xf32>, vector<2x32xf32> -> vector<2x32xf32>
    %c0_218 = arith.constant 0 : index
    %c0_219 = arith.constant 0 : index
    %c0_220 = arith.constant 0 : index
    %303 = vector.load %arg11[%c0_218, %c0_219, %c0_220] : memref<3x32x32xf32, #tpu.memory_space<vmem>>, vector<1x32x32xf32>
    %304 = vector.shape_cast %303 : vector<1x32x32xf32> to vector<32x32xf32>
    %cst_221 = arith.constant dense<0.000000e+00> : vector<2x32xf32>
    %305 = tpu.matmul %299, %304, %cst_221 {dimension_numbers = #tpu.dot_dimension_numbers<[1], [0], [0], [1], [0, 0, 1, 1], [], []>} : vector<2x32xf32>, vector<32x32xf32>, vector<2x32xf32> -> vector<2x32xf32>
    %306 = arith.addf %302, %305 : vector<2x32xf32>
    %c0_222 = arith.constant 0 : index
    %c0_223 = arith.constant 0 : index
    %c0_224 = arith.constant 0 : index
    %307 = vector.load %arg13[%c0_222, %c0_223, %c0_224] : memref<3x1x32xf32, #tpu.memory_space<vmem>>, vector<1x1x32xf32>
    %308 = vector.shape_cast %307 : vector<1x1x32xf32> to vector<1x32xf32>
    %309 = vector.broadcast %308 : vector<1x32xf32> to vector<2x32xf32>
    %310 = arith.addf %306, %309 : vector<2x32xf32>
    %c1_225 = arith.constant 1 : index
    %c0_226 = arith.constant 0 : index
    %c0_227 = arith.constant 0 : index
    %311 = vector.load %arg10[%c1_225, %c0_226, %c0_227] : memref<3x32x32xf32, #tpu.memory_space<vmem>>, vector<1x32x32xf32>
    %312 = vector.shape_cast %311 : vector<1x32x32xf32> to vector<32x32xf32>
    %cst_228 = arith.constant dense<0.000000e+00> : vector<2x32xf32>
    %313 = tpu.matmul %298, %312, %cst_228 {dimension_numbers = #tpu.dot_dimension_numbers<[1], [0], [0], [1], [0, 0, 1, 1], [], []>} : vector<2x32xf32>, vector<32x32xf32>, vector<2x32xf32> -> vector<2x32xf32>
    %c1_229 = arith.constant 1 : index
    %c0_230 = arith.constant 0 : index
    %c0_231 = arith.constant 0 : index
    %314 = vector.load %arg11[%c1_229, %c0_230, %c0_231] : memref<3x32x32xf32, #tpu.memory_space<vmem>>, vector<1x32x32xf32>
    %315 = vector.shape_cast %314 : vector<1x32x32xf32> to vector<32x32xf32>
    %cst_232 = arith.constant dense<0.000000e+00> : vector<2x32xf32>
    %316 = tpu.matmul %299, %315, %cst_232 {dimension_numbers = #tpu.dot_dimension_numbers<[1], [0], [0], [1], [0, 0, 1, 1], [], []>} : vector<2x32xf32>, vector<32x32xf32>, vector<2x32xf32> -> vector<2x32xf32>
    %317 = arith.addf %313, %316 : vector<2x32xf32>
    %c1_233 = arith.constant 1 : index
    %c0_234 = arith.constant 0 : index
    %c0_235 = arith.constant 0 : index
    %318 = vector.load %arg13[%c1_233, %c0_234, %c0_235] : memref<3x1x32xf32, #tpu.memory_space<vmem>>, vector<1x1x32xf32>
    %319 = vector.shape_cast %318 : vector<1x1x32xf32> to vector<1x32xf32>
    %320 = vector.broadcast %319 : vector<1x32xf32> to vector<2x32xf32>
    %321 = arith.addf %317, %320 : vector<2x32xf32>
    %c2_236 = arith.constant 2 : index
    %c0_237 = arith.constant 0 : index
    %c0_238 = arith.constant 0 : index
    %322 = vector.load %arg10[%c2_236, %c0_237, %c0_238] : memref<3x32x32xf32, #tpu.memory_space<vmem>>, vector<1x32x32xf32>
    %323 = vector.shape_cast %322 : vector<1x32x32xf32> to vector<32x32xf32>
    %cst_239 = arith.constant dense<0.000000e+00> : vector<2x32xf32>
    %324 = tpu.matmul %298, %323, %cst_239 {dimension_numbers = #tpu.dot_dimension_numbers<[1], [0], [0], [1], [0, 0, 1, 1], [], []>} : vector<2x32xf32>, vector<32x32xf32>, vector<2x32xf32> -> vector<2x32xf32>
    %c2_240 = arith.constant 2 : index
    %c0_241 = arith.constant 0 : index
    %c0_242 = arith.constant 0 : index
    %325 = vector.load %arg11[%c2_240, %c0_241, %c0_242] : memref<3x32x32xf32, #tpu.memory_space<vmem>>, vector<1x32x32xf32>
    %326 = vector.shape_cast %325 : vector<1x32x32xf32> to vector<32x32xf32>
    %cst_243 = arith.constant dense<0.000000e+00> : vector<2x32xf32>
    %327 = tpu.matmul %299, %326, %cst_243 {dimension_numbers = #tpu.dot_dimension_numbers<[1], [0], [0], [1], [0, 0, 1, 1], [], []>} : vector<2x32xf32>, vector<32x32xf32>, vector<2x32xf32> -> vector<2x32xf32>
    %328 = arith.addf %324, %327 : vector<2x32xf32>
    %c2_244 = arith.constant 2 : index
    %c0_245 = arith.constant 0 : index
    %c0_246 = arith.constant 0 : index
    %329 = vector.load %arg13[%c2_244, %c0_245, %c0_246] : memref<3x1x32xf32, #tpu.memory_space<vmem>>, vector<1x1x32xf32>
    %330 = vector.shape_cast %329 : vector<1x1x32xf32> to vector<1x32xf32>
    %331 = vector.broadcast %330 : vector<1x32xf32> to vector<2x32xf32>
    %332 = arith.addf %328, %331 : vector<2x32xf32>
    %c0_247 = arith.constant 0 : index
    %c0_248 = arith.constant 0 : index
    %c0_249 = arith.constant 0 : index
    %333 = vector.load %arg12[%c0_247, %c0_248, %c0_249] : memref<3x32x32xf32, #tpu.memory_space<vmem>>, vector<1x32x32xf32>
    %334 = vector.shape_cast %333 : vector<1x32x32xf32> to vector<32x32xf32>
    %c1_250 = arith.constant 1 : index
    %c0_251 = arith.constant 0 : index
    %c0_252 = arith.constant 0 : index
    %335 = vector.load %arg12[%c1_250, %c0_251, %c0_252] : memref<3x32x32xf32, #tpu.memory_space<vmem>>, vector<1x32x32xf32>
    %336 = vector.shape_cast %335 : vector<1x32x32xf32> to vector<32x32xf32>
    %c2_253 = arith.constant 2 : index
    %c0_254 = arith.constant 0 : index
    %c0_255 = arith.constant 0 : index
    %337 = vector.load %arg12[%c2_253, %c0_254, %c0_255] : memref<3x32x32xf32, #tpu.memory_space<vmem>>, vector<1x32x32xf32>
    %338 = vector.shape_cast %337 : vector<1x32x32xf32> to vector<32x32xf32>
    %c0_256 = arith.constant 0 : index
    %c0_257 = arith.constant 0 : index
    %c0_258 = arith.constant 0 : index
    %339 = vector.load %arg14[%c0_256, %c0_257, %c0_258] : memref<3x1x32xf32, #tpu.memory_space<vmem>>, vector<1x1x32xf32>
    %340 = vector.shape_cast %339 : vector<1x1x32xf32> to vector<1x32xf32>
    %c1_259 = arith.constant 1 : index
    %c0_260 = arith.constant 0 : index
    %c0_261 = arith.constant 0 : index
    %341 = vector.load %arg14[%c1_259, %c0_260, %c0_261] : memref<3x1x32xf32, #tpu.memory_space<vmem>>, vector<1x1x32xf32>
    %342 = vector.shape_cast %341 : vector<1x1x32xf32> to vector<1x32xf32>
    %c2_262 = arith.constant 2 : index
    %c0_263 = arith.constant 0 : index
    %c0_264 = arith.constant 0 : index
    %343 = vector.load %arg14[%c2_262, %c0_263, %c0_264] : memref<3x1x32xf32, #tpu.memory_space<vmem>>, vector<1x1x32xf32>
    %344 = vector.shape_cast %343 : vector<1x1x32xf32> to vector<1x32xf32>
    %c0_265 = arith.constant 0 : index
    %c0_266 = arith.constant 0 : index
    %345 = vector.load %arg15[%c0_265, %c0_266] : memref<32x4xf32, #tpu.memory_space<vmem>>, vector<32x4xf32>
    %c0_267 = arith.constant 0 : index
    %c0_268 = arith.constant 0 : index
    %346 = vector.load %arg16[%c0_267, %c0_268] : memref<1x4xf32, #tpu.memory_space<vmem>>, vector<1x4xf32>
    %cst_269 = arith.constant 0.000000e+00 : f32
    %347 = vector.broadcast %cst_269 : f32 to vector<2x32xf32>
    %cst_270 = arith.constant dense<0.000000e+00> : vector<2x32xf32>
    %348 = tpu.matmul %347, %334, %cst_270 {dimension_numbers = #tpu.dot_dimension_numbers<[1], [0], [0], [1], [0, 0, 1, 1], [], []>} : vector<2x32xf32>, vector<32x32xf32>, vector<2x32xf32> -> vector<2x32xf32>
    %349 = arith.addf %310, %348 : vector<2x32xf32>
    %350 = vector.broadcast %340 : vector<1x32xf32> to vector<2x32xf32>
    %351 = arith.addf %349, %350 : vector<2x32xf32>
    %352 = arith.negf %351 : vector<2x32xf32>
    %353 = math.exp %352 : vector<2x32xf32>
    %cst_271 = arith.constant 1.000000e+00 : f32
    %354 = vector.broadcast %cst_271 : f32 to vector<2x32xf32>
    %355 = arith.addf %354, %353 : vector<2x32xf32>
    %356 = arith.divf %354, %355 : vector<2x32xf32>
    %cst_272 = arith.constant dense<0.000000e+00> : vector<2x32xf32>
    %357 = tpu.matmul %347, %336, %cst_272 {dimension_numbers = #tpu.dot_dimension_numbers<[1], [0], [0], [1], [0, 0, 1, 1], [], []>} : vector<2x32xf32>, vector<32x32xf32>, vector<2x32xf32> -> vector<2x32xf32>
    %358 = arith.addf %321, %357 : vector<2x32xf32>
    %359 = vector.broadcast %342 : vector<1x32xf32> to vector<2x32xf32>
    %360 = arith.addf %358, %359 : vector<2x32xf32>
    %361 = arith.negf %360 : vector<2x32xf32>
    %362 = math.exp %361 : vector<2x32xf32>
    %cst_273 = arith.constant 1.000000e+00 : f32
    %363 = vector.broadcast %cst_273 : f32 to vector<2x32xf32>
    %364 = arith.addf %363, %362 : vector<2x32xf32>
    %365 = arith.divf %363, %364 : vector<2x32xf32>
    %cst_274 = arith.constant dense<0.000000e+00> : vector<2x32xf32>
    %366 = tpu.matmul %347, %338, %cst_274 {dimension_numbers = #tpu.dot_dimension_numbers<[1], [0], [0], [1], [0, 0, 1, 1], [], []>} : vector<2x32xf32>, vector<32x32xf32>, vector<2x32xf32> -> vector<2x32xf32>
    %367 = vector.broadcast %344 : vector<1x32xf32> to vector<2x32xf32>
    %368 = arith.addf %366, %367 : vector<2x32xf32>
    %369 = arith.mulf %356, %368 : vector<2x32xf32>
    %370 = arith.addf %332, %369 : vector<2x32xf32>
    %371 = math.tanh %370 : vector<2x32xf32>
    %cst_275 = arith.constant 1.000000e+00 : f32
    %372 = vector.broadcast %cst_275 : f32 to vector<2x32xf32>
    %373 = arith.subf %372, %365 : vector<2x32xf32>
    %374 = arith.mulf %373, %371 : vector<2x32xf32>
    %375 = arith.mulf %365, %347 : vector<2x32xf32>
    %376 = arith.addf %374, %375 : vector<2x32xf32>
    %cst_276 = arith.constant dense<0.000000e+00> : vector<2x4xf32>
    %377 = tpu.matmul %376, %345, %cst_276 {dimension_numbers = #tpu.dot_dimension_numbers<[1], [0], [0], [1], [0, 0, 1, 1], [], []>} : vector<2x32xf32>, vector<32x4xf32>, vector<2x4xf32> -> vector<2x4xf32>
    %378 = vector.broadcast %346 : vector<1x4xf32> to vector<2x4xf32>
    %379 = arith.addf %377, %378 : vector<2x4xf32>
    %c0_277 = arith.constant 0 : index
    %c0_278 = arith.constant 0 : index
    %c0_279 = arith.constant 0 : index
    %380 = vector.load %arg17[%c0_277, %c0_278, %c0_279] : memref<8x2x4xf32, #tpu.memory_space<vmem>>, vector<1x2x4xf32>
    %381 = vector.shape_cast %380 : vector<1x2x4xf32> to vector<2x4xf32>
    %382 = vector.shape_cast %379 : vector<2x4xf32> to vector<1x2x4xf32>
    tpu.vector_store %arg17[%c0_277, %c0_278, %c0_279], %382 {strides = array<i32>} : memref<8x2x4xf32, #tpu.memory_space<vmem>>, vector<1x2x4xf32>,
    %cst_280 = arith.constant dense<0.000000e+00> : vector<2x32xf32>
    %383 = tpu.matmul %376, %334, %cst_280 {dimension_numbers = #tpu.dot_dimension_numbers<[1], [0], [0], [1], [0, 0, 1, 1], [], []>} : vector<2x32xf32>, vector<32x32xf32>, vector<2x32xf32> -> vector<2x32xf32>
    %384 = arith.addf %310, %383 : vector<2x32xf32>
    %385 = vector.broadcast %340 : vector<1x32xf32> to vector<2x32xf32>
    %386 = arith.addf %384, %385 : vector<2x32xf32>
    %387 = arith.negf %386 : vector<2x32xf32>
    %388 = math.exp %387 : vector<2x32xf32>
    %cst_281 = arith.constant 1.000000e+00 : f32
    %389 = vector.broadcast %cst_281 : f32 to vector<2x32xf32>
    %390 = arith.addf %389, %388 : vector<2x32xf32>
    %391 = arith.divf %389, %390 : vector<2x32xf32>
    %cst_282 = arith.constant dense<0.000000e+00> : vector<2x32xf32>
    %392 = tpu.matmul %376, %336, %cst_282 {dimension_numbers = #tpu.dot_dimension_numbers<[1], [0], [0], [1], [0, 0, 1, 1], [], []>} : vector<2x32xf32>, vector<32x32xf32>, vector<2x32xf32> -> vector<2x32xf32>
    %393 = arith.addf %321, %392 : vector<2x32xf32>
    %394 = vector.broadcast %342 : vector<1x32xf32> to vector<2x32xf32>
    %395 = arith.addf %393, %394 : vector<2x32xf32>
    %396 = arith.negf %395 : vector<2x32xf32>
    %397 = math.exp %396 : vector<2x32xf32>
    %cst_283 = arith.constant 1.000000e+00 : f32
    %398 = vector.broadcast %cst_283 : f32 to vector<2x32xf32>
    %399 = arith.addf %398, %397 : vector<2x32xf32>
    %400 = arith.divf %398, %399 : vector<2x32xf32>
    %cst_284 = arith.constant dense<0.000000e+00> : vector<2x32xf32>
    %401 = tpu.matmul %376, %338, %cst_284 {dimension_numbers = #tpu.dot_dimension_numbers<[1], [0], [0], [1], [0, 0, 1, 1], [], []>} : vector<2x32xf32>, vector<32x32xf32>, vector<2x32xf32> -> vector<2x32xf32>
    %402 = vector.broadcast %344 : vector<1x32xf32> to vector<2x32xf32>
    %403 = arith.addf %401, %402 : vector<2x32xf32>
    %404 = arith.mulf %391, %403 : vector<2x32xf32>
    %405 = arith.addf %332, %404 : vector<2x32xf32>
    %406 = math.tanh %405 : vector<2x32xf32>
    %cst_285 = arith.constant 1.000000e+00 : f32
    %407 = vector.broadcast %cst_285 : f32 to vector<2x32xf32>
    %408 = arith.subf %407, %400 : vector<2x32xf32>
    %409 = arith.mulf %408, %406 : vector<2x32xf32>
    %410 = arith.mulf %400, %376 : vector<2x32xf32>
    %411 = arith.addf %409, %410 : vector<2x32xf32>
    %cst_286 = arith.constant dense<0.000000e+00> : vector<2x4xf32>
    %412 = tpu.matmul %411, %345, %cst_286 {dimension_numbers = #tpu.dot_dimension_numbers<[1], [0], [0], [1], [0, 0, 1, 1], [], []>} : vector<2x32xf32>, vector<32x4xf32>, vector<2x4xf32> -> vector<2x4xf32>
    %413 = vector.broadcast %346 : vector<1x4xf32> to vector<2x4xf32>
    %414 = arith.addf %412, %413 : vector<2x4xf32>
    %c1_287 = arith.constant 1 : index
    %c0_288 = arith.constant 0 : index
    %c0_289 = arith.constant 0 : index
    %415 = vector.load %arg17[%c1_287, %c0_288, %c0_289] : memref<8x2x4xf32, #tpu.memory_space<vmem>>, vector<1x2x4xf32>
    %416 = vector.shape_cast %415 : vector<1x2x4xf32> to vector<2x4xf32>
    %417 = vector.shape_cast %414 : vector<2x4xf32> to vector<1x2x4xf32>
    tpu.vector_store %arg17[%c1_287, %c0_288, %c0_289], %417 {strides = array<i32>} : memref<8x2x4xf32, #tpu.memory_space<vmem>>, vector<1x2x4xf32>,
    %cst_290 = arith.constant dense<0.000000e+00> : vector<2x32xf32>
    %418 = tpu.matmul %411, %334, %cst_290 {dimension_numbers = #tpu.dot_dimension_numbers<[1], [0], [0], [1], [0, 0, 1, 1], [], []>} : vector<2x32xf32>, vector<32x32xf32>, vector<2x32xf32> -> vector<2x32xf32>
    %419 = arith.addf %310, %418 : vector<2x32xf32>
    %420 = vector.broadcast %340 : vector<1x32xf32> to vector<2x32xf32>
    %421 = arith.addf %419, %420 : vector<2x32xf32>
    %422 = arith.negf %421 : vector<2x32xf32>
    %423 = math.exp %422 : vector<2x32xf32>
    %cst_291 = arith.constant 1.000000e+00 : f32
    %424 = vector.broadcast %cst_291 : f32 to vector<2x32xf32>
    %425 = arith.addf %424, %423 : vector<2x32xf32>
    %426 = arith.divf %424, %425 : vector<2x32xf32>
    %cst_292 = arith.constant dense<0.000000e+00> : vector<2x32xf32>
    %427 = tpu.matmul %411, %336, %cst_292 {dimension_numbers = #tpu.dot_dimension_numbers<[1], [0], [0], [1], [0, 0, 1, 1], [], []>} : vector<2x32xf32>, vector<32x32xf32>, vector<2x32xf32> -> vector<2x32xf32>
    %428 = arith.addf %321, %427 : vector<2x32xf32>
    %429 = vector.broadcast %342 : vector<1x32xf32> to vector<2x32xf32>
    %430 = arith.addf %428, %429 : vector<2x32xf32>
    %431 = arith.negf %430 : vector<2x32xf32>
    %432 = math.exp %431 : vector<2x32xf32>
    %cst_293 = arith.constant 1.000000e+00 : f32
    %433 = vector.broadcast %cst_293 : f32 to vector<2x32xf32>
    %434 = arith.addf %433, %432 : vector<2x32xf32>
    %435 = arith.divf %433, %434 : vector<2x32xf32>
    %cst_294 = arith.constant dense<0.000000e+00> : vector<2x32xf32>
    %436 = tpu.matmul %411, %338, %cst_294 {dimension_numbers = #tpu.dot_dimension_numbers<[1], [0], [0], [1], [0, 0, 1, 1], [], []>} : vector<2x32xf32>, vector<32x32xf32>, vector<2x32xf32> -> vector<2x32xf32>
    %437 = vector.broadcast %344 : vector<1x32xf32> to vector<2x32xf32>
    %438 = arith.addf %436, %437 : vector<2x32xf32>
    %439 = arith.mulf %426, %438 : vector<2x32xf32>
    %440 = arith.addf %332, %439 : vector<2x32xf32>
    %441 = math.tanh %440 : vector<2x32xf32>
    %cst_295 = arith.constant 1.000000e+00 : f32
    %442 = vector.broadcast %cst_295 : f32 to vector<2x32xf32>
    %443 = arith.subf %442, %435 : vector<2x32xf32>
    %444 = arith.mulf %443, %441 : vector<2x32xf32>
    %445 = arith.mulf %435, %411 : vector<2x32xf32>
    %446 = arith.addf %444, %445 : vector<2x32xf32>
    %cst_296 = arith.constant dense<0.000000e+00> : vector<2x4xf32>
    %447 = tpu.matmul %446, %345, %cst_296 {dimension_numbers = #tpu.dot_dimension_numbers<[1], [0], [0], [1], [0, 0, 1, 1], [], []>} : vector<2x32xf32>, vector<32x4xf32>, vector<2x4xf32> -> vector<2x4xf32>
    %448 = vector.broadcast %346 : vector<1x4xf32> to vector<2x4xf32>
    %449 = arith.addf %447, %448 : vector<2x4xf32>
    %c2_297 = arith.constant 2 : index
    %c0_298 = arith.constant 0 : index
    %c0_299 = arith.constant 0 : index
    %450 = vector.load %arg17[%c2_297, %c0_298, %c0_299] : memref<8x2x4xf32, #tpu.memory_space<vmem>>, vector<1x2x4xf32>
    %451 = vector.shape_cast %450 : vector<1x2x4xf32> to vector<2x4xf32>
    %452 = vector.shape_cast %449 : vector<2x4xf32> to vector<1x2x4xf32>
    tpu.vector_store %arg17[%c2_297, %c0_298, %c0_299], %452 {strides = array<i32>} : memref<8x2x4xf32, #tpu.memory_space<vmem>>, vector<1x2x4xf32>,
    %cst_300 = arith.constant dense<0.000000e+00> : vector<2x32xf32>
    %453 = tpu.matmul %446, %334, %cst_300 {dimension_numbers = #tpu.dot_dimension_numbers<[1], [0], [0], [1], [0, 0, 1, 1], [], []>} : vector<2x32xf32>, vector<32x32xf32>, vector<2x32xf32> -> vector<2x32xf32>
    %454 = arith.addf %310, %453 : vector<2x32xf32>
    %455 = vector.broadcast %340 : vector<1x32xf32> to vector<2x32xf32>
    %456 = arith.addf %454, %455 : vector<2x32xf32>
    %457 = arith.negf %456 : vector<2x32xf32>
    %458 = math.exp %457 : vector<2x32xf32>
    %cst_301 = arith.constant 1.000000e+00 : f32
    %459 = vector.broadcast %cst_301 : f32 to vector<2x32xf32>
    %460 = arith.addf %459, %458 : vector<2x32xf32>
    %461 = arith.divf %459, %460 : vector<2x32xf32>
    %cst_302 = arith.constant dense<0.000000e+00> : vector<2x32xf32>
    %462 = tpu.matmul %446, %336, %cst_302 {dimension_numbers = #tpu.dot_dimension_numbers<[1], [0], [0], [1], [0, 0, 1, 1], [], []>} : vector<2x32xf32>, vector<32x32xf32>, vector<2x32xf32> -> vector<2x32xf32>
    %463 = arith.addf %321, %462 : vector<2x32xf32>
    %464 = vector.broadcast %342 : vector<1x32xf32> to vector<2x32xf32>
    %465 = arith.addf %463, %464 : vector<2x32xf32>
    %466 = arith.negf %465 : vector<2x32xf32>
    %467 = math.exp %466 : vector<2x32xf32>
    %cst_303 = arith.constant 1.000000e+00 : f32
    %468 = vector.broadcast %cst_303 : f32 to vector<2x32xf32>
    %469 = arith.addf %468, %467 : vector<2x32xf32>
    %470 = arith.divf %468, %469 : vector<2x32xf32>
    %cst_304 = arith.constant dense<0.000000e+00> : vector<2x32xf32>
    %471 = tpu.matmul %446, %338, %cst_304 {dimension_numbers = #tpu.dot_dimension_numbers<[1], [0], [0], [1], [0, 0, 1, 1], [], []>} : vector<2x32xf32>, vector<32x32xf32>, vector<2x32xf32> -> vector<2x32xf32>
    %472 = vector.broadcast %344 : vector<1x32xf32> to vector<2x32xf32>
    %473 = arith.addf %471, %472 : vector<2x32xf32>
    %474 = arith.mulf %461, %473 : vector<2x32xf32>
    %475 = arith.addf %332, %474 : vector<2x32xf32>
    %476 = math.tanh %475 : vector<2x32xf32>
    %cst_305 = arith.constant 1.000000e+00 : f32
    %477 = vector.broadcast %cst_305 : f32 to vector<2x32xf32>
    %478 = arith.subf %477, %470 : vector<2x32xf32>
    %479 = arith.mulf %478, %476 : vector<2x32xf32>
    %480 = arith.mulf %470, %446 : vector<2x32xf32>
    %481 = arith.addf %479, %480 : vector<2x32xf32>
    %cst_306 = arith.constant dense<0.000000e+00> : vector<2x4xf32>
    %482 = tpu.matmul %481, %345, %cst_306 {dimension_numbers = #tpu.dot_dimension_numbers<[1], [0], [0], [1], [0, 0, 1, 1], [], []>} : vector<2x32xf32>, vector<32x4xf32>, vector<2x4xf32> -> vector<2x4xf32>
    %483 = vector.broadcast %346 : vector<1x4xf32> to vector<2x4xf32>
    %484 = arith.addf %482, %483 : vector<2x4xf32>
    %c3_307 = arith.constant 3 : index
    %c0_308 = arith.constant 0 : index
    %c0_309 = arith.constant 0 : index
    %485 = vector.load %arg17[%c3_307, %c0_308, %c0_309] : memref<8x2x4xf32, #tpu.memory_space<vmem>>, vector<1x2x4xf32>
    %486 = vector.shape_cast %485 : vector<1x2x4xf32> to vector<2x4xf32>
    %487 = vector.shape_cast %484 : vector<2x4xf32> to vector<1x2x4xf32>
    tpu.vector_store %arg17[%c3_307, %c0_308, %c0_309], %487 {strides = array<i32>} : memref<8x2x4xf32, #tpu.memory_space<vmem>>, vector<1x2x4xf32>,
    %cst_310 = arith.constant dense<0.000000e+00> : vector<2x32xf32>
    %488 = tpu.matmul %481, %334, %cst_310 {dimension_numbers = #tpu.dot_dimension_numbers<[1], [0], [0], [1], [0, 0, 1, 1], [], []>} : vector<2x32xf32>, vector<32x32xf32>, vector<2x32xf32> -> vector<2x32xf32>
    %489 = arith.addf %310, %488 : vector<2x32xf32>
    %490 = vector.broadcast %340 : vector<1x32xf32> to vector<2x32xf32>
    %491 = arith.addf %489, %490 : vector<2x32xf32>
    %492 = arith.negf %491 : vector<2x32xf32>
    %493 = math.exp %492 : vector<2x32xf32>
    %cst_311 = arith.constant 1.000000e+00 : f32
    %494 = vector.broadcast %cst_311 : f32 to vector<2x32xf32>
    %495 = arith.addf %494, %493 : vector<2x32xf32>
    %496 = arith.divf %494, %495 : vector<2x32xf32>
    %cst_312 = arith.constant dense<0.000000e+00> : vector<2x32xf32>
    %497 = tpu.matmul %481, %336, %cst_312 {dimension_numbers = #tpu.dot_dimension_numbers<[1], [0], [0], [1], [0, 0, 1, 1], [], []>} : vector<2x32xf32>, vector<32x32xf32>, vector<2x32xf32> -> vector<2x32xf32>
    %498 = arith.addf %321, %497 : vector<2x32xf32>
    %499 = vector.broadcast %342 : vector<1x32xf32> to vector<2x32xf32>
    %500 = arith.addf %498, %499 : vector<2x32xf32>
    %501 = arith.negf %500 : vector<2x32xf32>
    %502 = math.exp %501 : vector<2x32xf32>
    %cst_313 = arith.constant 1.000000e+00 : f32
    %503 = vector.broadcast %cst_313 : f32 to vector<2x32xf32>
    %504 = arith.addf %503, %502 : vector<2x32xf32>
    %505 = arith.divf %503, %504 : vector<2x32xf32>
    %cst_314 = arith.constant dense<0.000000e+00> : vector<2x32xf32>
    %506 = tpu.matmul %481, %338, %cst_314 {dimension_numbers = #tpu.dot_dimension_numbers<[1], [0], [0], [1], [0, 0, 1, 1], [], []>} : vector<2x32xf32>, vector<32x32xf32>, vector<2x32xf32> -> vector<2x32xf32>
    %507 = vector.broadcast %344 : vector<1x32xf32> to vector<2x32xf32>
    %508 = arith.addf %506, %507 : vector<2x32xf32>
    %509 = arith.mulf %496, %508 : vector<2x32xf32>
    %510 = arith.addf %332, %509 : vector<2x32xf32>
    %511 = math.tanh %510 : vector<2x32xf32>
    %cst_315 = arith.constant 1.000000e+00 : f32
    %512 = vector.broadcast %cst_315 : f32 to vector<2x32xf32>
    %513 = arith.subf %512, %505 : vector<2x32xf32>
    %514 = arith.mulf %513, %511 : vector<2x32xf32>
    %515 = arith.mulf %505, %481 : vector<2x32xf32>
    %516 = arith.addf %514, %515 : vector<2x32xf32>
    %cst_316 = arith.constant dense<0.000000e+00> : vector<2x4xf32>
    %517 = tpu.matmul %516, %345, %cst_316 {dimension_numbers = #tpu.dot_dimension_numbers<[1], [0], [0], [1], [0, 0, 1, 1], [], []>} : vector<2x32xf32>, vector<32x4xf32>, vector<2x4xf32> -> vector<2x4xf32>
    %518 = vector.broadcast %346 : vector<1x4xf32> to vector<2x4xf32>
    %519 = arith.addf %517, %518 : vector<2x4xf32>
    %c4_317 = arith.constant 4 : index
    %c0_318 = arith.constant 0 : index
    %c0_319 = arith.constant 0 : index
    %520 = vector.load %arg17[%c4_317, %c0_318, %c0_319] : memref<8x2x4xf32, #tpu.memory_space<vmem>>, vector<1x2x4xf32>
    %521 = vector.shape_cast %520 : vector<1x2x4xf32> to vector<2x4xf32>
    %522 = vector.shape_cast %519 : vector<2x4xf32> to vector<1x2x4xf32>
    tpu.vector_store %arg17[%c4_317, %c0_318, %c0_319], %522 {strides = array<i32>} : memref<8x2x4xf32, #tpu.memory_space<vmem>>, vector<1x2x4xf32>,
    %cst_320 = arith.constant dense<0.000000e+00> : vector<2x32xf32>
    %523 = tpu.matmul %516, %334, %cst_320 {dimension_numbers = #tpu.dot_dimension_numbers<[1], [0], [0], [1], [0, 0, 1, 1], [], []>} : vector<2x32xf32>, vector<32x32xf32>, vector<2x32xf32> -> vector<2x32xf32>
    %524 = arith.addf %310, %523 : vector<2x32xf32>
    %525 = vector.broadcast %340 : vector<1x32xf32> to vector<2x32xf32>
    %526 = arith.addf %524, %525 : vector<2x32xf32>
    %527 = arith.negf %526 : vector<2x32xf32>
    %528 = math.exp %527 : vector<2x32xf32>
    %cst_321 = arith.constant 1.000000e+00 : f32
    %529 = vector.broadcast %cst_321 : f32 to vector<2x32xf32>
    %530 = arith.addf %529, %528 : vector<2x32xf32>
    %531 = arith.divf %529, %530 : vector<2x32xf32>
    %cst_322 = arith.constant dense<0.000000e+00> : vector<2x32xf32>
    %532 = tpu.matmul %516, %336, %cst_322 {dimension_numbers = #tpu.dot_dimension_numbers<[1], [0], [0], [1], [0, 0, 1, 1], [], []>} : vector<2x32xf32>, vector<32x32xf32>, vector<2x32xf32> -> vector<2x32xf32>
    %533 = arith.addf %321, %532 : vector<2x32xf32>
    %534 = vector.broadcast %342 : vector<1x32xf32> to vector<2x32xf32>
    %535 = arith.addf %533, %534 : vector<2x32xf32>
    %536 = arith.negf %535 : vector<2x32xf32>
    %537 = math.exp %536 : vector<2x32xf32>
    %cst_323 = arith.constant 1.000000e+00 : f32
    %538 = vector.broadcast %cst_323 : f32 to vector<2x32xf32>
    %539 = arith.addf %538, %537 : vector<2x32xf32>
    %540 = arith.divf %538, %539 : vector<2x32xf32>
    %cst_324 = arith.constant dense<0.000000e+00> : vector<2x32xf32>
    %541 = tpu.matmul %516, %338, %cst_324 {dimension_numbers = #tpu.dot_dimension_numbers<[1], [0], [0], [1], [0, 0, 1, 1], [], []>} : vector<2x32xf32>, vector<32x32xf32>, vector<2x32xf32> -> vector<2x32xf32>
    %542 = vector.broadcast %344 : vector<1x32xf32> to vector<2x32xf32>
    %543 = arith.addf %541, %542 : vector<2x32xf32>
    %544 = arith.mulf %531, %543 : vector<2x32xf32>
    %545 = arith.addf %332, %544 : vector<2x32xf32>
    %546 = math.tanh %545 : vector<2x32xf32>
    %cst_325 = arith.constant 1.000000e+00 : f32
    %547 = vector.broadcast %cst_325 : f32 to vector<2x32xf32>
    %548 = arith.subf %547, %540 : vector<2x32xf32>
    %549 = arith.mulf %548, %546 : vector<2x32xf32>
    %550 = arith.mulf %540, %516 : vector<2x32xf32>
    %551 = arith.addf %549, %550 : vector<2x32xf32>
    %cst_326 = arith.constant dense<0.000000e+00> : vector<2x4xf32>
    %552 = tpu.matmul %551, %345, %cst_326 {dimension_numbers = #tpu.dot_dimension_numbers<[1], [0], [0], [1], [0, 0, 1, 1], [], []>} : vector<2x32xf32>, vector<32x4xf32>, vector<2x4xf32> -> vector<2x4xf32>
    %553 = vector.broadcast %346 : vector<1x4xf32> to vector<2x4xf32>
    %554 = arith.addf %552, %553 : vector<2x4xf32>
    %c5_327 = arith.constant 5 : index
    %c0_328 = arith.constant 0 : index
    %c0_329 = arith.constant 0 : index
    %555 = vector.load %arg17[%c5_327, %c0_328, %c0_329] : memref<8x2x4xf32, #tpu.memory_space<vmem>>, vector<1x2x4xf32>
    %556 = vector.shape_cast %555 : vector<1x2x4xf32> to vector<2x4xf32>
    %557 = vector.shape_cast %554 : vector<2x4xf32> to vector<1x2x4xf32>
    tpu.vector_store %arg17[%c5_327, %c0_328, %c0_329], %557 {strides = array<i32>} : memref<8x2x4xf32, #tpu.memory_space<vmem>>, vector<1x2x4xf32>,
    %cst_330 = arith.constant dense<0.000000e+00> : vector<2x32xf32>
    %558 = tpu.matmul %551, %334, %cst_330 {dimension_numbers = #tpu.dot_dimension_numbers<[1], [0], [0], [1], [0, 0, 1, 1], [], []>} : vector<2x32xf32>, vector<32x32xf32>, vector<2x32xf32> -> vector<2x32xf32>
    %559 = arith.addf %310, %558 : vector<2x32xf32>
    %560 = vector.broadcast %340 : vector<1x32xf32> to vector<2x32xf32>
    %561 = arith.addf %559, %560 : vector<2x32xf32>
    %562 = arith.negf %561 : vector<2x32xf32>
    %563 = math.exp %562 : vector<2x32xf32>
    %cst_331 = arith.constant 1.000000e+00 : f32
    %564 = vector.broadcast %cst_331 : f32 to vector<2x32xf32>
    %565 = arith.addf %564, %563 : vector<2x32xf32>
    %566 = arith.divf %564, %565 : vector<2x32xf32>
    %cst_332 = arith.constant dense<0.000000e+00> : vector<2x32xf32>
    %567 = tpu.matmul %551, %336, %cst_332 {dimension_numbers = #tpu.dot_dimension_numbers<[1], [0], [0], [1], [0, 0, 1, 1], [], []>} : vector<2x32xf32>, vector<32x32xf32>, vector<2x32xf32> -> vector<2x32xf32>
    %568 = arith.addf %321, %567 : vector<2x32xf32>
    %569 = vector.broadcast %342 : vector<1x32xf32> to vector<2x32xf32>
    %570 = arith.addf %568, %569 : vector<2x32xf32>
    %571 = arith.negf %570 : vector<2x32xf32>
    %572 = math.exp %571 : vector<2x32xf32>
    %cst_333 = arith.constant 1.000000e+00 : f32
    %573 = vector.broadcast %cst_333 : f32 to vector<2x32xf32>
    %574 = arith.addf %573, %572 : vector<2x32xf32>
    %575 = arith.divf %573, %574 : vector<2x32xf32>
    %cst_334 = arith.constant dense<0.000000e+00> : vector<2x32xf32>
    %576 = tpu.matmul %551, %338, %cst_334 {dimension_numbers = #tpu.dot_dimension_numbers<[1], [0], [0], [1], [0, 0, 1, 1], [], []>} : vector<2x32xf32>, vector<32x32xf32>, vector<2x32xf32> -> vector<2x32xf32>
    %577 = vector.broadcast %344 : vector<1x32xf32> to vector<2x32xf32>
    %578 = arith.addf %576, %577 : vector<2x32xf32>
    %579 = arith.mulf %566, %578 : vector<2x32xf32>
    %580 = arith.addf %332, %579 : vector<2x32xf32>
    %581 = math.tanh %580 : vector<2x32xf32>
    %cst_335 = arith.constant 1.000000e+00 : f32
    %582 = vector.broadcast %cst_335 : f32 to vector<2x32xf32>
    %583 = arith.subf %582, %575 : vector<2x32xf32>
    %584 = arith.mulf %583, %581 : vector<2x32xf32>
    %585 = arith.mulf %575, %551 : vector<2x32xf32>
    %586 = arith.addf %584, %585 : vector<2x32xf32>
    %cst_336 = arith.constant dense<0.000000e+00> : vector<2x4xf32>
    %587 = tpu.matmul %586, %345, %cst_336 {dimension_numbers = #tpu.dot_dimension_numbers<[1], [0], [0], [1], [0, 0, 1, 1], [], []>} : vector<2x32xf32>, vector<32x4xf32>, vector<2x4xf32> -> vector<2x4xf32>
    %588 = vector.broadcast %346 : vector<1x4xf32> to vector<2x4xf32>
    %589 = arith.addf %587, %588 : vector<2x4xf32>
    %c6_337 = arith.constant 6 : index
    %c0_338 = arith.constant 0 : index
    %c0_339 = arith.constant 0 : index
    %590 = vector.load %arg17[%c6_337, %c0_338, %c0_339] : memref<8x2x4xf32, #tpu.memory_space<vmem>>, vector<1x2x4xf32>
    %591 = vector.shape_cast %590 : vector<1x2x4xf32> to vector<2x4xf32>
    %592 = vector.shape_cast %589 : vector<2x4xf32> to vector<1x2x4xf32>
    tpu.vector_store %arg17[%c6_337, %c0_338, %c0_339], %592 {strides = array<i32>} : memref<8x2x4xf32, #tpu.memory_space<vmem>>, vector<1x2x4xf32>,
    %cst_340 = arith.constant dense<0.000000e+00> : vector<2x32xf32>
    %593 = tpu.matmul %586, %334, %cst_340 {dimension_numbers = #tpu.dot_dimension_numbers<[1], [0], [0], [1], [0, 0, 1, 1], [], []>} : vector<2x32xf32>, vector<32x32xf32>, vector<2x32xf32> -> vector<2x32xf32>
    %594 = arith.addf %310, %593 : vector<2x32xf32>
    %595 = vector.broadcast %340 : vector<1x32xf32> to vector<2x32xf32>
    %596 = arith.addf %594, %595 : vector<2x32xf32>
    %597 = arith.negf %596 : vector<2x32xf32>
    %598 = math.exp %597 : vector<2x32xf32>
    %cst_341 = arith.constant 1.000000e+00 : f32
    %599 = vector.broadcast %cst_341 : f32 to vector<2x32xf32>
    %600 = arith.addf %599, %598 : vector<2x32xf32>
    %601 = arith.divf %599, %600 : vector<2x32xf32>
    %cst_342 = arith.constant dense<0.000000e+00> : vector<2x32xf32>
    %602 = tpu.matmul %586, %336, %cst_342 {dimension_numbers = #tpu.dot_dimension_numbers<[1], [0], [0], [1], [0, 0, 1, 1], [], []>} : vector<2x32xf32>, vector<32x32xf32>, vector<2x32xf32> -> vector<2x32xf32>
    %603 = arith.addf %321, %602 : vector<2x32xf32>
    %604 = vector.broadcast %342 : vector<1x32xf32> to vector<2x32xf32>
    %605 = arith.addf %603, %604 : vector<2x32xf32>
    %606 = arith.negf %605 : vector<2x32xf32>
    %607 = math.exp %606 : vector<2x32xf32>
    %cst_343 = arith.constant 1.000000e+00 : f32
    %608 = vector.broadcast %cst_343 : f32 to vector<2x32xf32>
    %609 = arith.addf %608, %607 : vector<2x32xf32>
    %610 = arith.divf %608, %609 : vector<2x32xf32>
    %cst_344 = arith.constant dense<0.000000e+00> : vector<2x32xf32>
    %611 = tpu.matmul %586, %338, %cst_344 {dimension_numbers = #tpu.dot_dimension_numbers<[1], [0], [0], [1], [0, 0, 1, 1], [], []>} : vector<2x32xf32>, vector<32x32xf32>, vector<2x32xf32> -> vector<2x32xf32>
    %612 = vector.broadcast %344 : vector<1x32xf32> to vector<2x32xf32>
    %613 = arith.addf %611, %612 : vector<2x32xf32>
    %614 = arith.mulf %601, %613 : vector<2x32xf32>
    %615 = arith.addf %332, %614 : vector<2x32xf32>
    %616 = math.tanh %615 : vector<2x32xf32>
    %cst_345 = arith.constant 1.000000e+00 : f32
    %617 = vector.broadcast %cst_345 : f32 to vector<2x32xf32>
    %618 = arith.subf %617, %610 : vector<2x32xf32>
    %619 = arith.mulf %618, %616 : vector<2x32xf32>
    %620 = arith.mulf %610, %586 : vector<2x32xf32>
    %621 = arith.addf %619, %620 : vector<2x32xf32>
    %cst_346 = arith.constant dense<0.000000e+00> : vector<2x4xf32>
    %622 = tpu.matmul %621, %345, %cst_346 {dimension_numbers = #tpu.dot_dimension_numbers<[1], [0], [0], [1], [0, 0, 1, 1], [], []>} : vector<2x32xf32>, vector<32x4xf32>, vector<2x4xf32> -> vector<2x4xf32>
    %623 = vector.broadcast %346 : vector<1x4xf32> to vector<2x4xf32>
    %624 = arith.addf %622, %623 : vector<2x4xf32>
    %c7_347 = arith.constant 7 : index
    %c0_348 = arith.constant 0 : index
    %c0_349 = arith.constant 0 : index
    %625 = vector.load %arg17[%c7_347, %c0_348, %c0_349] : memref<8x2x4xf32, #tpu.memory_space<vmem>>, vector<1x2x4xf32>
    %626 = vector.shape_cast %625 : vector<1x2x4xf32> to vector<2x4xf32>
    %627 = vector.shape_cast %624 : vector<2x4xf32> to vector<1x2x4xf32>
    tpu.vector_store %arg17[%c7_347, %c0_348, %c0_349], %627 {strides = array<i32>} : memref<8x2x4xf32, #tpu.memory_space<vmem>>, vector<1x2x4xf32>,
    return
  }
}

</mosaic_0001>

<llo_original>
// kernel: decoder_forward.1
$region0: #{decoder_forward.1}
  #allocation0 [shape = 'u32[]', space=smem, size = 0x4, offset = 0x4, fixed_abs, tag = 'smem constant byte address 0x4 - core index']
  #allocation1 [shape = 'u32[144,128]{1,0:T(1,128)}', space=vmem, size = 0x12000, scoped, tag = 'internal scratch']
  %s0 = inlined_call_operand.vmem [shape: f32[16,2,768], index: 0, kind: input, shape index: {}]
  %s1 = inlined_call_operand.vmem [shape: f32[2,32], index: 1, kind: input, shape index: {}]
  %s2 = inlined_call_operand.vmem [shape: f32[768,128], index: 2, kind: input, shape index: {}]
  %s3 = inlined_call_operand.vmem [shape: f32[1,128], index: 3, kind: input, shape index: {}]
  %s4 = inlined_call_operand.vmem [shape: f32[128,16], index: 4, kind: input, shape index: {}]
  %s5 = inlined_call_operand.vmem [shape: f32[1,16], index: 5, kind: input, shape index: {}]
  %s6 = inlined_call_operand.vmem [shape: f32[16,16,32], index: 6, kind: input, shape index: {}]
  %s7 = inlined_call_operand.vmem [shape: f32[1,32], index: 7, kind: input, shape index: {}]
  %s8 = inlined_call_operand.vmem [shape: f32[32,32], index: 8, kind: input, shape index: {}]
  %s9 = inlined_call_operand.vmem [shape: f32[1,32], index: 9, kind: input, shape index: {}]
  %s10 = inlined_call_operand.vmem [shape: f32[3,32,32], index: 10, kind: input, shape index: {}]
  %s11 = inlined_call_operand.vmem [shape: f32[3,32,32], index: 11, kind: input, shape index: {}]
  %s12 = inlined_call_operand.vmem [shape: f32[3,32,32], index: 12, kind: input, shape index: {}]
  %s13 = inlined_call_operand.vmem [shape: f32[3,1,32], index: 13, kind: input, shape index: {}]
  %s14 = inlined_call_operand.vmem [shape: f32[3,1,32], index: 14, kind: input, shape index: {}]
  %s15 = inlined_call_operand.vmem [shape: f32[32,4], index: 15, kind: input, shape index: {}]
  %s16 = inlined_call_operand.vmem [shape: f32[1,4], index: 16, kind: input, shape index: {}]
  %s17 = inlined_call_operand.vmem [shape: f32[8,2,4], index: 17, kind: output, shape index: {}]
  %s18 = sld [smem:[#allocation0]]
  $region78: #{decoder_forward.1} parent=0
    _
  %s20 = ssub.s32 1, %s18
  %s21 = scalar_select 0, %s20, %s18
  // Predicated region
  $region2: #{decoder_forward.1} parent=0 // pred_check
    _
  $region3: #{decoder_forward.1} parent=0 // pred_check_branch
    %23 = sbr.rel (0) target = $region5
  $region4: #{decoder_forward.1} parent=0 // pred_region
    _
  $region5: #{decoder_forward.1} parent=0 // pred_fallthru
    _
  // Predicated region
  $region6: #{decoder_forward.1} parent=0 // pred_check
    _
  $region7: #{decoder_forward.1} parent=0 // pred_check_branch
    %25 = sbr.rel (0) target = $region9
  $region8: #{decoder_forward.1} parent=0 // pred_region
    _
  $region9: #{decoder_forward.1} parent=0 // pred_fallthru
    _
  // Predicated region
  $region10: #{decoder_forward.1} parent=0 // pred_check
    _
  $region11: #{decoder_forward.1} parent=0 // pred_check_branch
    %27 = sbr.rel (0) target = $region13
  $region12: #{decoder_forward.1} parent=0 // pred_region
    _
  $region13: #{decoder_forward.1} parent=0 // pred_fallthru
    _
  // Predicated region
  $region14: #{decoder_forward.1} parent=0 // pred_check
    _
  $region15: #{decoder_forward.1} parent=0 // pred_check_branch
    %29 = sbr.rel (0) target = $region17
  $region16: #{decoder_forward.1} parent=0 // pred_region
    _
  $region17: #{decoder_forward.1} parent=0 // pred_fallthru
    _
  // Predicated region
  $region18: #{decoder_forward.1} parent=0 // pred_check
    _
  $region19: #{decoder_forward.1} parent=0 // pred_check_branch
    %31 = sbr.rel (0) target = $region21
  $region20: #{decoder_forward.1} parent=0 // pred_region
    _
  $region21: #{decoder_forward.1} parent=0 // pred_fallthru
    _
  // Predicated region
  $region22: #{decoder_forward.1} parent=0 // pred_check
    _
  $region23: #{decoder_forward.1} parent=0 // pred_check_branch
    %33 = sbr.rel (0) target = $region25
  $region24: #{decoder_forward.1} parent=0 // pred_region
    _
  $region25: #{decoder_forward.1} parent=0 // pred_fallthru
    _
  // Predicated region
  $region26: #{decoder_forward.1} parent=0 // pred_check
    _
  $region27: #{decoder_forward.1} parent=0 // pred_check_branch
    %35 = sbr.rel (0) target = $region29
  $region28: #{decoder_forward.1} parent=0 // pred_region
    _
  $region29: #{decoder_forward.1} parent=0 // pred_fallthru
    _
  // Predicated region
  $region30: #{decoder_forward.1} parent=0 // pred_check
    _
  $region31: #{decoder_forward.1} parent=0 // pred_check_branch
    %37 = sbr.rel (0) target = $region33
  $region32: #{decoder_forward.1} parent=0 // pred_region
    _
  $region33: #{decoder_forward.1} parent=0 // pred_fallthru
    _
  // Predicated region
  $region34: #{decoder_forward.1} parent=0 // pred_check
    _
  $region35: #{decoder_forward.1} parent=0 // pred_check_branch
    %39 = sbr.rel (0) target = $region37
  $region36: #{decoder_forward.1} parent=0 // pred_region
    _
  $region37: #{decoder_forward.1} parent=0 // pred_fallthru
    _
  // Predicated region
  $region38: #{decoder_forward.1} parent=0 // pred_check
    _
  $region39: #{decoder_forward.1} parent=0 // pred_check_branch
    %41 = sbr.rel (0) target = $region41
  $region40: #{decoder_forward.1} parent=0 // pred_region
    _
  $region41: #{decoder_forward.1} parent=0 // pred_fallthru
    _
  // Predicated region
  $region42: #{decoder_forward.1} parent=0 // pred_check
    _
  $region43: #{decoder_forward.1} parent=0 // pred_check_branch
    %43 = sbr.rel (0) target = $region45
  $region44: #{decoder_forward.1} parent=0 // pred_region
    _
  $region45: #{decoder_forward.1} parent=0 // pred_fallthru
    _
  // Predicated region
  $region46: #{decoder_forward.1} parent=0 // pred_check
    _
  $region47: #{decoder_forward.1} parent=0 // pred_check_branch
    %45 = sbr.rel (0) target = $region49
  $region48: #{decoder_forward.1} parent=0 // pred_region
    _
  $region49: #{decoder_forward.1} parent=0 // pred_fallthru
    _
  // Predicated region
  $region50: #{decoder_forward.1} parent=0 // pred_check
    _
  $region51: #{decoder_forward.1} parent=0 // pred_check_branch
    %47 = sbr.rel (0) target = $region53
  $region52: #{decoder_forward.1} parent=0 // pred_region
    _
  $region53: #{decoder_forward.1} parent=0 // pred_fallthru
    _
  // Predicated region
  $region54: #{decoder_forward.1} parent=0 // pred_check
    _
  $region55: #{decoder_forward.1} parent=0 // pred_check_branch
    %49 = sbr.rel (0) target = $region57
  $region56: #{decoder_forward.1} parent=0 // pred_region
    _
  $region57: #{decoder_forward.1} parent=0 // pred_fallthru
    _
  // Predicated region
  $region58: #{decoder_forward.1} parent=0 // pred_check
    _
  $region59: #{decoder_forward.1} parent=0 // pred_check_branch
    %51 = sbr.rel (0) target = $region61
  $region60: #{decoder_forward.1} parent=0 // pred_region
    _
  $region61: #{decoder_forward.1} parent=0 // pred_fallthru
    _
  // Predicated region
  $region62: #{decoder_forward.1} parent=0 // pred_check
    _
  $region63: #{decoder_forward.1} parent=0 // pred_check_branch
    %53 = sbr.rel (0) target = $region65
  $region64: #{decoder_forward.1} parent=0 // pred_region
    _
  $region65: #{decoder_forward.1} parent=0 // pred_fallthru
    _
  // Predicated region
  $region66: #{decoder_forward.1} parent=0 // pred_check
    _
  $region67: #{decoder_forward.1} parent=0 // pred_check_branch
    %55 = sbr.rel (0) target = $region69
  $region68: #{decoder_forward.1} parent=0 // pred_region
    _
  $region69: #{decoder_forward.1} parent=0 // pred_fallthru
    _
  %v56 = vld [vmem:[%s3] sm:$0x1]
  %v57 = vld [vmem:[%s4] sm:$0xff]
  %v58 = vld [vmem:[%s4 + $0x8] sm:$0xff]
  %v59 = vld [vmem:[%s4 + $0x10] sm:$0xff]
  %v60 = vld [vmem:[%s4 + $0x18] sm:$0xff]
  %v61 = vld [vmem:[%s4 + $0x20] sm:$0xff]
  %v62 = vld [vmem:[%s4 + $0x28] sm:$0xff]
  %v63 = vld [vmem:[%s4 + $0x30] sm:$0xff]
  %v64 = vld [vmem:[%s4 + $0x38] sm:$0xff]
  %v65 = vld [vmem:[%s4 + $0x40] sm:$0xff]
  %v66 = vld [vmem:[%s4 + $0x48] sm:$0xff]
  %v67 = vld [vmem:[%s4 + $0x50] sm:$0xff]
  %v68 = vld [vmem:[%s4 + $0x58] sm:$0xff]
  %v69 = vld [vmem:[%s4 + $0x60] sm:$0xff]
  %v70 = vld [vmem:[%s4 + $0x68] sm:$0xff]
  %v71 = vld [vmem:[%s4 + $0x70] sm:$0xff]
  %v72 = vld [vmem:[%s4 + $0x78] sm:$0xff]
  %v73 = vld [vmem:[%s5] sm:$0x1]
  %v74 = vld [vmem:[%s0] sm:$0xff]
  %v75 = vld [vmem:[%s0 + $0x8] sm:$0xf]
  %v76 = vld [vmem:[%s2] sm:$0xff]
  %v77 = vld [vmem:[%s2 + $0x8] sm:$0xff]
  %v78 = vld [vmem:[%s2 + $0x10] sm:$0xff]
  %v79 = vld [vmem:[%s2 + $0x18] sm:$0xff]
  %v80 = vld [vmem:[%s2 + $0x20] sm:$0xff]
  %v81 = vld [vmem:[%s2 + $0x28] sm:$0xff]
  %v82 = vld [vmem:[%s2 + $0x30] sm:$0xff]
  %v83 = vld [vmem:[%s2 + $0x38] sm:$0xff]
  %v84 = vld [vmem:[%s2 + $0x40] sm:$0xff]
  %v85 = vld [vmem:[%s2 + $0x48] sm:$0xff]
  %v86 = vld [vmem:[%s2 + $0x50] sm:$0xff]
  %v87 = vld [vmem:[%s2 + $0x58] sm:$0xff]
  %v88 = vld [vmem:[%s2 + $0x60] sm:$0xff]
  %v89 = vld [vmem:[%s2 + $0x68] sm:$0xff]
  %v90 = vld [vmem:[%s2 + $0x70] sm:$0xff]
  %v91 = vld [vmem:[%s2 + $0x78] sm:$0xff]
  %v92 = vld [vmem:[%s2 + $0x80] sm:$0xff]
  %v93 = vld [vmem:[%s2 + $0x88] sm:$0xff]
  %v94 = vld [vmem:[%s2 + $0x90] sm:$0xff]
  %v95 = vld [vmem:[%s2 + $0x98] sm:$0xff]
  %v96 = vld [vmem:[%s2 + $0xa0] sm:$0xff]
  %v97 = vld [vmem:[%s2 + $0xa8] sm:$0xff]
  %v98 = vld [vmem:[%s2 + $0xb0] sm:$0xff]
  %v99 = vld [vmem:[%s2 + $0xb8] sm:$0xff]
  %v100 = vld [vmem:[%s2 + $0xc0] sm:$0xff]
  %v101 = vld [vmem:[%s2 + $0xc8] sm:$0xff]
  %v102 = vld [vmem:[%s2 + $0xd0] sm:$0xff]
  %v103 = vld [vmem:[%s2 + $0xd8] sm:$0xff]
  %v104 = vld [vmem:[%s2 + $0xe0] sm:$0xff]
  %v105 = vld [vmem:[%s2 + $0xe8] sm:$0xff]
  %v106 = vld [vmem:[%s2 + $0xf0] sm:$0xff]
  %v107 = vld [vmem:[%s2 + $0xf8] sm:$0xff]
  %v108 = vld [vmem:[%s2 + $0x100] sm:$0xff]
  %v109 = vld [vmem:[%s2 + $0x108] sm:$0xff]
  %v110 = vld [vmem:[%s2 + $0x110] sm:$0xff]
  %v111 = vld [vmem:[%s2 + $0x118] sm:$0xff]
  %v112 = vld [vmem:[%s2 + $0x120] sm:$0xff]
  %v113 = vld [vmem:[%s2 + $0x128] sm:$0xff]
  %v114 = vld [vmem:[%s2 + $0x130] sm:$0xff]
  %v115 = vld [vmem:[%s2 + $0x138] sm:$0xff]
  %v116 = vld [vmem:[%s2 + $0x140] sm:$0xff]
  %v117 = vld [vmem:[%s2 + $0x148] sm:$0xff]
  %v118 = vld [vmem:[%s2 + $0x150] sm:$0xff]
  %v119 = vld [vmem:[%s2 + $0x158] sm:$0xff]
  %v120 = vld [vmem:[%s2 + $0x160] sm:$0xff]
  %v121 = vld [vmem:[%s2 + $0x168] sm:$0xff]
  %v122 = vld [vmem:[%s2 + $0x170] sm:$0xff]
  %v123 = vld [vmem:[%s2 + $0x178] sm:$0xff]
  %v124 = vld [vmem:[%s2 + $0x180] sm:$0xff]
  %v125 = vld [vmem:[%s2 + $0x188] sm:$0xff]
  %v126 = vld [vmem:[%s2 + $0x190] sm:$0xff]
  %v127 = vld [vmem:[%s2 + $0x198] sm:$0xff]
  %v128 = vld [vmem:[%s2 + $0x1a0] sm:$0xff]
  %v129 = vld [vmem:[%s2 + $0x1a8] sm:$0xff]
  %v130 = vld [vmem:[%s2 + $0x1b0] sm:$0xff]
  %v131 = vld [vmem:[%s2 + $0x1b8] sm:$0xff]
  %v132 = vld [vmem:[%s2 + $0x1c0] sm:$0xff]
  %v133 = vld [vmem:[%s2 + $0x1c8] sm:$0xff]
  %v134 = vld [vmem:[%s2 + $0x1d0] sm:$0xff]
  %v135 = vld [vmem:[%s2 + $0x1d8] sm:$0xff]
  %v136 = vld [vmem:[%s2 + $0x1e0] sm:$0xff]
  %v137 = vld [vmem:[%s2 + $0x1e8] sm:$0xff]
  %v138 = vld [vmem:[%s2 + $0x1f0] sm:$0xff]
  %v139 = vld [vmem:[%s2 + $0x1f8] sm:$0xff]
  %v140 = vld [vmem:[%s2 + $0x200] sm:$0xff]
  %v141 = vld [vmem:[%s2 + $0x208] sm:$0xff]
  %v142 = vld [vmem:[%s2 + $0x210] sm:$0xff]
  %v143 = vld [vmem:[%s2 + $0x218] sm:$0xff]
  %v144 = vld [vmem:[%s2 + $0x220] sm:$0xff]
  %v145 = vld [vmem:[%s2 + $0x228] sm:$0xff]
  %v146 = vld [vmem:[%s2 + $0x230] sm:$0xff]
  %v147 = vld [vmem:[%s2 + $0x238] sm:$0xff]
  %v148 = vld [vmem:[%s2 + $0x240] sm:$0xff]
  %v149 = vld [vmem:[%s2 + $0x248] sm:$0xff]
  %v150 = vld [vmem:[%s2 + $0x250] sm:$0xff]
  %v151 = vld [vmem:[%s2 + $0x258] sm:$0xff]
  %v152 = vld [vmem:[%s2 + $0x260] sm:$0xff]
  %v153 = vld [vmem:[%s2 + $0x268] sm:$0xff]
  %v154 = vld [vmem:[%s2 + $0x270] sm:$0xff]
  %v155 = vld [vmem:[%s2 + $0x278] sm:$0xff]
  %v156 = vld [vmem:[%s2 + $0x280] sm:$0xff]
  %v157 = vld [vmem:[%s2 + $0x288] sm:$0xff]
  %v158 = vld [vmem:[%s2 + $0x290] sm:$0xff]
  %v159 = vld [vmem:[%s2 + $0x298] sm:$0xff]
  %v160 = vld [vmem:[%s2 + $0x2a0] sm:$0xff]
  %v161 = vld [vmem:[%s2 + $0x2a8] sm:$0xff]
  %v162 = vld [vmem:[%s2 + $0x2b0] sm:$0xff]
  %v163 = vld [vmem:[%s2 + $0x2b8] sm:$0xff]
  %v164 = vld [vmem:[%s2 + $0x2c0] sm:$0xff]
  %v165 = vld [vmem:[%s2 + $0x2c8] sm:$0xff]
  %v166 = vld [vmem:[%s2 + $0x2d0] sm:$0xff]
  %v167 = vld [vmem:[%s2 + $0x2d8] sm:$0xff]
  %v168 = vld [vmem:[%s2 + $0x2e0] sm:$0xff]
  %v169 = vld [vmem:[%s2 + $0x2e8] sm:$0xff]
  %v170 = vld [vmem:[%s2 + $0x2f0] sm:$0xff]
  %v171 = vld [vmem:[%s2 + $0x2f8] sm:$0xff]
  %v173 = vlaneseq
  %v174 = vshrl.u32 %v173, 7
  %v175 = vsub.s32 0, %v174
  %v176 = vrot.slane %v56, %v175
  %v180 = vcombine.high %v74, %v74
  %v182 = vunpack.c.l.s4 1983009808
  %v183 = vunpack.c.0.s8 %v182
  %v184 = vlaneseq
  %v185 = vshrl.u32 %v184, 7
  %v186 = vsub.s32 %v183, %v185
  %v187 = vrot.slane %v74, %v186
  %v189 = vunpack.c.l.s4 1983009808
  %v190 = vunpack.c.0.s8 %v189
  %v191 = vlaneseq
  %v192 = vshrl.u32 %v191, 7
  %v193 = vsub.s32 %v190, %v192
  %v194 = vrot.slane %v180, %v193
  %v195 = vcombine.high %v187, %v187
  %v196 = vcombine.high %v194, %v194
  %v198 = vunpack.c.l.s4 1983009808
  %v199 = vunpack.c.0.s8 %v198
  %v200 = vlaneseq
  %v201 = vshrl.u32 %v200, 7
  %v202 = vsub.s32 %v199, %v201
  %v203 = vrot.slane %v75, %v202
  %v204 = vcombine.high %v203, %v203
  %211 = vmatprep.subr.mxu0 0.0
  %212 = vmatpush1.msra.mxu0 %v76
  %213 = vmatprep.subr.mxu0 0.0
  %214 = vmatpush1.msra.mxu0 %v77
  %215 = vmatprep.subr.mxu0 0.0
  %216 = vmatpush1.msra.mxu0 %v78
  %217 = vmatprep.subr.mxu0 0.0
  %218 = vmatpush1.msra.mxu0 %v79
  %219 = vmatprep.subr.mxu0 0.0
  %220 = vmatpush1.msra.mxu0 %v80
  %221 = vmatprep.subr.mxu0 0.0
  %222 = vmatpush1.msra.mxu0 %v81
  %223 = vmatprep.subr.mxu0 0.0
  %224 = vmatpush1.msra.mxu0 %v82
  %225 = vmatprep.subr.mxu0 0.0
  %226 = vmatpush1.msra.mxu0 %v83
  %227 = vmatprep.subr.mxu0 0.0
  %228 = vmatpush1.msra.mxu0 %v84
  %229 = vmatprep.subr.mxu0 0.0
  %230 = vmatpush1.msra.mxu0 %v85
  %231 = vmatprep.subr.mxu0 0.0
  %232 = vmatpush1.msra.mxu0 %v86
  %233 = vmatprep.subr.mxu0 0.0
  %234 = vmatpush1.msra.mxu0 %v87
  %235 = vmatprep.subr.mxu0 0.0
  %236 = vmatpush1.msra.mxu0 %v88
  %237 = vmatprep.subr.mxu0 0.0
  %238 = vmatpush1.msra.mxu0 %v89
  %239 = vmatprep.subr.mxu0 0.0
  %240 = vmatpush1.msra.mxu0 %v90
  %241 = vmatprep.subr.mxu0 0.0
  %242 = vmatpush1.msra.mxu0 %v91
  %243 = vmatprep.subr.mxu0 0.0
  %244 = vmatpush1.msra.mxu0 %v92
  %245 = vmatprep.subr.mxu0 0.0
  %246 = vmatpush1.msra.mxu0 %v93
  %247 = vmatprep.subr.mxu0 0.0
  %248 = vmatpush1.msra.mxu0 %v94
  %249 = vmatprep.subr.mxu0 0.0
  %250 = vmatpush1.msra.mxu0 %v95
  %251 = vmatprep.subr.mxu0 0.0
  %252 = vmatpush1.msra.mxu0 %v96
  %253 = vmatprep.subr.mxu0 0.0
  %254 = vmatpush1.msra.mxu0 %v97
  %255 = vmatprep.subr.mxu0 0.0
  %256 = vmatpush1.msra.mxu0 %v98
  %257 = vmatprep.subr.mxu0 0.0
  %258 = vmatpush1.msra.mxu0 %v99
  %259 = vmatprep.subr.mxu0 0.0
  %260 = vmatpush1.msra.mxu0 %v100
  %261 = vmatprep.subr.mxu0 0.0
  %262 = vmatpush1.msra.mxu0 %v101
  %263 = vmatprep.subr.mxu0 0.0
  %264 = vmatpush1.msra.mxu0 %v102
  %265 = vmatprep.subr.mxu0 0.0
  %266 = vmatpush1.msra.mxu0 %v103
  %267 = vmatprep.subr.mxu0 0.0
  %268 = vmatpush1.msra.mxu0 %v104
  %269 = vmatprep.subr.mxu0 0.0
  %270 = vmatpush1.msra.mxu0 %v105
  %271 = vmatprep.subr.mxu0 0.0
  %272 = vmatpush1.msra.mxu0 %v106
  %273 = vmatprep.subr.mxu0 0.0
  %274 = vmatpush1.msra.mxu0 %v107
  %275 = vmatprep.mubr.f32.mxu0 %v195
  %276 = vmatmul.mubr.f32.gmra.mrb[0].mxu0 %v187
  %v277 = vpop.f32.mrb[0].mxu0
  %v278 = vadd.f32 %v176, %v277
  %v279 = vpop.f32.mrb[0].mxu0
  %280 = vdwg.mxu0
  %281 = vmatprep.subr.mxu0 0.0
  %282 = vmatpush1.msra.mxu0 %v108
  %283 = vmatprep.subr.mxu0 0.0
  %284 = vmatpush1.msra.mxu0 %v109
  %285 = vmatprep.subr.mxu0 0.0
  %286 = vmatpush1.msra.mxu0 %v110
  %287 = vmatprep.subr.mxu0 0.0
  %288 = vmatpush1.msra.mxu0 %v111
  %289 = vmatprep.subr.mxu0 0.0
  %290 = vmatpush1.msra.mxu0 %v112
  %291 = vmatprep.subr.mxu0 0.0
  %292 = vmatpush1.msra.mxu0 %v113
  %293 = vmatprep.subr.mxu0 0.0
  %294 = vmatpush1.msra.mxu0 %v114
  %295 = vmatprep.subr.mxu0 0.0
  %296 = vmatpush1.msra.mxu0 %v115
  %297 = vmatprep.subr.mxu0 0.0
  %298 = vmatpush1.msra.mxu0 %v116
  %299 = vmatprep.subr.mxu0 0.0
  %300 = vmatpush1.msra.mxu0 %v117
  %301 = vmatprep.subr.mxu0 0.0
  %302 = vmatpush1.msra.mxu0 %v118
  %303 = vmatprep.subr.mxu0 0.0
  %304 = vmatpush1.msra.mxu0 %v119
  %305 = vmatprep.subr.mxu0 0.0
  %306 = vmatpush1.msra.mxu0 %v120
  %307 = vmatprep.subr.mxu0 0.0
  %308 = vmatpush1.msra.mxu0 %v121
  %309 = vmatprep.subr.mxu0 0.0
  %310 = vmatpush1.msra.mxu0 %v122
  %311 = vmatprep.subr.mxu0 0.0
  %312 = vmatpush1.msra.mxu0 %v123
  %313 = vmatprep.subr.mxu0 0.0
  %314 = vmatpush1.msra.mxu0 %v124
  %315 = vmatprep.subr.mxu0 0.0
  %316 = vmatpush1.msra.mxu0 %v125
  %317 = vmatprep.subr.mxu0 0.0
  %318 = vmatpush1.msra.mxu0 %v126
  %319 = vmatprep.subr.mxu0 0.0
  %320 = vmatpush1.msra.mxu0 %v127
  %321 = vmatprep.subr.mxu0 0.0
  %322 = vmatpush1.msra.mxu0 %v128
  %323 = vmatprep.subr.mxu0 0.0
  %324 = vmatpush1.msra.mxu0 %v129
  %325 = vmatprep.subr.mxu0 0.0
  %326 = vmatpush1.msra.mxu0 %v130
  %327 = vmatprep.subr.mxu0 0.0
  %328 = vmatpush1.msra.mxu0 %v131
  %329 = vmatprep.subr.mxu0 0.0
  %330 = vmatpush1.msra.mxu0 %v132
  %331 = vmatprep.subr.mxu0 0.0
  %332 = vmatpush1.msra.mxu0 %v133
  %333 = vmatprep.subr.mxu0 0.0
  %334 = vmatpush1.msra.mxu0 %v134
  %335 = vmatprep.subr.mxu0 0.0
  %336 = vmatpush1.msra.mxu0 %v135
  %337 = vmatprep.subr.mxu0 0.0
  %338 = vmatpush1.msra.mxu0 %v136
  %339 = vmatprep.subr.mxu0 0.0
  %340 = vmatpush1.msra.mxu0 %v137
  %341 = vmatprep.subr.mxu0 0.0
  %342 = vmatpush1.msra.mxu0 %v138
  %343 = vmatprep.subr.mxu0 0.0
  %344 = vmatpush1.msra.mxu0 %v139
  %345 = vmatprep.mubr.f32.mxu0 %v196
  %346 = vmatmul.mubr.f32.gmra.mrb[0].mxu0 %v194
  %v347 = vpop.f32.mrb[0].mxu0
  %v348 = vadd.f32 %v278, %v347
  %v349 = vpop.f32.mrb[0].mxu0
  %350 = vdwg.mxu0
  %351 = vmatprep.subr.mxu0 0.0
  %352 = vmatpush1.msra.mxu0 %v140
  %353 = vmatprep.subr.mxu0 0.0
  %354 = vmatpush1.msra.mxu0 %v141
  %355 = vmatprep.subr.mxu0 0.0
  %356 = vmatpush1.msra.mxu0 %v142
  %357 = vmatprep.subr.mxu0 0.0
  %358 = vmatpush1.msra.mxu0 %v143
  %359 = vmatprep.subr.mxu0 0.0
  %360 = vmatpush1.msra.mxu0 %v144
  %361 = vmatprep.subr.mxu0 0.0
  %362 = vmatpush1.msra.mxu0 %v145
  %363 = vmatprep.subr.mxu0 0.0
  %364 = vmatpush1.msra.mxu0 %v146
  %365 = vmatprep.subr.mxu0 0.0
  %366 = vmatpush1.msra.mxu0 %v147
  %367 = vmatprep.subr.mxu0 0.0
  %368 = vmatpush1.msra.mxu0 %v148
  %369 = vmatprep.subr.mxu0 0.0
  %370 = vmatpush1.msra.mxu0 %v149
  %371 = vmatprep.subr.mxu0 0.0
  %372 = vmatpush1.msra.mxu0 %v150
  %373 = vmatprep.subr.mxu0 0.0
  %374 = vmatpush1.msra.mxu0 %v151
  %375 = vmatprep.subr.mxu0 0.0
  %376 = vmatpush1.msra.mxu0 %v152
  %377 = vmatprep.subr.mxu0 0.0
  %378 = vmatpush1.msra.mxu0 %v153
  %379 = vmatprep.subr.mxu0 0.0
  %380 = vmatpush1.msra.mxu0 %v154
  %381 = vmatprep.subr.mxu0 0.0
  %382 = vmatpush1.msra.mxu0 %v155
  %383 = vmatprep.subr.mxu0 0.0
  %384 = vmatpush1.msra.mxu0 %v156
  %385 = vmatprep.subr.mxu0 0.0
  %386 = vmatpush1.msra.mxu0 %v157
  %387 = vmatprep.subr.mxu0 0.0
  %388 = vmatpush1.msra.mxu0 %v158
  %389 = vmatprep.subr.mxu0 0.0
  %390 = vmatpush1.msra.mxu0 %v159
  %391 = vmatprep.subr.mxu0 0.0
  %392 = vmatpush1.msra.mxu0 %v160
  %393 = vmatprep.subr.mxu0 0.0
  %394 = vmatpush1.msra.mxu0 %v161
  %395 = vmatprep.subr.mxu0 0.0
  %396 = vmatpush1.msra.mxu0 %v162
  %397 = vmatprep.subr.mxu0 0.0
  %398 = vmatpush1.msra.mxu0 %v163
  %399 = vmatprep.subr.mxu0 0.0
  %400 = vmatpush1.msra.mxu0 %v164
  %401 = vmatprep.subr.mxu0 0.0
  %402 = vmatpush1.msra.mxu0 %v165
  %403 = vmatprep.subr.mxu0 0.0
  %404 = vmatpush1.msra.mxu0 %v166
  %405 = vmatprep.subr.mxu0 0.0
  %406 = vmatpush1.msra.mxu0 %v167
  %407 = vmatprep.subr.mxu0 0.0
  %408 = vmatpush1.msra.mxu0 %v168
  %409 = vmatprep.subr.mxu0 0.0
  %410 = vmatpush1.msra.mxu0 %v169
  %411 = vmatprep.subr.mxu0 0.0
  %412 = vmatpush1.msra.mxu0 %v170
  %413 = vmatprep.subr.mxu0 0.0
  %414 = vmatpush1.msra.mxu0 %v171
  %415 = vmatprep.mubr.f32.mxu0 %v204
  %416 = vmatmul.mubr.f32.gmra.mrb[0].mxu0 %v203
  %v417 = vpop.f32.mrb[0].mxu0
  %v418 = vadd.f32 %v348, %v417
  %v419 = vpop.f32.mrb[0].mxu0
  %420 = vdwg.mxu0
  %v421 = vmax.f32 %v418, 0.0
  %v423 = vlaneseq
  %v424 = vshrl.u32 %v423, 7
  %v425 = vsub.s32 0, %v424
  %v426 = vrot.slane %v73, %v425
  %428 = vmatprep.subr.mxu0 0.0
  %429 = vmatpush1.msra.mxu0 %v57
  %430 = vmatprep.subr.mxu0 0.0
  %431 = vmatpush1.msra.mxu0 %v58
  %432 = vmatprep.subr.mxu0 0.0
  %433 = vmatpush1.msra.mxu0 %v59
  %434 = vmatprep.subr.mxu0 0.0
  %435 = vmatpush1.msra.mxu0 %v60
  %436 = vmatprep.subr.mxu0 0.0
  %437 = vmatpush1.msra.mxu0 %v61
  %438 = vmatprep.subr.mxu0 0.0
  %439 = vmatpush1.msra.mxu0 %v62
  %440 = vmatprep.subr.mxu0 0.0
  %441 = vmatpush1.msra.mxu0 %v63
  %442 = vmatprep.subr.mxu0 0.0
  %443 = vmatpush1.msra.mxu0 %v64
  %444 = vmatprep.subr.mxu0 0.0
  %445 = vmatpush1.msra.mxu0 %v65
  %446 = vmatprep.subr.mxu0 0.0
  %447 = vmatpush1.msra.mxu0 %v66
  %448 = vmatprep.subr.mxu0 0.0
  %449 = vmatpush1.msra.mxu0 %v67
  %450 = vmatprep.subr.mxu0 0.0
  %451 = vmatpush1.msra.mxu0 %v68
  %452 = vmatprep.subr.mxu0 0.0
  %453 = vmatpush1.msra.mxu0 %v69
  %454 = vmatprep.subr.mxu0 0.0
  %455 = vmatpush1.msra.mxu0 %v70
  %456 = vmatprep.subr.mxu0 0.0
  %457 = vmatpush1.msra.mxu0 %v71
  %458 = vmatprep.subr.mxu0 0.0
  %459 = vmatpush1.msra.mxu0 %v72
  %460 = vmatprep.subr.mxu0 0.0
  %461 = vmatpush1.msra.mxu0 0.0
  %462 = vmatprep.subr.mxu0 0.0
  %463 = vmatpush1.msra.mxu0 0.0
  %464 = vmatprep.subr.mxu0 0.0
  %465 = vmatpush1.msra.mxu0 0.0
  %466 = vmatprep.subr.mxu0 0.0
  %467 = vmatpush1.msra.mxu0 0.0
  %468 = vmatprep.subr.mxu0 0.0
  %469 = vmatpush1.msra.mxu0 0.0
  %470 = vmatprep.subr.mxu0 0.0
  %471 = vmatpush1.msra.mxu0 0.0
  %472 = vmatprep.subr.mxu0 0.0
  %473 = vmatpush1.msra.mxu0 0.0
  %474 = vmatprep.subr.mxu0 0.0
  %475 = vmatpush1.msra.mxu0 0.0
  %476 = vmatprep.subr.mxu0 0.0
  %477 = vmatpush1.msra.mxu0 0.0
  %478 = vmatprep.subr.mxu0 0.0
  %479 = vmatpush1.msra.mxu0 0.0
  %480 = vmatprep.subr.mxu0 0.0
  %481 = vmatpush1.msra.mxu0 0.0
  %482 = vmatprep.subr.mxu0 0.0
  %483 = vmatpush1.msra.mxu0 0.0
  %484 = vmatprep.subr.mxu0 0.0
  %485 = vmatpush1.msra.mxu0 0.0
  %486 = vmatprep.subr.mxu0 0.0
  %487 = vmatpush1.msra.mxu0 0.0
  %488 = vmatprep.subr.mxu0 0.0
  %489 = vmatpush1.msra.mxu0 0.0
  %490 = vmatprep.subr.mxu0 0.0
  %491 = vmatpush1.msra.mxu0 0.0
  %492 = vmatprep.mubr.f32.mxu0 0.0
  %493 = vmatmul.mubr.f32.gmra.mrb[0].mxu0 %v421
  %v494 = vpop.f32.mrb[0].mxu0
  %v495 = vadd.f32 %v426, %v494
  %v496 = vpop.f32.mrb[0].mxu0
  %497 = vdwg.mxu0
  %v498 = vmax.f32 %v495, 0.0
  %v499 = vld [vmem:[%s6] sm:$0xff]
  %v500 = vld [vmem:[%s6 + $0x8] sm:$0xff]
  %s501 = scalar_lea.vmem %s0, 12
  %v502 = vld [vmem:[%s501] sm:$0xff]
  %v503 = vld [vmem:[%s501 + $0x8] sm:$0xf]
  %v506 = vcombine.high %v502, %v502
  %v508 = vunpack.c.l.s4 1983009808
  %v509 = vunpack.c.0.s8 %v508
  %v510 = vlaneseq
  %v511 = vshrl.u32 %v510, 7
  %v512 = vsub.s32 %v509, %v511
  %v513 = vrot.slane %v502, %v512
  %v515 = vunpack.c.l.s4 1983009808
  %v516 = vunpack.c.0.s8 %v515
  %v517 = vlaneseq
  %v518 = vshrl.u32 %v517, 7
  %v519 = vsub.s32 %v516, %v518
  %v520 = vrot.slane %v506, %v519
  %v521 = vcombine.high %v513, %v513
  %v522 = vcombine.high %v520, %v520
  %v524 = vunpack.c.l.s4 1983009808
  %v525 = vunpack.c.0.s8 %v524
  %v526 = vlaneseq
  %v527 = vshrl.u32 %v526, 7
  %v528 = vsub.s32 %v525, %v527
  %v529 = vrot.slane %v503, %v528
  %v530 = vcombine.high %v529, %v529
  %537 = vmatprep.subr.mxu0 0.0
  %538 = vmatpush1.msra.mxu0 %v76
  %539 = vmatprep.subr.mxu0 0.0
  %540 = vmatpush1.msra.mxu0 %v77
  %541 = vmatprep.subr.mxu0 0.0
  %542 = vmatpush1.msra.mxu0 %v78
  %543 = vmatprep.subr.mxu0 0.0
  %544 = vmatpush1.msra.mxu0 %v79
  %545 = vmatprep.subr.mxu0 0.0
  %546 = vmatpush1.msra.mxu0 %v80
  %547 = vmatprep.subr.mxu0 0.0
  %548 = vmatpush1.msra.mxu0 %v81
  %549 = vmatprep.subr.mxu0 0.0
  %550 = vmatpush1.msra.mxu0 %v82
  %551 = vmatprep.subr.mxu0 0.0
  %552 = vmatpush1.msra.mxu0 %v83
  %553 = vmatprep.subr.mxu0 0.0
  %554 = vmatpush1.msra.mxu0 %v84
  %555 = vmatprep.subr.mxu0 0.0
  %556 = vmatpush1.msra.mxu0 %v85
  %557 = vmatprep.subr.mxu0 0.0
  %558 = vmatpush1.msra.mxu0 %v86
  %559 = vmatprep.subr.mxu0 0.0
  %560 = vmatpush1.msra.mxu0 %v87
  %561 = vmatprep.subr.mxu0 0.0
  %562 = vmatpush1.msra.mxu0 %v88
  %563 = vmatprep.subr.mxu0 0.0
  %564 = vmatpush1.msra.mxu0 %v89
  %565 = vmatprep.subr.mxu0 0.0
  %566 = vmatpush1.msra.mxu0 %v90
  %567 = vmatprep.subr.mxu0 0.0
  %568 = vmatpush1.msra.mxu0 %v91
  %569 = vmatprep.subr.mxu0 0.0
  %570 = vmatpush1.msra.mxu0 %v92
  %571 = vmatprep.subr.mxu0 0.0
  %572 = vmatpush1.msra.mxu0 %v93
  %573 = vmatprep.subr.mxu0 0.0
  %574 = vmatpush1.msra.mxu0 %v94
  %575 = vmatprep.subr.mxu0 0.0
  %576 = vmatpush1.msra.mxu0 %v95
  %577 = vmatprep.subr.mxu0 0.0
  %578 = vmatpush1.msra.mxu0 %v96
  %579 = vmatprep.subr.mxu0 0.0
  %580 = vmatpush1.msra.mxu0 %v97
  %581 = vmatprep.subr.mxu0 0.0
  %582 = vmatpush1.msra.mxu0 %v98
  %583 = vmatprep.subr.mxu0 0.0
  %584 = vmatpush1.msra.mxu0 %v99
  %585 = vmatprep.subr.mxu0 0.0
  %586 = vmatpush1.msra.mxu0 %v100
  %587 = vmatprep.subr.mxu0 0.0
  %588 = vmatpush1.msra.mxu0 %v101
  %589 = vmatprep.subr.mxu0 0.0
  %590 = vmatpush1.msra.mxu0 %v102
  %591 = vmatprep.subr.mxu0 0.0
  %592 = vmatpush1.msra.mxu0 %v103
  %593 = vmatprep.subr.mxu0 0.0
  %594 = vmatpush1.msra.mxu0 %v104
  %595 = vmatprep.subr.mxu0 0.0
  %596 = vmatpush1.msra.mxu0 %v105
  %597 = vmatprep.subr.mxu0 0.0
  %598 = vmatpush1.msra.mxu0 %v106
  %599 = vmatprep.subr.mxu0 0.0
  %600 = vmatpush1.msra.mxu0 %v107
  %601 = vmatprep.mubr.f32.mxu0 %v521
  %602 = vmatmul.mubr.f32.gmra.mrb[0].mxu0 %v513
  %v603 = vpop.f32.mrb[0].mxu0
  %v604 = vadd.f32 %v176, %v603
  %v605 = vpop.f32.mrb[0].mxu0
  %606 = vdwg.mxu0
  %607 = vmatprep.subr.mxu0 0.0
  %608 = vmatpush1.msra.mxu0 %v108
  %609 = vmatprep.subr.mxu0 0.0
  %610 = vmatpush1.msra.mxu0 %v109
  %611 = vmatprep.subr.mxu0 0.0
  %612 = vmatpush1.msra.mxu0 %v110
  %613 = vmatprep.subr.mxu0 0.0
  %614 = vmatpush1.msra.mxu0 %v111
  %615 = vmatprep.subr.mxu0 0.0
  %616 = vmatpush1.msra.mxu0 %v112
  %617 = vmatprep.subr.mxu0 0.0
  %618 = vmatpush1.msra.mxu0 %v113
  %619 = vmatprep.subr.mxu0 0.0
  %620 = vmatpush1.msra.mxu0 %v114
  %621 = vmatprep.subr.mxu0 0.0
  %622 = vmatpush1.msra.mxu0 %v115
  %623 = vmatprep.subr.mxu0 0.0
  %624 = vmatpush1.msra.mxu0 %v116
  %625 = vmatprep.subr.mxu0 0.0
  %626 = vmatpush1.msra.mxu0 %v117
  %627 = vmatprep.subr.mxu0 0.0
  %628 = vmatpush1.msra.mxu0 %v118
  %629 = vmatprep.subr.mxu0 0.0
  %630 = vmatpush1.msra.mxu0 %v119
  %631 = vmatprep.subr.mxu0 0.0
  %632 = vmatpush1.msra.mxu0 %v120
  %633 = vmatprep.subr.mxu0 0.0
  %634 = vmatpush1.msra.mxu0 %v121
  %635 = vmatprep.subr.mxu0 0.0
  %636 = vmatpush1.msra.mxu0 %v122
  %637 = vmatprep.subr.mxu0 0.0
  %638 = vmatpush1.msra.mxu0 %v123
  %639 = vmatprep.subr.mxu0 0.0
  %640 = vmatpush1.msra.mxu0 %v124
  %641 = vmatprep.subr.mxu0 0.0
  %642 = vmatpush1.msra.mxu0 %v125
  %643 = vmatprep.subr.mxu0 0.0
  %644 = vmatpush1.msra.mxu0 %v126
  %645 = vmatprep.subr.mxu0 0.0
  %646 = vmatpush1.msra.mxu0 %v127
  %647 = vmatprep.subr.mxu0 0.0
  %648 = vmatpush1.msra.mxu0 %v128
  %649 = vmatprep.subr.mxu0 0.0
  %650 = vmatpush1.msra.mxu0 %v129
  %651 = vmatprep.subr.mxu0 0.0
  %652 = vmatpush1.msra.mxu0 %v130
  %653 = vmatprep.subr.mxu0 0.0
  %654 = vmatpush1.msra.mxu0 %v131
  %655 = vmatprep.subr.mxu0 0.0
  %656 = vmatpush1.msra.mxu0 %v132
  %657 = vmatprep.subr.mxu0 0.0
  %658 = vmatpush1.msra.mxu0 %v133
  %659 = vmatprep.subr.mxu0 0.0
  %660 = vmatpush1.msra.mxu0 %v134
  %661 = vmatprep.subr.mxu0 0.0
  %662 = vmatpush1.msra.mxu0 %v135
  %663 = vmatprep.subr.mxu0 0.0
  %664 = vmatpush1.msra.mxu0 %v136
  %665 = vmatprep.subr.mxu0 0.0
  %666 = vmatpush1.msra.mxu0 %v137
  %667 = vmatprep.subr.mxu0 0.0
  %668 = vmatpush1.msra.mxu0 %v138
  %669 = vmatprep.subr.mxu0 0.0
  %670 = vmatpush1.msra.mxu0 %v139
  %671 = vmatprep.mubr.f32.mxu0 %v522
  %672 = vmatmul.mubr.f32.gmra.mrb[0].mxu0 %v520
  %v673 = vpop.f32.mrb[0].mxu0
  %v674 = vadd.f32 %v604, %v673
  %v675 = vpop.f32.mrb[0].mxu0
  %676 = vdwg.mxu0
  %677 = vmatprep.subr.mxu0 0.0
  %678 = vmatpush1.msra.mxu0 %v140
  %679 = vmatprep.subr.mxu0 0.0
  %680 = vmatpush1.msra.mxu0 %v141
  %681 = vmatprep.subr.mxu0 0.0
  %682 = vmatpush1.msra.mxu0 %v142
  %683 = vmatprep.subr.mxu0 0.0
  %684 = vmatpush1.msra.mxu0 %v143
  %685 = vmatprep.subr.mxu0 0.0
  %686 = vmatpush1.msra.mxu0 %v144
  %687 = vmatprep.subr.mxu0 0.0
  %688 = vmatpush1.msra.mxu0 %v145
  %689 = vmatprep.subr.mxu0 0.0
  %690 = vmatpush1.msra.mxu0 %v146
  %691 = vmatprep.subr.mxu0 0.0
  %692 = vmatpush1.msra.mxu0 %v147
  %693 = vmatprep.subr.mxu0 0.0
  %694 = vmatpush1.msra.mxu0 %v148
  %695 = vmatprep.subr.mxu0 0.0
  %696 = vmatpush1.msra.mxu0 %v149
  %697 = vmatprep.subr.mxu0 0.0
  %698 = vmatpush1.msra.mxu0 %v150
  %699 = vmatprep.subr.mxu0 0.0
  %700 = vmatpush1.msra.mxu0 %v151
  %701 = vmatprep.subr.mxu0 0.0
  %702 = vmatpush1.msra.mxu0 %v152
  %703 = vmatprep.subr.mxu0 0.0
  %704 = vmatpush1.msra.mxu0 %v153
  %705 = vmatprep.subr.mxu0 0.0
  %706 = vmatpush1.msra.mxu0 %v154
  %707 = vmatprep.subr.mxu0 0.0
  %708 = vmatpush1.msra.mxu0 %v155
  %709 = vmatprep.subr.mxu0 0.0
  %710 = vmatpush1.msra.mxu0 %v156
  %711 = vmatprep.subr.mxu0 0.0
  %712 = vmatpush1.msra.mxu0 %v157
  %713 = vmatprep.subr.mxu0 0.0
  %714 = vmatpush1.msra.mxu0 %v158
  %715 = vmatprep.subr.mxu0 0.0
  %716 = vmatpush1.msra.mxu0 %v159
  %717 = vmatprep.subr.mxu0 0.0
  %718 = vmatpush1.msra.mxu0 %v160
  %719 = vmatprep.subr.mxu0 0.0
  %720 = vmatpush1.msra.mxu0 %v161
  %721 = vmatprep.subr.mxu0 0.0
  %722 = vmatpush1.msra.mxu0 %v162
  %723 = vmatprep.subr.mxu0 0.0
  %724 = vmatpush1.msra.mxu0 %v163
  %725 = vmatprep.subr.mxu0 0.0
  %726 = vmatpush1.msra.mxu0 %v164
  %727 = vmatprep.subr.mxu0 0.0
  %728 = vmatpush1.msra.mxu0 %v165
  %729 = vmatprep.subr.mxu0 0.0
  %730 = vmatpush1.msra.mxu0 %v166
  %731 = vmatprep.subr.mxu0 0.0
  %732 = vmatpush1.msra.mxu0 %v167
  %733 = vmatprep.subr.mxu0 0.0
  %734 = vmatpush1.msra.mxu0 %v168
  %735 = vmatprep.subr.mxu0 0.0
  %736 = vmatpush1.msra.mxu0 %v169
  %737 = vmatprep.subr.mxu0 0.0
  %738 = vmatpush1.msra.mxu0 %v170
  %739 = vmatprep.subr.mxu0 0.0
  %740 = vmatpush1.msra.mxu0 %v171
  %741 = vmatprep.mubr.f32.mxu0 %v530
  %742 = vmatmul.mubr.f32.gmra.mrb[0].mxu0 %v529
  %v743 = vpop.f32.mrb[0].mxu0
  %v744 = vadd.f32 %v674, %v743
  %v745 = vpop.f32.mrb[0].mxu0
  %746 = vdwg.mxu0
  %v747 = vmax.f32 %v744, 0.0
  %748 = vmatprep.subr.mxu0 0.0
  %749 = vmatpush1.msra.mxu0 %v57
  %750 = vmatprep.subr.mxu0 0.0
  %751 = vmatpush1.msra.mxu0 %v58
  %752 = vmatprep.subr.mxu0 0.0
  %753 = vmatpush1.msra.mxu0 %v59
  %754 = vmatprep.subr.mxu0 0.0
  %755 = vmatpush1.msra.mxu0 %v60
  %756 = vmatprep.subr.mxu0 0.0
  %757 = vmatpush1.msra.mxu0 %v61
  %758 = vmatprep.subr.mxu0 0.0
  %759 = vmatpush1.msra.mxu0 %v62
  %760 = vmatprep.subr.mxu0 0.0
  %761 = vmatpush1.msra.mxu0 %v63
  %762 = vmatprep.subr.mxu0 0.0
  %763 = vmatpush1.msra.mxu0 %v64
  %764 = vmatprep.subr.mxu0 0.0
  %765 = vmatpush1.msra.mxu0 %v65
  %766 = vmatprep.subr.mxu0 0.0
  %767 = vmatpush1.msra.mxu0 %v66
  %768 = vmatprep.subr.mxu0 0.0
  %769 = vmatpush1.msra.mxu0 %v67
  %770 = vmatprep.subr.mxu0 0.0
  %771 = vmatpush1.msra.mxu0 %v68
  %772 = vmatprep.subr.mxu0 0.0
  %773 = vmatpush1.msra.mxu0 %v69
  %774 = vmatprep.subr.mxu0 0.0
  %775 = vmatpush1.msra.mxu0 %v70
  %776 = vmatprep.subr.mxu0 0.0
  %777 = vmatpush1.msra.mxu0 %v71
  %778 = vmatprep.subr.mxu0 0.0
  %779 = vmatpush1.msra.mxu0 %v72
  %780 = vmatprep.subr.mxu0 0.0
  %781 = vmatpush1.msra.mxu0 0.0
  %782 = vmatprep.subr.mxu0 0.0
  %783 = vmatpush1.msra.mxu0 0.0
  %784 = vmatprep.subr.mxu0 0.0
  %785 = vmatpush1.msra.mxu0 0.0
  %786 = vmatprep.subr.mxu0 0.0
  %787 = vmatpush1.msra.mxu0 0.0
  %788 = vmatprep.subr.mxu0 0.0
  %789 = vmatpush1.msra.mxu0 0.0
  %790 = vmatprep.subr.mxu0 0.0
  %791 = vmatpush1.msra.mxu0 0.0
  %792 = vmatprep.subr.mxu0 0.0
  %793 = vmatpush1.msra.mxu0 0.0
  %794 = vmatprep.subr.mxu0 0.0
  %795 = vmatpush1.msra.mxu0 0.0
  %796 = vmatprep.subr.mxu0 0.0
  %797 = vmatpush1.msra.mxu0 0.0
  %798 = vmatprep.subr.mxu0 0.0
  %799 = vmatpush1.msra.mxu0 0.0
  %800 = vmatprep.subr.mxu0 0.0
  %801 = vmatpush1.msra.mxu0 0.0
  %802 = vmatprep.subr.mxu0 0.0
  %803 = vmatpush1.msra.mxu0 0.0
  %804 = vmatprep.subr.mxu0 0.0
  %805 = vmatpush1.msra.mxu0 0.0
  %806 = vmatprep.subr.mxu0 0.0
  %807 = vmatpush1.msra.mxu0 0.0
  %808 = vmatprep.subr.mxu0 0.0
  %809 = vmatpush1.msra.mxu0 0.0
  %810 = vmatprep.subr.mxu0 0.0
  %811 = vmatpush1.msra.mxu0 0.0
  %812 = vmatprep.mubr.f32.mxu0 0.0
  %813 = vmatmul.mubr.f32.gmra.mrb[0].mxu0 %v747
  %v814 = vpop.f32.mrb[0].mxu0
  %v815 = vadd.f32 %v426, %v814
  %v816 = vpop.f32.mrb[0].mxu0
  %817 = vdwg.mxu0
  %v818 = vmax.f32 %v815, 0.0
  %s819 = scalar_lea.vmem %s6, 16
  %v820 = vld [vmem:[%s819] sm:$0xff]
  %v821 = vld [vmem:[%s819 + $0x8] sm:$0xff]
  %vm822 = vcmask 130048
  %v824 = vsel %vm822, %v818, 0
  %826 = vmatprep.subr.mxu0 0.0
  %827 = vmatpush1.msra.mxu0 %v820
  %828 = vmatprep.subr.mxu0 0.0
  %829 = vmatpush1.msra.mxu0 %v821
  %830 = vmatprep.subr.mxu0 0.0
  %831 = vmatpush1.msra.mxu0 0.0
  %832 = vmatprep.subr.mxu0 0.0
  %833 = vmatpush1.msra.mxu0 0.0
  %834 = vmatprep.subr.mxu0 0.0
  %835 = vmatpush1.msra.mxu0 0.0
  %836 = vmatprep.subr.mxu0 0.0
  %837 = vmatpush1.msra.mxu0 0.0
  %838 = vmatprep.subr.mxu0 0.0
  %839 = vmatpush1.msra.mxu0 0.0
  %840 = vmatprep.subr.mxu0 0.0
  %841 = vmatpush1.msra.mxu0 0.0
  %842 = vmatprep.subr.mxu0 0.0
  %843 = vmatpush1.msra.mxu0 0.0
  %844 = vmatprep.subr.mxu0 0.0
  %845 = vmatpush1.msra.mxu0 0.0
  %846 = vmatprep.subr.mxu0 0.0
  %847 = vmatpush1.msra.mxu0 0.0
  %848 = vmatprep.subr.mxu0 0.0
  %849 = vmatpush1.msra.mxu0 0.0
  %850 = vmatprep.subr.mxu0 0.0
  %851 = vmatpush1.msra.mxu0 0.0
  %852 = vmatprep.subr.mxu0 0.0
  %853 = vmatpush1.msra.mxu0 0.0
  %854 = vmatprep.subr.mxu0 0.0
  %855 = vmatpush1.msra.mxu0 0.0
  %856 = vmatprep.subr.mxu0 0.0
  %857 = vmatpush1.msra.mxu0 0.0
  %858 = vmatprep.subr.mxu0 0.0
  %859 = vmatpush1.msra.mxu0 0.0
  %860 = vmatprep.subr.mxu0 0.0
  %861 = vmatpush1.msra.mxu0 0.0
  %862 = vmatprep.subr.mxu0 0.0
  %863 = vmatpush1.msra.mxu0 0.0
  %864 = vmatprep.subr.mxu0 0.0
  %865 = vmatpush1.msra.mxu0 0.0
  %866 = vmatprep.subr.mxu0 0.0
  %867 = vmatpush1.msra.mxu0 0.0
  %868 = vmatprep.subr.mxu0 0.0
  %869 = vmatpush1.msra.mxu0 0.0
  %870 = vmatprep.subr.mxu0 0.0
  %871 = vmatpush1.msra.mxu0 0.0
  %872 = vmatprep.subr.mxu0 0.0
  %873 = vmatpush1.msra.mxu0 0.0
  %874 = vmatprep.subr.mxu0 0.0
  %875 = vmatpush1.msra.mxu0 0.0
  %876 = vmatprep.subr.mxu0 0.0
  %877 = vmatpush1.msra.mxu0 0.0
  %878 = vmatprep.subr.mxu0 0.0
  %879 = vmatpush1.msra.mxu0 0.0
  %880 = vmatprep.subr.mxu0 0.0
  %881 = vmatpush1.msra.mxu0 0.0
  %882 = vmatprep.subr.mxu0 0.0
  %883 = vmatpush1.msra.mxu0 0.0
  %884 = vmatprep.subr.mxu0 0.0
  %885 = vmatpush1.msra.mxu0 0.0
  %886 = vmatprep.subr.mxu0 0.0
  %887 = vmatpush1.msra.mxu0 0.0
  %888 = vmatprep.subr.mxu0 0.0
  %889 = vmatpush1.msra.mxu0 0.0
  %890 = vmatprep.mubr.f32.mxu0 0.0
  %891 = vmatmul.mubr.f32.gmra.mrb[0].mxu0 %v824
  %v892 = vpop.f32.mrb[0].mxu0
  %v893 = vadd.f32 0.0, %v892
  %v894 = vpop.f32.mrb[0].mxu0
  %895 = vdwg.mxu0
  %v897 = vsel %vm822, %v498, 0
  %899 = vmatprep.subr.mxu0 0.0
  %900 = vmatpush1.msra.mxu0 %v499
  %901 = vmatprep.subr.mxu0 0.0
  %902 = vmatpush1.msra.mxu0 %v500
  %903 = vmatprep.subr.mxu0 0.0
  %904 = vmatpush1.msra.mxu0 0.0
  %905 = vmatprep.subr.mxu0 0.0
  %906 = vmatpush1.msra.mxu0 0.0
  %907 = vmatprep.subr.mxu0 0.0
  %908 = vmatpush1.msra.mxu0 0.0
  %909 = vmatprep.subr.mxu0 0.0
  %910 = vmatpush1.msra.mxu0 0.0
  %911 = vmatprep.subr.mxu0 0.0
  %912 = vmatpush1.msra.mxu0 0.0
  %913 = vmatprep.subr.mxu0 0.0
  %914 = vmatpush1.msra.mxu0 0.0
  %915 = vmatprep.subr.mxu0 0.0
  %916 = vmatpush1.msra.mxu0 0.0
  %917 = vmatprep.subr.mxu0 0.0
  %918 = vmatpush1.msra.mxu0 0.0
  %919 = vmatprep.subr.mxu0 0.0
  %920 = vmatpush1.msra.mxu0 0.0
  %921 = vmatprep.subr.mxu0 0.0
  %922 = vmatpush1.msra.mxu0 0.0
  %923 = vmatprep.subr.mxu0 0.0
  %924 = vmatpush1.msra.mxu0 0.0
  %925 = vmatprep.subr.mxu0 0.0
  %926 = vmatpush1.msra.mxu0 0.0
  %927 = vmatprep.subr.mxu0 0.0
  %928 = vmatpush1.msra.mxu0 0.0
  %929 = vmatprep.subr.mxu0 0.0
  %930 = vmatpush1.msra.mxu0 0.0
  %931 = vmatprep.subr.mxu0 0.0
  %932 = vmatpush1.msra.mxu0 0.0
  %933 = vmatprep.subr.mxu0 0.0
  %934 = vmatpush1.msra.mxu0 0.0
  %935 = vmatprep.subr.mxu0 0.0
  %936 = vmatpush1.msra.mxu0 0.0
  %937 = vmatprep.subr.mxu0 0.0
  %938 = vmatpush1.msra.mxu0 0.0
  %939 = vmatprep.subr.mxu0 0.0
  %940 = vmatpush1.msra.mxu0 0.0
  %941 = vmatprep.subr.mxu0 0.0
  %942 = vmatpush1.msra.mxu0 0.0
  %943 = vmatprep.subr.mxu0 0.0
  %944 = vmatpush1.msra.mxu0 0.0
  %945 = vmatprep.subr.mxu0 0.0
  %946 = vmatpush1.msra.mxu0 0.0
  %947 = vmatprep.subr.mxu0 0.0
  %948 = vmatpush1.msra.mxu0 0.0
  %949 = vmatprep.subr.mxu0 0.0
  %950 = vmatpush1.msra.mxu0 0.0
  %951 = vmatprep.subr.mxu0 0.0
  %952 = vmatpush1.msra.mxu0 0.0
  %953 = vmatprep.subr.mxu0 0.0
  %954 = vmatpush1.msra.mxu0 0.0
  %955 = vmatprep.subr.mxu0 0.0
  %956 = vmatpush1.msra.mxu0 0.0
  %957 = vmatprep.subr.mxu0 0.0
  %958 = vmatpush1.msra.mxu0 0.0
  %959 = vmatprep.subr.mxu0 0.0
  %960 = vmatpush1.msra.mxu0 0.0
  %961 = vmatprep.subr.mxu0 0.0
  %962 = vmatpush1.msra.mxu0 0.0
  %963 = vmatprep.mubr.f32.mxu0 0.0
  %964 = vmatmul.mubr.f32.gmra.mrb[0].mxu0 %v897
  %v965 = vpop.f32.mrb[0].mxu0
  %v966 = vadd.f32 %v893, %v965
  %v967 = vpop.f32.mrb[0].mxu0
  %968 = vdwg.mxu0
  %s969 = scalar_lea.vmem %s0, 24
  %v970 = vld [vmem:[%s969] sm:$0xff]
  %v971 = vld [vmem:[%s969 + $0x8] sm:$0xf]
  %v974 = vcombine.high %v970, %v970
  %v976 = vunpack.c.l.s4 1983009808
  %v977 = vunpack.c.0.s8 %v976
  %v978 = vlaneseq
  %v979 = vshrl.u32 %v978, 7
  %v980 = vsub.s32 %v977, %v979
  %v981 = vrot.slane %v970, %v980
  %v983 = vunpack.c.l.s4 1983009808
  %v984 = vunpack.c.0.s8 %v983
  %v985 = vlaneseq
  %v986 = vshrl.u32 %v985, 7
  %v987 = vsub.s32 %v984, %v986
  %v988 = vrot.slane %v974, %v987
  %v989 = vcombine.high %v981, %v981
  %v990 = vcombine.high %v988, %v988
  %v992 = vunpack.c.l.s4 1983009808
  %v993 = vunpack.c.0.s8 %v992
  %v994 = vlaneseq
  %v995 = vshrl.u32 %v994, 7
  %v996 = vsub.s32 %v993, %v995
  %v997 = vrot.slane %v971, %v996
  %v998 = vcombine.high %v997, %v997
  %1005 = vmatprep.subr.mxu0 0.0
  %1006 = vmatpush1.msra.mxu0 %v76
  %1007 = vmatprep.subr.mxu0 0.0
  %1008 = vmatpush1.msra.mxu0 %v77
  %1009 = vmatprep.subr.mxu0 0.0
  %1010 = vmatpush1.msra.mxu0 %v78
  %1011 = vmatprep.subr.mxu0 0.0
  %1012 = vmatpush1.msra.mxu0 %v79
  %1013 = vmatprep.subr.mxu0 0.0
  %1014 = vmatpush1.msra.mxu0 %v80
  %1015 = vmatprep.subr.mxu0 0.0
  %1016 = vmatpush1.msra.mxu0 %v81
  %1017 = vmatprep.subr.mxu0 0.0
  %1018 = vmatpush1.msra.mxu0 %v82
  %1019 = vmatprep.subr.mxu0 0.0
  %1020 = vmatpush1.msra.mxu0 %v83
  %1021 = vmatprep.subr.mxu0 0.0
  %1022 = vmatpush1.msra.mxu0 %v84
  %1023 = vmatprep.subr.mxu0 0.0
  %1024 = vmatpush1.msra.mxu0 %v85
  %1025 = vmatprep.subr.mxu0 0.0
  %1026 = vmatpush1.msra.mxu0 %v86
  %1027 = vmatprep.subr.mxu0 0.0
  %1028 = vmatpush1.msra.mxu0 %v87
  %1029 = vmatprep.subr.mxu0 0.0
  %1030 = vmatpush1.msra.mxu0 %v88
  %1031 = vmatprep.subr.mxu0 0.0
  %1032 = vmatpush1.msra.mxu0 %v89
  %1033 = vmatprep.subr.mxu0 0.0
  %1034 = vmatpush1.msra.mxu0 %v90
  %1035 = vmatprep.subr.mxu0 0.0
  %1036 = vmatpush1.msra.mxu0 %v91
  %1037 = vmatprep.subr.mxu0 0.0
  %1038 = vmatpush1.msra.mxu0 %v92
  %1039 = vmatprep.subr.mxu0 0.0
  %1040 = vmatpush1.msra.mxu0 %v93
  %1041 = vmatprep.subr.mxu0 0.0
  %1042 = vmatpush1.msra.mxu0 %v94
  %1043 = vmatprep.subr.mxu0 0.0
  %1044 = vmatpush1.msra.mxu0 %v95
  %1045 = vmatprep.subr.mxu0 0.0
  %1046 = vmatpush1.msra.mxu0 %v96
  %1047 = vmatprep.subr.mxu0 0.0
  %1048 = vmatpush1.msra.mxu0 %v97
  %1049 = vmatprep.subr.mxu0 0.0
  %1050 = vmatpush1.msra.mxu0 %v98
  %1051 = vmatprep.subr.mxu0 0.0
  %1052 = vmatpush1.msra.mxu0 %v99
  %1053 = vmatprep.subr.mxu0 0.0
  %1054 = vmatpush1.msra.mxu0 %v100
  %1055 = vmatprep.subr.mxu0 0.0
  %1056 = vmatpush1.msra.mxu0 %v101
  %1057 = vmatprep.subr.mxu0 0.0
  %1058 = vmatpush1.msra.mxu0 %v102
  %1059 = vmatprep.subr.mxu0 0.0
  %1060 = vmatpush1.msra.mxu0 %v103
  %1061 = vmatprep.subr.mxu0 0.0
  %1062 = vmatpush1.msra.mxu0 %v104
  %1063 = vmatprep.subr.mxu0 0.0
  %1064 = vmatpush1.msra.mxu0 %v105
  %1065 = vmatprep.subr.mxu0 0.0
  %1066 = vmatpush1.msra.mxu0 %v106
  %1067 = vmatprep.subr.mxu0 0.0
  %1068 = vmatpush1.msra.mxu0 %v107
  %1069 = vmatprep.mubr.f32.mxu0 %v989
  %1070 = vmatmul.mubr.f32.gmra.mrb[0].mxu0 %v981
  %v1071 = vpop.f32.mrb[0].mxu0
  %v1072 = vadd.f32 %v176, %v1071
  %v1073 = vpop.f32.mrb[0].mxu0
  %1074 = vdwg.mxu0
  %1075 = vmatprep.subr.mxu0 0.0
  %1076 = vmatpush1.msra.mxu0 %v108
  %1077 = vmatprep.subr.mxu0 0.0
  %1078 = vmatpush1.msra.mxu0 %v109
  %1079 = vmatprep.subr.mxu0 0.0
  %1080 = vmatpush1.msra.mxu0 %v110
  %1081 = vmatprep.subr.mxu0 0.0
  %1082 = vmatpush1.msra.mxu0 %v111
  %1083 = vmatprep.subr.mxu0 0.0
  %1084 = vmatpush1.msra.mxu0 %v112
  %1085 = vmatprep.subr.mxu0 0.0
  %1086 = vmatpush1.msra.mxu0 %v113
  %1087 = vmatprep.subr.mxu0 0.0
  %1088 = vmatpush1.msra.mxu0 %v114
  %1089 = vmatprep.subr.mxu0 0.0
  %1090 = vmatpush1.msra.mxu0 %v115
  %1091 = vmatprep.subr.mxu0 0.0
  %1092 = vmatpush1.msra.mxu0 %v116
  %1093 = vmatprep.subr.mxu0 0.0
  %1094 = vmatpush1.msra.mxu0 %v117
  %1095 = vmatprep.subr.mxu0 0.0
  %1096 = vmatpush1.msra.mxu0 %v118
  %1097 = vmatprep.subr.mxu0 0.0
  %1098 = vmatpush1.msra.mxu0 %v119
  %1099 = vmatprep.subr.mxu0 0.0
  %1100 = vmatpush1.msra.mxu0 %v120
  %1101 = vmatprep.subr.mxu0 0.0
  %1102 = vmatpush1.msra.mxu0 %v121
  %1103 = vmatprep.subr.mxu0 0.0
  %1104 = vmatpush1.msra.mxu0 %v122
  %1105 = vmatprep.subr.mxu0 0.0
  %1106 = vmatpush1.msra.mxu0 %v123
  %1107 = vmatprep.subr.mxu0 0.0
  %1108 = vmatpush1.msra.mxu0 %v124
  %1109 = vmatprep.subr.mxu0 0.0
  %1110 = vmatpush1.msra.mxu0 %v125
  %1111 = vmatprep.subr.mxu0 0.0
  %1112 = vmatpush1.msra.mxu0 %v126
  %1113 = vmatprep.subr.mxu0 0.0
  %1114 = vmatpush1.msra.mxu0 %v127
  %1115 = vmatprep.subr.mxu0 0.0
  %1116 = vmatpush1.msra.mxu0 %v128
  %1117 = vmatprep.subr.mxu0 0.0
  %1118 = vmatpush1.msra.mxu0 %v129
  %1119 = vmatprep.subr.mxu0 0.0
  %1120 = vmatpush1.msra.mxu0 %v130
  %1121 = vmatprep.subr.mxu0 0.0
  %1122 = vmatpush1.msra.mxu0 %v131
  %1123 = vmatprep.subr.mxu0 0.0
  %1124 = vmatpush1.msra.mxu0 %v132
  %1125 = vmatprep.subr.mxu0 0.0
  %1126 = vmatpush1.msra.mxu0 %v133
  %1127 = vmatprep.subr.mxu0 0.0
  %1128 = vmatpush1.msra.mxu0 %v134
  %1129 = vmatprep.subr.mxu0 0.0
  %1130 = vmatpush1.msra.mxu0 %v135
  %1131 = vmatprep.subr.mxu0 0.0
  %1132 = vmatpush1.msra.mxu0 %v136
  %1133 = vmatprep.subr.mxu0 0.0
  %1134 = vmatpush1.msra.mxu0 %v137
  %1135 = vmatprep.subr.mxu0 0.0
  %1136 = vmatpush1.msra.mxu0 %v138
  %1137 = vmatprep.subr.mxu0 0.0
  %1138 = vmatpush1.msra.mxu0 %v139
  %1139 = vmatprep.mubr.f32.mxu0 %v990
  %1140 = vmatmul.mubr.f32.gmra.mrb[0].mxu0 %v988
  %v1141 = vpop.f32.mrb[0].mxu0
  %v1142 = vadd.f32 %v1072, %v1141
  %v1143 = vpop.f32.mrb[0].mxu0
  %1144 = vdwg.mxu0
  %1145 = vmatprep.subr.mxu0 0.0
  %1146 = vmatpush1.msra.mxu0 %v140
  %1147 = vmatprep.subr.mxu0 0.0
  %1148 = vmatpush1.msra.mxu0 %v141
  %1149 = vmatprep.subr.mxu0 0.0
  %1150 = vmatpush1.msra.mxu0 %v142
  %1151 = vmatprep.subr.mxu0 0.0
  %1152 = vmatpush1.msra.mxu0 %v143
  %1153 = vmatprep.subr.mxu0 0.0
  %1154 = vmatpush1.msra.mxu0 %v144
  %1155 = vmatprep.subr.mxu0 0.0
  %1156 = vmatpush1.msra.mxu0 %v145
  %1157 = vmatprep.subr.mxu0 0.0
  %1158 = vmatpush1.msra.mxu0 %v146
  %1159 = vmatprep.subr.mxu0 0.0
  %1160 = vmatpush1.msra.mxu0 %v147
  %1161 = vmatprep.subr.mxu0 0.0
  %1162 = vmatpush1.msra.mxu0 %v148
  %1163 = vmatprep.subr.mxu0 0.0
  %1164 = vmatpush1.msra.mxu0 %v149
  %1165 = vmatprep.subr.mxu0 0.0
  %1166 = vmatpush1.msra.mxu0 %v150
  %1167 = vmatprep.subr.mxu0 0.0
  %1168 = vmatpush1.msra.mxu0 %v151
  %1169 = vmatprep.subr.mxu0 0.0
  %1170 = vmatpush1.msra.mxu0 %v152
  %1171 = vmatprep.subr.mxu0 0.0
  %1172 = vmatpush1.msra.mxu0 %v153
  %1173 = vmatprep.subr.mxu0 0.0
  %1174 = vmatpush1.msra.mxu0 %v154
  %1175 = vmatprep.subr.mxu0 0.0
  %1176 = vmatpush1.msra.mxu0 %v155
  %1177 = vmatprep.subr.mxu0 0.0
  %1178 = vmatpush1.msra.mxu0 %v156
  %1179 = vmatprep.subr.mxu0 0.0
  %1180 = vmatpush1.msra.mxu0 %v157
  %1181 = vmatprep.subr.mxu0 0.0
  %1182 = vmatpush1.msra.mxu0 %v158
  %1183 = vmatprep.subr.mxu0 0.0
  %1184 = vmatpush1.msra.mxu0 %v159
  %1185 = vmatprep.subr.mxu0 0.0
  %1186 = vmatpush1.msra.mxu0 %v160
  %1187 = vmatprep.subr.mxu0 0.0
  %1188 = vmatpush1.msra.mxu0 %v161
  %1189 = vmatprep.subr.mxu0 0.0
  %1190 = vmatpush1.msra.mxu0 %v162
  %1191 = vmatprep.subr.mxu0 0.0
  %1192 = vmatpush1.msra.mxu0 %v163
  %1193 = vmatprep.subr.mxu0 0.0
  %1194 = vmatpush1.msra.mxu0 %v164
  %1195 = vmatprep.subr.mxu0 0.0
  %1196 = vmatpush1.msra.mxu0 %v165
  %1197 = vmatprep.subr.mxu0 0.0
  %1198 = vmatpush1.msra.mxu0 %v166
  %1199 = vmatprep.subr.mxu0 0.0
  %1200 = vmatpush1.msra.mxu0 %v167
  %1201 = vmatprep.subr.mxu0 0.0
  %1202 = vmatpush1.msra.mxu0 %v168
  %1203 = vmatprep.subr.mxu0 0.0
  %1204 = vmatpush1.msra.mxu0 %v169
  %1205 = vmatprep.subr.mxu0 0.0
  %1206 = vmatpush1.msra.mxu0 %v170
  %1207 = vmatprep.subr.mxu0 0.0
  %1208 = vmatpush1.msra.mxu0 %v171
  %1209 = vmatprep.mubr.f32.mxu0 %v998
  %1210 = vmatmul.mubr.f32.gmra.mrb[0].mxu0 %v997
  %v1211 = vpop.f32.mrb[0].mxu0
  %v1212 = vadd.f32 %v1142, %v1211
  %v1213 = vpop.f32.mrb[0].mxu0
  %1214 = vdwg.mxu0
  %v1215 = vmax.f32 %v1212, 0.0
  %1216 = vmatprep.subr.mxu0 0.0
  %1217 = vmatpush1.msra.mxu0 %v57
  %1218 = vmatprep.subr.mxu0 0.0
  %1219 = vmatpush1.msra.mxu0 %v58
  %1220 = vmatprep.subr.mxu0 0.0
  %1221 = vmatpush1.msra.mxu0 %v59
  %1222 = vmatprep.subr.mxu0 0.0
  %1223 = vmatpush1.msra.mxu0 %v60
  %1224 = vmatprep.subr.mxu0 0.0
  %1225 = vmatpush1.msra.mxu0 %v61
  %1226 = vmatprep.subr.mxu0 0.0
  %1227 = vmatpush1.msra.mxu0 %v62
  %1228 = vmatprep.subr.mxu0 0.0
  %1229 = vmatpush1.msra.mxu0 %v63
  %1230 = vmatprep.subr.mxu0 0.0
  %1231 = vmatpush1.msra.mxu0 %v64
  %1232 = vmatprep.subr.mxu0 0.0
  %1233 = vmatpush1.msra.mxu0 %v65
  %1234 = vmatprep.subr.mxu0 0.0
  %1235 = vmatpush1.msra.mxu0 %v66
  %1236 = vmatprep.subr.mxu0 0.0
  %1237 = vmatpush1.msra.mxu0 %v67
  %1238 = vmatprep.subr.mxu0 0.0
  %1239 = vmatpush1.msra.mxu0 %v68
  %1240 = vmatprep.subr.mxu0 0.0
  %1241 = vmatpush1.msra.mxu0 %v69
  %1242 = vmatprep.subr.mxu0 0.0
  %1243 = vmatpush1.msra.mxu0 %v70
  %1244 = vmatprep.subr.mxu0 0.0
  %1245 = vmatpush1.msra.mxu0 %v71
  %1246 = vmatprep.subr.mxu0 0.0
  %1247 = vmatpush1.msra.mxu0 %v72
  %1248 = vmatprep.subr.mxu0 0.0
  %1249 = vmatpush1.msra.mxu0 0.0
  %1250 = vmatprep.subr.mxu0 0.0
  %1251 = vmatpush1.msra.mxu0 0.0
  %1252 = vmatprep.subr.mxu0 0.0
  %1253 = vmatpush1.msra.mxu0 0.0
  %1254 = vmatprep.subr.mxu0 0.0
  %1255 = vmatpush1.msra.mxu0 0.0
  %1256 = vmatprep.subr.mxu0 0.0
  %1257 = vmatpush1.msra.mxu0 0.0
  %1258 = vmatprep.subr.mxu0 0.0
  %1259 = vmatpush1.msra.mxu0 0.0
  %1260 = vmatprep.subr.mxu0 0.0
  %1261 = vmatpush1.msra.mxu0 0.0
  %1262 = vmatprep.subr.mxu0 0.0
  %1263 = vmatpush1.msra.mxu0 0.0
  %1264 = vmatprep.subr.mxu0 0.0
  %1265 = vmatpush1.msra.mxu0 0.0
  %1266 = vmatprep.subr.mxu0 0.0
  %1267 = vmatpush1.msra.mxu0 0.0
  %1268 = vmatprep.subr.mxu0 0.0
  %1269 = vmatpush1.msra.mxu0 0.0
  %1270 = vmatprep.subr.mxu0 0.0
  %1271 = vmatpush1.msra.mxu0 0.0
  %1272 = vmatprep.subr.mxu0 0.0
  %1273 = vmatpush1.msra.mxu0 0.0
  %1274 = vmatprep.subr.mxu0 0.0
  %1275 = vmatpush1.msra.mxu0 0.0
  %1276 = vmatprep.subr.mxu0 0.0
  %1277 = vmatpush1.msra.mxu0 0.0
  %1278 = vmatprep.subr.mxu0 0.0
  %1279 = vmatpush1.msra.mxu0 0.0
  %1280 = vmatprep.mubr.f32.mxu0 0.0
  %1281 = vmatmul.mubr.f32.gmra.mrb[0].mxu0 %v1215
  %v1282 = vpop.f32.mrb[0].mxu0
  %v1283 = vadd.f32 %v426, %v1282
  %v1284 = vpop.f32.mrb[0].mxu0
  %1285 = vdwg.mxu0
  %v1286 = vmax.f32 %v1283, 0.0
  %s1287 = scalar_lea.vmem %s6, 32
  %v1288 = vld [vmem:[%s1287] sm:$0xff]
  %v1289 = vld [vmem:[%s1287 + $0x8] sm:$0xff]
  %v1291 = vsel %vm822, %v1286, 0
  %1293 = vmatprep.subr.mxu0 0.0
  %1294 = vmatpush1.msra.mxu0 %v1288
  %1295 = vmatprep.subr.mxu0 0.0
  %1296 = vmatpush1.msra.mxu0 %v1289
  %1297 = vmatprep.subr.mxu0 0.0
  %1298 = vmatpush1.msra.mxu0 0.0
  %1299 = vmatprep.subr.mxu0 0.0
  %1300 = vmatpush1.msra.mxu0 0.0
  %1301 = vmatprep.subr.mxu0 0.0
  %1302 = vmatpush1.msra.mxu0 0.0
  %1303 = vmatprep.subr.mxu0 0.0
  %1304 = vmatpush1.msra.mxu0 0.0
  %1305 = vmatprep.subr.mxu0 0.0
  %1306 = vmatpush1.msra.mxu0 0.0
  %1307 = vmatprep.subr.mxu0 0.0
  %1308 = vmatpush1.msra.mxu0 0.0
  %1309 = vmatprep.subr.mxu0 0.0
  %1310 = vmatpush1.msra.mxu0 0.0
  %1311 = vmatprep.subr.mxu0 0.0
  %1312 = vmatpush1.msra.mxu0 0.0
  %1313 = vmatprep.subr.mxu0 0.0
  %1314 = vmatpush1.msra.mxu0 0.0
  %1315 = vmatprep.subr.mxu0 0.0
  %1316 = vmatpush1.msra.mxu0 0.0
  %1317 = vmatprep.subr.mxu0 0.0
  %1318 = vmatpush1.msra.mxu0 0.0
  %1319 = vmatprep.subr.mxu0 0.0
  %1320 = vmatpush1.msra.mxu0 0.0
  %1321 = vmatprep.subr.mxu0 0.0
  %1322 = vmatpush1.msra.mxu0 0.0
  %1323 = vmatprep.subr.mxu0 0.0
  %1324 = vmatpush1.msra.mxu0 0.0
  %1325 = vmatprep.subr.mxu0 0.0
  %1326 = vmatpush1.msra.mxu0 0.0
  %1327 = vmatprep.subr.mxu0 0.0
  %1328 = vmatpush1.msra.mxu0 0.0
  %1329 = vmatprep.subr.mxu0 0.0
  %1330 = vmatpush1.msra.mxu0 0.0
  %1331 = vmatprep.subr.mxu0 0.0
  %1332 = vmatpush1.msra.mxu0 0.0
  %1333 = vmatprep.subr.mxu0 0.0
  %1334 = vmatpush1.msra.mxu0 0.0
  %1335 = vmatprep.subr.mxu0 0.0
  %1336 = vmatpush1.msra.mxu0 0.0
  %1337 = vmatprep.subr.mxu0 0.0
  %1338 = vmatpush1.msra.mxu0 0.0
  %1339 = vmatprep.subr.mxu0 0.0
  %1340 = vmatpush1.msra.mxu0 0.0
  %1341 = vmatprep.subr.mxu0 0.0
  %1342 = vmatpush1.msra.mxu0 0.0
  %1343 = vmatprep.subr.mxu0 0.0
  %1344 = vmatpush1.msra.mxu0 0.0
  %1345 = vmatprep.subr.mxu0 0.0
  %1346 = vmatpush1.msra.mxu0 0.0
  %1347 = vmatprep.subr.mxu0 0.0
  %1348 = vmatpush1.msra.mxu0 0.0
  %1349 = vmatprep.subr.mxu0 0.0
  %1350 = vmatpush1.msra.mxu0 0.0
  %1351 = vmatprep.subr.mxu0 0.0
  %1352 = vmatpush1.msra.mxu0 0.0
  %1353 = vmatprep.subr.mxu0 0.0
  %1354 = vmatpush1.msra.mxu0 0.0
  %1355 = vmatprep.subr.mxu0 0.0
  %1356 = vmatpush1.msra.mxu0 0.0
  %1357 = vmatprep.mubr.f32.mxu0 0.0
  %1358 = vmatmul.mubr.f32.gmra.mrb[0].mxu0 %v1291
  %v1359 = vpop.f32.mrb[0].mxu0
  %v1360 = vadd.f32 0.0, %v1359
  %v1361 = vpop.f32.mrb[0].mxu0
  %1362 = vdwg.mxu0
  %v1363 = vadd.f32 %v966, %v1360
  %s1364 = scalar_lea.vmem %s0, 36
  %v1365 = vld [vmem:[%s1364] sm:$0xff]
  %v1366 = vld [vmem:[%s1364 + $0x8] sm:$0xf]
  %v1369 = vcombine.high %v1365, %v1365
  %v1371 = vunpack.c.l.s4 1983009808
  %v1372 = vunpack.c.0.s8 %v1371
  %v1373 = vlaneseq
  %v1374 = vshrl.u32 %v1373, 7
  %v1375 = vsub.s32 %v1372, %v1374
  %v1376 = vrot.slane %v1365, %v1375
  %v1378 = vunpack.c.l.s4 1983009808
  %v1379 = vunpack.c.0.s8 %v1378
  %v1380 = vlaneseq
  %v1381 = vshrl.u32 %v1380, 7
  %v1382 = vsub.s32 %v1379, %v1381
  %v1383 = vrot.slane %v1369, %v1382
  %v1384 = vcombine.high %v1376, %v1376
  %v1385 = vcombine.high %v1383, %v1383
  %v1387 = vunpack.c.l.s4 1983009808
  %v1388 = vunpack.c.0.s8 %v1387
  %v1389 = vlaneseq
  %v1390 = vshrl.u32 %v1389, 7
  %v1391 = vsub.s32 %v1388, %v1390
  %v1392 = vrot.slane %v1366, %v1391
  %v1393 = vcombine.high %v1392, %v1392
  %1400 = vmatprep.subr.mxu0 0.0
  %1401 = vmatpush1.msra.mxu0 %v76
  %1402 = vmatprep.subr.mxu0 0.0
  %1403 = vmatpush1.msra.mxu0 %v77
  %1404 = vmatprep.subr.mxu0 0.0
  %1405 = vmatpush1.msra.mxu0 %v78
  %1406 = vmatprep.subr.mxu0 0.0
  %1407 = vmatpush1.msra.mxu0 %v79
  %1408 = vmatprep.subr.mxu0 0.0
  %1409 = vmatpush1.msra.mxu0 %v80
  %1410 = vmatprep.subr.mxu0 0.0
  %1411 = vmatpush1.msra.mxu0 %v81
  %1412 = vmatprep.subr.mxu0 0.0
  %1413 = vmatpush1.msra.mxu0 %v82
  %1414 = vmatprep.subr.mxu0 0.0
  %1415 = vmatpush1.msra.mxu0 %v83
  %1416 = vmatprep.subr.mxu0 0.0
  %1417 = vmatpush1.msra.mxu0 %v84
  %1418 = vmatprep.subr.mxu0 0.0
  %1419 = vmatpush1.msra.mxu0 %v85
  %1420 = vmatprep.subr.mxu0 0.0
  %1421 = vmatpush1.msra.mxu0 %v86
  %1422 = vmatprep.subr.mxu0 0.0
  %1423 = vmatpush1.msra.mxu0 %v87
  %1424 = vmatprep.subr.mxu0 0.0
  %1425 = vmatpush1.msra.mxu0 %v88
  %1426 = vmatprep.subr.mxu0 0.0
  %1427 = vmatpush1.msra.mxu0 %v89
  %1428 = vmatprep.subr.mxu0 0.0
  %1429 = vmatpush1.msra.mxu0 %v90
  %1430 = vmatprep.subr.mxu0 0.0
  %1431 = vmatpush1.msra.mxu0 %v91
  %1432 = vmatprep.subr.mxu0 0.0
  %1433 = vmatpush1.msra.mxu0 %v92
  %1434 = vmatprep.subr.mxu0 0.0
  %1435 = vmatpush1.msra.mxu0 %v93
  %1436 = vmatprep.subr.mxu0 0.0
  %1437 = vmatpush1.msra.mxu0 %v94
  %1438 = vmatprep.subr.mxu0 0.0
  %1439 = vmatpush1.msra.mxu0 %v95
  %1440 = vmatprep.subr.mxu0 0.0
  %1441 = vmatpush1.msra.mxu0 %v96
  %1442 = vmatprep.subr.mxu0 0.0
  %1443 = vmatpush1.msra.mxu0 %v97
  %1444 = vmatprep.subr.mxu0 0.0
  %1445 = vmatpush1.msra.mxu0 %v98
  %1446 = vmatprep.subr.mxu0 0.0
  %1447 = vmatpush1.msra.mxu0 %v99
  %1448 = vmatprep.subr.mxu0 0.0
  %1449 = vmatpush1.msra.mxu0 %v100
  %1450 = vmatprep.subr.mxu0 0.0
  %1451 = vmatpush1.msra.mxu0 %v101
  %1452 = vmatprep.subr.mxu0 0.0
  %1453 = vmatpush1.msra.mxu0 %v102
  %1454 = vmatprep.subr.mxu0 0.0
  %1455 = vmatpush1.msra.mxu0 %v103
  %1456 = vmatprep.subr.mxu0 0.0
  %1457 = vmatpush1.msra.mxu0 %v104
  %1458 = vmatprep.subr.mxu0 0.0
  %1459 = vmatpush1.msra.mxu0 %v105
  %1460 = vmatprep.subr.mxu0 0.0
  %1461 = vmatpush1.msra.mxu0 %v106
  %1462 = vmatprep.subr.mxu0 0.0
  %1463 = vmatpush1.msra.mxu0 %v107
  %1464 = vmatprep.mubr.f32.mxu0 %v1384
  %1465 = vmatmul.mubr.f32.gmra.mrb[0].mxu0 %v1376
  %v1466 = vpop.f32.mrb[0].mxu0
  %v1467 = vadd.f32 %v176, %v1466
  %v1468 = vpop.f32.mrb[0].mxu0
  %1469 = vdwg.mxu0
  %1470 = vmatprep.subr.mxu0 0.0
  %1471 = vmatpush1.msra.mxu0 %v108
  %1472 = vmatprep.subr.mxu0 0.0
  %1473 = vmatpush1.msra.mxu0 %v109
  %1474 = vmatprep.subr.mxu0 0.0
  %1475 = vmatpush1.msra.mxu0 %v110
  %1476 = vmatprep.subr.mxu0 0.0
  %1477 = vmatpush1.msra.mxu0 %v111
  %1478 = vmatprep.subr.mxu0 0.0
  %1479 = vmatpush1.msra.mxu0 %v112
  %1480 = vmatprep.subr.mxu0 0.0
  %1481 = vmatpush1.msra.mxu0 %v113
  %1482 = vmatprep.subr.mxu0 0.0
  %1483 = vmatpush1.msra.mxu0 %v114
  %1484 = vmatprep.subr.mxu0 0.0
  %1485 = vmatpush1.msra.mxu0 %v115
  %1486 = vmatprep.subr.mxu0 0.0
  %1487 = vmatpush1.msra.mxu0 %v116
  %1488 = vmatprep.subr.mxu0 0.0
  %1489 = vmatpush1.msra.mxu0 %v117
  %1490 = vmatprep.subr.mxu0 0.0
  %1491 = vmatpush1.msra.mxu0 %v118
  %1492 = vmatprep.subr.mxu0 0.0
  %1493 = vmatpush1.msra.mxu0 %v119
  %1494 = vmatprep.subr.mxu0 0.0
  %1495 = vmatpush1.msra.mxu0 %v120
  %1496 = vmatprep.subr.mxu0 0.0
  %1497 = vmatpush1.msra.mxu0 %v121
  %1498 = vmatprep.subr.mxu0 0.0
  %1499 = vmatpush1.msra.mxu0 %v122
  %1500 = vmatprep.subr.mxu0 0.0
  %1501 = vmatpush1.msra.mxu0 %v123
  %1502 = vmatprep.subr.mxu0 0.0
  %1503 = vmatpush1.msra.mxu0 %v124
  %1504 = vmatprep.subr.mxu0 0.0
  %1505 = vmatpush1.msra.mxu0 %v125
  %1506 = vmatprep.subr.mxu0 0.0
  %1507 = vmatpush1.msra.mxu0 %v126
  %1508 = vmatprep.subr.mxu0 0.0
  %1509 = vmatpush1.msra.mxu0 %v127
  %1510 = vmatprep.subr.mxu0 0.0
  %1511 = vmatpush1.msra.mxu0 %v128
  %1512 = vmatprep.subr.mxu0 0.0
  %1513 = vmatpush1.msra.mxu0 %v129
  %1514 = vmatprep.subr.mxu0 0.0
  %1515 = vmatpush1.msra.mxu0 %v130
  %1516 = vmatprep.subr.mxu0 0.0
  %1517 = vmatpush1.msra.mxu0 %v131
  %1518 = vmatprep.subr.mxu0 0.0
  %1519 = vmatpush1.msra.mxu0 %v132
  %1520 = vmatprep.subr.mxu0 0.0
  %1521 = vmatpush1.msra.mxu0 %v133
  %1522 = vmatprep.subr.mxu0 0.0
  %1523 = vmatpush1.msra.mxu0 %v134
  %1524 = vmatprep.subr.mxu0 0.0
  %1525 = vmatpush1.msra.mxu0 %v135
  %1526 = vmatprep.subr.mxu0 0.0
  %1527 = vmatpush1.msra.mxu0 %v136
  %1528 = vmatprep.subr.mxu0 0.0
  %1529 = vmatpush1.msra.mxu0 %v137
  %1530 = vmatprep.subr.mxu0 0.0
  %1531 = vmatpush1.msra.mxu0 %v138
  %1532 = vmatprep.subr.mxu0 0.0
  %1533 = vmatpush1.msra.mxu0 %v139
  %1534 = vmatprep.mubr.f32.mxu0 %v1385
  %1535 = vmatmul.mubr.f32.gmra.mrb[0].mxu0 %v1383
  %v1536 = vpop.f32.mrb[0].mxu0
  %v1537 = vadd.f32 %v1467, %v1536
  %v1538 = vpop.f32.mrb[0].mxu0
  %1539 = vdwg.mxu0
  %1540 = vmatprep.subr.mxu0 0.0
  %1541 = vmatpush1.msra.mxu0 %v140
  %1542 = vmatprep.subr.mxu0 0.0
  %1543 = vmatpush1.msra.mxu0 %v141
  %1544 = vmatprep.subr.mxu0 0.0
  %1545 = vmatpush1.msra.mxu0 %v142
  %1546 = vmatprep.subr.mxu0 0.0
  %1547 = vmatpush1.msra.mxu0 %v143
  %1548 = vmatprep.subr.mxu0 0.0
  %1549 = vmatpush1.msra.mxu0 %v144
  %1550 = vmatprep.subr.mxu0 0.0
  %1551 = vmatpush1.msra.mxu0 %v145
  %1552 = vmatprep.subr.mxu0 0.0
  %1553 = vmatpush1.msra.mxu0 %v146
  %1554 = vmatprep.subr.mxu0 0.0
  %1555 = vmatpush1.msra.mxu0 %v147
  %1556 = vmatprep.subr.mxu0 0.0
  %1557 = vmatpush1.msra.mxu0 %v148
  %1558 = vmatprep.subr.mxu0 0.0
  %1559 = vmatpush1.msra.mxu0 %v149
  %1560 = vmatprep.subr.mxu0 0.0
  %1561 = vmatpush1.msra.mxu0 %v150
  %1562 = vmatprep.subr.mxu0 0.0
  %1563 = vmatpush1.msra.mxu0 %v151
  %1564 = vmatprep.subr.mxu0 0.0
  %1565 = vmatpush1.msra.mxu0 %v152
  %1566 = vmatprep.subr.mxu0 0.0
  %1567 = vmatpush1.msra.mxu0 %v153
  %1568 = vmatprep.subr.mxu0 0.0
  %1569 = vmatpush1.msra.mxu0 %v154
  %1570 = vmatprep.subr.mxu0 0.0
  %1571 = vmatpush1.msra.mxu0 %v155
  %1572 = vmatprep.subr.mxu0 0.0
  %1573 = vmatpush1.msra.mxu0 %v156
  %1574 = vmatprep.subr.mxu0 0.0
  %1575 = vmatpush1.msra.mxu0 %v157
  %1576 = vmatprep.subr.mxu0 0.0
  %1577 = vmatpush1.msra.mxu0 %v158
  %1578 = vmatprep.subr.mxu0 0.0
  %1579 = vmatpush1.msra.mxu0 %v159
  %1580 = vmatprep.subr.mxu0 0.0
  %1581 = vmatpush1.msra.mxu0 %v160
  %1582 = vmatprep.subr.mxu0 0.0
  %1583 = vmatpush1.msra.mxu0 %v161
  %1584 = vmatprep.subr.mxu0 0.0
  %1585 = vmatpush1.msra.mxu0 %v162
  %1586 = vmatprep.subr.mxu0 0.0
  %1587 = vmatpush1.msra.mxu0 %v163
  %1588 = vmatprep.subr.mxu0 0.0
  %1589 = vmatpush1.msra.mxu0 %v164
  %1590 = vmatprep.subr.mxu0 0.0
  %1591 = vmatpush1.msra.mxu0 %v165
  %1592 = vmatprep.subr.mxu0 0.0
  %1593 = vmatpush1.msra.mxu0 %v166
  %1594 = vmatprep.subr.mxu0 0.0
  %1595 = vmatpush1.msra.mxu0 %v167
  %1596 = vmatprep.subr.mxu0 0.0
  %1597 = vmatpush1.msra.mxu0 %v168
  %1598 = vmatprep.subr.mxu0 0.0
  %1599 = vmatpush1.msra.mxu0 %v169
  %1600 = vmatprep.subr.mxu0 0.0
  %1601 = vmatpush1.msra.mxu0 %v170
  %1602 = vmatprep.subr.mxu0 0.0
  %1603 = vmatpush1.msra.mxu0 %v171
  %1604 = vmatprep.mubr.f32.mxu0 %v1393
  %1605 = vmatmul.mubr.f32.gmra.mrb[0].mxu0 %v1392
  %v1606 = vpop.f32.mrb[0].mxu0
  %v1607 = vadd.f32 %v1537, %v1606
  %v1608 = vpop.f32.mrb[0].mxu0
  %1609 = vdwg.mxu0
  %v1610 = vmax.f32 %v1607, 0.0
  %1611 = vmatprep.subr.mxu0 0.0
  %1612 = vmatpush1.msra.mxu0 %v57
  %1613 = vmatprep.subr.mxu0 0.0
  %1614 = vmatpush1.msra.mxu0 %v58
  %1615 = vmatprep.subr.mxu0 0.0
  %1616 = vmatpush1.msra.mxu0 %v59
  %1617 = vmatprep.subr.mxu0 0.0
  %1618 = vmatpush1.msra.mxu0 %v60
  %1619 = vmatprep.subr.mxu0 0.0
  %1620 = vmatpush1.msra.mxu0 %v61
  %1621 = vmatprep.subr.mxu0 0.0
  %1622 = vmatpush1.msra.mxu0 %v62
  %1623 = vmatprep.subr.mxu0 0.0
  %1624 = vmatpush1.msra.mxu0 %v63
  %1625 = vmatprep.subr.mxu0 0.0
  %1626 = vmatpush1.msra.mxu0 %v64
  %1627 = vmatprep.subr.mxu0 0.0
  %1628 = vmatpush1.msra.mxu0 %v65
  %1629 = vmatprep.subr.mxu0 0.0
  %1630 = vmatpush1.msra.mxu0 %v66
  %1631 = vmatprep.subr.mxu0 0.0
  %1632 = vmatpush1.msra.mxu0 %v67
  %1633 = vmatprep.subr.mxu0 0.0
  %1634 = vmatpush1.msra.mxu0 %v68
  %1635 = vmatprep.subr.mxu0 0.0
  %1636 = vmatpush1.msra.mxu0 %v69
  %1637 = vmatprep.subr.mxu0 0.0
  %1638 = vmatpush1.msra.mxu0 %v70
  %1639 = vmatprep.subr.mxu0 0.0
  %1640 = vmatpush1.msra.mxu0 %v71
  %1641 = vmatprep.subr.mxu0 0.0
  %1642 = vmatpush1.msra.mxu0 %v72
  %1643 = vmatprep.subr.mxu0 0.0
  %1644 = vmatpush1.msra.mxu0 0.0
  %1645 = vmatprep.subr.mxu0 0.0
  %1646 = vmatpush1.msra.mxu0 0.0
  %1647 = vmatprep.subr.mxu0 0.0
  %1648 = vmatpush1.msra.mxu0 0.0
  %1649 = vmatprep.subr.mxu0 0.0
  %1650 = vmatpush1.msra.mxu0 0.0
  %1651 = vmatprep.subr.mxu0 0.0
  %1652 = vmatpush1.msra.mxu0 0.0
  %1653 = vmatprep.subr.mxu0 0.0
  %1654 = vmatpush1.msra.mxu0 0.0
  %1655 = vmatprep.subr.mxu0 0.0
  %1656 = vmatpush1.msra.mxu0 0.0
  %1657 = vmatprep.subr.mxu0 0.0
  %1658 = vmatpush1.msra.mxu0 0.0
  %1659 = vmatprep.subr.mxu0 0.0
  %1660 = vmatpush1.msra.mxu0 0.0
  %1661 = vmatprep.subr.mxu0 0.0
  %1662 = vmatpush1.msra.mxu0 0.0
  %1663 = vmatprep.subr.mxu0 0.0
  %1664 = vmatpush1.msra.mxu0 0.0
  %1665 = vmatprep.subr.mxu0 0.0
  %1666 = vmatpush1.msra.mxu0 0.0
  %1667 = vmatprep.subr.mxu0 0.0
  %1668 = vmatpush1.msra.mxu0 0.0
  %1669 = vmatprep.subr.mxu0 0.0
  %1670 = vmatpush1.msra.mxu0 0.0
  %1671 = vmatprep.subr.mxu0 0.0
  %1672 = vmatpush1.msra.mxu0 0.0
  %1673 = vmatprep.subr.mxu0 0.0
  %1674 = vmatpush1.msra.mxu0 0.0
  %1675 = vmatprep.mubr.f32.mxu0 0.0
  %1676 = vmatmul.mubr.f32.gmra.mrb[0].mxu0 %v1610
  %v1677 = vpop.f32.mrb[0].mxu0
  %v1678 = vadd.f32 %v426, %v1677
  %v1679 = vpop.f32.mrb[0].mxu0
  %1680 = vdwg.mxu0
  %v1681 = vmax.f32 %v1678, 0.0
  %s1682 = scalar_lea.vmem %s6, 48
  %v1683 = vld [vmem:[%s1682] sm:$0xff]
  %v1684 = vld [vmem:[%s1682 + $0x8] sm:$0xff]
  %v1686 = vsel %vm822, %v1681, 0
  %1688 = vmatprep.subr.mxu0 0.0
  %1689 = vmatpush1.msra.mxu0 %v1683
  %1690 = vmatprep.subr.mxu0 0.0
  %1691 = vmatpush1.msra.mxu0 %v1684
  %1692 = vmatprep.subr.mxu0 0.0
  %1693 = vmatpush1.msra.mxu0 0.0
  %1694 = vmatprep.subr.mxu0 0.0
  %1695 = vmatpush1.msra.mxu0 0.0
  %1696 = vmatprep.subr.mxu0 0.0
  %1697 = vmatpush1.msra.mxu0 0.0
  %1698 = vmatprep.subr.mxu0 0.0
  %1699 = vmatpush1.msra.mxu0 0.0
  %1700 = vmatprep.subr.mxu0 0.0
  %1701 = vmatpush1.msra.mxu0 0.0
  %1702 = vmatprep.subr.mxu0 0.0
  %1703 = vmatpush1.msra.mxu0 0.0
  %1704 = vmatprep.subr.mxu0 0.0
  %1705 = vmatpush1.msra.mxu0 0.0
  %1706 = vmatprep.subr.mxu0 0.0
  %1707 = vmatpush1.msra.mxu0 0.0
  %1708 = vmatprep.subr.mxu0 0.0
  %1709 = vmatpush1.msra.mxu0 0.0
  %1710 = vmatprep.subr.mxu0 0.0
  %1711 = vmatpush1.msra.mxu0 0.0
  %1712 = vmatprep.subr.mxu0 0.0
  %1713 = vmatpush1.msra.mxu0 0.0
  %1714 = vmatprep.subr.mxu0 0.0
  %1715 = vmatpush1.msra.mxu0 0.0
  %1716 = vmatprep.subr.mxu0 0.0
  %1717 = vmatpush1.msra.mxu0 0.0
  %1718 = vmatprep.subr.mxu0 0.0
  %1719 = vmatpush1.msra.mxu0 0.0
  %1720 = vmatprep.subr.mxu0 0.0
  %1721 = vmatpush1.msra.mxu0 0.0
  %1722 = vmatprep.subr.mxu0 0.0
  %1723 = vmatpush1.msra.mxu0 0.0
  %1724 = vmatprep.subr.mxu0 0.0
  %1725 = vmatpush1.msra.mxu0 0.0
  %1726 = vmatprep.subr.mxu0 0.0
  %1727 = vmatpush1.msra.mxu0 0.0
  %1728 = vmatprep.subr.mxu0 0.0
  %1729 = vmatpush1.msra.mxu0 0.0
  %1730 = vmatprep.subr.mxu0 0.0
  %1731 = vmatpush1.msra.mxu0 0.0
  %1732 = vmatprep.subr.mxu0 0.0
  %1733 = vmatpush1.msra.mxu0 0.0
  %1734 = vmatprep.subr.mxu0 0.0
  %1735 = vmatpush1.msra.mxu0 0.0
  %1736 = vmatprep.subr.mxu0 0.0
  %1737 = vmatpush1.msra.mxu0 0.0
  %1738 = vmatprep.subr.mxu0 0.0
  %1739 = vmatpush1.msra.mxu0 0.0
  %1740 = vmatprep.subr.mxu0 0.0
  %1741 = vmatpush1.msra.mxu0 0.0
  %1742 = vmatprep.subr.mxu0 0.0
  %1743 = vmatpush1.msra.mxu0 0.0
  %1744 = vmatprep.subr.mxu0 0.0
  %1745 = vmatpush1.msra.mxu0 0.0
  %1746 = vmatprep.subr.mxu0 0.0
  %1747 = vmatpush1.msra.mxu0 0.0
  %1748 = vmatprep.subr.mxu0 0.0
  %1749 = vmatpush1.msra.mxu0 0.0
  %1750 = vmatprep.subr.mxu0 0.0
  %1751 = vmatpush1.msra.mxu0 0.0
  %1752 = vmatprep.mubr.f32.mxu0 0.0
  %1753 = vmatmul.mubr.f32.gmra.mrb[0].mxu0 %v1686
  %v1754 = vpop.f32.mrb[0].mxu0
  %v1755 = vadd.f32 0.0, %v1754
  %v1756 = vpop.f32.mrb[0].mxu0
  %1757 = vdwg.mxu0
  %v1758 = vadd.f32 %v1363, %v1755
  %s1759 = scalar_lea.vmem %s0, 48
  %v1760 = vld [vmem:[%s1759] sm:$0xff]
  %v1761 = vld [vmem:[%s1759 + $0x8] sm:$0xf]
  %v1764 = vcombine.high %v1760, %v1760
  %v1766 = vunpack.c.l.s4 1983009808
  %v1767 = vunpack.c.0.s8 %v1766
  %v1768 = vlaneseq
  %v1769 = vshrl.u32 %v1768, 7
  %v1770 = vsub.s32 %v1767, %v1769
  %v1771 = vrot.slane %v1760, %v1770
  %v1773 = vunpack.c.l.s4 1983009808
  %v1774 = vunpack.c.0.s8 %v1773
  %v1775 = vlaneseq
  %v1776 = vshrl.u32 %v1775, 7
  %v1777 = vsub.s32 %v1774, %v1776
  %v1778 = vrot.slane %v1764, %v1777
  %v1779 = vcombine.high %v1771, %v1771
  %v1780 = vcombine.high %v1778, %v1778
  %v1782 = vunpack.c.l.s4 1983009808
  %v1783 = vunpack.c.0.s8 %v1782
  %v1784 = vlaneseq
  %v1785 = vshrl.u32 %v1784, 7
  %v1786 = vsub.s32 %v1783, %v1785
  %v1787 = vrot.slane %v1761, %v1786
  %v1788 = vcombine.high %v1787, %v1787
  %1795 = vmatprep.subr.mxu0 0.0
  %1796 = vmatpush1.msra.mxu0 %v76
  %1797 = vmatprep.subr.mxu0 0.0
  %1798 = vmatpush1.msra.mxu0 %v77
  %1799 = vmatprep.subr.mxu0 0.0
  %1800 = vmatpush1.msra.mxu0 %v78
  %1801 = vmatprep.subr.mxu0 0.0
  %1802 = vmatpush1.msra.mxu0 %v79
  %1803 = vmatprep.subr.mxu0 0.0
  %1804 = vmatpush1.msra.mxu0 %v80
  %1805 = vmatprep.subr.mxu0 0.0
  %1806 = vmatpush1.msra.mxu0 %v81
  %1807 = vmatprep.subr.mxu0 0.0
  %1808 = vmatpush1.msra.mxu0 %v82
  %1809 = vmatprep.subr.mxu0 0.0
  %1810 = vmatpush1.msra.mxu0 %v83
  %1811 = vmatprep.subr.mxu0 0.0
  %1812 = vmatpush1.msra.mxu0 %v84
  %1813 = vmatprep.subr.mxu0 0.0
  %1814 = vmatpush1.msra.mxu0 %v85
  %1815 = vmatprep.subr.mxu0 0.0
  %1816 = vmatpush1.msra.mxu0 %v86
  %1817 = vmatprep.subr.mxu0 0.0
  %1818 = vmatpush1.msra.mxu0 %v87
  %1819 = vmatprep.subr.mxu0 0.0
  %1820 = vmatpush1.msra.mxu0 %v88
  %1821 = vmatprep.subr.mxu0 0.0
  %1822 = vmatpush1.msra.mxu0 %v89
  %1823 = vmatprep.subr.mxu0 0.0
  %1824 = vmatpush1.msra.mxu0 %v90
  %1825 = vmatprep.subr.mxu0 0.0
  %1826 = vmatpush1.msra.mxu0 %v91
  %1827 = vmatprep.subr.mxu0 0.0
  %1828 = vmatpush1.msra.mxu0 %v92
  %1829 = vmatprep.subr.mxu0 0.0
  %1830 = vmatpush1.msra.mxu0 %v93
  %1831 = vmatprep.subr.mxu0 0.0
  %1832 = vmatpush1.msra.mxu0 %v94
  %1833 = vmatprep.subr.mxu0 0.0
  %1834 = vmatpush1.msra.mxu0 %v95
  %1835 = vmatprep.subr.mxu0 0.0
  %1836 = vmatpush1.msra.mxu0 %v96
  %1837 = vmatprep.subr.mxu0 0.0
  %1838 = vmatpush1.msra.mxu0 %v97
  %1839 = vmatprep.subr.mxu0 0.0
  %1840 = vmatpush1.msra.mxu0 %v98
  %1841 = vmatprep.subr.mxu0 0.0
  %1842 = vmatpush1.msra.mxu0 %v99
  %1843 = vmatprep.subr.mxu0 0.0
  %1844 = vmatpush1.msra.mxu0 %v100
  %1845 = vmatprep.subr.mxu0 0.0
  %1846 = vmatpush1.msra.mxu0 %v101
  %1847 = vmatprep.subr.mxu0 0.0
  %1848 = vmatpush1.msra.mxu0 %v102
  %1849 = vmatprep.subr.mxu0 0.0
  %1850 = vmatpush1.msra.mxu0 %v103
  %1851 = vmatprep.subr.mxu0 0.0
  %1852 = vmatpush1.msra.mxu0 %v104
  %1853 = vmatprep.subr.mxu0 0.0
  %1854 = vmatpush1.msra.mxu0 %v105
  %1855 = vmatprep.subr.mxu0 0.0
  %1856 = vmatpush1.msra.mxu0 %v106
  %1857 = vmatprep.subr.mxu0 0.0
  %1858 = vmatpush1.msra.mxu0 %v107
  %1859 = vmatprep.mubr.f32.mxu0 %v1779
  %1860 = vmatmul.mubr.f32.gmra.mrb[0].mxu0 %v1771
  %v1861 = vpop.f32.mrb[0].mxu0
  %v1862 = vadd.f32 %v176, %v1861
  %v1863 = vpop.f32.mrb[0].mxu0
  %1864 = vdwg.mxu0
  %1865 = vmatprep.subr.mxu0 0.0
  %1866 = vmatpush1.msra.mxu0 %v108
  %1867 = vmatprep.subr.mxu0 0.0
  %1868 = vmatpush1.msra.mxu0 %v109
  %1869 = vmatprep.subr.mxu0 0.0
  %1870 = vmatpush1.msra.mxu0 %v110
  %1871 = vmatprep.subr.mxu0 0.0
  %1872 = vmatpush1.msra.mxu0 %v111
  %1873 = vmatprep.subr.mxu0 0.0
  %1874 = vmatpush1.msra.mxu0 %v112
  %1875 = vmatprep.subr.mxu0 0.0
  %1876 = vmatpush1.msra.mxu0 %v113
  %1877 = vmatprep.subr.mxu0 0.0
  %1878 = vmatpush1.msra.mxu0 %v114
  %1879 = vmatprep.subr.mxu0 0.0
  %1880 = vmatpush1.msra.mxu0 %v115
  %1881 = vmatprep.subr.mxu0 0.0
  %1882 = vmatpush1.msra.mxu0 %v116
  %1883 = vmatprep.subr.mxu0 0.0
  %1884 = vmatpush1.msra.mxu0 %v117
  %1885 = vmatprep.subr.mxu0 0.0
  %1886 = vmatpush1.msra.mxu0 %v118
  %1887 = vmatprep.subr.mxu0 0.0
  %1888 = vmatpush1.msra.mxu0 %v119
  %1889 = vmatprep.subr.mxu0 0.0
  %1890 = vmatpush1.msra.mxu0 %v120
  %1891 = vmatprep.subr.mxu0 0.0
  %1892 = vmatpush1.msra.mxu0 %v121
  %1893 = vmatprep.subr.mxu0 0.0
  %1894 = vmatpush1.msra.mxu0 %v122
  %1895 = vmatprep.subr.mxu0 0.0
  %1896 = vmatpush1.msra.mxu0 %v123
  %1897 = vmatprep.subr.mxu0 0.0
  %1898 = vmatpush1.msra.mxu0 %v124
  %1899 = vmatprep.subr.mxu0 0.0
  %1900 = vmatpush1.msra.mxu0 %v125
  %1901 = vmatprep.subr.mxu0 0.0
  %1902 = vmatpush1.msra.mxu0 %v126
  %1903 = vmatprep.subr.mxu0 0.0
  %1904 = vmatpush1.msra.mxu0 %v127
  %1905 = vmatprep.subr.mxu0 0.0
  %1906 = vmatpush1.msra.mxu0 %v128
  %1907 = vmatprep.subr.mxu0 0.0
  %1908 = vmatpush1.msra.mxu0 %v129
  %1909 = vmatprep.subr.mxu0 0.0
  %1910 = vmatpush1.msra.mxu0 %v130
  %1911 = vmatprep.subr.mxu0 0.0
  %1912 = vmatpush1.msra.mxu0 %v131
  %1913 = vmatprep.subr.mxu0 0.0
  %1914 = vmatpush1.msra.mxu0 %v132
  %1915 = vmatprep.subr.mxu0 0.0
  %1916 = vmatpush1.msra.mxu0 %v133
  %1917 = vmatprep.subr.mxu0 0.0
  %1918 = vmatpush1.msra.mxu0 %v134
  %1919 = vmatprep.subr.mxu0 0.0
  %1920 = vmatpush1.msra.mxu0 %v135
  %1921 = vmatprep.subr.mxu0 0.0
  %1922 = vmatpush1.msra.mxu0 %v136
  %1923 = vmatprep.subr.mxu0 0.0
  %1924 = vmatpush1.msra.mxu0 %v137
  %1925 = vmatprep.subr.mxu0 0.0
  %1926 = vmatpush1.msra.mxu0 %v138
  %1927 = vmatprep.subr.mxu0 0.0
  %1928 = vmatpush1.msra.mxu0 %v139
  %1929 = vmatprep.mubr.f32.mxu0 %v1780
  %1930 = vmatmul.mubr.f32.gmra.mrb[0].mxu0 %v1778
  %v1931 = vpop.f32.mrb[0].mxu0
  %v1932 = vadd.f32 %v1862, %v1931
  %v1933 = vpop.f32.mrb[0].mxu0
  %1934 = vdwg.mxu0
  %1935 = vmatprep.subr.mxu0 0.0
  %1936 = vmatpush1.msra.mxu0 %v140
  %1937 = vmatprep.subr.mxu0 0.0
  %1938 = vmatpush1.msra.mxu0 %v141
  %1939 = vmatprep.subr.mxu0 0.0
  %1940 = vmatpush1.msra.mxu0 %v142
  %1941 = vmatprep.subr.mxu0 0.0
  %1942 = vmatpush1.msra.mxu0 %v143
  %1943 = vmatprep.subr.mxu0 0.0
  %1944 = vmatpush1.msra.mxu0 %v144
  %1945 = vmatprep.subr.mxu0 0.0
  %1946 = vmatpush1.msra.mxu0 %v145
  %1947 = vmatprep.subr.mxu0 0.0
  %1948 = vmatpush1.msra.mxu0 %v146
  %1949 = vmatprep.subr.mxu0 0.0
  %1950 = vmatpush1.msra.mxu0 %v147
  %1951 = vmatprep.subr.mxu0 0.0
  %1952 = vmatpush1.msra.mxu0 %v148
  %1953 = vmatprep.subr.mxu0 0.0
  %1954 = vmatpush1.msra.mxu0 %v149
  %1955 = vmatprep.subr.mxu0 0.0
  %1956 = vmatpush1.msra.mxu0 %v150
  %1957 = vmatprep.subr.mxu0 0.0
  %1958 = vmatpush1.msra.mxu0 %v151
  %1959 = vmatprep.subr.mxu0 0.0
  %1960 = vmatpush1.msra.mxu0 %v152
  %1961 = vmatprep.subr.mxu0 0.0
  %1962 = vmatpush1.msra.mxu0 %v153
  %1963 = vmatprep.subr.mxu0 0.0
  %1964 = vmatpush1.msra.mxu0 %v154
  %1965 = vmatprep.subr.mxu0 0.0
  %1966 = vmatpush1.msra.mxu0 %v155
  %1967 = vmatprep.subr.mxu0 0.0
  %1968 = vmatpush1.msra.mxu0 %v156
  %1969 = vmatprep.subr.mxu0 0.0
  %1970 = vmatpush1.msra.mxu0 %v157
  %1971 = vmatprep.subr.mxu0 0.0
  %1972 = vmatpush1.msra.mxu0 %v158
  %1973 = vmatprep.subr.mxu0 0.0
  %1974 = vmatpush1.msra.mxu0 %v159
  %1975 = vmatprep.subr.mxu0 0.0
  %1976 = vmatpush1.msra.mxu0 %v160
  %1977 = vmatprep.subr.mxu0 0.0
  %1978 = vmatpush1.msra.mxu0 %v161
  %1979 = vmatprep.subr.mxu0 0.0
  %1980 = vmatpush1.msra.mxu0 %v162
  %1981 = vmatprep.subr.mxu0 0.0
  %1982 = vmatpush1.msra.mxu0 %v163
  %1983 = vmatprep.subr.mxu0 0.0
  %1984 = vmatpush1.msra.mxu0 %v164
  %1985 = vmatprep.subr.mxu0 0.0
  %1986 = vmatpush1.msra.mxu0 %v165
  %1987 = vmatprep.subr.mxu0 0.0
  %1988 = vmatpush1.msra.mxu0 %v166
  %1989 = vmatprep.subr.mxu0 0.0
  %1990 = vmatpush1.msra.mxu0 %v167
  %1991 = vmatprep.subr.mxu0 0.0
  %1992 = vmatpush1.msra.mxu0 %v168
  %1993 = vmatprep.subr.mxu0 0.0
  %1994 = vmatpush1.msra.mxu0 %v169
  %1995 = vmatprep.subr.mxu0 0.0
  %1996 = vmatpush1.msra.mxu0 %v170
  %1997 = vmatprep.subr.mxu0 0.0
  %1998 = vmatpush1.msra.mxu0 %v171
  %1999 = vmatprep.mubr.f32.mxu0 %v1788
  %2000 = vmatmul.mubr.f32.gmra.mrb[0].mxu0 %v1787
  %v2001 = vpop.f32.mrb[0].mxu0
  %v2002 = vadd.f32 %v1932, %v2001
  %v2003 = vpop.f32.mrb[0].mxu0
  %2004 = vdwg.mxu0
  %v2005 = vmax.f32 %v2002, 0.0
  %2006 = vmatprep.subr.mxu0 0.0
  %2007 = vmatpush1.msra.mxu0 %v57
  %2008 = vmatprep.subr.mxu0 0.0
  %2009 = vmatpush1.msra.mxu0 %v58
  %2010 = vmatprep.subr.mxu0 0.0
  %2011 = vmatpush1.msra.mxu0 %v59
  %2012 = vmatprep.subr.mxu0 0.0
  %2013 = vmatpush1.msra.mxu0 %v60
  %2014 = vmatprep.subr.mxu0 0.0
  %2015 = vmatpush1.msra.mxu0 %v61
  %2016 = vmatprep.subr.mxu0 0.0
  %2017 = vmatpush1.msra.mxu0 %v62
  %2018 = vmatprep.subr.mxu0 0.0
  %2019 = vmatpush1.msra.mxu0 %v63
  %2020 = vmatprep.subr.mxu0 0.0
  %2021 = vmatpush1.msra.mxu0 %v64
  %2022 = vmatprep.subr.mxu0 0.0
  %2023 = vmatpush1.msra.mxu0 %v65
  %2024 = vmatprep.subr.mxu0 0.0
  %2025 = vmatpush1.msra.mxu0 %v66
  %2026 = vmatprep.subr.mxu0 0.0
  %2027 = vmatpush1.msra.mxu0 %v67
  %2028 = vmatprep.subr.mxu0 0.0
  %2029 = vmatpush1.msra.mxu0 %v68
  %2030 = vmatprep.subr.mxu0 0.0
  %2031 = vmatpush1.msra.mxu0 %v69
  %2032 = vmatprep.subr.mxu0 0.0
  %2033 = vmatpush1.msra.mxu0 %v70
  %2034 = vmatprep.subr.mxu0 0.0
  %2035 = vmatpush1.msra.mxu0 %v71
  %2036 = vmatprep.subr.mxu0 0.0
  %2037 = vmatpush1.msra.mxu0 %v72
  %2038 = vmatprep.subr.mxu0 0.0
  %2039 = vmatpush1.msra.mxu0 0.0
  %2040 = vmatprep.subr.mxu0 0.0
  %2041 = vmatpush1.msra.mxu0 0.0
  %2042 = vmatprep.subr.mxu0 0.0
  %2043 = vmatpush1.msra.mxu0 0.0
  %2044 = vmatprep.subr.mxu0 0.0
  %2045 = vmatpush1.msra.mxu0 0.0
  %2046 = vmatprep.subr.mxu0 0.0
  %2047 = vmatpush1.msra.mxu0 0.0
  %2048 = vmatprep.subr.mxu0 0.0
  %2049 = vmatpush1.msra.mxu0 0.0
  %2050 = vmatprep.subr.mxu0 0.0
  %2051 = vmatpush1.msra.mxu0 0.0
  %2052 = vmatprep.subr.mxu0 0.0
  %2053 = vmatpush1.msra.mxu0 0.0
  %2054 = vmatprep.subr.mxu0 0.0
  %2055 = vmatpush1.msra.mxu0 0.0
  %2056 = vmatprep.subr.mxu0 0.0
  %2057 = vmatpush1.msra.mxu0 0.0
  %2058 = vmatprep.subr.mxu0 0.0
  %2059 = vmatpush1.msra.mxu0 0.0
  %2060 = vmatprep.subr.mxu0 0.0
  %2061 = vmatpush1.msra.mxu0 0.0
  %2062 = vmatprep.subr.mxu0 0.0
  %2063 = vmatpush1.msra.mxu0 0.0
  %2064 = vmatprep.subr.mxu0 0.0
  %2065 = vmatpush1.msra.mxu0 0.0
  %2066 = vmatprep.subr.mxu0 0.0
  %2067 = vmatpush1.msra.mxu0 0.0
  %2068 = vmatprep.subr.mxu0 0.0
  %2069 = vmatpush1.msra.mxu0 0.0
  %2070 = vmatprep.mubr.f32.mxu0 0.0
  %2071 = vmatmul.mubr.f32.gmra.mrb[0].mxu0 %v2005
  %v2072 = vpop.f32.mrb[0].mxu0
  %v2073 = vadd.f32 %v426, %v2072
  %v2074 = vpop.f32.mrb[0].mxu0
  %2075 = vdwg.mxu0
  %v2076 = vmax.f32 %v2073, 0.0
  %s2077 = scalar_lea.vmem %s6, 64
  %v2078 = vld [vmem:[%s2077] sm:$0xff]
  %v2079 = vld [vmem:[%s2077 + $0x8] sm:$0xff]
  %v2081 = vsel %vm822, %v2076, 0
  %2083 = vmatprep.subr.mxu0 0.0
  %2084 = vmatpush1.msra.mxu0 %v2078
  %2085 = vmatprep.subr.mxu0 0.0
  %2086 = vmatpush1.msra.mxu0 %v2079
  %2087 = vmatprep.subr.mxu0 0.0
  %2088 = vmatpush1.msra.mxu0 0.0
  %2089 = vmatprep.subr.mxu0 0.0
  %2090 = vmatpush1.msra.mxu0 0.0
  %2091 = vmatprep.subr.mxu0 0.0
  %2092 = vmatpush1.msra.mxu0 0.0
  %2093 = vmatprep.subr.mxu0 0.0
  %2094 = vmatpush1.msra.mxu0 0.0
  %2095 = vmatprep.subr.mxu0 0.0
  %2096 = vmatpush1.msra.mxu0 0.0
  %2097 = vmatprep.subr.mxu0 0.0
  %2098 = vmatpush1.msra.mxu0 0.0
  %2099 = vmatprep.subr.mxu0 0.0
  %2100 = vmatpush1.msra.mxu0 0.0
  %2101 = vmatprep.subr.mxu0 0.0
  %2102 = vmatpush1.msra.mxu0 0.0
  %2103 = vmatprep.subr.mxu0 0.0
  %2104 = vmatpush1.msra.mxu0 0.0
  %2105 = vmatprep.subr.mxu0 0.0
  %2106 = vmatpush1.msra.mxu0 0.0
  %2107 = vmatprep.subr.mxu0 0.0
  %2108 = vmatpush1.msra.mxu0 0.0
  %2109 = vmatprep.subr.mxu0 0.0
  %2110 = vmatpush1.msra.mxu0 0.0
  %2111 = vmatprep.subr.mxu0 0.0
  %2112 = vmatpush1.msra.mxu0 0.0
  %2113 = vmatprep.subr.mxu0 0.0
  %2114 = vmatpush1.msra.mxu0 0.0
  %2115 = vmatprep.subr.mxu0 0.0
  %2116 = vmatpush1.msra.mxu0 0.0
  %2117 = vmatprep.subr.mxu0 0.0
  %2118 = vmatpush1.msra.mxu0 0.0
  %2119 = vmatprep.subr.mxu0 0.0
  %2120 = vmatpush1.msra.mxu0 0.0
  %2121 = vmatprep.subr.mxu0 0.0
  %2122 = vmatpush1.msra.mxu0 0.0
  %2123 = vmatprep.subr.mxu0 0.0
  %2124 = vmatpush1.msra.mxu0 0.0
  %2125 = vmatprep.subr.mxu0 0.0
  %2126 = vmatpush1.msra.mxu0 0.0
  %2127 = vmatprep.subr.mxu0 0.0
  %2128 = vmatpush1.msra.mxu0 0.0
  %2129 = vmatprep.subr.mxu0 0.0
  %2130 = vmatpush1.msra.mxu0 0.0
  %2131 = vmatprep.subr.mxu0 0.0
  %2132 = vmatpush1.msra.mxu0 0.0
  %2133 = vmatprep.subr.mxu0 0.0
  %2134 = vmatpush1.msra.mxu0 0.0
  %2135 = vmatprep.subr.mxu0 0.0
  %2136 = vmatpush1.msra.mxu0 0.0
  %2137 = vmatprep.subr.mxu0 0.0
  %2138 = vmatpush1.msra.mxu0 0.0
  %2139 = vmatprep.subr.mxu0 0.0
  %2140 = vmatpush1.msra.mxu0 0.0
  %2141 = vmatprep.subr.mxu0 0.0
  %2142 = vmatpush1.msra.mxu0 0.0
  %2143 = vmatprep.subr.mxu0 0.0
  %2144 = vmatpush1.msra.mxu0 0.0
  %2145 = vmatprep.subr.mxu0 0.0
  %2146 = vmatpush1.msra.mxu0 0.0
  %2147 = vmatprep.mubr.f32.mxu0 0.0
  %2148 = vmatmul.mubr.f32.gmra.mrb[0].mxu0 %v2081
  %v2149 = vpop.f32.mrb[0].mxu0
  %v2150 = vadd.f32 0.0, %v2149
  %v2151 = vpop.f32.mrb[0].mxu0
  %2152 = vdwg.mxu0
  %v2153 = vadd.f32 %v1758, %v2150
  %s2154 = scalar_lea.vmem %s0, 60
  %v2155 = vld [vmem:[%s2154] sm:$0xff]
  %v2156 = vld [vmem:[%s2154 + $0x8] sm:$0xf]
  %v2159 = vcombine.high %v2155, %v2155
  %v2161 = vunpack.c.l.s4 1983009808
  %v2162 = vunpack.c.0.s8 %v2161
  %v2163 = vlaneseq
  %v2164 = vshrl.u32 %v2163, 7
  %v2165 = vsub.s32 %v2162, %v2164
  %v2166 = vrot.slane %v2155, %v2165
  %v2168 = vunpack.c.l.s4 1983009808
  %v2169 = vunpack.c.0.s8 %v2168
  %v2170 = vlaneseq
  %v2171 = vshrl.u32 %v2170, 7
  %v2172 = vsub.s32 %v2169, %v2171
  %v2173 = vrot.slane %v2159, %v2172
  %v2174 = vcombine.high %v2166, %v2166
  %v2175 = vcombine.high %v2173, %v2173
  %v2177 = vunpack.c.l.s4 1983009808
  %v2178 = vunpack.c.0.s8 %v2177
  %v2179 = vlaneseq
  %v2180 = vshrl.u32 %v2179, 7
  %v2181 = vsub.s32 %v2178, %v2180
  %v2182 = vrot.slane %v2156, %v2181
  %v2183 = vcombine.high %v2182, %v2182
  %2190 = vmatprep.subr.mxu0 0.0
  %2191 = vmatpush1.msra.mxu0 %v76
  %2192 = vmatprep.subr.mxu0 0.0
  %2193 = vmatpush1.msra.mxu0 %v77
  %2194 = vmatprep.subr.mxu0 0.0
  %2195 = vmatpush1.msra.mxu0 %v78
  %2196 = vmatprep.subr.mxu0 0.0
  %2197 = vmatpush1.msra.mxu0 %v79
  %2198 = vmatprep.subr.mxu0 0.0
  %2199 = vmatpush1.msra.mxu0 %v80
  %2200 = vmatprep.subr.mxu0 0.0
  %2201 = vmatpush1.msra.mxu0 %v81
  %2202 = vmatprep.subr.mxu0 0.0
  %2203 = vmatpush1.msra.mxu0 %v82
  %2204 = vmatprep.subr.mxu0 0.0
  %2205 = vmatpush1.msra.mxu0 %v83
  %2206 = vmatprep.subr.mxu0 0.0
  %2207 = vmatpush1.msra.mxu0 %v84
  %2208 = vmatprep.subr.mxu0 0.0
  %2209 = vmatpush1.msra.mxu0 %v85
  %2210 = vmatprep.subr.mxu0 0.0
  %2211 = vmatpush1.msra.mxu0 %v86
  %2212 = vmatprep.subr.mxu0 0.0
  %2213 = vmatpush1.msra.mxu0 %v87
  %2214 = vmatprep.subr.mxu0 0.0
  %2215 = vmatpush1.msra.mxu0 %v88
  %2216 = vmatprep.subr.mxu0 0.0
  %2217 = vmatpush1.msra.mxu0 %v89
  %2218 = vmatprep.subr.mxu0 0.0
  %2219 = vmatpush1.msra.mxu0 %v90
  %2220 = vmatprep.subr.mxu0 0.0
  %2221 = vmatpush1.msra.mxu0 %v91
  %2222 = vmatprep.subr.mxu0 0.0
  %2223 = vmatpush1.msra.mxu0 %v92
  %2224 = vmatprep.subr.mxu0 0.0
  %2225 = vmatpush1.msra.mxu0 %v93
  %2226 = vmatprep.subr.mxu0 0.0
  %2227 = vmatpush1.msra.mxu0 %v94
  %2228 = vmatprep.subr.mxu0 0.0
  %2229 = vmatpush1.msra.mxu0 %v95
  %2230 = vmatprep.subr.mxu0 0.0
  %2231 = vmatpush1.msra.mxu0 %v96
  %2232 = vmatprep.subr.mxu0 0.0
  %2233 = vmatpush1.msra.mxu0 %v97
  %2234 = vmatprep.subr.mxu0 0.0
  %2235 = vmatpush1.msra.mxu0 %v98
  %2236 = vmatprep.subr.mxu0 0.0
  %2237 = vmatpush1.msra.mxu0 %v99
  %2238 = vmatprep.subr.mxu0 0.0
  %2239 = vmatpush1.msra.mxu0 %v100
  %2240 = vmatprep.subr.mxu0 0.0
  %2241 = vmatpush1.msra.mxu0 %v101
  %2242 = vmatprep.subr.mxu0 0.0
  %2243 = vmatpush1.msra.mxu0 %v102
  %2244 = vmatprep.subr.mxu0 0.0
  %2245 = vmatpush1.msra.mxu0 %v103
  %2246 = vmatprep.subr.mxu0 0.0
  %2247 = vmatpush1.msra.mxu0 %v104
  %2248 = vmatprep.subr.mxu0 0.0
  %2249 = vmatpush1.msra.mxu0 %v105
  %2250 = vmatprep.subr.mxu0 0.0
  %2251 = vmatpush1.msra.mxu0 %v106
  %2252 = vmatprep.subr.mxu0 0.0
  %2253 = vmatpush1.msra.mxu0 %v107
  %2254 = vmatprep.mubr.f32.mxu0 %v2174
  %2255 = vmatmul.mubr.f32.gmra.mrb[0].mxu0 %v2166
  %v2256 = vpop.f32.mrb[0].mxu0
  %v2257 = vadd.f32 %v176, %v2256
  %v2258 = vpop.f32.mrb[0].mxu0
  %2259 = vdwg.mxu0
  %2260 = vmatprep.subr.mxu0 0.0
  %2261 = vmatpush1.msra.mxu0 %v108
  %2262 = vmatprep.subr.mxu0 0.0
  %2263 = vmatpush1.msra.mxu0 %v109
  %2264 = vmatprep.subr.mxu0 0.0
  %2265 = vmatpush1.msra.mxu0 %v110
  %2266 = vmatprep.subr.mxu0 0.0
  %2267 = vmatpush1.msra.mxu0 %v111
  %2268 = vmatprep.subr.mxu0 0.0
  %2269 = vmatpush1.msra.mxu0 %v112
  %2270 = vmatprep.subr.mxu0 0.0
  %2271 = vmatpush1.msra.mxu0 %v113
  %2272 = vmatprep.subr.mxu0 0.0
  %2273 = vmatpush1.msra.mxu0 %v114
  %2274 = vmatprep.subr.mxu0 0.0
  %2275 = vmatpush1.msra.mxu0 %v115
  %2276 = vmatprep.subr.mxu0 0.0
  %2277 = vmatpush1.msra.mxu0 %v116
  %2278 = vmatprep.subr.mxu0 0.0
  %2279 = vmatpush1.msra.mxu0 %v117
  %2280 = vmatprep.subr.mxu0 0.0
  %2281 = vmatpush1.msra.mxu0 %v118
  %2282 = vmatprep.subr.mxu0 0.0
  %2283 = vmatpush1.msra.mxu0 %v119
  %2284 = vmatprep.subr.mxu0 0.0
  %2285 = vmatpush1.msra.mxu0 %v120
  %2286 = vmatprep.subr.mxu0 0.0
  %2287 = vmatpush1.msra.mxu0 %v121
  %2288 = vmatprep.subr.mxu0 0.0
  %2289 = vmatpush1.msra.mxu0 %v122
  %2290 = vmatprep.subr.mxu0 0.0
  %2291 = vmatpush1.msra.mxu0 %v123
  %2292 = vmatprep.subr.mxu0 0.0
  %2293 = vmatpush1.msra.mxu0 %v124
  %2294 = vmatprep.subr.mxu0 0.0
  %2295 = vmatpush1.msra.mxu0 %v125
  %2296 = vmatprep.subr.mxu0 0.0
  %2297 = vmatpush1.msra.mxu0 %v126
  %2298 = vmatprep.subr.mxu0 0.0
  %2299 = vmatpush1.msra.mxu0 %v127
  %2300 = vmatprep.subr.mxu0 0.0
  %2301 = vmatpush1.msra.mxu0 %v128
  %2302 = vmatprep.subr.mxu0 0.0
  %2303 = vmatpush1.msra.mxu0 %v129
  %2304 = vmatprep.subr.mxu0 0.0
  %2305 = vmatpush1.msra.mxu0 %v130
  %2306 = vmatprep.subr.mxu0 0.0
  %2307 = vmatpush1.msra.mxu0 %v131
  %2308 = vmatprep.subr.mxu0 0.0
  %2309 = vmatpush1.msra.mxu0 %v132
  %2310 = vmatprep.subr.mxu0 0.0
  %2311 = vmatpush1.msra.mxu0 %v133
  %2312 = vmatprep.subr.mxu0 0.0
  %2313 = vmatpush1.msra.mxu0 %v134
  %2314 = vmatprep.subr.mxu0 0.0
  %2315 = vmatpush1.msra.mxu0 %v135
  %2316 = vmatprep.subr.mxu0 0.0
  %2317 = vmatpush1.msra.mxu0 %v136
  %2318 = vmatprep.subr.mxu0 0.0
  %2319 = vmatpush1.msra.mxu0 %v137
  %2320 = vmatprep.subr.mxu0 0.0
  %2321 = vmatpush1.msra.mxu0 %v138
  %2322 = vmatprep.subr.mxu0 0.0
  %2323 = vmatpush1.msra.mxu0 %v139
  %2324 = vmatprep.mubr.f32.mxu0 %v2175
  %2325 = vmatmul.mubr.f32.gmra.mrb[0].mxu0 %v2173
  %v2326 = vpop.f32.mrb[0].mxu0
  %v2327 = vadd.f32 %v2257, %v2326
  %v2328 = vpop.f32.mrb[0].mxu0
  %2329 = vdwg.mxu0
  %2330 = vmatprep.subr.mxu0 0.0
  %2331 = vmatpush1.msra.mxu0 %v140
  %2332 = vmatprep.subr.mxu0 0.0
  %2333 = vmatpush1.msra.mxu0 %v141
  %2334 = vmatprep.subr.mxu0 0.0
  %2335 = vmatpush1.msra.mxu0 %v142
  %2336 = vmatprep.subr.mxu0 0.0
  %2337 = vmatpush1.msra.mxu0 %v143
  %2338 = vmatprep.subr.mxu0 0.0
  %2339 = vmatpush1.msra.mxu0 %v144
  %2340 = vmatprep.subr.mxu0 0.0
  %2341 = vmatpush1.msra.mxu0 %v145
  %2342 = vmatprep.subr.mxu0 0.0
  %2343 = vmatpush1.msra.mxu0 %v146
  %2344 = vmatprep.subr.mxu0 0.0
  %2345 = vmatpush1.msra.mxu0 %v147
  %2346 = vmatprep.subr.mxu0 0.0
  %2347 = vmatpush1.msra.mxu0 %v148
  %2348 = vmatprep.subr.mxu0 0.0
  %2349 = vmatpush1.msra.mxu0 %v149
  %2350 = vmatprep.subr.mxu0 0.0
  %2351 = vmatpush1.msra.mxu0 %v150
  %2352 = vmatprep.subr.mxu0 0.0
  %2353 = vmatpush1.msra.mxu0 %v151
  %2354 = vmatprep.subr.mxu0 0.0
  %2355 = vmatpush1.msra.mxu0 %v152
  %2356 = vmatprep.subr.mxu0 0.0
  %2357 = vmatpush1.msra.mxu0 %v153
  %2358 = vmatprep.subr.mxu0 0.0
  %2359 = vmatpush1.msra.mxu0 %v154
  %2360 = vmatprep.subr.mxu0 0.0
  %2361 = vmatpush1.msra.mxu0 %v155
  %2362 = vmatprep.subr.mxu0 0.0
  %2363 = vmatpush1.msra.mxu0 %v156
  %2364 = vmatprep.subr.mxu0 0.0
  %2365 = vmatpush1.msra.mxu0 %v157
  %2366 = vmatprep.subr.mxu0 0.0
  %2367 = vmatpush1.msra.mxu0 %v158
  %2368 = vmatprep.subr.mxu0 0.0
  %2369 = vmatpush1.msra.mxu0 %v159
  %2370 = vmatprep.subr.mxu0 0.0
  %2371 = vmatpush1.msra.mxu0 %v160
  %2372 = vmatprep.subr.mxu0 0.0
  %2373 = vmatpush1.msra.mxu0 %v161
  %2374 = vmatprep.subr.mxu0 0.0
  %2375 = vmatpush1.msra.mxu0 %v162
  %2376 = vmatprep.subr.mxu0 0.0
  %2377 = vmatpush1.msra.mxu0 %v163
  %2378 = vmatprep.subr.mxu0 0.0
  %2379 = vmatpush1.msra.mxu0 %v164
  %2380 = vmatprep.subr.mxu0 0.0
  %2381 = vmatpush1.msra.mxu0 %v165
  %2382 = vmatprep.subr.mxu0 0.0
  %2383 = vmatpush1.msra.mxu0 %v166
  %2384 = vmatprep.subr.mxu0 0.0
  %2385 = vmatpush1.msra.mxu0 %v167
  %2386 = vmatprep.subr.mxu0 0.0
  %2387 = vmatpush1.msra.mxu0 %v168
  %2388 = vmatprep.subr.mxu0 0.0
  %2389 = vmatpush1.msra.mxu0 %v169
  %2390 = vmatprep.subr.mxu0 0.0
  %2391 = vmatpush1.msra.mxu0 %v170
  %2392 = vmatprep.subr.mxu0 0.0
  %2393 = vmatpush1.msra.mxu0 %v171
  %2394 = vmatprep.mubr.f32.mxu0 %v2183
  %2395 = vmatmul.mubr.f32.gmra.mrb[0].mxu0 %v2182
  %v2396 = vpop.f32.mrb[0].mxu0
  %v2397 = vadd.f32 %v2327, %v2396
  %v2398 = vpop.f32.mrb[0].mxu0
  %2399 = vdwg.mxu0
  %v2400 = vmax.f32 %v2397, 0.0
  %2401 = vmatprep.subr.mxu0 0.0
  %2402 = vmatpush1.msra.mxu0 %v57
  %2403 = vmatprep.subr.mxu0 0.0
  %2404 = vmatpush1.msra.mxu0 %v58
  %2405 = vmatprep.subr.mxu0 0.0
  %2406 = vmatpush1.msra.mxu0 %v59
  %2407 = vmatprep.subr.mxu0 0.0
  %2408 = vmatpush1.msra.mxu0 %v60
  %2409 = vmatprep.subr.mxu0 0.0
  %2410 = vmatpush1.msra.mxu0 %v61
  %2411 = vmatprep.subr.mxu0 0.0
  %2412 = vmatpush1.msra.mxu0 %v62
  %2413 = vmatprep.subr.mxu0 0.0
  %2414 = vmatpush1.msra.mxu0 %v63
  %2415 = vmatprep.subr.mxu0 0.0
  %2416 = vmatpush1.msra.mxu0 %v64
  %2417 = vmatprep.subr.mxu0 0.0
  %2418 = vmatpush1.msra.mxu0 %v65
  %2419 = vmatprep.subr.mxu0 0.0
  %2420 = vmatpush1.msra.mxu0 %v66
  %2421 = vmatprep.subr.mxu0 0.0
  %2422 = vmatpush1.msra.mxu0 %v67
  %2423 = vmatprep.subr.mxu0 0.0
  %2424 = vmatpush1.msra.mxu0 %v68
  %2425 = vmatprep.subr.mxu0 0.0
  %2426 = vmatpush1.msra.mxu0 %v69
  %2427 = vmatprep.subr.mxu0 0.0
  %2428 = vmatpush1.msra.mxu0 %v70
  %2429 = vmatprep.subr.mxu0 0.0
  %2430 = vmatpush1.msra.mxu0 %v71
  %2431 = vmatprep.subr.mxu0 0.0
  %2432 = vmatpush1.msra.mxu0 %v72
  %2433 = vmatprep.subr.mxu0 0.0
  %2434 = vmatpush1.msra.mxu0 0.0
  %2435 = vmatprep.subr.mxu0 0.0
  %2436 = vmatpush1.msra.mxu0 0.0
  %2437 = vmatprep.subr.mxu0 0.0
  %2438 = vmatpush1.msra.mxu0 0.0
  %2439 = vmatprep.subr.mxu0 0.0
  %2440 = vmatpush1.msra.mxu0 0.0
  %2441 = vmatprep.subr.mxu0 0.0
  %2442 = vmatpush1.msra.mxu0 0.0
  %2443 = vmatprep.subr.mxu0 0.0
  %2444 = vmatpush1.msra.mxu0 0.0
  %2445 = vmatprep.subr.mxu0 0.0
  %2446 = vmatpush1.msra.mxu0 0.0
  %2447 = vmatprep.subr.mxu0 0.0
  %2448 = vmatpush1.msra.mxu0 0.0
  %2449 = vmatprep.subr.mxu0 0.0
  %2450 = vmatpush1.msra.mxu0 0.0
  %2451 = vmatprep.subr.mxu0 0.0
  %2452 = vmatpush1.msra.mxu0 0.0
  %2453 = vmatprep.subr.mxu0 0.0
  %2454 = vmatpush1.msra.mxu0 0.0
  %2455 = vmatprep.subr.mxu0 0.0
  %2456 = vmatpush1.msra.mxu0 0.0
  %2457 = vmatprep.subr.mxu0 0.0
  %2458 = vmatpush1.msra.mxu0 0.0
  %2459 = vmatprep.subr.mxu0 0.0
  %2460 = vmatpush1.msra.mxu0 0.0
  %2461 = vmatprep.subr.mxu0 0.0
  %2462 = vmatpush1.msra.mxu0 0.0
  %2463 = vmatprep.subr.mxu0 0.0
  %2464 = vmatpush1.msra.mxu0 0.0
  %2465 = vmatprep.mubr.f32.mxu0 0.0
  %2466 = vmatmul.mubr.f32.gmra.mrb[0].mxu0 %v2400
  %v2467 = vpop.f32.mrb[0].mxu0
  %v2468 = vadd.f32 %v426, %v2467
  %v2469 = vpop.f32.mrb[0].mxu0
  %2470 = vdwg.mxu0
  %v2471 = vmax.f32 %v2468, 0.0
  %s2472 = scalar_lea.vmem %s6, 80
  %v2473 = vld [vmem:[%s2472] sm:$0xff]
  %v2474 = vld [vmem:[%s2472 + $0x8] sm:$0xff]
  %v2476 = vsel %vm822, %v2471, 0
  %2478 = vmatprep.subr.mxu0 0.0
  %2479 = vmatpush1.msra.mxu0 %v2473
  %2480 = vmatprep.subr.mxu0 0.0
  %2481 = vmatpush1.msra.mxu0 %v2474
  %2482 = vmatprep.subr.mxu0 0.0
  %2483 = vmatpush1.msra.mxu0 0.0
  %2484 = vmatprep.subr.mxu0 0.0
  %2485 = vmatpush1.msra.mxu0 0.0
  %2486 = vmatprep.subr.mxu0 0.0
  %2487 = vmatpush1.msra.mxu0 0.0
  %2488 = vmatprep.subr.mxu0 0.0
  %2489 = vmatpush1.msra.mxu0 0.0
  %2490 = vmatprep.subr.mxu0 0.0
  %2491 = vmatpush1.msra.mxu0 0.0
  %2492 = vmatprep.subr.mxu0 0.0
  %2493 = vmatpush1.msra.mxu0 0.0
  %2494 = vmatprep.subr.mxu0 0.0
  %2495 = vmatpush1.msra.mxu0 0.0
  %2496 = vmatprep.subr.mxu0 0.0
  %2497 = vmatpush1.msra.mxu0 0.0
  %2498 = vmatprep.subr.mxu0 0.0
  %2499 = vmatpush1.msra.mxu0 0.0
  %2500 = vmatprep.subr.mxu0 0.0
  %2501 = vmatpush1.msra.mxu0 0.0
  %2502 = vmatprep.subr.mxu0 0.0
  %2503 = vmatpush1.msra.mxu0 0.0
  %2504 = vmatprep.subr.mxu0 0.0
  %2505 = vmatpush1.msra.mxu0 0.0
  %2506 = vmatprep.subr.mxu0 0.0
  %2507 = vmatpush1.msra.mxu0 0.0
  %2508 = vmatprep.subr.mxu0 0.0
  %2509 = vmatpush1.msra.mxu0 0.0
  %2510 = vmatprep.subr.mxu0 0.0
  %2511 = vmatpush1.msra.mxu0 0.0
  %2512 = vmatprep.subr.mxu0 0.0
  %2513 = vmatpush1.msra.mxu0 0.0
  %2514 = vmatprep.subr.mxu0 0.0
  %2515 = vmatpush1.msra.mxu0 0.0
  %2516 = vmatprep.subr.mxu0 0.0
  %2517 = vmatpush1.msra.mxu0 0.0
  %2518 = vmatprep.subr.mxu0 0.0
  %2519 = vmatpush1.msra.mxu0 0.0
  %2520 = vmatprep.subr.mxu0 0.0
  %2521 = vmatpush1.msra.mxu0 0.0
  %2522 = vmatprep.subr.mxu0 0.0
  %2523 = vmatpush1.msra.mxu0 0.0
  %2524 = vmatprep.subr.mxu0 0.0
  %2525 = vmatpush1.msra.mxu0 0.0
  %2526 = vmatprep.subr.mxu0 0.0
  %2527 = vmatpush1.msra.mxu0 0.0
  %2528 = vmatprep.subr.mxu0 0.0
  %2529 = vmatpush1.msra.mxu0 0.0
  %2530 = vmatprep.subr.mxu0 0.0
  %2531 = vmatpush1.msra.mxu0 0.0
  %2532 = vmatprep.subr.mxu0 0.0
  %2533 = vmatpush1.msra.mxu0 0.0
  %2534 = vmatprep.subr.mxu0 0.0
  %2535 = vmatpush1.msra.mxu0 0.0
  %2536 = vmatprep.subr.mxu0 0.0
  %2537 = vmatpush1.msra.mxu0 0.0
  %2538 = vmatprep.subr.mxu0 0.0
  %2539 = vmatpush1.msra.mxu0 0.0
  %2540 = vmatprep.subr.mxu0 0.0
  %2541 = vmatpush1.msra.mxu0 0.0
  %2542 = vmatprep.mubr.f32.mxu0 0.0
  %2543 = vmatmul.mubr.f32.gmra.mrb[0].mxu0 %v2476
  %v2544 = vpop.f32.mrb[0].mxu0
  %v2545 = vadd.f32 0.0, %v2544
  %v2546 = vpop.f32.mrb[0].mxu0
  %2547 = vdwg.mxu0
  %v2548 = vadd.f32 %v2153, %v2545
  %s2549 = scalar_lea.vmem %s0, 72
  %v2550 = vld [vmem:[%s2549] sm:$0xff]
  %v2551 = vld [vmem:[%s2549 + $0x8] sm:$0xf]
  %v2554 = vcombine.high %v2550, %v2550
  %v2556 = vunpack.c.l.s4 1983009808
  %v2557 = vunpack.c.0.s8 %v2556
  %v2558 = vlaneseq
  %v2559 = vshrl.u32 %v2558, 7
  %v2560 = vsub.s32 %v2557, %v2559
  %v2561 = vrot.slane %v2550, %v2560
  %v2563 = vunpack.c.l.s4 1983009808
  %v2564 = vunpack.c.0.s8 %v2563
  %v2565 = vlaneseq
  %v2566 = vshrl.u32 %v2565, 7
  %v2567 = vsub.s32 %v2564, %v2566
  %v2568 = vrot.slane %v2554, %v2567
  %v2569 = vcombine.high %v2561, %v2561
  %v2570 = vcombine.high %v2568, %v2568
  %v2572 = vunpack.c.l.s4 1983009808
  %v2573 = vunpack.c.0.s8 %v2572
  %v2574 = vlaneseq
  %v2575 = vshrl.u32 %v2574, 7
  %v2576 = vsub.s32 %v2573, %v2575
  %v2577 = vrot.slane %v2551, %v2576
  %v2578 = vcombine.high %v2577, %v2577
  %2585 = vmatprep.subr.mxu0 0.0
  %2586 = vmatpush1.msra.mxu0 %v76
  %2587 = vmatprep.subr.mxu0 0.0
  %2588 = vmatpush1.msra.mxu0 %v77
  %2589 = vmatprep.subr.mxu0 0.0
  %2590 = vmatpush1.msra.mxu0 %v78
  %2591 = vmatprep.subr.mxu0 0.0
  %2592 = vmatpush1.msra.mxu0 %v79
  %2593 = vmatprep.subr.mxu0 0.0
  %2594 = vmatpush1.msra.mxu0 %v80
  %2595 = vmatprep.subr.mxu0 0.0
  %2596 = vmatpush1.msra.mxu0 %v81
  %2597 = vmatprep.subr.mxu0 0.0
  %2598 = vmatpush1.msra.mxu0 %v82
  %2599 = vmatprep.subr.mxu0 0.0
  %2600 = vmatpush1.msra.mxu0 %v83
  %2601 = vmatprep.subr.mxu0 0.0
  %2602 = vmatpush1.msra.mxu0 %v84
  %2603 = vmatprep.subr.mxu0 0.0
  %2604 = vmatpush1.msra.mxu0 %v85
  %2605 = vmatprep.subr.mxu0 0.0
  %2606 = vmatpush1.msra.mxu0 %v86
  %2607 = vmatprep.subr.mxu0 0.0
  %2608 = vmatpush1.msra.mxu0 %v87
  %2609 = vmatprep.subr.mxu0 0.0
  %2610 = vmatpush1.msra.mxu0 %v88
  %2611 = vmatprep.subr.mxu0 0.0
  %2612 = vmatpush1.msra.mxu0 %v89
  %2613 = vmatprep.subr.mxu0 0.0
  %2614 = vmatpush1.msra.mxu0 %v90
  %2615 = vmatprep.subr.mxu0 0.0
  %2616 = vmatpush1.msra.mxu0 %v91
  %2617 = vmatprep.subr.mxu0 0.0
  %2618 = vmatpush1.msra.mxu0 %v92
  %2619 = vmatprep.subr.mxu0 0.0
  %2620 = vmatpush1.msra.mxu0 %v93
  %2621 = vmatprep.subr.mxu0 0.0
  %2622 = vmatpush1.msra.mxu0 %v94
  %2623 = vmatprep.subr.mxu0 0.0
  %2624 = vmatpush1.msra.mxu0 %v95
  %2625 = vmatprep.subr.mxu0 0.0
  %2626 = vmatpush1.msra.mxu0 %v96
  %2627 = vmatprep.subr.mxu0 0.0
  %2628 = vmatpush1.msra.mxu0 %v97
  %2629 = vmatprep.subr.mxu0 0.0
  %2630 = vmatpush1.msra.mxu0 %v98
  %2631 = vmatprep.subr.mxu0 0.0
  %2632 = vmatpush1.msra.mxu0 %v99
  %2633 = vmatprep.subr.mxu0 0.0
  %2634 = vmatpush1.msra.mxu0 %v100
  %2635 = vmatprep.subr.mxu0 0.0
  %2636 = vmatpush1.msra.mxu0 %v101
  %2637 = vmatprep.subr.mxu0 0.0
  %2638 = vmatpush1.msra.mxu0 %v102
  %2639 = vmatprep.subr.mxu0 0.0
  %2640 = vmatpush1.msra.mxu0 %v103
  %2641 = vmatprep.subr.mxu0 0.0
  %2642 = vmatpush1.msra.mxu0 %v104
  %2643 = vmatprep.subr.mxu0 0.0
  %2644 = vmatpush1.msra.mxu0 %v105
  %2645 = vmatprep.subr.mxu0 0.0
  %2646 = vmatpush1.msra.mxu0 %v106
  %2647 = vmatprep.subr.mxu0 0.0
  %2648 = vmatpush1.msra.mxu0 %v107
  %2649 = vmatprep.mubr.f32.mxu0 %v2569
  %2650 = vmatmul.mubr.f32.gmra.mrb[0].mxu0 %v2561
  %v2651 = vpop.f32.mrb[0].mxu0
  %v2652 = vadd.f32 %v176, %v2651
  %v2653 = vpop.f32.mrb[0].mxu0
  %2654 = vdwg.mxu0
  %2655 = vmatprep.subr.mxu0 0.0
  %2656 = vmatpush1.msra.mxu0 %v108
  %2657 = vmatprep.subr.mxu0 0.0
  %2658 = vmatpush1.msra.mxu0 %v109
  %2659 = vmatprep.subr.mxu0 0.0
  %2660 = vmatpush1.msra.mxu0 %v110
  %2661 = vmatprep.subr.mxu0 0.0
  %2662 = vmatpush1.msra.mxu0 %v111
  %2663 = vmatprep.subr.mxu0 0.0
  %2664 = vmatpush1.msra.mxu0 %v112
  %2665 = vmatprep.subr.mxu0 0.0
  %2666 = vmatpush1.msra.mxu0 %v113
  %2667 = vmatprep.subr.mxu0 0.0
  %2668 = vmatpush1.msra.mxu0 %v114
  %2669 = vmatprep.subr.mxu0 0.0
  %2670 = vmatpush1.msra.mxu0 %v115
  %2671 = vmatprep.subr.mxu0 0.0
  %2672 = vmatpush1.msra.mxu0 %v116
  %2673 = vmatprep.subr.mxu0 0.0
  %2674 = vmatpush1.msra.mxu0 %v117
  %2675 = vmatprep.subr.mxu0 0.0
  %2676 = vmatpush1.msra.mxu0 %v118
  %2677 = vmatprep.subr.mxu0 0.0
  %2678 = vmatpush1.msra.mxu0 %v119
  %2679 = vmatprep.subr.mxu0 0.0
  %2680 = vmatpush1.msra.mxu0 %v120
  %2681 = vmatprep.subr.mxu0 0.0
  %2682 = vmatpush1.msra.mxu0 %v121
  %2683 = vmatprep.subr.mxu0 0.0
  %2684 = vmatpush1.msra.mxu0 %v122
  %2685 = vmatprep.subr.mxu0 0.0
  %2686 = vmatpush1.msra.mxu0 %v123
  %2687 = vmatprep.subr.mxu0 0.0
  %2688 = vmatpush1.msra.mxu0 %v124
  %2689 = vmatprep.subr.mxu0 0.0
  %2690 = vmatpush1.msra.mxu0 %v125
  %2691 = vmatprep.subr.mxu0 0.0
  %2692 = vmatpush1.msra.mxu0 %v126
  %2693 = vmatprep.subr.mxu0 0.0
  %2694 = vmatpush1.msra.mxu0 %v127
  %2695 = vmatprep.subr.mxu0 0.0
  %2696 = vmatpush1.msra.mxu0 %v128
  %2697 = vmatprep.subr.mxu0 0.0
  %2698 = vmatpush1.msra.mxu0 %v129
  %2699 = vmatprep.subr.mxu0 0.0
  %2700 = vmatpush1.msra.mxu0 %v130
  %2701 = vmatprep.subr.mxu0 0.0
  %2702 = vmatpush1.msra.mxu0 %v131
  %2703 = vmatprep.subr.mxu0 0.0
  %2704 = vmatpush1.msra.mxu0 %v132
  %2705 = vmatprep.subr.mxu0 0.0
  %2706 = vmatpush1.msra.mxu0 %v133
  %2707 = vmatprep.subr.mxu0 0.0
  %2708 = vmatpush1.msra.mxu0 %v134
  %2709 = vmatprep.subr.mxu0 0.0
  %2710 = vmatpush1.msra.mxu0 %v135
  %2711 = vmatprep.subr.mxu0 0.0
  %2712 = vmatpush1.msra.mxu0 %v136
  %2713 = vmatprep.subr.mxu0 0.0
  %2714 = vmatpush1.msra.mxu0 %v137
  %2715 = vmatprep.subr.mxu0 0.0
  %2716 = vmatpush1.msra.mxu0 %v138
  %2717 = vmatprep.subr.mxu0 0.0
  %2718 = vmatpush1.msra.mxu0 %v139
  %2719 = vmatprep.mubr.f32.mxu0 %v2570
  %2720 = vmatmul.mubr.f32.gmra.mrb[0].mxu0 %v2568
  %v2721 = vpop.f32.mrb[0].mxu0
  %v2722 = vadd.f32 %v2652, %v2721
  %v2723 = vpop.f32.mrb[0].mxu0
  %2724 = vdwg.mxu0
  %2725 = vmatprep.subr.mxu0 0.0
  %2726 = vmatpush1.msra.mxu0 %v140
  %2727 = vmatprep.subr.mxu0 0.0
  %2728 = vmatpush1.msra.mxu0 %v141
  %2729 = vmatprep.subr.mxu0 0.0
  %2730 = vmatpush1.msra.mxu0 %v142
  %2731 = vmatprep.subr.mxu0 0.0
  %2732 = vmatpush1.msra.mxu0 %v143
  %2733 = vmatprep.subr.mxu0 0.0
  %2734 = vmatpush1.msra.mxu0 %v144
  %2735 = vmatprep.subr.mxu0 0.0
  %2736 = vmatpush1.msra.mxu0 %v145
  %2737 = vmatprep.subr.mxu0 0.0
  %2738 = vmatpush1.msra.mxu0 %v146
  %2739 = vmatprep.subr.mxu0 0.0
  %2740 = vmatpush1.msra.mxu0 %v147
  %2741 = vmatprep.subr.mxu0 0.0
  %2742 = vmatpush1.msra.mxu0 %v148
  %2743 = vmatprep.subr.mxu0 0.0
  %2744 = vmatpush1.msra.mxu0 %v149
  %2745 = vmatprep.subr.mxu0 0.0
  %2746 = vmatpush1.msra.mxu0 %v150
  %2747 = vmatprep.subr.mxu0 0.0
  %2748 = vmatpush1.msra.mxu0 %v151
  %2749 = vmatprep.subr.mxu0 0.0
  %2750 = vmatpush1.msra.mxu0 %v152
  %2751 = vmatprep.subr.mxu0 0.0
  %2752 = vmatpush1.msra.mxu0 %v153
  %2753 = vmatprep.subr.mxu0 0.0
  %2754 = vmatpush1.msra.mxu0 %v154
  %2755 = vmatprep.subr.mxu0 0.0
  %2756 = vmatpush1.msra.mxu0 %v155
  %2757 = vmatprep.subr.mxu0 0.0
  %2758 = vmatpush1.msra.mxu0 %v156
  %2759 = vmatprep.subr.mxu0 0.0
  %2760 = vmatpush1.msra.mxu0 %v157
  %2761 = vmatprep.subr.mxu0 0.0
  %2762 = vmatpush1.msra.mxu0 %v158
  %2763 = vmatprep.subr.mxu0 0.0
  %2764 = vmatpush1.msra.mxu0 %v159
  %2765 = vmatprep.subr.mxu0 0.0
  %2766 = vmatpush1.msra.mxu0 %v160
  %2767 = vmatprep.subr.mxu0 0.0
  %2768 = vmatpush1.msra.mxu0 %v161
  %2769 = vmatprep.subr.mxu0 0.0
  %2770 = vmatpush1.msra.mxu0 %v162
  %2771 = vmatprep.subr.mxu0 0.0
  %2772 = vmatpush1.msra.mxu0 %v163
  %2773 = vmatprep.subr.mxu0 0.0
  %2774 = vmatpush1.msra.mxu0 %v164
  %2775 = vmatprep.subr.mxu0 0.0
  %2776 = vmatpush1.msra.mxu0 %v165
  %2777 = vmatprep.subr.mxu0 0.0
  %2778 = vmatpush1.msra.mxu0 %v166
  %2779 = vmatprep.subr.mxu0 0.0
  %2780 = vmatpush1.msra.mxu0 %v167
  %2781 = vmatprep.subr.mxu0 0.0
  %2782 = vmatpush1.msra.mxu0 %v168
  %2783 = vmatprep.subr.mxu0 0.0
  %2784 = vmatpush1.msra.mxu0 %v169
  %2785 = vmatprep.subr.mxu0 0.0
  %2786 = vmatpush1.msra.mxu0 %v170
  %2787 = vmatprep.subr.mxu0 0.0
  %2788 = vmatpush1.msra.mxu0 %v171
  %2789 = vmatprep.mubr.f32.mxu0 %v2578
  %2790 = vmatmul.mubr.f32.gmra.mrb[0].mxu0 %v2577
  %v2791 = vpop.f32.mrb[0].mxu0
  %v2792 = vadd.f32 %v2722, %v2791
  %v2793 = vpop.f32.mrb[0].mxu0
  %2794 = vdwg.mxu0
  %v2795 = vmax.f32 %v2792, 0.0
  %2796 = vmatprep.subr.mxu0 0.0
  %2797 = vmatpush1.msra.mxu0 %v57
  %2798 = vmatprep.subr.mxu0 0.0
  %2799 = vmatpush1.msra.mxu0 %v58
  %2800 = vmatprep.subr.mxu0 0.0
  %2801 = vmatpush1.msra.mxu0 %v59
  %2802 = vmatprep.subr.mxu0 0.0
  %2803 = vmatpush1.msra.mxu0 %v60
  %2804 = vmatprep.subr.mxu0 0.0
  %2805 = vmatpush1.msra.mxu0 %v61
  %2806 = vmatprep.subr.mxu0 0.0
  %2807 = vmatpush1.msra.mxu0 %v62
  %2808 = vmatprep.subr.mxu0 0.0
  %2809 = vmatpush1.msra.mxu0 %v63
  %2810 = vmatprep.subr.mxu0 0.0
  %2811 = vmatpush1.msra.mxu0 %v64
  %2812 = vmatprep.subr.mxu0 0.0
  %2813 = vmatpush1.msra.mxu0 %v65
  %2814 = vmatprep.subr.mxu0 0.0
  %2815 = vmatpush1.msra.mxu0 %v66
  %2816 = vmatprep.subr.mxu0 0.0
  %2817 = vmatpush1.msra.mxu0 %v67
  %2818 = vmatprep.subr.mxu0 0.0
  %2819 = vmatpush1.msra.mxu0 %v68
  %2820 = vmatprep.subr.mxu0 0.0
  %2821 = vmatpush1.msra.mxu0 %v69
  %2822 = vmatprep.subr.mxu0 0.0
  %2823 = vmatpush1.msra.mxu0 %v70
  %2824 = vmatprep.subr.mxu0 0.0
  %2825 = vmatpush1.msra.mxu0 %v71
  %2826 = vmatprep.subr.mxu0 0.0
  %2827 = vmatpush1.msra.mxu0 %v72
  %2828 = vmatprep.subr.mxu0 0.0
  %2829 = vmatpush1.msra.mxu0 0.0
  %2830 = vmatprep.subr.mxu0 0.0
  %2831 = vmatpush1.msra.mxu0 0.0
  %2832 = vmatprep.subr.mxu0 0.0
  %2833 = vmatpush1.msra.mxu0 0.0
  %2834 = vmatprep.subr.mxu0 0.0
  %2835 = vmatpush1.msra.mxu0 0.0
  %2836 = vmatprep.subr.mxu0 0.0
  %2837 = vmatpush1.msra.mxu0 0.0
  %2838 = vmatprep.subr.mxu0 0.0
  %2839 = vmatpush1.msra.mxu0 0.0
  %2840 = vmatprep.subr.mxu0 0.0
  %2841 = vmatpush1.msra.mxu0 0.0
  %2842 = vmatprep.subr.mxu0 0.0
  %2843 = vmatpush1.msra.mxu0 0.0
  %2844 = vmatprep.subr.mxu0 0.0
  %2845 = vmatpush1.msra.mxu0 0.0
  %2846 = vmatprep.subr.mxu0 0.0
  %2847 = vmatpush1.msra.mxu0 0.0
  %2848 = vmatprep.subr.mxu0 0.0
  %2849 = vmatpush1.msra.mxu0 0.0
  %2850 = vmatprep.subr.mxu0 0.0
  %2851 = vmatpush1.msra.mxu0 0.0
  %2852 = vmatprep.subr.mxu0 0.0
  %2853 = vmatpush1.msra.mxu0 0.0
  %2854 = vmatprep.subr.mxu0 0.0
  %2855 = vmatpush1.msra.mxu0 0.0
  %2856 = vmatprep.subr.mxu0 0.0
  %2857 = vmatpush1.msra.mxu0 0.0
  %2858 = vmatprep.subr.mxu0 0.0
  %2859 = vmatpush1.msra.mxu0 0.0
  %2860 = vmatprep.mubr.f32.mxu0 0.0
  %2861 = vmatmul.mubr.f32.gmra.mrb[0].mxu0 %v2795
  %v2862 = vpop.f32.mrb[0].mxu0
  %v2863 = vadd.f32 %v426, %v2862
  %v2864 = vpop.f32.mrb[0].mxu0
  %2865 = vdwg.mxu0
  %v2866 = vmax.f32 %v2863, 0.0
  %s2867 = scalar_lea.vmem %s6, 96
  %v2868 = vld [vmem:[%s2867] sm:$0xff]
  %v2869 = vld [vmem:[%s2867 + $0x8] sm:$0xff]
  %v2871 = vsel %vm822, %v2866, 0
  %2873 = vmatprep.subr.mxu0 0.0
  %2874 = vmatpush1.msra.mxu0 %v2868
  %2875 = vmatprep.subr.mxu0 0.0
  %2876 = vmatpush1.msra.mxu0 %v2869
  %2877 = vmatprep.subr.mxu0 0.0
  %2878 = vmatpush1.msra.mxu0 0.0
  %2879 = vmatprep.subr.mxu0 0.0
  %2880 = vmatpush1.msra.mxu0 0.0
  %2881 = vmatprep.subr.mxu0 0.0
  %2882 = vmatpush1.msra.mxu0 0.0
  %2883 = vmatprep.subr.mxu0 0.0
  %2884 = vmatpush1.msra.mxu0 0.0
  %2885 = vmatprep.subr.mxu0 0.0
  %2886 = vmatpush1.msra.mxu0 0.0
  %2887 = vmatprep.subr.mxu0 0.0
  %2888 = vmatpush1.msra.mxu0 0.0
  %2889 = vmatprep.subr.mxu0 0.0
  %2890 = vmatpush1.msra.mxu0 0.0
  %2891 = vmatprep.subr.mxu0 0.0
  %2892 = vmatpush1.msra.mxu0 0.0
  %2893 = vmatprep.subr.mxu0 0.0
  %2894 = vmatpush1.msra.mxu0 0.0
  %2895 = vmatprep.subr.mxu0 0.0
  %2896 = vmatpush1.msra.mxu0 0.0
  %2897 = vmatprep.subr.mxu0 0.0
  %2898 = vmatpush1.msra.mxu0 0.0
  %2899 = vmatprep.subr.mxu0 0.0
  %2900 = vmatpush1.msra.mxu0 0.0
  %2901 = vmatprep.subr.mxu0 0.0
  %2902 = vmatpush1.msra.mxu0 0.0
  %2903 = vmatprep.subr.mxu0 0.0
  %2904 = vmatpush1.msra.mxu0 0.0
  %2905 = vmatprep.subr.mxu0 0.0
  %2906 = vmatpush1.msra.mxu0 0.0
  %2907 = vmatprep.subr.mxu0 0.0
  %2908 = vmatpush1.msra.mxu0 0.0
  %2909 = vmatprep.subr.mxu0 0.0
  %2910 = vmatpush1.msra.mxu0 0.0
  %2911 = vmatprep.subr.mxu0 0.0
  %2912 = vmatpush1.msra.mxu0 0.0
  %2913 = vmatprep.subr.mxu0 0.0
  %2914 = vmatpush1.msra.mxu0 0.0
  %2915 = vmatprep.subr.mxu0 0.0
  %2916 = vmatpush1.msra.mxu0 0.0
  %2917 = vmatprep.subr.mxu0 0.0
  %2918 = vmatpush1.msra.mxu0 0.0
  %2919 = vmatprep.subr.mxu0 0.0
  %2920 = vmatpush1.msra.mxu0 0.0
  %2921 = vmatprep.subr.mxu0 0.0
  %2922 = vmatpush1.msra.mxu0 0.0
  %2923 = vmatprep.subr.mxu0 0.0
  %2924 = vmatpush1.msra.mxu0 0.0
  %2925 = vmatprep.subr.mxu0 0.0
  %2926 = vmatpush1.msra.mxu0 0.0
  %2927 = vmatprep.subr.mxu0 0.0
  %2928 = vmatpush1.msra.mxu0 0.0
  %2929 = vmatprep.subr.mxu0 0.0
  %2930 = vmatpush1.msra.mxu0 0.0
  %2931 = vmatprep.subr.mxu0 0.0
  %2932 = vmatpush1.msra.mxu0 0.0
  %2933 = vmatprep.subr.mxu0 0.0
  %2934 = vmatpush1.msra.mxu0 0.0
  %2935 = vmatprep.subr.mxu0 0.0
  %2936 = vmatpush1.msra.mxu0 0.0
  %2937 = vmatprep.mubr.f32.mxu0 0.0
  %2938 = vmatmul.mubr.f32.gmra.mrb[0].mxu0 %v2871
  %v2939 = vpop.f32.mrb[0].mxu0
  %v2940 = vadd.f32 0.0, %v2939
  %v2941 = vpop.f32.mrb[0].mxu0
  %2942 = vdwg.mxu0
  %v2943 = vadd.f32 %v2548, %v2940
  %s2944 = scalar_lea.vmem %s0, 84
  %v2945 = vld [vmem:[%s2944] sm:$0xff]
  %v2946 = vld [vmem:[%s2944 + $0x8] sm:$0xf]
  %v2949 = vcombine.high %v2945, %v2945
  %v2951 = vunpack.c.l.s4 1983009808
  %v2952 = vunpack.c.0.s8 %v2951
  %v2953 = vlaneseq
  %v2954 = vshrl.u32 %v2953, 7
  %v2955 = vsub.s32 %v2952, %v2954
  %v2956 = vrot.slane %v2945, %v2955
  %v2958 = vunpack.c.l.s4 1983009808
  %v2959 = vunpack.c.0.s8 %v2958
  %v2960 = vlaneseq
  %v2961 = vshrl.u32 %v2960, 7
  %v2962 = vsub.s32 %v2959, %v2961
  %v2963 = vrot.slane %v2949, %v2962
  %v2964 = vcombine.high %v2956, %v2956
  %v2965 = vcombine.high %v2963, %v2963
  %v2967 = vunpack.c.l.s4 1983009808
  %v2968 = vunpack.c.0.s8 %v2967
  %v2969 = vlaneseq
  %v2970 = vshrl.u32 %v2969, 7
  %v2971 = vsub.s32 %v2968, %v2970
  %v2972 = vrot.slane %v2946, %v2971
  %v2973 = vcombine.high %v2972, %v2972
  %2980 = vmatprep.subr.mxu0 0.0
  %2981 = vmatpush1.msra.mxu0 %v76
  %2982 = vmatprep.subr.mxu0 0.0
  %2983 = vmatpush1.msra.mxu0 %v77
  %2984 = vmatprep.subr.mxu0 0.0
  %2985 = vmatpush1.msra.mxu0 %v78
  %2986 = vmatprep.subr.mxu0 0.0
  %2987 = vmatpush1.msra.mxu0 %v79
  %2988 = vmatprep.subr.mxu0 0.0
  %2989 = vmatpush1.msra.mxu0 %v80
  %2990 = vmatprep.subr.mxu0 0.0
  %2991 = vmatpush1.msra.mxu0 %v81
  %2992 = vmatprep.subr.mxu0 0.0
  %2993 = vmatpush1.msra.mxu0 %v82
  %2994 = vmatprep.subr.mxu0 0.0
  %2995 = vmatpush1.msra.mxu0 %v83
  %2996 = vmatprep.subr.mxu0 0.0
  %2997 = vmatpush1.msra.mxu0 %v84
  %2998 = vmatprep.subr.mxu0 0.0
  %2999 = vmatpush1.msra.mxu0 %v85
  %3000 = vmatprep.subr.mxu0 0.0
  %3001 = vmatpush1.msra.mxu0 %v86
  %3002 = vmatprep.subr.mxu0 0.0
  %3003 = vmatpush1.msra.mxu0 %v87
  %3004 = vmatprep.subr.mxu0 0.0
  %3005 = vmatpush1.msra.mxu0 %v88
  %3006 = vmatprep.subr.mxu0 0.0
  %3007 = vmatpush1.msra.mxu0 %v89
  %3008 = vmatprep.subr.mxu0 0.0
  %3009 = vmatpush1.msra.mxu0 %v90
  %3010 = vmatprep.subr.mxu0 0.0
  %3011 = vmatpush1.msra.mxu0 %v91
  %3012 = vmatprep.subr.mxu0 0.0
  %3013 = vmatpush1.msra.mxu0 %v92
  %3014 = vmatprep.subr.mxu0 0.0
  %3015 = vmatpush1.msra.mxu0 %v93
  %3016 = vmatprep.subr.mxu0 0.0
  %3017 = vmatpush1.msra.mxu0 %v94
  %3018 = vmatprep.subr.mxu0 0.0
  %3019 = vmatpush1.msra.mxu0 %v95
  %3020 = vmatprep.subr.mxu0 0.0
  %3021 = vmatpush1.msra.mxu0 %v96
  %3022 = vmatprep.subr.mxu0 0.0
  %3023 = vmatpush1.msra.mxu0 %v97
  %3024 = vmatprep.subr.mxu0 0.0
  %3025 = vmatpush1.msra.mxu0 %v98
  %3026 = vmatprep.subr.mxu0 0.0
  %3027 = vmatpush1.msra.mxu0 %v99
  %3028 = vmatprep.subr.mxu0 0.0
  %3029 = vmatpush1.msra.mxu0 %v100
  %3030 = vmatprep.subr.mxu0 0.0
  %3031 = vmatpush1.msra.mxu0 %v101
  %3032 = vmatprep.subr.mxu0 0.0
  %3033 = vmatpush1.msra.mxu0 %v102
  %3034 = vmatprep.subr.mxu0 0.0
  %3035 = vmatpush1.msra.mxu0 %v103
  %3036 = vmatprep.subr.mxu0 0.0
  %3037 = vmatpush1.msra.mxu0 %v104
  %3038 = vmatprep.subr.mxu0 0.0
  %3039 = vmatpush1.msra.mxu0 %v105
  %3040 = vmatprep.subr.mxu0 0.0
  %3041 = vmatpush1.msra.mxu0 %v106
  %3042 = vmatprep.subr.mxu0 0.0
  %3043 = vmatpush1.msra.mxu0 %v107
  %3044 = vmatprep.mubr.f32.mxu0 %v2964
  %3045 = vmatmul.mubr.f32.gmra.mrb[0].mxu0 %v2956
  %v3046 = vpop.f32.mrb[0].mxu0
  %v3047 = vadd.f32 %v176, %v3046
  %v3048 = vpop.f32.mrb[0].mxu0
  %3049 = vdwg.mxu0
  %3050 = vmatprep.subr.mxu0 0.0
  %3051 = vmatpush1.msra.mxu0 %v108
  %3052 = vmatprep.subr.mxu0 0.0
  %3053 = vmatpush1.msra.mxu0 %v109
  %3054 = vmatprep.subr.mxu0 0.0
  %3055 = vmatpush1.msra.mxu0 %v110
  %3056 = vmatprep.subr.mxu0 0.0
  %3057 = vmatpush1.msra.mxu0 %v111
  %3058 = vmatprep.subr.mxu0 0.0
  %3059 = vmatpush1.msra.mxu0 %v112
  %3060 = vmatprep.subr.mxu0 0.0
  %3061 = vmatpush1.msra.mxu0 %v113
  %3062 = vmatprep.subr.mxu0 0.0
  %3063 = vmatpush1.msra.mxu0 %v114
  %3064 = vmatprep.subr.mxu0 0.0
  %3065 = vmatpush1.msra.mxu0 %v115
  %3066 = vmatprep.subr.mxu0 0.0
  %3067 = vmatpush1.msra.mxu0 %v116
  %3068 = vmatprep.subr.mxu0 0.0
  %3069 = vmatpush1.msra.mxu0 %v117
  %3070 = vmatprep.subr.mxu0 0.0
  %3071 = vmatpush1.msra.mxu0 %v118
  %3072 = vmatprep.subr.mxu0 0.0
  %3073 = vmatpush1.msra.mxu0 %v119
  %3074 = vmatprep.subr.mxu0 0.0
  %3075 = vmatpush1.msra.mxu0 %v120
  %3076 = vmatprep.subr.mxu0 0.0
  %3077 = vmatpush1.msra.mxu0 %v121
  %3078 = vmatprep.subr.mxu0 0.0
  %3079 = vmatpush1.msra.mxu0 %v122
  %3080 = vmatprep.subr.mxu0 0.0
  %3081 = vmatpush1.msra.mxu0 %v123
  %3082 = vmatprep.subr.mxu0 0.0
  %3083 = vmatpush1.msra.mxu0 %v124
  %3084 = vmatprep.subr.mxu0 0.0
  %3085 = vmatpush1.msra.mxu0 %v125
  %3086 = vmatprep.subr.mxu0 0.0
  %3087 = vmatpush1.msra.mxu0 %v126
  %3088 = vmatprep.subr.mxu0 0.0
  %3089 = vmatpush1.msra.mxu0 %v127
  %3090 = vmatprep.subr.mxu0 0.0
  %3091 = vmatpush1.msra.mxu0 %v128
  %3092 = vmatprep.subr.mxu0 0.0
  %3093 = vmatpush1.msra.mxu0 %v129
  %3094 = vmatprep.subr.mxu0 0.0
  %3095 = vmatpush1.msra.mxu0 %v130
  %3096 = vmatprep.subr.mxu0 0.0
  %3097 = vmatpush1.msra.mxu0 %v131
  %3098 = vmatprep.subr.mxu0 0.0
  %3099 = vmatpush1.msra.mxu0 %v132
  %3100 = vmatprep.subr.mxu0 0.0
  %3101 = vmatpush1.msra.mxu0 %v133
  %3102 = vmatprep.subr.mxu0 0.0
  %3103 = vmatpush1.msra.mxu0 %v134
  %3104 = vmatprep.subr.mxu0 0.0
  %3105 = vmatpush1.msra.mxu0 %v135
  %3106 = vmatprep.subr.mxu0 0.0
  %3107 = vmatpush1.msra.mxu0 %v136
  %3108 = vmatprep.subr.mxu0 0.0
  %3109 = vmatpush1.msra.mxu0 %v137
  %3110 = vmatprep.subr.mxu0 0.0
  %3111 = vmatpush1.msra.mxu0 %v138
  %3112 = vmatprep.subr.mxu0 0.0
  %3113 = vmatpush1.msra.mxu0 %v139
  %3114 = vmatprep.mubr.f32.mxu0 %v2965
  %3115 = vmatmul.mubr.f32.gmra.mrb[0].mxu0 %v2963
  %v3116 = vpop.f32.mrb[0].mxu0
  %v3117 = vadd.f32 %v3047, %v3116
  %v3118 = vpop.f32.mrb[0].mxu0
  %3119 = vdwg.mxu0
  %3120 = vmatprep.subr.mxu0 0.0
  %3121 = vmatpush1.msra.mxu0 %v140
  %3122 = vmatprep.subr.mxu0 0.0
  %3123 = vmatpush1.msra.mxu0 %v141
  %3124 = vmatprep.subr.mxu0 0.0
  %3125 = vmatpush1.msra.mxu0 %v142
  %3126 = vmatprep.subr.mxu0 0.0
  %3127 = vmatpush1.msra.mxu0 %v143
  %3128 = vmatprep.subr.mxu0 0.0
  %3129 = vmatpush1.msra.mxu0 %v144
  %3130 = vmatprep.subr.mxu0 0.0
  %3131 = vmatpush1.msra.mxu0 %v145
  %3132 = vmatprep.subr.mxu0 0.0
  %3133 = vmatpush1.msra.mxu0 %v146
  %3134 = vmatprep.subr.mxu0 0.0
  %3135 = vmatpush1.msra.mxu0 %v147
  %3136 = vmatprep.subr.mxu0 0.0
  %3137 = vmatpush1.msra.mxu0 %v148
  %3138 = vmatprep.subr.mxu0 0.0
  %3139 = vmatpush1.msra.mxu0 %v149
  %3140 = vmatprep.subr.mxu0 0.0
  %3141 = vmatpush1.msra.mxu0 %v150
  %3142 = vmatprep.subr.mxu0 0.0
  %3143 = vmatpush1.msra.mxu0 %v151
  %3144 = vmatprep.subr.mxu0 0.0
  %3145 = vmatpush1.msra.mxu0 %v152
  %3146 = vmatprep.subr.mxu0 0.0
  %3147 = vmatpush1.msra.mxu0 %v153
  %3148 = vmatprep.subr.mxu0 0.0
  %3149 = vmatpush1.msra.mxu0 %v154
  %3150 = vmatprep.subr.mxu0 0.0
  %3151 = vmatpush1.msra.mxu0 %v155
  %3152 = vmatprep.subr.mxu0 0.0
  %3153 = vmatpush1.msra.mxu0 %v156
  %3154 = vmatprep.subr.mxu0 0.0
  %3155 = vmatpush1.msra.mxu0 %v157
  %3156 = vmatprep.subr.mxu0 0.0
  %3157 = vmatpush1.msra.mxu0 %v158
  %3158 = vmatprep.subr.mxu0 0.0
  %3159 = vmatpush1.msra.mxu0 %v159
  %3160 = vmatprep.subr.mxu0 0.0
  %3161 = vmatpush1.msra.mxu0 %v160
  %3162 = vmatprep.subr.mxu0 0.0
  %3163 = vmatpush1.msra.mxu0 %v161
  %3164 = vmatprep.subr.mxu0 0.0
  %3165 = vmatpush1.msra.mxu0 %v162
  %3166 = vmatprep.subr.mxu0 0.0
  %3167 = vmatpush1.msra.mxu0 %v163
  %3168 = vmatprep.subr.mxu0 0.0
  %3169 = vmatpush1.msra.mxu0 %v164
  %3170 = vmatprep.subr.mxu0 0.0
  %3171 = vmatpush1.msra.mxu0 %v165
  %3172 = vmatprep.subr.mxu0 0.0
  %3173 = vmatpush1.msra.mxu0 %v166
  %3174 = vmatprep.subr.mxu0 0.0
  %3175 = vmatpush1.msra.mxu0 %v167
  %3176 = vmatprep.subr.mxu0 0.0
  %3177 = vmatpush1.msra.mxu0 %v168
  %3178 = vmatprep.subr.mxu0 0.0
  %3179 = vmatpush1.msra.mxu0 %v169
  %3180 = vmatprep.subr.mxu0 0.0
  %3181 = vmatpush1.msra.mxu0 %v170
  %3182 = vmatprep.subr.mxu0 0.0
  %3183 = vmatpush1.msra.mxu0 %v171
  %3184 = vmatprep.mubr.f32.mxu0 %v2973
  %3185 = vmatmul.mubr.f32.gmra.mrb[0].mxu0 %v2972
  %v3186 = vpop.f32.mrb[0].mxu0
  %v3187 = vadd.f32 %v3117, %v3186
  %v3188 = vpop.f32.mrb[0].mxu0
  %3189 = vdwg.mxu0
  %v3190 = vmax.f32 %v3187, 0.0
  %3191 = vmatprep.subr.mxu0 0.0
  %3192 = vmatpush1.msra.mxu0 %v57
  %3193 = vmatprep.subr.mxu0 0.0
  %3194 = vmatpush1.msra.mxu0 %v58
  %3195 = vmatprep.subr.mxu0 0.0
  %3196 = vmatpush1.msra.mxu0 %v59
  %3197 = vmatprep.subr.mxu0 0.0
  %3198 = vmatpush1.msra.mxu0 %v60
  %3199 = vmatprep.subr.mxu0 0.0
  %3200 = vmatpush1.msra.mxu0 %v61
  %3201 = vmatprep.subr.mxu0 0.0
  %3202 = vmatpush1.msra.mxu0 %v62
  %3203 = vmatprep.subr.mxu0 0.0
  %3204 = vmatpush1.msra.mxu0 %v63
  %3205 = vmatprep.subr.mxu0 0.0
  %3206 = vmatpush1.msra.mxu0 %v64
  %3207 = vmatprep.subr.mxu0 0.0
  %3208 = vmatpush1.msra.mxu0 %v65
  %3209 = vmatprep.subr.mxu0 0.0
  %3210 = vmatpush1.msra.mxu0 %v66
  %3211 = vmatprep.subr.mxu0 0.0
  %3212 = vmatpush1.msra.mxu0 %v67
  %3213 = vmatprep.subr.mxu0 0.0
  %3214 = vmatpush1.msra.mxu0 %v68
  %3215 = vmatprep.subr.mxu0 0.0
  %3216 = vmatpush1.msra.mxu0 %v69
  %3217 = vmatprep.subr.mxu0 0.0
  %3218 = vmatpush1.msra.mxu0 %v70
  %3219 = vmatprep.subr.mxu0 0.0
  %3220 = vmatpush1.msra.mxu0 %v71
  %3221 = vmatprep.subr.mxu0 0.0
  %3222 = vmatpush1.msra.mxu0 %v72
  %3223 = vmatprep.subr.mxu0 0.0
  %3224 = vmatpush1.msra.mxu0 0.0
  %3225 = vmatprep.subr.mxu0 0.0
  %3226 = vmatpush1.msra.mxu0 0.0
  %3227 = vmatprep.subr.mxu0 0.0
  %3228 = vmatpush1.msra.mxu0 0.0
  %3229 = vmatprep.subr.mxu0 0.0
  %3230 = vmatpush1.msra.mxu0 0.0
  %3231 = vmatprep.subr.mxu0 0.0
  %3232 = vmatpush1.msra.mxu0 0.0
  %3233 = vmatprep.subr.mxu0 0.0
  %3234 = vmatpush1.msra.mxu0 0.0
  %3235 = vmatprep.subr.mxu0 0.0
  %3236 = vmatpush1.msra.mxu0 0.0
  %3237 = vmatprep.subr.mxu0 0.0
  %3238 = vmatpush1.msra.mxu0 0.0
  %3239 = vmatprep.subr.mxu0 0.0
  %3240 = vmatpush1.msra.mxu0 0.0
  %3241 = vmatprep.subr.mxu0 0.0
  %3242 = vmatpush1.msra.mxu0 0.0
  %3243 = vmatprep.subr.mxu0 0.0
  %3244 = vmatpush1.msra.mxu0 0.0
  %3245 = vmatprep.subr.mxu0 0.0
  %3246 = vmatpush1.msra.mxu0 0.0
  %3247 = vmatprep.subr.mxu0 0.0
  %3248 = vmatpush1.msra.mxu0 0.0
  %3249 = vmatprep.subr.mxu0 0.0
  %3250 = vmatpush1.msra.mxu0 0.0
  %3251 = vmatprep.subr.mxu0 0.0
  %3252 = vmatpush1.msra.mxu0 0.0
  %3253 = vmatprep.subr.mxu0 0.0
  %3254 = vmatpush1.msra.mxu0 0.0
  %3255 = vmatprep.mubr.f32.mxu0 0.0
  %3256 = vmatmul.mubr.f32.gmra.mrb[0].mxu0 %v3190
  %v3257 = vpop.f32.mrb[0].mxu0
  %v3258 = vadd.f32 %v426, %v3257
  %v3259 = vpop.f32.mrb[0].mxu0
  %3260 = vdwg.mxu0
  %v3261 = vmax.f32 %v3258, 0.0
  %s3262 = scalar_lea.vmem %s6, 112
  %v3263 = vld [vmem:[%s3262] sm:$0xff]
  %v3264 = vld [vmem:[%s3262 + $0x8] sm:$0xff]
  %v3266 = vsel %vm822, %v3261, 0
  %3268 = vmatprep.subr.mxu0 0.0
  %3269 = vmatpush1.msra.mxu0 %v3263
  %3270 = vmatprep.subr.mxu0 0.0
  %3271 = vmatpush1.msra.mxu0 %v3264
  %3272 = vmatprep.subr.mxu0 0.0
  %3273 = vmatpush1.msra.mxu0 0.0
  %3274 = vmatprep.subr.mxu0 0.0
  %3275 = vmatpush1.msra.mxu0 0.0
  %3276 = vmatprep.subr.mxu0 0.0
  %3277 = vmatpush1.msra.mxu0 0.0
  %3278 = vmatprep.subr.mxu0 0.0
  %3279 = vmatpush1.msra.mxu0 0.0
  %3280 = vmatprep.subr.mxu0 0.0
  %3281 = vmatpush1.msra.mxu0 0.0
  %3282 = vmatprep.subr.mxu0 0.0
  %3283 = vmatpush1.msra.mxu0 0.0
  %3284 = vmatprep.subr.mxu0 0.0
  %3285 = vmatpush1.msra.mxu0 0.0
  %3286 = vmatprep.subr.mxu0 0.0
  %3287 = vmatpush1.msra.mxu0 0.0
  %3288 = vmatprep.subr.mxu0 0.0
  %3289 = vmatpush1.msra.mxu0 0.0
  %3290 = vmatprep.subr.mxu0 0.0
  %3291 = vmatpush1.msra.mxu0 0.0
  %3292 = vmatprep.subr.mxu0 0.0
  %3293 = vmatpush1.msra.mxu0 0.0
  %3294 = vmatprep.subr.mxu0 0.0
  %3295 = vmatpush1.msra.mxu0 0.0
  %3296 = vmatprep.subr.mxu0 0.0
  %3297 = vmatpush1.msra.mxu0 0.0
  %3298 = vmatprep.subr.mxu0 0.0
  %3299 = vmatpush1.msra.mxu0 0.0
  %3300 = vmatprep.subr.mxu0 0.0
  %3301 = vmatpush1.msra.mxu0 0.0
  %3302 = vmatprep.subr.mxu0 0.0
  %3303 = vmatpush1.msra.mxu0 0.0
  %3304 = vmatprep.subr.mxu0 0.0
  %3305 = vmatpush1.msra.mxu0 0.0
  %3306 = vmatprep.subr.mxu0 0.0
  %3307 = vmatpush1.msra.mxu0 0.0
  %3308 = vmatprep.subr.mxu0 0.0
  %3309 = vmatpush1.msra.mxu0 0.0
  %3310 = vmatprep.subr.mxu0 0.0
  %3311 = vmatpush1.msra.mxu0 0.0
  %3312 = vmatprep.subr.mxu0 0.0
  %3313 = vmatpush1.msra.mxu0 0.0
  %3314 = vmatprep.subr.mxu0 0.0
  %3315 = vmatpush1.msra.mxu0 0.0
  %3316 = vmatprep.subr.mxu0 0.0
  %3317 = vmatpush1.msra.mxu0 0.0
  %3318 = vmatprep.subr.mxu0 0.0
  %3319 = vmatpush1.msra.mxu0 0.0
  %3320 = vmatprep.subr.mxu0 0.0
  %3321 = vmatpush1.msra.mxu0 0.0
  %3322 = vmatprep.subr.mxu0 0.0
  %3323 = vmatpush1.msra.mxu0 0.0
  %3324 = vmatprep.subr.mxu0 0.0
  %3325 = vmatpush1.msra.mxu0 0.0
  %3326 = vmatprep.subr.mxu0 0.0
  %3327 = vmatpush1.msra.mxu0 0.0
  %3328 = vmatprep.subr.mxu0 0.0
  %3329 = vmatpush1.msra.mxu0 0.0
  %3330 = vmatprep.subr.mxu0 0.0
  %3331 = vmatpush1.msra.mxu0 0.0
  %3332 = vmatprep.mubr.f32.mxu0 0.0
  %3333 = vmatmul.mubr.f32.gmra.mrb[0].mxu0 %v3266
  %v3334 = vpop.f32.mrb[0].mxu0
  %v3335 = vadd.f32 0.0, %v3334
  %v3336 = vpop.f32.mrb[0].mxu0
  %3337 = vdwg.mxu0
  %v3338 = vadd.f32 %v2943, %v3335
  %s3339 = scalar_lea.vmem %s0, 96
  %v3340 = vld [vmem:[%s3339] sm:$0xff]
  %v3341 = vld [vmem:[%s3339 + $0x8] sm:$0xf]
  %v3344 = vcombine.high %v3340, %v3340
  %v3346 = vunpack.c.l.s4 1983009808
  %v3347 = vunpack.c.0.s8 %v3346
  %v3348 = vlaneseq
  %v3349 = vshrl.u32 %v3348, 7
  %v3350 = vsub.s32 %v3347, %v3349
  %v3351 = vrot.slane %v3340, %v3350
  %v3353 = vunpack.c.l.s4 1983009808
  %v3354 = vunpack.c.0.s8 %v3353
  %v3355 = vlaneseq
  %v3356 = vshrl.u32 %v3355, 7
  %v3357 = vsub.s32 %v3354, %v3356
  %v3358 = vrot.slane %v3344, %v3357
  %v3359 = vcombine.high %v3351, %v3351
  %v3360 = vcombine.high %v3358, %v3358
  %v3362 = vunpack.c.l.s4 1983009808
  %v3363 = vunpack.c.0.s8 %v3362
  %v3364 = vlaneseq
  %v3365 = vshrl.u32 %v3364, 7
  %v3366 = vsub.s32 %v3363, %v3365
  %v3367 = vrot.slane %v3341, %v3366
  %v3368 = vcombine.high %v3367, %v3367
  %3375 = vmatprep.subr.mxu0 0.0
  %3376 = vmatpush1.msra.mxu0 %v76
  %3377 = vmatprep.subr.mxu0 0.0
  %3378 = vmatpush1.msra.mxu0 %v77
  %3379 = vmatprep.subr.mxu0 0.0
  %3380 = vmatpush1.msra.mxu0 %v78
  %3381 = vmatprep.subr.mxu0 0.0
  %3382 = vmatpush1.msra.mxu0 %v79
  %3383 = vmatprep.subr.mxu0 0.0
  %3384 = vmatpush1.msra.mxu0 %v80
  %3385 = vmatprep.subr.mxu0 0.0
  %3386 = vmatpush1.msra.mxu0 %v81
  %3387 = vmatprep.subr.mxu0 0.0
  %3388 = vmatpush1.msra.mxu0 %v82
  %3389 = vmatprep.subr.mxu0 0.0
  %3390 = vmatpush1.msra.mxu0 %v83
  %3391 = vmatprep.subr.mxu0 0.0
  %3392 = vmatpush1.msra.mxu0 %v84
  %3393 = vmatprep.subr.mxu0 0.0
  %3394 = vmatpush1.msra.mxu0 %v85
  %3395 = vmatprep.subr.mxu0 0.0
  %3396 = vmatpush1.msra.mxu0 %v86
  %3397 = vmatprep.subr.mxu0 0.0
  %3398 = vmatpush1.msra.mxu0 %v87
  %3399 = vmatprep.subr.mxu0 0.0
  %3400 = vmatpush1.msra.mxu0 %v88
  %3401 = vmatprep.subr.mxu0 0.0
  %3402 = vmatpush1.msra.mxu0 %v89
  %3403 = vmatprep.subr.mxu0 0.0
  %3404 = vmatpush1.msra.mxu0 %v90
  %3405 = vmatprep.subr.mxu0 0.0
  %3406 = vmatpush1.msra.mxu0 %v91
  %3407 = vmatprep.subr.mxu0 0.0
  %3408 = vmatpush1.msra.mxu0 %v92
  %3409 = vmatprep.subr.mxu0 0.0
  %3410 = vmatpush1.msra.mxu0 %v93
  %3411 = vmatprep.subr.mxu0 0.0
  %3412 = vmatpush1.msra.mxu0 %v94
  %3413 = vmatprep.subr.mxu0 0.0
  %3414 = vmatpush1.msra.mxu0 %v95
  %3415 = vmatprep.subr.mxu0 0.0
  %3416 = vmatpush1.msra.mxu0 %v96
  %3417 = vmatprep.subr.mxu0 0.0
  %3418 = vmatpush1.msra.mxu0 %v97
  %3419 = vmatprep.subr.mxu0 0.0
  %3420 = vmatpush1.msra.mxu0 %v98
  %3421 = vmatprep.subr.mxu0 0.0
  %3422 = vmatpush1.msra.mxu0 %v99
  %3423 = vmatprep.subr.mxu0 0.0
  %3424 = vmatpush1.msra.mxu0 %v100
  %3425 = vmatprep.subr.mxu0 0.0
  %3426 = vmatpush1.msra.mxu0 %v101
  %3427 = vmatprep.subr.mxu0 0.0
  %3428 = vmatpush1.msra.mxu0 %v102
  %3429 = vmatprep.subr.mxu0 0.0
  %3430 = vmatpush1.msra.mxu0 %v103
  %3431 = vmatprep.subr.mxu0 0.0
  %3432 = vmatpush1.msra.mxu0 %v104
  %3433 = vmatprep.subr.mxu0 0.0
  %3434 = vmatpush1.msra.mxu0 %v105
  %3435 = vmatprep.subr.mxu0 0.0
  %3436 = vmatpush1.msra.mxu0 %v106
  %3437 = vmatprep.subr.mxu0 0.0
  %3438 = vmatpush1.msra.mxu0 %v107
  %3439 = vmatprep.mubr.f32.mxu0 %v3359
  %3440 = vmatmul.mubr.f32.gmra.mrb[0].mxu0 %v3351
  %v3441 = vpop.f32.mrb[0].mxu0
  %v3442 = vadd.f32 %v176, %v3441
  %v3443 = vpop.f32.mrb[0].mxu0
  %3444 = vdwg.mxu0
  %3445 = vmatprep.subr.mxu0 0.0
  %3446 = vmatpush1.msra.mxu0 %v108
  %3447 = vmatprep.subr.mxu0 0.0
  %3448 = vmatpush1.msra.mxu0 %v109
  %3449 = vmatprep.subr.mxu0 0.0
  %3450 = vmatpush1.msra.mxu0 %v110
  %3451 = vmatprep.subr.mxu0 0.0
  %3452 = vmatpush1.msra.mxu0 %v111
  %3453 = vmatprep.subr.mxu0 0.0
  %3454 = vmatpush1.msra.mxu0 %v112
  %3455 = vmatprep.subr.mxu0 0.0
  %3456 = vmatpush1.msra.mxu0 %v113
  %3457 = vmatprep.subr.mxu0 0.0
  %3458 = vmatpush1.msra.mxu0 %v114
  %3459 = vmatprep.subr.mxu0 0.0
  %3460 = vmatpush1.msra.mxu0 %v115
  %3461 = vmatprep.subr.mxu0 0.0
  %3462 = vmatpush1.msra.mxu0 %v116
  %3463 = vmatprep.subr.mxu0 0.0
  %3464 = vmatpush1.msra.mxu0 %v117
  %3465 = vmatprep.subr.mxu0 0.0
  %3466 = vmatpush1.msra.mxu0 %v118
  %3467 = vmatprep.subr.mxu0 0.0
  %3468 = vmatpush1.msra.mxu0 %v119
  %3469 = vmatprep.subr.mxu0 0.0
  %3470 = vmatpush1.msra.mxu0 %v120
  %3471 = vmatprep.subr.mxu0 0.0
  %3472 = vmatpush1.msra.mxu0 %v121
  %3473 = vmatprep.subr.mxu0 0.0
  %3474 = vmatpush1.msra.mxu0 %v122
  %3475 = vmatprep.subr.mxu0 0.0
  %3476 = vmatpush1.msra.mxu0 %v123
  %3477 = vmatprep.subr.mxu0 0.0
  %3478 = vmatpush1.msra.mxu0 %v124
  %3479 = vmatprep.subr.mxu0 0.0
  %3480 = vmatpush1.msra.mxu0 %v125
  %3481 = vmatprep.subr.mxu0 0.0
  %3482 = vmatpush1.msra.mxu0 %v126
  %3483 = vmatprep.subr.mxu0 0.0
  %3484 = vmatpush1.msra.mxu0 %v127
  %3485 = vmatprep.subr.mxu0 0.0
  %3486 = vmatpush1.msra.mxu0 %v128
  %3487 = vmatprep.subr.mxu0 0.0
  %3488 = vmatpush1.msra.mxu0 %v129
  %3489 = vmatprep.subr.mxu0 0.0
  %3490 = vmatpush1.msra.mxu0 %v130
  %3491 = vmatprep.subr.mxu0 0.0
  %3492 = vmatpush1.msra.mxu0 %v131
  %3493 = vmatprep.subr.mxu0 0.0
  %3494 = vmatpush1.msra.mxu0 %v132
  %3495 = vmatprep.subr.mxu0 0.0
  %3496 = vmatpush1.msra.mxu0 %v133
  %3497 = vmatprep.subr.mxu0 0.0
  %3498 = vmatpush1.msra.mxu0 %v134
  %3499 = vmatprep.subr.mxu0 0.0
  %3500 = vmatpush1.msra.mxu0 %v135
  %3501 = vmatprep.subr.mxu0 0.0
  %3502 = vmatpush1.msra.mxu0 %v136
  %3503 = vmatprep.subr.mxu0 0.0
  %3504 = vmatpush1.msra.mxu0 %v137
  %3505 = vmatprep.subr.mxu0 0.0
  %3506 = vmatpush1.msra.mxu0 %v138
  %3507 = vmatprep.subr.mxu0 0.0
  %3508 = vmatpush1.msra.mxu0 %v139
  %3509 = vmatprep.mubr.f32.mxu0 %v3360
  %3510 = vmatmul.mubr.f32.gmra.mrb[0].mxu0 %v3358
  %v3511 = vpop.f32.mrb[0].mxu0
  %v3512 = vadd.f32 %v3442, %v3511
  %v3513 = vpop.f32.mrb[0].mxu0
  %3514 = vdwg.mxu0
  %3515 = vmatprep.subr.mxu0 0.0
  %3516 = vmatpush1.msra.mxu0 %v140
  %3517 = vmatprep.subr.mxu0 0.0
  %3518 = vmatpush1.msra.mxu0 %v141
  %3519 = vmatprep.subr.mxu0 0.0
  %3520 = vmatpush1.msra.mxu0 %v142
  %3521 = vmatprep.subr.mxu0 0.0
  %3522 = vmatpush1.msra.mxu0 %v143
  %3523 = vmatprep.subr.mxu0 0.0
  %3524 = vmatpush1.msra.mxu0 %v144
  %3525 = vmatprep.subr.mxu0 0.0
  %3526 = vmatpush1.msra.mxu0 %v145
  %3527 = vmatprep.subr.mxu0 0.0
  %3528 = vmatpush1.msra.mxu0 %v146
  %3529 = vmatprep.subr.mxu0 0.0
  %3530 = vmatpush1.msra.mxu0 %v147
  %3531 = vmatprep.subr.mxu0 0.0
  %3532 = vmatpush1.msra.mxu0 %v148
  %3533 = vmatprep.subr.mxu0 0.0
  %3534 = vmatpush1.msra.mxu0 %v149
  %3535 = vmatprep.subr.mxu0 0.0
  %3536 = vmatpush1.msra.mxu0 %v150
  %3537 = vmatprep.subr.mxu0 0.0
  %3538 = vmatpush1.msra.mxu0 %v151
  %3539 = vmatprep.subr.mxu0 0.0
  %3540 = vmatpush1.msra.mxu0 %v152
  %3541 = vmatprep.subr.mxu0 0.0
  %3542 = vmatpush1.msra.mxu0 %v153
  %3543 = vmatprep.subr.mxu0 0.0
  %3544 = vmatpush1.msra.mxu0 %v154
  %3545 = vmatprep.subr.mxu0 0.0
  %3546 = vmatpush1.msra.mxu0 %v155
  %3547 = vmatprep.subr.mxu0 0.0
  %3548 = vmatpush1.msra.mxu0 %v156
  %3549 = vmatprep.subr.mxu0 0.0
  %3550 = vmatpush1.msra.mxu0 %v157
  %3551 = vmatprep.subr.mxu0 0.0
  %3552 = vmatpush1.msra.mxu0 %v158
  %3553 = vmatprep.subr.mxu0 0.0
  %3554 = vmatpush1.msra.mxu0 %v159
  %3555 = vmatprep.subr.mxu0 0.0
  %3556 = vmatpush1.msra.mxu0 %v160
  %3557 = vmatprep.subr.mxu0 0.0
  %3558 = vmatpush1.msra.mxu0 %v161
  %3559 = vmatprep.subr.mxu0 0.0
  %3560 = vmatpush1.msra.mxu0 %v162
  %3561 = vmatprep.subr.mxu0 0.0
  %3562 = vmatpush1.msra.mxu0 %v163
  %3563 = vmatprep.subr.mxu0 0.0
  %3564 = vmatpush1.msra.mxu0 %v164
  %3565 = vmatprep.subr.mxu0 0.0
  %3566 = vmatpush1.msra.mxu0 %v165
  %3567 = vmatprep.subr.mxu0 0.0
  %3568 = vmatpush1.msra.mxu0 %v166
  %3569 = vmatprep.subr.mxu0 0.0
  %3570 = vmatpush1.msra.mxu0 %v167
  %3571 = vmatprep.subr.mxu0 0.0
  %3572 = vmatpush1.msra.mxu0 %v168
  %3573 = vmatprep.subr.mxu0 0.0
  %3574 = vmatpush1.msra.mxu0 %v169
  %3575 = vmatprep.subr.mxu0 0.0
  %3576 = vmatpush1.msra.mxu0 %v170
  %3577 = vmatprep.subr.mxu0 0.0
  %3578 = vmatpush1.msra.mxu0 %v171
  %3579 = vmatprep.mubr.f32.mxu0 %v3368
  %3580 = vmatmul.mubr.f32.gmra.mrb[0].mxu0 %v3367
  %v3581 = vpop.f32.mrb[0].mxu0
  %v3582 = vadd.f32 %v3512, %v3581
  %v3583 = vpop.f32.mrb[0].mxu0
  %3584 = vdwg.mxu0
  %v3585 = vmax.f32 %v3582, 0.0
  %3586 = vmatprep.subr.mxu0 0.0
  %3587 = vmatpush1.msra.mxu0 %v57
  %3588 = vmatprep.subr.mxu0 0.0
  %3589 = vmatpush1.msra.mxu0 %v58
  %3590 = vmatprep.subr.mxu0 0.0
  %3591 = vmatpush1.msra.mxu0 %v59
  %3592 = vmatprep.subr.mxu0 0.0
  %3593 = vmatpush1.msra.mxu0 %v60
  %3594 = vmatprep.subr.mxu0 0.0
  %3595 = vmatpush1.msra.mxu0 %v61
  %3596 = vmatprep.subr.mxu0 0.0
  %3597 = vmatpush1.msra.mxu0 %v62
  %3598 = vmatprep.subr.mxu0 0.0
  %3599 = vmatpush1.msra.mxu0 %v63
  %3600 = vmatprep.subr.mxu0 0.0
  %3601 = vmatpush1.msra.mxu0 %v64
  %3602 = vmatprep.subr.mxu0 0.0
  %3603 = vmatpush1.msra.mxu0 %v65
  %3604 = vmatprep.subr.mxu0 0.0
  %3605 = vmatpush1.msra.mxu0 %v66
  %3606 = vmatprep.subr.mxu0 0.0
  %3607 = vmatpush1.msra.mxu0 %v67
  %3608 = vmatprep.subr.mxu0 0.0
  %3609 = vmatpush1.msra.mxu0 %v68
  %3610 = vmatprep.subr.mxu0 0.0
  %3611 = vmatpush1.msra.mxu0 %v69
  %3612 = vmatprep.subr.mxu0 0.0
  %3613 = vmatpush1.msra.mxu0 %v70
  %3614 = vmatprep.subr.mxu0 0.0
  %3615 = vmatpush1.msra.mxu0 %v71
  %3616 = vmatprep.subr.mxu0 0.0
  %3617 = vmatpush1.msra.mxu0 %v72
  %3618 = vmatprep.subr.mxu0 0.0
  %3619 = vmatpush1.msra.mxu0 0.0
  %3620 = vmatprep.subr.mxu0 0.0
  %3621 = vmatpush1.msra.mxu0 0.0
  %3622 = vmatprep.subr.mxu0 0.0
  %3623 = vmatpush1.msra.mxu0 0.0
  %3624 = vmatprep.subr.mxu0 0.0
  %3625 = vmatpush1.msra.mxu0 0.0
  %3626 = vmatprep.subr.mxu0 0.0
  %3627 = vmatpush1.msra.mxu0 0.0
  %3628 = vmatprep.subr.mxu0 0.0
  %3629 = vmatpush1.msra.mxu0 0.0
  %3630 = vmatprep.subr.mxu0 0.0
  %3631 = vmatpush1.msra.mxu0 0.0
  %3632 = vmatprep.subr.mxu0 0.0
  %3633 = vmatpush1.msra.mxu0 0.0
  %3634 = vmatprep.subr.mxu0 0.0
  %3635 = vmatpush1.msra.mxu0 0.0
  %3636 = vmatprep.subr.mxu0 0.0
  %3637 = vmatpush1.msra.mxu0 0.0
  %3638 = vmatprep.subr.mxu0 0.0
  %3639 = vmatpush1.msra.mxu0 0.0
  %3640 = vmatprep.subr.mxu0 0.0
  %3641 = vmatpush1.msra.mxu0 0.0
  %3642 = vmatprep.subr.mxu0 0.0
  %3643 = vmatpush1.msra.mxu0 0.0
  %3644 = vmatprep.subr.mxu0 0.0
  %3645 = vmatpush1.msra.mxu0 0.0
  %3646 = vmatprep.subr.mxu0 0.0
  %3647 = vmatpush1.msra.mxu0 0.0
  %3648 = vmatprep.subr.mxu0 0.0
  %3649 = vmatpush1.msra.mxu0 0.0
  %3650 = vmatprep.mubr.f32.mxu0 0.0
  %3651 = vmatmul.mubr.f32.gmra.mrb[0].mxu0 %v3585
  %v3652 = vpop.f32.mrb[0].mxu0
  %v3653 = vadd.f32 %v426, %v3652
  %v3654 = vpop.f32.mrb[0].mxu0
  %3655 = vdwg.mxu0
  %v3656 = vmax.f32 %v3653, 0.0
  %s3657 = scalar_lea.vmem %s6, 128
  %v3658 = vld [vmem:[%s3657] sm:$0xff]
  %v3659 = vld [vmem:[%s3657 + $0x8] sm:$0xff]
  %v3661 = vsel %vm822, %v3656, 0
  %3663 = vmatprep.subr.mxu0 0.0
  %3664 = vmatpush1.msra.mxu0 %v3658
  %3665 = vmatprep.subr.mxu0 0.0
  %3666 = vmatpush1.msra.mxu0 %v3659
  %3667 = vmatprep.subr.mxu0 0.0
  %3668 = vmatpush1.msra.mxu0 0.0
  %3669 = vmatprep.subr.mxu0 0.0
  %3670 = vmatpush1.msra.mxu0 0.0
  %3671 = vmatprep.subr.mxu0 0.0
  %3672 = vmatpush1.msra.mxu0 0.0
  %3673 = vmatprep.subr.mxu0 0.0
  %3674 = vmatpush1.msra.mxu0 0.0
  %3675 = vmatprep.subr.mxu0 0.0
  %3676 = vmatpush1.msra.mxu0 0.0
  %3677 = vmatprep.subr.mxu0 0.0
  %3678 = vmatpush1.msra.mxu0 0.0
  %3679 = vmatprep.subr.mxu0 0.0
  %3680 = vmatpush1.msra.mxu0 0.0
  %3681 = vmatprep.subr.mxu0 0.0
  %3682 = vmatpush1.msra.mxu0 0.0
  %3683 = vmatprep.subr.mxu0 0.0
  %3684 = vmatpush1.msra.mxu0 0.0
  %3685 = vmatprep.subr.mxu0 0.0
  %3686 = vmatpush1.msra.mxu0 0.0
  %3687 = vmatprep.subr.mxu0 0.0
  %3688 = vmatpush1.msra.mxu0 0.0
  %3689 = vmatprep.subr.mxu0 0.0
  %3690 = vmatpush1.msra.mxu0 0.0
  %3691 = vmatprep.subr.mxu0 0.0
  %3692 = vmatpush1.msra.mxu0 0.0
  %3693 = vmatprep.subr.mxu0 0.0
  %3694 = vmatpush1.msra.mxu0 0.0
  %3695 = vmatprep.subr.mxu0 0.0
  %3696 = vmatpush1.msra.mxu0 0.0
  %3697 = vmatprep.subr.mxu0 0.0
  %3698 = vmatpush1.msra.mxu0 0.0
  %3699 = vmatprep.subr.mxu0 0.0
  %3700 = vmatpush1.msra.mxu0 0.0
  %3701 = vmatprep.subr.mxu0 0.0
  %3702 = vmatpush1.msra.mxu0 0.0
  %3703 = vmatprep.subr.mxu0 0.0
  %3704 = vmatpush1.msra.mxu0 0.0
  %3705 = vmatprep.subr.mxu0 0.0
  %3706 = vmatpush1.msra.mxu0 0.0
  %3707 = vmatprep.subr.mxu0 0.0
  %3708 = vmatpush1.msra.mxu0 0.0
  %3709 = vmatprep.subr.mxu0 0.0
  %3710 = vmatpush1.msra.mxu0 0.0
  %3711 = vmatprep.subr.mxu0 0.0
  %3712 = vmatpush1.msra.mxu0 0.0
  %3713 = vmatprep.subr.mxu0 0.0
  %3714 = vmatpush1.msra.mxu0 0.0
  %3715 = vmatprep.subr.mxu0 0.0
  %3716 = vmatpush1.msra.mxu0 0.0
  %3717 = vmatprep.subr.mxu0 0.0
  %3718 = vmatpush1.msra.mxu0 0.0
  %3719 = vmatprep.subr.mxu0 0.0
  %3720 = vmatpush1.msra.mxu0 0.0
  %3721 = vmatprep.subr.mxu0 0.0
  %3722 = vmatpush1.msra.mxu0 0.0
  %3723 = vmatprep.subr.mxu0 0.0
  %3724 = vmatpush1.msra.mxu0 0.0
  %3725 = vmatprep.subr.mxu0 0.0
  %3726 = vmatpush1.msra.mxu0 0.0
  %3727 = vmatprep.mubr.f32.mxu0 0.0
  %3728 = vmatmul.mubr.f32.gmra.mrb[0].mxu0 %v3661
  %v3729 = vpop.f32.mrb[0].mxu0
  %v3730 = vadd.f32 0.0, %v3729
  %v3731 = vpop.f32.mrb[0].mxu0
  %3732 = vdwg.mxu0
  %v3733 = vadd.f32 %v3338, %v3730
  %s3734 = scalar_lea.vmem %s0, 108
  %v3735 = vld [vmem:[%s3734] sm:$0xff]
  %v3736 = vld [vmem:[%s3734 + $0x8] sm:$0xf]
  %v3739 = vcombine.high %v3735, %v3735
  %v3741 = vunpack.c.l.s4 1983009808
  %v3742 = vunpack.c.0.s8 %v3741
  %v3743 = vlaneseq
  %v3744 = vshrl.u32 %v3743, 7
  %v3745 = vsub.s32 %v3742, %v3744
  %v3746 = vrot.slane %v3735, %v3745
  %v3748 = vunpack.c.l.s4 1983009808
  %v3749 = vunpack.c.0.s8 %v3748
  %v3750 = vlaneseq
  %v3751 = vshrl.u32 %v3750, 7
  %v3752 = vsub.s32 %v3749, %v3751
  %v3753 = vrot.slane %v3739, %v3752
  %v3754 = vcombine.high %v3746, %v3746
  %v3755 = vcombine.high %v3753, %v3753
  %v3757 = vunpack.c.l.s4 1983009808
  %v3758 = vunpack.c.0.s8 %v3757
  %v3759 = vlaneseq
  %v3760 = vshrl.u32 %v3759, 7
  %v3761 = vsub.s32 %v3758, %v3760
  %v3762 = vrot.slane %v3736, %v3761
  %v3763 = vcombine.high %v3762, %v3762
  %3770 = vmatprep.subr.mxu0 0.0
  %3771 = vmatpush1.msra.mxu0 %v76
  %3772 = vmatprep.subr.mxu0 0.0
  %3773 = vmatpush1.msra.mxu0 %v77
  %3774 = vmatprep.subr.mxu0 0.0
  %3775 = vmatpush1.msra.mxu0 %v78
  %3776 = vmatprep.subr.mxu0 0.0
  %3777 = vmatpush1.msra.mxu0 %v79
  %3778 = vmatprep.subr.mxu0 0.0
  %3779 = vmatpush1.msra.mxu0 %v80
  %3780 = vmatprep.subr.mxu0 0.0
  %3781 = vmatpush1.msra.mxu0 %v81
  %3782 = vmatprep.subr.mxu0 0.0
  %3783 = vmatpush1.msra.mxu0 %v82
  %3784 = vmatprep.subr.mxu0 0.0
  %3785 = vmatpush1.msra.mxu0 %v83
  %3786 = vmatprep.subr.mxu0 0.0
  %3787 = vmatpush1.msra.mxu0 %v84
  %3788 = vmatprep.subr.mxu0 0.0
  %3789 = vmatpush1.msra.mxu0 %v85
  %3790 = vmatprep.subr.mxu0 0.0
  %3791 = vmatpush1.msra.mxu0 %v86
  %3792 = vmatprep.subr.mxu0 0.0
  %3793 = vmatpush1.msra.mxu0 %v87
  %3794 = vmatprep.subr.mxu0 0.0
  %3795 = vmatpush1.msra.mxu0 %v88
  %3796 = vmatprep.subr.mxu0 0.0
  %3797 = vmatpush1.msra.mxu0 %v89
  %3798 = vmatprep.subr.mxu0 0.0
  %3799 = vmatpush1.msra.mxu0 %v90
  %3800 = vmatprep.subr.mxu0 0.0
  %3801 = vmatpush1.msra.mxu0 %v91
  %3802 = vmatprep.subr.mxu0 0.0
  %3803 = vmatpush1.msra.mxu0 %v92
  %3804 = vmatprep.subr.mxu0 0.0
  %3805 = vmatpush1.msra.mxu0 %v93
  %3806 = vmatprep.subr.mxu0 0.0
  %3807 = vmatpush1.msra.mxu0 %v94
  %3808 = vmatprep.subr.mxu0 0.0
  %3809 = vmatpush1.msra.mxu0 %v95
  %3810 = vmatprep.subr.mxu0 0.0
  %3811 = vmatpush1.msra.mxu0 %v96
  %3812 = vmatprep.subr.mxu0 0.0
  %3813 = vmatpush1.msra.mxu0 %v97
  %3814 = vmatprep.subr.mxu0 0.0
  %3815 = vmatpush1.msra.mxu0 %v98
  %3816 = vmatprep.subr.mxu0 0.0
  %3817 = vmatpush1.msra.mxu0 %v99
  %3818 = vmatprep.subr.mxu0 0.0
  %3819 = vmatpush1.msra.mxu0 %v100
  %3820 = vmatprep.subr.mxu0 0.0
  %3821 = vmatpush1.msra.mxu0 %v101
  %3822 = vmatprep.subr.mxu0 0.0
  %3823 = vmatpush1.msra.mxu0 %v102
  %3824 = vmatprep.subr.mxu0 0.0
  %3825 = vmatpush1.msra.mxu0 %v103
  %3826 = vmatprep.subr.mxu0 0.0
  %3827 = vmatpush1.msra.mxu0 %v104
  %3828 = vmatprep.subr.mxu0 0.0
  %3829 = vmatpush1.msra.mxu0 %v105
  %3830 = vmatprep.subr.mxu0 0.0
  %3831 = vmatpush1.msra.mxu0 %v106
  %3832 = vmatprep.subr.mxu0 0.0
  %3833 = vmatpush1.msra.mxu0 %v107
  %3834 = vmatprep.mubr.f32.mxu0 %v3754
  %3835 = vmatmul.mubr.f32.gmra.mrb[0].mxu0 %v3746
  %v3836 = vpop.f32.mrb[0].mxu0
  %v3837 = vadd.f32 %v176, %v3836
  %v3838 = vpop.f32.mrb[0].mxu0
  %3839 = vdwg.mxu0
  %3840 = vmatprep.subr.mxu0 0.0
  %3841 = vmatpush1.msra.mxu0 %v108
  %3842 = vmatprep.subr.mxu0 0.0
  %3843 = vmatpush1.msra.mxu0 %v109
  %3844 = vmatprep.subr.mxu0 0.0
  %3845 = vmatpush1.msra.mxu0 %v110
  %3846 = vmatprep.subr.mxu0 0.0
  %3847 = vmatpush1.msra.mxu0 %v111
  %3848 = vmatprep.subr.mxu0 0.0
  %3849 = vmatpush1.msra.mxu0 %v112
  %3850 = vmatprep.subr.mxu0 0.0
  %3851 = vmatpush1.msra.mxu0 %v113
  %3852 = vmatprep.subr.mxu0 0.0
  %3853 = vmatpush1.msra.mxu0 %v114
  %3854 = vmatprep.subr.mxu0 0.0
  %3855 = vmatpush1.msra.mxu0 %v115
  %3856 = vmatprep.subr.mxu0 0.0
  %3857 = vmatpush1.msra.mxu0 %v116
  %3858 = vmatprep.subr.mxu0 0.0
  %3859 = vmatpush1.msra.mxu0 %v117
  %3860 = vmatprep.subr.mxu0 0.0
  %3861 = vmatpush1.msra.mxu0 %v118
  %3862 = vmatprep.subr.mxu0 0.0
  %3863 = vmatpush1.msra.mxu0 %v119
  %3864 = vmatprep.subr.mxu0 0.0
  %3865 = vmatpush1.msra.mxu0 %v120
  %3866 = vmatprep.subr.mxu0 0.0
  %3867 = vmatpush1.msra.mxu0 %v121
  %3868 = vmatprep.subr.mxu0 0.0
  %3869 = vmatpush1.msra.mxu0 %v122
  %3870 = vmatprep.subr.mxu0 0.0
  %3871 = vmatpush1.msra.mxu0 %v123
  %3872 = vmatprep.subr.mxu0 0.0
  %3873 = vmatpush1.msra.mxu0 %v124
  %3874 = vmatprep.subr.mxu0 0.0
  %3875 = vmatpush1.msra.mxu0 %v125
  %3876 = vmatprep.subr.mxu0 0.0
  %3877 = vmatpush1.msra.mxu0 %v126
  %3878 = vmatprep.subr.mxu0 0.0
  %3879 = vmatpush1.msra.mxu0 %v127
  %3880 = vmatprep.subr.mxu0 0.0
  %3881 = vmatpush1.msra.mxu0 %v128
  %3882 = vmatprep.subr.mxu0 0.0
  %3883 = vmatpush1.msra.mxu0 %v129
  %3884 = vmatprep.subr.mxu0 0.0
  %3885 = vmatpush1.msra.mxu0 %v130
  %3886 = vmatprep.subr.mxu0 0.0
  %3887 = vmatpush1.msra.mxu0 %v131
  %3888 = vmatprep.subr.mxu0 0.0
  %3889 = vmatpush1.msra.mxu0 %v132
  %3890 = vmatprep.subr.mxu0 0.0
  %3891 = vmatpush1.msra.mxu0 %v133
  %3892 = vmatprep.subr.mxu0 0.0
  %3893 = vmatpush1.msra.mxu0 %v134
  %3894 = vmatprep.subr.mxu0 0.0
  %3895 = vmatpush1.msra.mxu0 %v135
  %3896 = vmatprep.subr.mxu0 0.0
  %3897 = vmatpush1.msra.mxu0 %v136
  %3898 = vmatprep.subr.mxu0 0.0
  %3899 = vmatpush1.msra.mxu0 %v137
  %3900 = vmatprep.subr.mxu0 0.0
  %3901 = vmatpush1.msra.mxu0 %v138
  %3902 = vmatprep.subr.mxu0 0.0
  %3903 = vmatpush1.msra.mxu0 %v139
  %3904 = vmatprep.mubr.f32.mxu0 %v3755
  %3905 = vmatmul.mubr.f32.gmra.mrb[0].mxu0 %v3753
  %v3906 = vpop.f32.mrb[0].mxu0
  %v3907 = vadd.f32 %v3837, %v3906
  %v3908 = vpop.f32.mrb[0].mxu0
  %3909 = vdwg.mxu0
  %3910 = vmatprep.subr.mxu0 0.0
  %3911 = vmatpush1.msra.mxu0 %v140
  %3912 = vmatprep.subr.mxu0 0.0
  %3913 = vmatpush1.msra.mxu0 %v141
  %3914 = vmatprep.subr.mxu0 0.0
  %3915 = vmatpush1.msra.mxu0 %v142
  %3916 = vmatprep.subr.mxu0 0.0
  %3917 = vmatpush1.msra.mxu0 %v143
  %3918 = vmatprep.subr.mxu0 0.0
  %3919 = vmatpush1.msra.mxu0 %v144
  %3920 = vmatprep.subr.mxu0 0.0
  %3921 = vmatpush1.msra.mxu0 %v145
  %3922 = vmatprep.subr.mxu0 0.0
  %3923 = vmatpush1.msra.mxu0 %v146
  %3924 = vmatprep.subr.mxu0 0.0
  %3925 = vmatpush1.msra.mxu0 %v147
  %3926 = vmatprep.subr.mxu0 0.0
  %3927 = vmatpush1.msra.mxu0 %v148
  %3928 = vmatprep.subr.mxu0 0.0
  %3929 = vmatpush1.msra.mxu0 %v149
  %3930 = vmatprep.subr.mxu0 0.0
  %3931 = vmatpush1.msra.mxu0 %v150
  %3932 = vmatprep.subr.mxu0 0.0
  %3933 = vmatpush1.msra.mxu0 %v151
  %3934 = vmatprep.subr.mxu0 0.0
  %3935 = vmatpush1.msra.mxu0 %v152
  %3936 = vmatprep.subr.mxu0 0.0
  %3937 = vmatpush1.msra.mxu0 %v153
  %3938 = vmatprep.subr.mxu0 0.0
  %3939 = vmatpush1.msra.mxu0 %v154
  %3940 = vmatprep.subr.mxu0 0.0
  %3941 = vmatpush1.msra.mxu0 %v155
  %3942 = vmatprep.subr.mxu0 0.0
  %3943 = vmatpush1.msra.mxu0 %v156
  %3944 = vmatprep.subr.mxu0 0.0
  %3945 = vmatpush1.msra.mxu0 %v157
  %3946 = vmatprep.subr.mxu0 0.0
  %3947 = vmatpush1.msra.mxu0 %v158
  %3948 = vmatprep.subr.mxu0 0.0
  %3949 = vmatpush1.msra.mxu0 %v159
  %3950 = vmatprep.subr.mxu0 0.0
  %3951 = vmatpush1.msra.mxu0 %v160
  %3952 = vmatprep.subr.mxu0 0.0
  %3953 = vmatpush1.msra.mxu0 %v161
  %3954 = vmatprep.subr.mxu0 0.0
  %3955 = vmatpush1.msra.mxu0 %v162
  %3956 = vmatprep.subr.mxu0 0.0
  %3957 = vmatpush1.msra.mxu0 %v163
  %3958 = vmatprep.subr.mxu0 0.0
  %3959 = vmatpush1.msra.mxu0 %v164
  %3960 = vmatprep.subr.mxu0 0.0
  %3961 = vmatpush1.msra.mxu0 %v165
  %3962 = vmatprep.subr.mxu0 0.0
  %3963 = vmatpush1.msra.mxu0 %v166
  %3964 = vmatprep.subr.mxu0 0.0
  %3965 = vmatpush1.msra.mxu0 %v167
  %3966 = vmatprep.subr.mxu0 0.0
  %3967 = vmatpush1.msra.mxu0 %v168
  %3968 = vmatprep.subr.mxu0 0.0
  %3969 = vmatpush1.msra.mxu0 %v169
  %3970 = vmatprep.subr.mxu0 0.0
  %3971 = vmatpush1.msra.mxu0 %v170
  %3972 = vmatprep.subr.mxu0 0.0
  %3973 = vmatpush1.msra.mxu0 %v171
  %3974 = vmatprep.mubr.f32.mxu0 %v3763
  %3975 = vmatmul.mubr.f32.gmra.mrb[0].mxu0 %v3762
  %v3976 = vpop.f32.mrb[0].mxu0
  %v3977 = vadd.f32 %v3907, %v3976
  %v3978 = vpop.f32.mrb[0].mxu0
  %3979 = vdwg.mxu0
  %v3980 = vmax.f32 %v3977, 0.0
  %3981 = vmatprep.subr.mxu0 0.0
  %3982 = vmatpush1.msra.mxu0 %v57
  %3983 = vmatprep.subr.mxu0 0.0
  %3984 = vmatpush1.msra.mxu0 %v58
  %3985 = vmatprep.subr.mxu0 0.0
  %3986 = vmatpush1.msra.mxu0 %v59
  %3987 = vmatprep.subr.mxu0 0.0
  %3988 = vmatpush1.msra.mxu0 %v60
  %3989 = vmatprep.subr.mxu0 0.0
  %3990 = vmatpush1.msra.mxu0 %v61
  %3991 = vmatprep.subr.mxu0 0.0
  %3992 = vmatpush1.msra.mxu0 %v62
  %3993 = vmatprep.subr.mxu0 0.0
  %3994 = vmatpush1.msra.mxu0 %v63
  %3995 = vmatprep.subr.mxu0 0.0
  %3996 = vmatpush1.msra.mxu0 %v64
  %3997 = vmatprep.subr.mxu0 0.0
  %3998 = vmatpush1.msra.mxu0 %v65
  %3999 = vmatprep.subr.mxu0 0.0
  %4000 = vmatpush1.msra.mxu0 %v66
  %4001 = vmatprep.subr.mxu0 0.0
  %4002 = vmatpush1.msra.mxu0 %v67
  %4003 = vmatprep.subr.mxu0 0.0
  %4004 = vmatpush1.msra.mxu0 %v68
  %4005 = vmatprep.subr.mxu0 0.0
  %4006 = vmatpush1.msra.mxu0 %v69
  %4007 = vmatprep.subr.mxu0 0.0
  %4008 = vmatpush1.msra.mxu0 %v70
  %4009 = vmatprep.subr.mxu0 0.0
  %4010 = vmatpush1.msra.mxu0 %v71
  %4011 = vmatprep.subr.mxu0 0.0
  %4012 = vmatpush1.msra.mxu0 %v72
  %4013 = vmatprep.subr.mxu0 0.0
  %4014 = vmatpush1.msra.mxu0 0.0
  %4015 = vmatprep.subr.mxu0 0.0
  %4016 = vmatpush1.msra.mxu0 0.0
  %4017 = vmatprep.subr.mxu0 0.0
  %4018 = vmatpush1.msra.mxu0 0.0
  %4019 = vmatprep.subr.mxu0 0.0
  %4020 = vmatpush1.msra.mxu0 0.0
  %4021 = vmatprep.subr.mxu0 0.0
  %4022 = vmatpush1.msra.mxu0 0.0
  %4023 = vmatprep.subr.mxu0 0.0
  %4024 = vmatpush1.msra.mxu0 0.0
  %4025 = vmatprep.subr.mxu0 0.0
  %4026 = vmatpush1.msra.mxu0 0.0
  %4027 = vmatprep.subr.mxu0 0.0
  %4028 = vmatpush1.msra.mxu0 0.0
  %4029 = vmatprep.subr.mxu0 0.0
  %4030 = vmatpush1.msra.mxu0 0.0
  %4031 = vmatprep.subr.mxu0 0.0
  %4032 = vmatpush1.msra.mxu0 0.0
  %4033 = vmatprep.subr.mxu0 0.0
  %4034 = vmatpush1.msra.mxu0 0.0
  %4035 = vmatprep.subr.mxu0 0.0
  %4036 = vmatpush1.msra.mxu0 0.0
  %4037 = vmatprep.subr.mxu0 0.0
  %4038 = vmatpush1.msra.mxu0 0.0
  %4039 = vmatprep.subr.mxu0 0.0
  %4040 = vmatpush1.msra.mxu0 0.0
  %4041 = vmatprep.subr.mxu0 0.0
  %4042 = vmatpush1.msra.mxu0 0.0
  %4043 = vmatprep.subr.mxu0 0.0
  %4044 = vmatpush1.msra.mxu0 0.0
  %4045 = vmatprep.mubr.f32.mxu0 0.0
  %4046 = vmatmul.mubr.f32.gmra.mrb[0].mxu0 %v3980
  %v4047 = vpop.f32.mrb[0].mxu0
  %v4048 = vadd.f32 %v426, %v4047
  %v4049 = vpop.f32.mrb[0].mxu0
  %4050 = vdwg.mxu0
  %v4051 = vmax.f32 %v4048, 0.0
  %s4052 = scalar_lea.vmem %s6, 144
  %v4053 = vld [vmem:[%s4052] sm:$0xff]
  %v4054 = vld [vmem:[%s4052 + $0x8] sm:$0xff]
  %v4056 = vsel %vm822, %v4051, 0
  %4058 = vmatprep.subr.mxu0 0.0
  %4059 = vmatpush1.msra.mxu0 %v4053
  %4060 = vmatprep.subr.mxu0 0.0
  %4061 = vmatpush1.msra.mxu0 %v4054
  %4062 = vmatprep.subr.mxu0 0.0
  %4063 = vmatpush1.msra.mxu0 0.0
  %4064 = vmatprep.subr.mxu0 0.0
  %4065 = vmatpush1.msra.mxu0 0.0
  %4066 = vmatprep.subr.mxu0 0.0
  %4067 = vmatpush1.msra.mxu0 0.0
  %4068 = vmatprep.subr.mxu0 0.0
  %4069 = vmatpush1.msra.mxu0 0.0
  %4070 = vmatprep.subr.mxu0 0.0
  %4071 = vmatpush1.msra.mxu0 0.0
  %4072 = vmatprep.subr.mxu0 0.0
  %4073 = vmatpush1.msra.mxu0 0.0
  %4074 = vmatprep.subr.mxu0 0.0
  %4075 = vmatpush1.msra.mxu0 0.0
  %4076 = vmatprep.subr.mxu0 0.0
  %4077 = vmatpush1.msra.mxu0 0.0
  %4078 = vmatprep.subr.mxu0 0.0
  %4079 = vmatpush1.msra.mxu0 0.0
  %4080 = vmatprep.subr.mxu0 0.0
  %4081 = vmatpush1.msra.mxu0 0.0
  %4082 = vmatprep.subr.mxu0 0.0
  %4083 = vmatpush1.msra.mxu0 0.0
  %4084 = vmatprep.subr.mxu0 0.0
  %4085 = vmatpush1.msra.mxu0 0.0
  %4086 = vmatprep.subr.mxu0 0.0
  %4087 = vmatpush1.msra.mxu0 0.0
  %4088 = vmatprep.subr.mxu0 0.0
  %4089 = vmatpush1.msra.mxu0 0.0
  %4090 = vmatprep.subr.mxu0 0.0
  %4091 = vmatpush1.msra.mxu0 0.0
  %4092 = vmatprep.subr.mxu0 0.0
  %4093 = vmatpush1.msra.mxu0 0.0
  %4094 = vmatprep.subr.mxu0 0.0
  %4095 = vmatpush1.msra.mxu0 0.0
  %4096 = vmatprep.subr.mxu0 0.0
  %4097 = vmatpush1.msra.mxu0 0.0
  %4098 = vmatprep.subr.mxu0 0.0
  %4099 = vmatpush1.msra.mxu0 0.0
  %4100 = vmatprep.subr.mxu0 0.0
  %4101 = vmatpush1.msra.mxu0 0.0
  %4102 = vmatprep.subr.mxu0 0.0
  %4103 = vmatpush1.msra.mxu0 0.0
  %4104 = vmatprep.subr.mxu0 0.0
  %4105 = vmatpush1.msra.mxu0 0.0
  %4106 = vmatprep.subr.mxu0 0.0
  %4107 = vmatpush1.msra.mxu0 0.0
  %4108 = vmatprep.subr.mxu0 0.0
  %4109 = vmatpush1.msra.mxu0 0.0
  %4110 = vmatprep.subr.mxu0 0.0
  %4111 = vmatpush1.msra.mxu0 0.0
  %4112 = vmatprep.subr.mxu0 0.0
  %4113 = vmatpush1.msra.mxu0 0.0
  %4114 = vmatprep.subr.mxu0 0.0
  %4115 = vmatpush1.msra.mxu0 0.0
  %4116 = vmatprep.subr.mxu0 0.0
  %4117 = vmatpush1.msra.mxu0 0.0
  %4118 = vmatprep.subr.mxu0 0.0
  %4119 = vmatpush1.msra.mxu0 0.0
  %4120 = vmatprep.subr.mxu0 0.0
  %4121 = vmatpush1.msra.mxu0 0.0
  %4122 = vmatprep.mubr.f32.mxu0 0.0
  %4123 = vmatmul.mubr.f32.gmra.mrb[0].mxu0 %v4056
  %v4124 = vpop.f32.mrb[0].mxu0
  %v4125 = vadd.f32 0.0, %v4124
  %v4126 = vpop.f32.mrb[0].mxu0
  %4127 = vdwg.mxu0
  %v4128 = vadd.f32 %v3733, %v4125
  %s4129 = scalar_lea.vmem %s0, 120
  %v4130 = vld [vmem:[%s4129] sm:$0xff]
  %v4131 = vld [vmem:[%s4129 + $0x8] sm:$0xf]
  %v4134 = vcombine.high %v4130, %v4130
  %v4136 = vunpack.c.l.s4 1983009808
  %v4137 = vunpack.c.0.s8 %v4136
  %v4138 = vlaneseq
  %v4139 = vshrl.u32 %v4138, 7
  %v4140 = vsub.s32 %v4137, %v4139
  %v4141 = vrot.slane %v4130, %v4140
  %v4143 = vunpack.c.l.s4 1983009808
  %v4144 = vunpack.c.0.s8 %v4143
  %v4145 = vlaneseq
  %v4146 = vshrl.u32 %v4145, 7
  %v4147 = vsub.s32 %v4144, %v4146
  %v4148 = vrot.slane %v4134, %v4147
  %v4149 = vcombine.high %v4141, %v4141
  %v4150 = vcombine.high %v4148, %v4148
  %v4152 = vunpack.c.l.s4 1983009808
  %v4153 = vunpack.c.0.s8 %v4152
  %v4154 = vlaneseq
  %v4155 = vshrl.u32 %v4154, 7
  %v4156 = vsub.s32 %v4153, %v4155
  %v4157 = vrot.slane %v4131, %v4156
  %v4158 = vcombine.high %v4157, %v4157
  %4165 = vmatprep.subr.mxu0 0.0
  %4166 = vmatpush1.msra.mxu0 %v76
  %4167 = vmatprep.subr.mxu0 0.0
  %4168 = vmatpush1.msra.mxu0 %v77
  %4169 = vmatprep.subr.mxu0 0.0
  %4170 = vmatpush1.msra.mxu0 %v78
  %4171 = vmatprep.subr.mxu0 0.0
  %4172 = vmatpush1.msra.mxu0 %v79
  %4173 = vmatprep.subr.mxu0 0.0
  %4174 = vmatpush1.msra.mxu0 %v80
  %4175 = vmatprep.subr.mxu0 0.0
  %4176 = vmatpush1.msra.mxu0 %v81
  %4177 = vmatprep.subr.mxu0 0.0
  %4178 = vmatpush1.msra.mxu0 %v82
  %4179 = vmatprep.subr.mxu0 0.0
  %4180 = vmatpush1.msra.mxu0 %v83
  %4181 = vmatprep.subr.mxu0 0.0
  %4182 = vmatpush1.msra.mxu0 %v84
  %4183 = vmatprep.subr.mxu0 0.0
  %4184 = vmatpush1.msra.mxu0 %v85
  %4185 = vmatprep.subr.mxu0 0.0
  %4186 = vmatpush1.msra.mxu0 %v86
  %4187 = vmatprep.subr.mxu0 0.0
  %4188 = vmatpush1.msra.mxu0 %v87
  %4189 = vmatprep.subr.mxu0 0.0
  %4190 = vmatpush1.msra.mxu0 %v88
  %4191 = vmatprep.subr.mxu0 0.0
  %4192 = vmatpush1.msra.mxu0 %v89
  %4193 = vmatprep.subr.mxu0 0.0
  %4194 = vmatpush1.msra.mxu0 %v90
  %4195 = vmatprep.subr.mxu0 0.0
  %4196 = vmatpush1.msra.mxu0 %v91
  %4197 = vmatprep.subr.mxu0 0.0
  %4198 = vmatpush1.msra.mxu0 %v92
  %4199 = vmatprep.subr.mxu0 0.0
  %4200 = vmatpush1.msra.mxu0 %v93
  %4201 = vmatprep.subr.mxu0 0.0
  %4202 = vmatpush1.msra.mxu0 %v94
  %4203 = vmatprep.subr.mxu0 0.0
  %4204 = vmatpush1.msra.mxu0 %v95
  %4205 = vmatprep.subr.mxu0 0.0
  %4206 = vmatpush1.msra.mxu0 %v96
  %4207 = vmatprep.subr.mxu0 0.0
  %4208 = vmatpush1.msra.mxu0 %v97
  %4209 = vmatprep.subr.mxu0 0.0
  %4210 = vmatpush1.msra.mxu0 %v98
  %4211 = vmatprep.subr.mxu0 0.0
  %4212 = vmatpush1.msra.mxu0 %v99
  %4213 = vmatprep.subr.mxu0 0.0
  %4214 = vmatpush1.msra.mxu0 %v100
  %4215 = vmatprep.subr.mxu0 0.0
  %4216 = vmatpush1.msra.mxu0 %v101
  %4217 = vmatprep.subr.mxu0 0.0
  %4218 = vmatpush1.msra.mxu0 %v102
  %4219 = vmatprep.subr.mxu0 0.0
  %4220 = vmatpush1.msra.mxu0 %v103
  %4221 = vmatprep.subr.mxu0 0.0
  %4222 = vmatpush1.msra.mxu0 %v104
  %4223 = vmatprep.subr.mxu0 0.0
  %4224 = vmatpush1.msra.mxu0 %v105
  %4225 = vmatprep.subr.mxu0 0.0
  %4226 = vmatpush1.msra.mxu0 %v106
  %4227 = vmatprep.subr.mxu0 0.0
  %4228 = vmatpush1.msra.mxu0 %v107
  %4229 = vmatprep.mubr.f32.mxu0 %v4149
  %4230 = vmatmul.mubr.f32.gmra.mrb[0].mxu0 %v4141
  %v4231 = vpop.f32.mrb[0].mxu0
  %v4232 = vadd.f32 %v176, %v4231
  %v4233 = vpop.f32.mrb[0].mxu0
  %4234 = vdwg.mxu0
  %4235 = vmatprep.subr.mxu0 0.0
  %4236 = vmatpush1.msra.mxu0 %v108
  %4237 = vmatprep.subr.mxu0 0.0
  %4238 = vmatpush1.msra.mxu0 %v109
  %4239 = vmatprep.subr.mxu0 0.0
  %4240 = vmatpush1.msra.mxu0 %v110
  %4241 = vmatprep.subr.mxu0 0.0
  %4242 = vmatpush1.msra.mxu0 %v111
  %4243 = vmatprep.subr.mxu0 0.0
  %4244 = vmatpush1.msra.mxu0 %v112
  %4245 = vmatprep.subr.mxu0 0.0
  %4246 = vmatpush1.msra.mxu0 %v113
  %4247 = vmatprep.subr.mxu0 0.0
  %4248 = vmatpush1.msra.mxu0 %v114
  %4249 = vmatprep.subr.mxu0 0.0
  %4250 = vmatpush1.msra.mxu0 %v115
  %4251 = vmatprep.subr.mxu0 0.0
  %4252 = vmatpush1.msra.mxu0 %v116
  %4253 = vmatprep.subr.mxu0 0.0
  %4254 = vmatpush1.msra.mxu0 %v117
  %4255 = vmatprep.subr.mxu0 0.0
  %4256 = vmatpush1.msra.mxu0 %v118
  %4257 = vmatprep.subr.mxu0 0.0
  %4258 = vmatpush1.msra.mxu0 %v119
  %4259 = vmatprep.subr.mxu0 0.0
  %4260 = vmatpush1.msra.mxu0 %v120
  %4261 = vmatprep.subr.mxu0 0.0
  %4262 = vmatpush1.msra.mxu0 %v121
  %4263 = vmatprep.subr.mxu0 0.0
  %4264 = vmatpush1.msra.mxu0 %v122
  %4265 = vmatprep.subr.mxu0 0.0
  %4266 = vmatpush1.msra.mxu0 %v123
  %4267 = vmatprep.subr.mxu0 0.0
  %4268 = vmatpush1.msra.mxu0 %v124
  %4269 = vmatprep.subr.mxu0 0.0
  %4270 = vmatpush1.msra.mxu0 %v125
  %4271 = vmatprep.subr.mxu0 0.0
  %4272 = vmatpush1.msra.mxu0 %v126
  %4273 = vmatprep.subr.mxu0 0.0
  %4274 = vmatpush1.msra.mxu0 %v127
  %4275 = vmatprep.subr.mxu0 0.0
  %4276 = vmatpush1.msra.mxu0 %v128
  %4277 = vmatprep.subr.mxu0 0.0
  %4278 = vmatpush1.msra.mxu0 %v129
  %4279 = vmatprep.subr.mxu0 0.0
  %4280 = vmatpush1.msra.mxu0 %v130
  %4281 = vmatprep.subr.mxu0 0.0
  %4282 = vmatpush1.msra.mxu0 %v131
  %4283 = vmatprep.subr.mxu0 0.0
  %4284 = vmatpush1.msra.mxu0 %v132
  %4285 = vmatprep.subr.mxu0 0.0
  %4286 = vmatpush1.msra.mxu0 %v133
  %4287 = vmatprep.subr.mxu0 0.0
  %4288 = vmatpush1.msra.mxu0 %v134
  %4289 = vmatprep.subr.mxu0 0.0
  %4290 = vmatpush1.msra.mxu0 %v135
  %4291 = vmatprep.subr.mxu0 0.0
  %4292 = vmatpush1.msra.mxu0 %v136
  %4293 = vmatprep.subr.mxu0 0.0
  %4294 = vmatpush1.msra.mxu0 %v137
  %4295 = vmatprep.subr.mxu0 0.0
  %4296 = vmatpush1.msra.mxu0 %v138
  %4297 = vmatprep.subr.mxu0 0.0
  %4298 = vmatpush1.msra.mxu0 %v139
  %4299 = vmatprep.mubr.f32.mxu0 %v4150
  %4300 = vmatmul.mubr.f32.gmra.mrb[0].mxu0 %v4148
  %v4301 = vpop.f32.mrb[0].mxu0
  %v4302 = vadd.f32 %v4232, %v4301
  %v4303 = vpop.f32.mrb[0].mxu0
  %4304 = vdwg.mxu0
  %4305 = vmatprep.subr.mxu0 0.0
  %4306 = vmatpush1.msra.mxu0 %v140
  %4307 = vmatprep.subr.mxu0 0.0
  %4308 = vmatpush1.msra.mxu0 %v141
  %4309 = vmatprep.subr.mxu0 0.0
  %4310 = vmatpush1.msra.mxu0 %v142
  %4311 = vmatprep.subr.mxu0 0.0
  %4312 = vmatpush1.msra.mxu0 %v143
  %4313 = vmatprep.subr.mxu0 0.0
  %4314 = vmatpush1.msra.mxu0 %v144
  %4315 = vmatprep.subr.mxu0 0.0
  %4316 = vmatpush1.msra.mxu0 %v145
  %4317 = vmatprep.subr.mxu0 0.0
  %4318 = vmatpush1.msra.mxu0 %v146
  %4319 = vmatprep.subr.mxu0 0.0
  %4320 = vmatpush1.msra.mxu0 %v147
  %4321 = vmatprep.subr.mxu0 0.0
  %4322 = vmatpush1.msra.mxu0 %v148
  %4323 = vmatprep.subr.mxu0 0.0
  %4324 = vmatpush1.msra.mxu0 %v149
  %4325 = vmatprep.subr.mxu0 0.0
  %4326 = vmatpush1.msra.mxu0 %v150
  %4327 = vmatprep.subr.mxu0 0.0
  %4328 = vmatpush1.msra.mxu0 %v151
  %4329 = vmatprep.subr.mxu0 0.0
  %4330 = vmatpush1.msra.mxu0 %v152
  %4331 = vmatprep.subr.mxu0 0.0
  %4332 = vmatpush1.msra.mxu0 %v153
  %4333 = vmatprep.subr.mxu0 0.0
  %4334 = vmatpush1.msra.mxu0 %v154
  %4335 = vmatprep.subr.mxu0 0.0
  %4336 = vmatpush1.msra.mxu0 %v155
  %4337 = vmatprep.subr.mxu0 0.0
  %4338 = vmatpush1.msra.mxu0 %v156
  %4339 = vmatprep.subr.mxu0 0.0
  %4340 = vmatpush1.msra.mxu0 %v157
  %4341 = vmatprep.subr.mxu0 0.0
  %4342 = vmatpush1.msra.mxu0 %v158
  %4343 = vmatprep.subr.mxu0 0.0
  %4344 = vmatpush1.msra.mxu0 %v159
  %4345 = vmatprep.subr.mxu0 0.0
  %4346 = vmatpush1.msra.mxu0 %v160
  %4347 = vmatprep.subr.mxu0 0.0
  %4348 = vmatpush1.msra.mxu0 %v161
  %4349 = vmatprep.subr.mxu0 0.0
  %4350 = vmatpush1.msra.mxu0 %v162
  %4351 = vmatprep.subr.mxu0 0.0
  %4352 = vmatpush1.msra.mxu0 %v163
  %4353 = vmatprep.subr.mxu0 0.0
  %4354 = vmatpush1.msra.mxu0 %v164
  %4355 = vmatprep.subr.mxu0 0.0
  %4356 = vmatpush1.msra.mxu0 %v165
  %4357 = vmatprep.subr.mxu0 0.0
  %4358 = vmatpush1.msra.mxu0 %v166
  %4359 = vmatprep.subr.mxu0 0.0
  %4360 = vmatpush1.msra.mxu0 %v167
  %4361 = vmatprep.subr.mxu0 0.0
  %4362 = vmatpush1.msra.mxu0 %v168
  %4363 = vmatprep.subr.mxu0 0.0
  %4364 = vmatpush1.msra.mxu0 %v169
  %4365 = vmatprep.subr.mxu0 0.0
  %4366 = vmatpush1.msra.mxu0 %v170
  %4367 = vmatprep.subr.mxu0 0.0
  %4368 = vmatpush1.msra.mxu0 %v171
  %4369 = vmatprep.mubr.f32.mxu0 %v4158
  %4370 = vmatmul.mubr.f32.gmra.mrb[0].mxu0 %v4157
  %v4371 = vpop.f32.mrb[0].mxu0
  %v4372 = vadd.f32 %v4302, %v4371
  %v4373 = vpop.f32.mrb[0].mxu0
  %4374 = vdwg.mxu0
  %v4375 = vmax.f32 %v4372, 0.0
  %4376 = vmatprep.subr.mxu0 0.0
  %4377 = vmatpush1.msra.mxu0 %v57
  %4378 = vmatprep.subr.mxu0 0.0
  %4379 = vmatpush1.msra.mxu0 %v58
  %4380 = vmatprep.subr.mxu0 0.0
  %4381 = vmatpush1.msra.mxu0 %v59
  %4382 = vmatprep.subr.mxu0 0.0
  %4383 = vmatpush1.msra.mxu0 %v60
  %4384 = vmatprep.subr.mxu0 0.0
  %4385 = vmatpush1.msra.mxu0 %v61
  %4386 = vmatprep.subr.mxu0 0.0
  %4387 = vmatpush1.msra.mxu0 %v62
  %4388 = vmatprep.subr.mxu0 0.0
  %4389 = vmatpush1.msra.mxu0 %v63
  %4390 = vmatprep.subr.mxu0 0.0
  %4391 = vmatpush1.msra.mxu0 %v64
  %4392 = vmatprep.subr.mxu0 0.0
  %4393 = vmatpush1.msra.mxu0 %v65
  %4394 = vmatprep.subr.mxu0 0.0
  %4395 = vmatpush1.msra.mxu0 %v66
  %4396 = vmatprep.subr.mxu0 0.0
  %4397 = vmatpush1.msra.mxu0 %v67
  %4398 = vmatprep.subr.mxu0 0.0
  %4399 = vmatpush1.msra.mxu0 %v68
  %4400 = vmatprep.subr.mxu0 0.0
  %4401 = vmatpush1.msra.mxu0 %v69
  %4402 = vmatprep.subr.mxu0 0.0
  %4403 = vmatpush1.msra.mxu0 %v70
  %4404 = vmatprep.subr.mxu0 0.0
  %4405 = vmatpush1.msra.mxu0 %v71
  %4406 = vmatprep.subr.mxu0 0.0
  %4407 = vmatpush1.msra.mxu0 %v72
  %4408 = vmatprep.subr.mxu0 0.0
  %4409 = vmatpush1.msra.mxu0 0.0
  %4410 = vmatprep.subr.mxu0 0.0
  %4411 = vmatpush1.msra.mxu0 0.0
  %4412 = vmatprep.subr.mxu0 0.0
  %4413 = vmatpush1.msra.mxu0 0.0
  %4414 = vmatprep.subr.mxu0 0.0
  %4415 = vmatpush1.msra.mxu0 0.0
  %4416 = vmatprep.subr.mxu0 0.0
  %4417 = vmatpush1.msra.mxu0 0.0
  %4418 = vmatprep.subr.mxu0 0.0
  %4419 = vmatpush1.msra.mxu0 0.0
  %4420 = vmatprep.subr.mxu0 0.0
  %4421 = vmatpush1.msra.mxu0 0.0
  %4422 = vmatprep.subr.mxu0 0.0
  %4423 = vmatpush1.msra.mxu0 0.0
  %4424 = vmatprep.subr.mxu0 0.0
  %4425 = vmatpush1.msra.mxu0 0.0
  %4426 = vmatprep.subr.mxu0 0.0
  %4427 = vmatpush1.msra.mxu0 0.0
  %4428 = vmatprep.subr.mxu0 0.0
  %4429 = vmatpush1.msra.mxu0 0.0
  %4430 = vmatprep.subr.mxu0 0.0
  %4431 = vmatpush1.msra.mxu0 0.0
  %4432 = vmatprep.subr.mxu0 0.0
  %4433 = vmatpush1.msra.mxu0 0.0
  %4434 = vmatprep.subr.mxu0 0.0
  %4435 = vmatpush1.msra.mxu0 0.0
  %4436 = vmatprep.subr.mxu0 0.0
  %4437 = vmatpush1.msra.mxu0 0.0
  %4438 = vmatprep.subr.mxu0 0.0
  %4439 = vmatpush1.msra.mxu0 0.0
  %4440 = vmatprep.mubr.f32.mxu0 0.0
  %4441 = vmatmul.mubr.f32.gmra.mrb[0].mxu0 %v4375
  %v4442 = vpop.f32.mrb[0].mxu0
  %v4443 = vadd.f32 %v426, %v4442
  %v4444 = vpop.f32.mrb[0].mxu0
  %4445 = vdwg.mxu0
  %v4446 = vmax.f32 %v4443, 0.0
  %s4447 = scalar_lea.vmem %s6, 160
  %v4448 = vld [vmem:[%s4447] sm:$0xff]
  %v4449 = vld [vmem:[%s4447 + $0x8] sm:$0xff]
  %v4451 = vsel %vm822, %v4446, 0
  %4453 = vmatprep.subr.mxu0 0.0
  %4454 = vmatpush1.msra.mxu0 %v4448
  %4455 = vmatprep.subr.mxu0 0.0
  %4456 = vmatpush1.msra.mxu0 %v4449
  %4457 = vmatprep.subr.mxu0 0.0
  %4458 = vmatpush1.msra.mxu0 0.0
  %4459 = vmatprep.subr.mxu0 0.0
  %4460 = vmatpush1.msra.mxu0 0.0
  %4461 = vmatprep.subr.mxu0 0.0
  %4462 = vmatpush1.msra.mxu0 0.0
  %4463 = vmatprep.subr.mxu0 0.0
  %4464 = vmatpush1.msra.mxu0 0.0
  %4465 = vmatprep.subr.mxu0 0.0
  %4466 = vmatpush1.msra.mxu0 0.0
  %4467 = vmatprep.subr.mxu0 0.0
  %4468 = vmatpush1.msra.mxu0 0.0
  %4469 = vmatprep.subr.mxu0 0.0
  %4470 = vmatpush1.msra.mxu0 0.0
  %4471 = vmatprep.subr.mxu0 0.0
  %4472 = vmatpush1.msra.mxu0 0.0
  %4473 = vmatprep.subr.mxu0 0.0
  %4474 = vmatpush1.msra.mxu0 0.0
  %4475 = vmatprep.subr.mxu0 0.0
  %4476 = vmatpush1.msra.mxu0 0.0
  %4477 = vmatprep.subr.mxu0 0.0
  %4478 = vmatpush1.msra.mxu0 0.0
  %4479 = vmatprep.subr.mxu0 0.0
  %4480 = vmatpush1.msra.mxu0 0.0
  %4481 = vmatprep.subr.mxu0 0.0
  %4482 = vmatpush1.msra.mxu0 0.0
  %4483 = vmatprep.subr.mxu0 0.0
  %4484 = vmatpush1.msra.mxu0 0.0
  %4485 = vmatprep.subr.mxu0 0.0
  %4486 = vmatpush1.msra.mxu0 0.0
  %4487 = vmatprep.subr.mxu0 0.0
  %4488 = vmatpush1.msra.mxu0 0.0
  %4489 = vmatprep.subr.mxu0 0.0
  %4490 = vmatpush1.msra.mxu0 0.0
  %4491 = vmatprep.subr.mxu0 0.0
  %4492 = vmatpush1.msra.mxu0 0.0
  %4493 = vmatprep.subr.mxu0 0.0
  %4494 = vmatpush1.msra.mxu0 0.0
  %4495 = vmatprep.subr.mxu0 0.0
  %4496 = vmatpush1.msra.mxu0 0.0
  %4497 = vmatprep.subr.mxu0 0.0
  %4498 = vmatpush1.msra.mxu0 0.0
  %4499 = vmatprep.subr.mxu0 0.0
  %4500 = vmatpush1.msra.mxu0 0.0
  %4501 = vmatprep.subr.mxu0 0.0
  %4502 = vmatpush1.msra.mxu0 0.0
  %4503 = vmatprep.subr.mxu0 0.0
  %4504 = vmatpush1.msra.mxu0 0.0
  %4505 = vmatprep.subr.mxu0 0.0
  %4506 = vmatpush1.msra.mxu0 0.0
  %4507 = vmatprep.subr.mxu0 0.0
  %4508 = vmatpush1.msra.mxu0 0.0
  %4509 = vmatprep.subr.mxu0 0.0
  %4510 = vmatpush1.msra.mxu0 0.0
  %4511 = vmatprep.subr.mxu0 0.0
  %4512 = vmatpush1.msra.mxu0 0.0
  %4513 = vmatprep.subr.mxu0 0.0
  %4514 = vmatpush1.msra.mxu0 0.0
  %4515 = vmatprep.subr.mxu0 0.0
  %4516 = vmatpush1.msra.mxu0 0.0
  %4517 = vmatprep.mubr.f32.mxu0 0.0
  %4518 = vmatmul.mubr.f32.gmra.mrb[0].mxu0 %v4451
  %v4519 = vpop.f32.mrb[0].mxu0
  %v4520 = vadd.f32 0.0, %v4519
  %v4521 = vpop.f32.mrb[0].mxu0
  %4522 = vdwg.mxu0
  %v4523 = vadd.f32 %v4128, %v4520
  %s4524 = scalar_lea.vmem %s0, 132
  %v4525 = vld [vmem:[%s4524] sm:$0xff]
  %v4526 = vld [vmem:[%s4524 + $0x8] sm:$0xf]
  %v4529 = vcombine.high %v4525, %v4525
  %v4531 = vunpack.c.l.s4 1983009808
  %v4532 = vunpack.c.0.s8 %v4531
  %v4533 = vlaneseq
  %v4534 = vshrl.u32 %v4533, 7
  %v4535 = vsub.s32 %v4532, %v4534
  %v4536 = vrot.slane %v4525, %v4535
  %v4538 = vunpack.c.l.s4 1983009808
  %v4539 = vunpack.c.0.s8 %v4538
  %v4540 = vlaneseq
  %v4541 = vshrl.u32 %v4540, 7
  %v4542 = vsub.s32 %v4539, %v4541
  %v4543 = vrot.slane %v4529, %v4542
  %v4544 = vcombine.high %v4536, %v4536
  %v4545 = vcombine.high %v4543, %v4543
  %v4547 = vunpack.c.l.s4 1983009808
  %v4548 = vunpack.c.0.s8 %v4547
  %v4549 = vlaneseq
  %v4550 = vshrl.u32 %v4549, 7
  %v4551 = vsub.s32 %v4548, %v4550
  %v4552 = vrot.slane %v4526, %v4551
  %v4553 = vcombine.high %v4552, %v4552
  %4560 = vmatprep.subr.mxu0 0.0
  %4561 = vmatpush1.msra.mxu0 %v76
  %4562 = vmatprep.subr.mxu0 0.0
  %4563 = vmatpush1.msra.mxu0 %v77
  %4564 = vmatprep.subr.mxu0 0.0
  %4565 = vmatpush1.msra.mxu0 %v78
  %4566 = vmatprep.subr.mxu0 0.0
  %4567 = vmatpush1.msra.mxu0 %v79
  %4568 = vmatprep.subr.mxu0 0.0
  %4569 = vmatpush1.msra.mxu0 %v80
  %4570 = vmatprep.subr.mxu0 0.0
  %4571 = vmatpush1.msra.mxu0 %v81
  %4572 = vmatprep.subr.mxu0 0.0
  %4573 = vmatpush1.msra.mxu0 %v82
  %4574 = vmatprep.subr.mxu0 0.0
  %4575 = vmatpush1.msra.mxu0 %v83
  %4576 = vmatprep.subr.mxu0 0.0
  %4577 = vmatpush1.msra.mxu0 %v84
  %4578 = vmatprep.subr.mxu0 0.0
  %4579 = vmatpush1.msra.mxu0 %v85
  %4580 = vmatprep.subr.mxu0 0.0
  %4581 = vmatpush1.msra.mxu0 %v86
  %4582 = vmatprep.subr.mxu0 0.0
  %4583 = vmatpush1.msra.mxu0 %v87
  %4584 = vmatprep.subr.mxu0 0.0
  %4585 = vmatpush1.msra.mxu0 %v88
  %4586 = vmatprep.subr.mxu0 0.0
  %4587 = vmatpush1.msra.mxu0 %v89
  %4588 = vmatprep.subr.mxu0 0.0
  %4589 = vmatpush1.msra.mxu0 %v90
  %4590 = vmatprep.subr.mxu0 0.0
  %4591 = vmatpush1.msra.mxu0 %v91
  %4592 = vmatprep.subr.mxu0 0.0
  %4593 = vmatpush1.msra.mxu0 %v92
  %4594 = vmatprep.subr.mxu0 0.0
  %4595 = vmatpush1.msra.mxu0 %v93
  %4596 = vmatprep.subr.mxu0 0.0
  %4597 = vmatpush1.msra.mxu0 %v94
  %4598 = vmatprep.subr.mxu0 0.0
  %4599 = vmatpush1.msra.mxu0 %v95
  %4600 = vmatprep.subr.mxu0 0.0
  %4601 = vmatpush1.msra.mxu0 %v96
  %4602 = vmatprep.subr.mxu0 0.0
  %4603 = vmatpush1.msra.mxu0 %v97
  %4604 = vmatprep.subr.mxu0 0.0
  %4605 = vmatpush1.msra.mxu0 %v98
  %4606 = vmatprep.subr.mxu0 0.0
  %4607 = vmatpush1.msra.mxu0 %v99
  %4608 = vmatprep.subr.mxu0 0.0
  %4609 = vmatpush1.msra.mxu0 %v100
  %4610 = vmatprep.subr.mxu0 0.0
  %4611 = vmatpush1.msra.mxu0 %v101
  %4612 = vmatprep.subr.mxu0 0.0
  %4613 = vmatpush1.msra.mxu0 %v102
  %4614 = vmatprep.subr.mxu0 0.0
  %4615 = vmatpush1.msra.mxu0 %v103
  %4616 = vmatprep.subr.mxu0 0.0
  %4617 = vmatpush1.msra.mxu0 %v104
  %4618 = vmatprep.subr.mxu0 0.0
  %4619 = vmatpush1.msra.mxu0 %v105
  %4620 = vmatprep.subr.mxu0 0.0
  %4621 = vmatpush1.msra.mxu0 %v106
  %4622 = vmatprep.subr.mxu0 0.0
  %4623 = vmatpush1.msra.mxu0 %v107
  %4624 = vmatprep.mubr.f32.mxu0 %v4544
  %4625 = vmatmul.mubr.f32.gmra.mrb[0].mxu0 %v4536
  %v4626 = vpop.f32.mrb[0].mxu0
  %v4627 = vadd.f32 %v176, %v4626
  %v4628 = vpop.f32.mrb[0].mxu0
  %4629 = vdwg.mxu0
  %4630 = vmatprep.subr.mxu0 0.0
  %4631 = vmatpush1.msra.mxu0 %v108
  %4632 = vmatprep.subr.mxu0 0.0
  %4633 = vmatpush1.msra.mxu0 %v109
  %4634 = vmatprep.subr.mxu0 0.0
  %4635 = vmatpush1.msra.mxu0 %v110
  %4636 = vmatprep.subr.mxu0 0.0
  %4637 = vmatpush1.msra.mxu0 %v111
  %4638 = vmatprep.subr.mxu0 0.0
  %4639 = vmatpush1.msra.mxu0 %v112
  %4640 = vmatprep.subr.mxu0 0.0
  %4641 = vmatpush1.msra.mxu0 %v113
  %4642 = vmatprep.subr.mxu0 0.0
  %4643 = vmatpush1.msra.mxu0 %v114
  %4644 = vmatprep.subr.mxu0 0.0
  %4645 = vmatpush1.msra.mxu0 %v115
  %4646 = vmatprep.subr.mxu0 0.0
  %4647 = vmatpush1.msra.mxu0 %v116
  %4648 = vmatprep.subr.mxu0 0.0
  %4649 = vmatpush1.msra.mxu0 %v117
  %4650 = vmatprep.subr.mxu0 0.0
  %4651 = vmatpush1.msra.mxu0 %v118
  %4652 = vmatprep.subr.mxu0 0.0
  %4653 = vmatpush1.msra.mxu0 %v119
  %4654 = vmatprep.subr.mxu0 0.0
  %4655 = vmatpush1.msra.mxu0 %v120
  %4656 = vmatprep.subr.mxu0 0.0
  %4657 = vmatpush1.msra.mxu0 %v121
  %4658 = vmatprep.subr.mxu0 0.0
  %4659 = vmatpush1.msra.mxu0 %v122
  %4660 = vmatprep.subr.mxu0 0.0
  %4661 = vmatpush1.msra.mxu0 %v123
  %4662 = vmatprep.subr.mxu0 0.0
  %4663 = vmatpush1.msra.mxu0 %v124
  %4664 = vmatprep.subr.mxu0 0.0
  %4665 = vmatpush1.msra.mxu0 %v125
  %4666 = vmatprep.subr.mxu0 0.0
  %4667 = vmatpush1.msra.mxu0 %v126
  %4668 = vmatprep.subr.mxu0 0.0
  %4669 = vmatpush1.msra.mxu0 %v127
  %4670 = vmatprep.subr.mxu0 0.0
  %4671 = vmatpush1.msra.mxu0 %v128
  %4672 = vmatprep.subr.mxu0 0.0
  %4673 = vmatpush1.msra.mxu0 %v129
  %4674 = vmatprep.subr.mxu0 0.0
  %4675 = vmatpush1.msra.mxu0 %v130
  %4676 = vmatprep.subr.mxu0 0.0
  %4677 = vmatpush1.msra.mxu0 %v131
  %4678 = vmatprep.subr.mxu0 0.0
  %4679 = vmatpush1.msra.mxu0 %v132
  %4680 = vmatprep.subr.mxu0 0.0
  %4681 = vmatpush1.msra.mxu0 %v133
  %4682 = vmatprep.subr.mxu0 0.0
  %4683 = vmatpush1.msra.mxu0 %v134
  %4684 = vmatprep.subr.mxu0 0.0
  %4685 = vmatpush1.msra.mxu0 %v135
  %4686 = vmatprep.subr.mxu0 0.0
  %4687 = vmatpush1.msra.mxu0 %v136
  %4688 = vmatprep.subr.mxu0 0.0
  %4689 = vmatpush1.msra.mxu0 %v137
  %4690 = vmatprep.subr.mxu0 0.0
  %4691 = vmatpush1.msra.mxu0 %v138
  %4692 = vmatprep.subr.mxu0 0.0
  %4693 = vmatpush1.msra.mxu0 %v139
  %4694 = vmatprep.mubr.f32.mxu0 %v4545
  %4695 = vmatmul.mubr.f32.gmra.mrb[0].mxu0 %v4543
  %v4696 = vpop.f32.mrb[0].mxu0
  %v4697 = vadd.f32 %v4627, %v4696
  %v4698 = vpop.f32.mrb[0].mxu0
  %4699 = vdwg.mxu0
  %4700 = vmatprep.subr.mxu0 0.0
  %4701 = vmatpush1.msra.mxu0 %v140
  %4702 = vmatprep.subr.mxu0 0.0
  %4703 = vmatpush1.msra.mxu0 %v141
  %4704 = vmatprep.subr.mxu0 0.0
  %4705 = vmatpush1.msra.mxu0 %v142
  %4706 = vmatprep.subr.mxu0 0.0
  %4707 = vmatpush1.msra.mxu0 %v143
  %4708 = vmatprep.subr.mxu0 0.0
  %4709 = vmatpush1.msra.mxu0 %v144
  %4710 = vmatprep.subr.mxu0 0.0
  %4711 = vmatpush1.msra.mxu0 %v145
  %4712 = vmatprep.subr.mxu0 0.0
  %4713 = vmatpush1.msra.mxu0 %v146
  %4714 = vmatprep.subr.mxu0 0.0
  %4715 = vmatpush1.msra.mxu0 %v147
  %4716 = vmatprep.subr.mxu0 0.0
  %4717 = vmatpush1.msra.mxu0 %v148
  %4718 = vmatprep.subr.mxu0 0.0
  %4719 = vmatpush1.msra.mxu0 %v149
  %4720 = vmatprep.subr.mxu0 0.0
  %4721 = vmatpush1.msra.mxu0 %v150
  %4722 = vmatprep.subr.mxu0 0.0
  %4723 = vmatpush1.msra.mxu0 %v151
  %4724 = vmatprep.subr.mxu0 0.0
  %4725 = vmatpush1.msra.mxu0 %v152
  %4726 = vmatprep.subr.mxu0 0.0
  %4727 = vmatpush1.msra.mxu0 %v153
  %4728 = vmatprep.subr.mxu0 0.0
  %4729 = vmatpush1.msra.mxu0 %v154
  %4730 = vmatprep.subr.mxu0 0.0
  %4731 = vmatpush1.msra.mxu0 %v155
  %4732 = vmatprep.subr.mxu0 0.0
  %4733 = vmatpush1.msra.mxu0 %v156
  %4734 = vmatprep.subr.mxu0 0.0
  %4735 = vmatpush1.msra.mxu0 %v157
  %4736 = vmatprep.subr.mxu0 0.0
  %4737 = vmatpush1.msra.mxu0 %v158
  %4738 = vmatprep.subr.mxu0 0.0
  %4739 = vmatpush1.msra.mxu0 %v159
  %4740 = vmatprep.subr.mxu0 0.0
  %4741 = vmatpush1.msra.mxu0 %v160
  %4742 = vmatprep.subr.mxu0 0.0
  %4743 = vmatpush1.msra.mxu0 %v161
  %4744 = vmatprep.subr.mxu0 0.0
  %4745 = vmatpush1.msra.mxu0 %v162
  %4746 = vmatprep.subr.mxu0 0.0
  %4747 = vmatpush1.msra.mxu0 %v163
  %4748 = vmatprep.subr.mxu0 0.0
  %4749 = vmatpush1.msra.mxu0 %v164
  %4750 = vmatprep.subr.mxu0 0.0
  %4751 = vmatpush1.msra.mxu0 %v165
  %4752 = vmatprep.subr.mxu0 0.0
  %4753 = vmatpush1.msra.mxu0 %v166
  %4754 = vmatprep.subr.mxu0 0.0
  %4755 = vmatpush1.msra.mxu0 %v167
  %4756 = vmatprep.subr.mxu0 0.0
  %4757 = vmatpush1.msra.mxu0 %v168
  %4758 = vmatprep.subr.mxu0 0.0
  %4759 = vmatpush1.msra.mxu0 %v169
  %4760 = vmatprep.subr.mxu0 0.0
  %4761 = vmatpush1.msra.mxu0 %v170
  %4762 = vmatprep.subr.mxu0 0.0
  %4763 = vmatpush1.msra.mxu0 %v171
  %4764 = vmatprep.mubr.f32.mxu0 %v4553
  %4765 = vmatmul.mubr.f32.gmra.mrb[0].mxu0 %v4552
  %v4766 = vpop.f32.mrb[0].mxu0
  %v4767 = vadd.f32 %v4697, %v4766
  %v4768 = vpop.f32.mrb[0].mxu0
  %4769 = vdwg.mxu0
  %v4770 = vmax.f32 %v4767, 0.0
  %4771 = vmatprep.subr.mxu0 0.0
  %4772 = vmatpush1.msra.mxu0 %v57
  %4773 = vmatprep.subr.mxu0 0.0
  %4774 = vmatpush1.msra.mxu0 %v58
  %4775 = vmatprep.subr.mxu0 0.0
  %4776 = vmatpush1.msra.mxu0 %v59
  %4777 = vmatprep.subr.mxu0 0.0
  %4778 = vmatpush1.msra.mxu0 %v60
  %4779 = vmatprep.subr.mxu0 0.0
  %4780 = vmatpush1.msra.mxu0 %v61
  %4781 = vmatprep.subr.mxu0 0.0
  %4782 = vmatpush1.msra.mxu0 %v62
  %4783 = vmatprep.subr.mxu0 0.0
  %4784 = vmatpush1.msra.mxu0 %v63
  %4785 = vmatprep.subr.mxu0 0.0
  %4786 = vmatpush1.msra.mxu0 %v64
  %4787 = vmatprep.subr.mxu0 0.0
  %4788 = vmatpush1.msra.mxu0 %v65
  %4789 = vmatprep.subr.mxu0 0.0
  %4790 = vmatpush1.msra.mxu0 %v66
  %4791 = vmatprep.subr.mxu0 0.0
  %4792 = vmatpush1.msra.mxu0 %v67
  %4793 = vmatprep.subr.mxu0 0.0
  %4794 = vmatpush1.msra.mxu0 %v68
  %4795 = vmatprep.subr.mxu0 0.0
  %4796 = vmatpush1.msra.mxu0 %v69
  %4797 = vmatprep.subr.mxu0 0.0
  %4798 = vmatpush1.msra.mxu0 %v70
  %4799 = vmatprep.subr.mxu0 0.0
  %4800 = vmatpush1.msra.mxu0 %v71
  %4801 = vmatprep.subr.mxu0 0.0
  %4802 = vmatpush1.msra.mxu0 %v72
  %4803 = vmatprep.subr.mxu0 0.0
  %4804 = vmatpush1.msra.mxu0 0.0
  %4805 = vmatprep.subr.mxu0 0.0
  %4806 = vmatpush1.msra.mxu0 0.0
  %4807 = vmatprep.subr.mxu0 0.0
  %4808 = vmatpush1.msra.mxu0 0.0
  %4809 = vmatprep.subr.mxu0 0.0
  %4810 = vmatpush1.msra.mxu0 0.0
  %4811 = vmatprep.subr.mxu0 0.0
  %4812 = vmatpush1.msra.mxu0 0.0
  %4813 = vmatprep.subr.mxu0 0.0
  %4814 = vmatpush1.msra.mxu0 0.0
  %4815 = vmatprep.subr.mxu0 0.0
  %4816 = vmatpush1.msra.mxu0 0.0
  %4817 = vmatprep.subr.mxu0 0.0
  %4818 = vmatpush1.msra.mxu0 0.0
  %4819 = vmatprep.subr.mxu0 0.0
  %4820 = vmatpush1.msra.mxu0 0.0
  %4821 = vmatprep.subr.mxu0 0.0
  %4822 = vmatpush1.msra.mxu0 0.0
  %4823 = vmatprep.subr.mxu0 0.0
  %4824 = vmatpush1.msra.mxu0 0.0
  %4825 = vmatprep.subr.mxu0 0.0
  %4826 = vmatpush1.msra.mxu0 0.0
  %4827 = vmatprep.subr.mxu0 0.0
  %4828 = vmatpush1.msra.mxu0 0.0
  %4829 = vmatprep.subr.mxu0 0.0
  %4830 = vmatpush1.msra.mxu0 0.0
  %4831 = vmatprep.subr.mxu0 0.0
  %4832 = vmatpush1.msra.mxu0 0.0
  %4833 = vmatprep.subr.mxu0 0.0
  %4834 = vmatpush1.msra.mxu0 0.0
  %4835 = vmatprep.mubr.f32.mxu0 0.0
  %4836 = vmatmul.mubr.f32.gmra.mrb[0].mxu0 %v4770
  %v4837 = vpop.f32.mrb[0].mxu0
  %v4838 = vadd.f32 %v426, %v4837
  %v4839 = vpop.f32.mrb[0].mxu0
  %4840 = vdwg.mxu0
  %v4841 = vmax.f32 %v4838, 0.0
  %s4842 = scalar_lea.vmem %s6, 176
  %v4843 = vld [vmem:[%s4842] sm:$0xff]
  %v4844 = vld [vmem:[%s4842 + $0x8] sm:$0xff]
  %v4846 = vsel %vm822, %v4841, 0
  %4848 = vmatprep.subr.mxu0 0.0
  %4849 = vmatpush1.msra.mxu0 %v4843
  %4850 = vmatprep.subr.mxu0 0.0
  %4851 = vmatpush1.msra.mxu0 %v4844
  %4852 = vmatprep.subr.mxu0 0.0
  %4853 = vmatpush1.msra.mxu0 0.0
  %4854 = vmatprep.subr.mxu0 0.0
  %4855 = vmatpush1.msra.mxu0 0.0
  %4856 = vmatprep.subr.mxu0 0.0
  %4857 = vmatpush1.msra.mxu0 0.0
  %4858 = vmatprep.subr.mxu0 0.0
  %4859 = vmatpush1.msra.mxu0 0.0
  %4860 = vmatprep.subr.mxu0 0.0
  %4861 = vmatpush1.msra.mxu0 0.0
  %4862 = vmatprep.subr.mxu0 0.0
  %4863 = vmatpush1.msra.mxu0 0.0
  %4864 = vmatprep.subr.mxu0 0.0
  %4865 = vmatpush1.msra.mxu0 0.0
  %4866 = vmatprep.subr.mxu0 0.0
  %4867 = vmatpush1.msra.mxu0 0.0
  %4868 = vmatprep.subr.mxu0 0.0
  %4869 = vmatpush1.msra.mxu0 0.0
  %4870 = vmatprep.subr.mxu0 0.0
  %4871 = vmatpush1.msra.mxu0 0.0
  %4872 = vmatprep.subr.mxu0 0.0
  %4873 = vmatpush1.msra.mxu0 0.0
  %4874 = vmatprep.subr.mxu0 0.0
  %4875 = vmatpush1.msra.mxu0 0.0
  %4876 = vmatprep.subr.mxu0 0.0
  %4877 = vmatpush1.msra.mxu0 0.0
  %4878 = vmatprep.subr.mxu0 0.0
  %4879 = vmatpush1.msra.mxu0 0.0
  %4880 = vmatprep.subr.mxu0 0.0
  %4881 = vmatpush1.msra.mxu0 0.0
  %4882 = vmatprep.subr.mxu0 0.0
  %4883 = vmatpush1.msra.mxu0 0.0
  %4884 = vmatprep.subr.mxu0 0.0
  %4885 = vmatpush1.msra.mxu0 0.0
  %4886 = vmatprep.subr.mxu0 0.0
  %4887 = vmatpush1.msra.mxu0 0.0
  %4888 = vmatprep.subr.mxu0 0.0
  %4889 = vmatpush1.msra.mxu0 0.0
  %4890 = vmatprep.subr.mxu0 0.0
  %4891 = vmatpush1.msra.mxu0 0.0
  %4892 = vmatprep.subr.mxu0 0.0
  %4893 = vmatpush1.msra.mxu0 0.0
  %4894 = vmatprep.subr.mxu0 0.0
  %4895 = vmatpush1.msra.mxu0 0.0
  %4896 = vmatprep.subr.mxu0 0.0
  %4897 = vmatpush1.msra.mxu0 0.0
  %4898 = vmatprep.subr.mxu0 0.0
  %4899 = vmatpush1.msra.mxu0 0.0
  %4900 = vmatprep.subr.mxu0 0.0
  %4901 = vmatpush1.msra.mxu0 0.0
  %4902 = vmatprep.subr.mxu0 0.0
  %4903 = vmatpush1.msra.mxu0 0.0
  %4904 = vmatprep.subr.mxu0 0.0
  %4905 = vmatpush1.msra.mxu0 0.0
  %4906 = vmatprep.subr.mxu0 0.0
  %4907 = vmatpush1.msra.mxu0 0.0
  %4908 = vmatprep.subr.mxu0 0.0
  %4909 = vmatpush1.msra.mxu0 0.0
  %4910 = vmatprep.subr.mxu0 0.0
  %4911 = vmatpush1.msra.mxu0 0.0
  %4912 = vmatprep.mubr.f32.mxu0 0.0
  %4913 = vmatmul.mubr.f32.gmra.mrb[0].mxu0 %v4846
  %v4914 = vpop.f32.mrb[0].mxu0
  %v4915 = vadd.f32 0.0, %v4914
  %v4916 = vpop.f32.mrb[0].mxu0
  %4917 = vdwg.mxu0
  %v4918 = vadd.f32 %v4523, %v4915
  %s4919 = scalar_lea.vmem %s0, 144
  %v4920 = vld [vmem:[%s4919] sm:$0xff]
  %v4921 = vld [vmem:[%s4919 + $0x8] sm:$0xf]
  %v4924 = vcombine.high %v4920, %v4920
  %v4926 = vunpack.c.l.s4 1983009808
  %v4927 = vunpack.c.0.s8 %v4926
  %v4928 = vlaneseq
  %v4929 = vshrl.u32 %v4928, 7
  %v4930 = vsub.s32 %v4927, %v4929
  %v4931 = vrot.slane %v4920, %v4930
  %v4933 = vunpack.c.l.s4 1983009808
  %v4934 = vunpack.c.0.s8 %v4933
  %v4935 = vlaneseq
  %v4936 = vshrl.u32 %v4935, 7
  %v4937 = vsub.s32 %v4934, %v4936
  %v4938 = vrot.slane %v4924, %v4937
  %v4939 = vcombine.high %v4931, %v4931
  %v4940 = vcombine.high %v4938, %v4938
  %v4942 = vunpack.c.l.s4 1983009808
  %v4943 = vunpack.c.0.s8 %v4942
  %v4944 = vlaneseq
  %v4945 = vshrl.u32 %v4944, 7
  %v4946 = vsub.s32 %v4943, %v4945
  %v4947 = vrot.slane %v4921, %v4946
  %v4948 = vcombine.high %v4947, %v4947
  %4955 = vmatprep.subr.mxu0 0.0
  %4956 = vmatpush1.msra.mxu0 %v76
  %4957 = vmatprep.subr.mxu0 0.0
  %4958 = vmatpush1.msra.mxu0 %v77
  %4959 = vmatprep.subr.mxu0 0.0
  %4960 = vmatpush1.msra.mxu0 %v78
  %4961 = vmatprep.subr.mxu0 0.0
  %4962 = vmatpush1.msra.mxu0 %v79
  %4963 = vmatprep.subr.mxu0 0.0
  %4964 = vmatpush1.msra.mxu0 %v80
  %4965 = vmatprep.subr.mxu0 0.0
  %4966 = vmatpush1.msra.mxu0 %v81
  %4967 = vmatprep.subr.mxu0 0.0
  %4968 = vmatpush1.msra.mxu0 %v82
  %4969 = vmatprep.subr.mxu0 0.0
  %4970 = vmatpush1.msra.mxu0 %v83
  %4971 = vmatprep.subr.mxu0 0.0
  %4972 = vmatpush1.msra.mxu0 %v84
  %4973 = vmatprep.subr.mxu0 0.0
  %4974 = vmatpush1.msra.mxu0 %v85
  %4975 = vmatprep.subr.mxu0 0.0
  %4976 = vmatpush1.msra.mxu0 %v86
  %4977 = vmatprep.subr.mxu0 0.0
  %4978 = vmatpush1.msra.mxu0 %v87
  %4979 = vmatprep.subr.mxu0 0.0
  %4980 = vmatpush1.msra.mxu0 %v88
  %4981 = vmatprep.subr.mxu0 0.0
  %4982 = vmatpush1.msra.mxu0 %v89
  %4983 = vmatprep.subr.mxu0 0.0
  %4984 = vmatpush1.msra.mxu0 %v90
  %4985 = vmatprep.subr.mxu0 0.0
  %4986 = vmatpush1.msra.mxu0 %v91
  %4987 = vmatprep.subr.mxu0 0.0
  %4988 = vmatpush1.msra.mxu0 %v92
  %4989 = vmatprep.subr.mxu0 0.0
  %4990 = vmatpush1.msra.mxu0 %v93
  %4991 = vmatprep.subr.mxu0 0.0
  %4992 = vmatpush1.msra.mxu0 %v94
  %4993 = vmatprep.subr.mxu0 0.0
  %4994 = vmatpush1.msra.mxu0 %v95
  %4995 = vmatprep.subr.mxu0 0.0
  %4996 = vmatpush1.msra.mxu0 %v96
  %4997 = vmatprep.subr.mxu0 0.0
  %4998 = vmatpush1.msra.mxu0 %v97
  %4999 = vmatprep.subr.mxu0 0.0
  %5000 = vmatpush1.msra.mxu0 %v98
  %5001 = vmatprep.subr.mxu0 0.0
  %5002 = vmatpush1.msra.mxu0 %v99
  %5003 = vmatprep.subr.mxu0 0.0
  %5004 = vmatpush1.msra.mxu0 %v100
  %5005 = vmatprep.subr.mxu0 0.0
  %5006 = vmatpush1.msra.mxu0 %v101
  %5007 = vmatprep.subr.mxu0 0.0
  %5008 = vmatpush1.msra.mxu0 %v102
  %5009 = vmatprep.subr.mxu0 0.0
  %5010 = vmatpush1.msra.mxu0 %v103
  %5011 = vmatprep.subr.mxu0 0.0
  %5012 = vmatpush1.msra.mxu0 %v104
  %5013 = vmatprep.subr.mxu0 0.0
  %5014 = vmatpush1.msra.mxu0 %v105
  %5015 = vmatprep.subr.mxu0 0.0
  %5016 = vmatpush1.msra.mxu0 %v106
  %5017 = vmatprep.subr.mxu0 0.0
  %5018 = vmatpush1.msra.mxu0 %v107
  %5019 = vmatprep.mubr.f32.mxu0 %v4939
  %5020 = vmatmul.mubr.f32.gmra.mrb[0].mxu0 %v4931
  %v5021 = vpop.f32.mrb[0].mxu0
  %v5022 = vadd.f32 %v176, %v5021
  %v5023 = vpop.f32.mrb[0].mxu0
  %5024 = vdwg.mxu0
  %5025 = vmatprep.subr.mxu0 0.0
  %5026 = vmatpush1.msra.mxu0 %v108
  %5027 = vmatprep.subr.mxu0 0.0
  %5028 = vmatpush1.msra.mxu0 %v109
  %5029 = vmatprep.subr.mxu0 0.0
  %5030 = vmatpush1.msra.mxu0 %v110
  %5031 = vmatprep.subr.mxu0 0.0
  %5032 = vmatpush1.msra.mxu0 %v111
  %5033 = vmatprep.subr.mxu0 0.0
  %5034 = vmatpush1.msra.mxu0 %v112
  %5035 = vmatprep.subr.mxu0 0.0
  %5036 = vmatpush1.msra.mxu0 %v113
  %5037 = vmatprep.subr.mxu0 0.0
  %5038 = vmatpush1.msra.mxu0 %v114
  %5039 = vmatprep.subr.mxu0 0.0
  %5040 = vmatpush1.msra.mxu0 %v115
  %5041 = vmatprep.subr.mxu0 0.0
  %5042 = vmatpush1.msra.mxu0 %v116
  %5043 = vmatprep.subr.mxu0 0.0
  %5044 = vmatpush1.msra.mxu0 %v117
  %5045 = vmatprep.subr.mxu0 0.0
  %5046 = vmatpush1.msra.mxu0 %v118
  %5047 = vmatprep.subr.mxu0 0.0
  %5048 = vmatpush1.msra.mxu0 %v119
  %5049 = vmatprep.subr.mxu0 0.0
  %5050 = vmatpush1.msra.mxu0 %v120
  %5051 = vmatprep.subr.mxu0 0.0
  %5052 = vmatpush1.msra.mxu0 %v121
  %5053 = vmatprep.subr.mxu0 0.0
  %5054 = vmatpush1.msra.mxu0 %v122
  %5055 = vmatprep.subr.mxu0 0.0
  %5056 = vmatpush1.msra.mxu0 %v123
  %5057 = vmatprep.subr.mxu0 0.0
  %5058 = vmatpush1.msra.mxu0 %v124
  %5059 = vmatprep.subr.mxu0 0.0
  %5060 = vmatpush1.msra.mxu0 %v125
  %5061 = vmatprep.subr.mxu0 0.0
  %5062 = vmatpush1.msra.mxu0 %v126
  %5063 = vmatprep.subr.mxu0 0.0
  %5064 = vmatpush1.msra.mxu0 %v127
  %5065 = vmatprep.subr.mxu0 0.0
  %5066 = vmatpush1.msra.mxu0 %v128
  %5067 = vmatprep.subr.mxu0 0.0
  %5068 = vmatpush1.msra.mxu0 %v129
  %5069 = vmatprep.subr.mxu0 0.0
  %5070 = vmatpush1.msra.mxu0 %v130
  %5071 = vmatprep.subr.mxu0 0.0
  %5072 = vmatpush1.msra.mxu0 %v131
  %5073 = vmatprep.subr.mxu0 0.0
  %5074 = vmatpush1.msra.mxu0 %v132
  %5075 = vmatprep.subr.mxu0 0.0
  %5076 = vmatpush1.msra.mxu0 %v133
  %5077 = vmatprep.subr.mxu0 0.0
  %5078 = vmatpush1.msra.mxu0 %v134
  %5079 = vmatprep.subr.mxu0 0.0
  %5080 = vmatpush1.msra.mxu0 %v135
  %5081 = vmatprep.subr.mxu0 0.0
  %5082 = vmatpush1.msra.mxu0 %v136
  %5083 = vmatprep.subr.mxu0 0.0
  %5084 = vmatpush1.msra.mxu0 %v137
  %5085 = vmatprep.subr.mxu0 0.0
  %5086 = vmatpush1.msra.mxu0 %v138
  %5087 = vmatprep.subr.mxu0 0.0
  %5088 = vmatpush1.msra.mxu0 %v139
  %5089 = vmatprep.mubr.f32.mxu0 %v4940
  %5090 = vmatmul.mubr.f32.gmra.mrb[0].mxu0 %v4938
  %v5091 = vpop.f32.mrb[0].mxu0
  %v5092 = vadd.f32 %v5022, %v5091
  %v5093 = vpop.f32.mrb[0].mxu0
  %5094 = vdwg.mxu0
  %5095 = vmatprep.subr.mxu0 0.0
  %5096 = vmatpush1.msra.mxu0 %v140
  %5097 = vmatprep.subr.mxu0 0.0
  %5098 = vmatpush1.msra.mxu0 %v141
  %5099 = vmatprep.subr.mxu0 0.0
  %5100 = vmatpush1.msra.mxu0 %v142
  %5101 = vmatprep.subr.mxu0 0.0
  %5102 = vmatpush1.msra.mxu0 %v143
  %5103 = vmatprep.subr.mxu0 0.0
  %5104 = vmatpush1.msra.mxu0 %v144
  %5105 = vmatprep.subr.mxu0 0.0
  %5106 = vmatpush1.msra.mxu0 %v145
  %5107 = vmatprep.subr.mxu0 0.0
  %5108 = vmatpush1.msra.mxu0 %v146
  %5109 = vmatprep.subr.mxu0 0.0
  %5110 = vmatpush1.msra.mxu0 %v147
  %5111 = vmatprep.subr.mxu0 0.0
  %5112 = vmatpush1.msra.mxu0 %v148
  %5113 = vmatprep.subr.mxu0 0.0
  %5114 = vmatpush1.msra.mxu0 %v149
  %5115 = vmatprep.subr.mxu0 0.0
  %5116 = vmatpush1.msra.mxu0 %v150
  %5117 = vmatprep.subr.mxu0 0.0
  %5118 = vmatpush1.msra.mxu0 %v151
  %5119 = vmatprep.subr.mxu0 0.0
  %5120 = vmatpush1.msra.mxu0 %v152
  %5121 = vmatprep.subr.mxu0 0.0
  %5122 = vmatpush1.msra.mxu0 %v153
  %5123 = vmatprep.subr.mxu0 0.0
  %5124 = vmatpush1.msra.mxu0 %v154
  %5125 = vmatprep.subr.mxu0 0.0
  %5126 = vmatpush1.msra.mxu0 %v155
  %5127 = vmatprep.subr.mxu0 0.0
  %5128 = vmatpush1.msra.mxu0 %v156
  %5129 = vmatprep.subr.mxu0 0.0
  %5130 = vmatpush1.msra.mxu0 %v157
  %5131 = vmatprep.subr.mxu0 0.0
  %5132 = vmatpush1.msra.mxu0 %v158
  %5133 = vmatprep.subr.mxu0 0.0
  %5134 = vmatpush1.msra.mxu0 %v159
  %5135 = vmatprep.subr.mxu0 0.0
  %5136 = vmatpush1.msra.mxu0 %v160
  %5137 = vmatprep.subr.mxu0 0.0
  %5138 = vmatpush1.msra.mxu0 %v161
  %5139 = vmatprep.subr.mxu0 0.0
  %5140 = vmatpush1.msra.mxu0 %v162
  %5141 = vmatprep.subr.mxu0 0.0
  %5142 = vmatpush1.msra.mxu0 %v163
  %5143 = vmatprep.subr.mxu0 0.0
  %5144 = vmatpush1.msra.mxu0 %v164
  %5145 = vmatprep.subr.mxu0 0.0
  %5146 = vmatpush1.msra.mxu0 %v165
  %5147 = vmatprep.subr.mxu0 0.0
  %5148 = vmatpush1.msra.mxu0 %v166
  %5149 = vmatprep.subr.mxu0 0.0
  %5150 = vmatpush1.msra.mxu0 %v167
  %5151 = vmatprep.subr.mxu0 0.0
  %5152 = vmatpush1.msra.mxu0 %v168
  %5153 = vmatprep.subr.mxu0 0.0
  %5154 = vmatpush1.msra.mxu0 %v169
  %5155 = vmatprep.subr.mxu0 0.0
  %5156 = vmatpush1.msra.mxu0 %v170
  %5157 = vmatprep.subr.mxu0 0.0
  %5158 = vmatpush1.msra.mxu0 %v171
  %5159 = vmatprep.mubr.f32.mxu0 %v4948
  %5160 = vmatmul.mubr.f32.gmra.mrb[0].mxu0 %v4947
  %v5161 = vpop.f32.mrb[0].mxu0
  %v5162 = vadd.f32 %v5092, %v5161
  %v5163 = vpop.f32.mrb[0].mxu0
  %5164 = vdwg.mxu0
  %v5165 = vmax.f32 %v5162, 0.0
  %5166 = vmatprep.subr.mxu0 0.0
  %5167 = vmatpush1.msra.mxu0 %v57
  %5168 = vmatprep.subr.mxu0 0.0
  %5169 = vmatpush1.msra.mxu0 %v58
  %5170 = vmatprep.subr.mxu0 0.0
  %5171 = vmatpush1.msra.mxu0 %v59
  %5172 = vmatprep.subr.mxu0 0.0
  %5173 = vmatpush1.msra.mxu0 %v60
  %5174 = vmatprep.subr.mxu0 0.0
  %5175 = vmatpush1.msra.mxu0 %v61
  %5176 = vmatprep.subr.mxu0 0.0
  %5177 = vmatpush1.msra.mxu0 %v62
  %5178 = vmatprep.subr.mxu0 0.0
  %5179 = vmatpush1.msra.mxu0 %v63
  %5180 = vmatprep.subr.mxu0 0.0
  %5181 = vmatpush1.msra.mxu0 %v64
  %5182 = vmatprep.subr.mxu0 0.0
  %5183 = vmatpush1.msra.mxu0 %v65
  %5184 = vmatprep.subr.mxu0 0.0
  %5185 = vmatpush1.msra.mxu0 %v66
  %5186 = vmatprep.subr.mxu0 0.0
  %5187 = vmatpush1.msra.mxu0 %v67
  %5188 = vmatprep.subr.mxu0 0.0
  %5189 = vmatpush1.msra.mxu0 %v68
  %5190 = vmatprep.subr.mxu0 0.0
  %5191 = vmatpush1.msra.mxu0 %v69
  %5192 = vmatprep.subr.mxu0 0.0
  %5193 = vmatpush1.msra.mxu0 %v70
  %5194 = vmatprep.subr.mxu0 0.0
  %5195 = vmatpush1.msra.mxu0 %v71
  %5196 = vmatprep.subr.mxu0 0.0
  %5197 = vmatpush1.msra.mxu0 %v72
  %5198 = vmatprep.subr.mxu0 0.0
  %5199 = vmatpush1.msra.mxu0 0.0
  %5200 = vmatprep.subr.mxu0 0.0
  %5201 = vmatpush1.msra.mxu0 0.0
  %5202 = vmatprep.subr.mxu0 0.0
  %5203 = vmatpush1.msra.mxu0 0.0
  %5204 = vmatprep.subr.mxu0 0.0
  %5205 = vmatpush1.msra.mxu0 0.0
  %5206 = vmatprep.subr.mxu0 0.0
  %5207 = vmatpush1.msra.mxu0 0.0
  %5208 = vmatprep.subr.mxu0 0.0
  %5209 = vmatpush1.msra.mxu0 0.0
  %5210 = vmatprep.subr.mxu0 0.0
  %5211 = vmatpush1.msra.mxu0 0.0
  %5212 = vmatprep.subr.mxu0 0.0
  %5213 = vmatpush1.msra.mxu0 0.0
  %5214 = vmatprep.subr.mxu0 0.0
  %5215 = vmatpush1.msra.mxu0 0.0
  %5216 = vmatprep.subr.mxu0 0.0
  %5217 = vmatpush1.msra.mxu0 0.0
  %5218 = vmatprep.subr.mxu0 0.0
  %5219 = vmatpush1.msra.mxu0 0.0
  %5220 = vmatprep.subr.mxu0 0.0
  %5221 = vmatpush1.msra.mxu0 0.0
  %5222 = vmatprep.subr.mxu0 0.0
  %5223 = vmatpush1.msra.mxu0 0.0
  %5224 = vmatprep.subr.mxu0 0.0
  %5225 = vmatpush1.msra.mxu0 0.0
  %5226 = vmatprep.subr.mxu0 0.0
  %5227 = vmatpush1.msra.mxu0 0.0
  %5228 = vmatprep.subr.mxu0 0.0
  %5229 = vmatpush1.msra.mxu0 0.0
  %5230 = vmatprep.mubr.f32.mxu0 0.0
  %5231 = vmatmul.mubr.f32.gmra.mrb[0].mxu0 %v5165
  %v5232 = vpop.f32.mrb[0].mxu0
  %v5233 = vadd.f32 %v426, %v5232
  %v5234 = vpop.f32.mrb[0].mxu0
  %5235 = vdwg.mxu0
  %v5236 = vmax.f32 %v5233, 0.0
  %s5237 = scalar_lea.vmem %s6, 192
  %v5238 = vld [vmem:[%s5237] sm:$0xff]
  %v5239 = vld [vmem:[%s5237 + $0x8] sm:$0xff]
  %v5241 = vsel %vm822, %v5236, 0
  %5243 = vmatprep.subr.mxu0 0.0
  %5244 = vmatpush1.msra.mxu0 %v5238
  %5245 = vmatprep.subr.mxu0 0.0
  %5246 = vmatpush1.msra.mxu0 %v5239
  %5247 = vmatprep.subr.mxu0 0.0
  %5248 = vmatpush1.msra.mxu0 0.0
  %5249 = vmatprep.subr.mxu0 0.0
  %5250 = vmatpush1.msra.mxu0 0.0
  %5251 = vmatprep.subr.mxu0 0.0
  %5252 = vmatpush1.msra.mxu0 0.0
  %5253 = vmatprep.subr.mxu0 0.0
  %5254 = vmatpush1.msra.mxu0 0.0
  %5255 = vmatprep.subr.mxu0 0.0
  %5256 = vmatpush1.msra.mxu0 0.0
  %5257 = vmatprep.subr.mxu0 0.0
  %5258 = vmatpush1.msra.mxu0 0.0
  %5259 = vmatprep.subr.mxu0 0.0
  %5260 = vmatpush1.msra.mxu0 0.0
  %5261 = vmatprep.subr.mxu0 0.0
  %5262 = vmatpush1.msra.mxu0 0.0
  %5263 = vmatprep.subr.mxu0 0.0
  %5264 = vmatpush1.msra.mxu0 0.0
  %5265 = vmatprep.subr.mxu0 0.0
  %5266 = vmatpush1.msra.mxu0 0.0
  %5267 = vmatprep.subr.mxu0 0.0
  %5268 = vmatpush1.msra.mxu0 0.0
  %5269 = vmatprep.subr.mxu0 0.0
  %5270 = vmatpush1.msra.mxu0 0.0
  %5271 = vmatprep.subr.mxu0 0.0
  %5272 = vmatpush1.msra.mxu0 0.0
  %5273 = vmatprep.subr.mxu0 0.0
  %5274 = vmatpush1.msra.mxu0 0.0
  %5275 = vmatprep.subr.mxu0 0.0
  %5276 = vmatpush1.msra.mxu0 0.0
  %5277 = vmatprep.subr.mxu0 0.0
  %5278 = vmatpush1.msra.mxu0 0.0
  %5279 = vmatprep.subr.mxu0 0.0
  %5280 = vmatpush1.msra.mxu0 0.0
  %5281 = vmatprep.subr.mxu0 0.0
  %5282 = vmatpush1.msra.mxu0 0.0
  %5283 = vmatprep.subr.mxu0 0.0
  %5284 = vmatpush1.msra.mxu0 0.0
  %5285 = vmatprep.subr.mxu0 0.0
  %5286 = vmatpush1.msra.mxu0 0.0
  %5287 = vmatprep.subr.mxu0 0.0
  %5288 = vmatpush1.msra.mxu0 0.0
  %5289 = vmatprep.subr.mxu0 0.0
  %5290 = vmatpush1.msra.mxu0 0.0
  %5291 = vmatprep.subr.mxu0 0.0
  %5292 = vmatpush1.msra.mxu0 0.0
  %5293 = vmatprep.subr.mxu0 0.0
  %5294 = vmatpush1.msra.mxu0 0.0
  %5295 = vmatprep.subr.mxu0 0.0
  %5296 = vmatpush1.msra.mxu0 0.0
  %5297 = vmatprep.subr.mxu0 0.0
  %5298 = vmatpush1.msra.mxu0 0.0
  %5299 = vmatprep.subr.mxu0 0.0
  %5300 = vmatpush1.msra.mxu0 0.0
  %5301 = vmatprep.subr.mxu0 0.0
  %5302 = vmatpush1.msra.mxu0 0.0
  %5303 = vmatprep.subr.mxu0 0.0
  %5304 = vmatpush1.msra.mxu0 0.0
  %5305 = vmatprep.subr.mxu0 0.0
  %5306 = vmatpush1.msra.mxu0 0.0
  %5307 = vmatprep.mubr.f32.mxu0 0.0
  %5308 = vmatmul.mubr.f32.gmra.mrb[0].mxu0 %v5241
  %v5309 = vpop.f32.mrb[0].mxu0
  %v5310 = vadd.f32 0.0, %v5309
  %v5311 = vpop.f32.mrb[0].mxu0
  %5312 = vdwg.mxu0
  %v5313 = vadd.f32 %v4918, %v5310
  %s5314 = scalar_lea.vmem %s0, 156
  %v5315 = vld [vmem:[%s5314] sm:$0xff]
  %v5316 = vld [vmem:[%s5314 + $0x8] sm:$0xf]
  %v5319 = vcombine.high %v5315, %v5315
  %v5321 = vunpack.c.l.s4 1983009808
  %v5322 = vunpack.c.0.s8 %v5321
  %v5323 = vlaneseq
  %v5324 = vshrl.u32 %v5323, 7
  %v5325 = vsub.s32 %v5322, %v5324
  %v5326 = vrot.slane %v5315, %v5325
  %v5328 = vunpack.c.l.s4 1983009808
  %v5329 = vunpack.c.0.s8 %v5328
  %v5330 = vlaneseq
  %v5331 = vshrl.u32 %v5330, 7
  %v5332 = vsub.s32 %v5329, %v5331
  %v5333 = vrot.slane %v5319, %v5332
  %v5334 = vcombine.high %v5326, %v5326
  %v5335 = vcombine.high %v5333, %v5333
  %v5337 = vunpack.c.l.s4 1983009808
  %v5338 = vunpack.c.0.s8 %v5337
  %v5339 = vlaneseq
  %v5340 = vshrl.u32 %v5339, 7
  %v5341 = vsub.s32 %v5338, %v5340
  %v5342 = vrot.slane %v5316, %v5341
  %v5343 = vcombine.high %v5342, %v5342
  %5350 = vmatprep.subr.mxu0 0.0
  %5351 = vmatpush1.msra.mxu0 %v76
  %5352 = vmatprep.subr.mxu0 0.0
  %5353 = vmatpush1.msra.mxu0 %v77
  %5354 = vmatprep.subr.mxu0 0.0
  %5355 = vmatpush1.msra.mxu0 %v78
  %5356 = vmatprep.subr.mxu0 0.0
  %5357 = vmatpush1.msra.mxu0 %v79
  %5358 = vmatprep.subr.mxu0 0.0
  %5359 = vmatpush1.msra.mxu0 %v80
  %5360 = vmatprep.subr.mxu0 0.0
  %5361 = vmatpush1.msra.mxu0 %v81
  %5362 = vmatprep.subr.mxu0 0.0
  %5363 = vmatpush1.msra.mxu0 %v82
  %5364 = vmatprep.subr.mxu0 0.0
  %5365 = vmatpush1.msra.mxu0 %v83
  %5366 = vmatprep.subr.mxu0 0.0
  %5367 = vmatpush1.msra.mxu0 %v84
  %5368 = vmatprep.subr.mxu0 0.0
  %5369 = vmatpush1.msra.mxu0 %v85
  %5370 = vmatprep.subr.mxu0 0.0
  %5371 = vmatpush1.msra.mxu0 %v86
  %5372 = vmatprep.subr.mxu0 0.0
  %5373 = vmatpush1.msra.mxu0 %v87
  %5374 = vmatprep.subr.mxu0 0.0
  %5375 = vmatpush1.msra.mxu0 %v88
  %5376 = vmatprep.subr.mxu0 0.0
  %5377 = vmatpush1.msra.mxu0 %v89
  %5378 = vmatprep.subr.mxu0 0.0
  %5379 = vmatpush1.msra.mxu0 %v90
  %5380 = vmatprep.subr.mxu0 0.0
  %5381 = vmatpush1.msra.mxu0 %v91
  %5382 = vmatprep.subr.mxu0 0.0
  %5383 = vmatpush1.msra.mxu0 %v92
  %5384 = vmatprep.subr.mxu0 0.0
  %5385 = vmatpush1.msra.mxu0 %v93
  %5386 = vmatprep.subr.mxu0 0.0
  %5387 = vmatpush1.msra.mxu0 %v94
  %5388 = vmatprep.subr.mxu0 0.0
  %5389 = vmatpush1.msra.mxu0 %v95
  %5390 = vmatprep.subr.mxu0 0.0
  %5391 = vmatpush1.msra.mxu0 %v96
  %5392 = vmatprep.subr.mxu0 0.0
  %5393 = vmatpush1.msra.mxu0 %v97
  %5394 = vmatprep.subr.mxu0 0.0
  %5395 = vmatpush1.msra.mxu0 %v98
  %5396 = vmatprep.subr.mxu0 0.0
  %5397 = vmatpush1.msra.mxu0 %v99
  %5398 = vmatprep.subr.mxu0 0.0
  %5399 = vmatpush1.msra.mxu0 %v100
  %5400 = vmatprep.subr.mxu0 0.0
  %5401 = vmatpush1.msra.mxu0 %v101
  %5402 = vmatprep.subr.mxu0 0.0
  %5403 = vmatpush1.msra.mxu0 %v102
  %5404 = vmatprep.subr.mxu0 0.0
  %5405 = vmatpush1.msra.mxu0 %v103
  %5406 = vmatprep.subr.mxu0 0.0
  %5407 = vmatpush1.msra.mxu0 %v104
  %5408 = vmatprep.subr.mxu0 0.0
  %5409 = vmatpush1.msra.mxu0 %v105
  %5410 = vmatprep.subr.mxu0 0.0
  %5411 = vmatpush1.msra.mxu0 %v106
  %5412 = vmatprep.subr.mxu0 0.0
  %5413 = vmatpush1.msra.mxu0 %v107
  %5414 = vmatprep.mubr.f32.mxu0 %v5334
  %5415 = vmatmul.mubr.f32.gmra.mrb[0].mxu0 %v5326
  %v5416 = vpop.f32.mrb[0].mxu0
  %v5417 = vadd.f32 %v176, %v5416
  %v5418 = vpop.f32.mrb[0].mxu0
  %5419 = vdwg.mxu0
  %5420 = vmatprep.subr.mxu0 0.0
  %5421 = vmatpush1.msra.mxu0 %v108
  %5422 = vmatprep.subr.mxu0 0.0
  %5423 = vmatpush1.msra.mxu0 %v109
  %5424 = vmatprep.subr.mxu0 0.0
  %5425 = vmatpush1.msra.mxu0 %v110
  %5426 = vmatprep.subr.mxu0 0.0
  %5427 = vmatpush1.msra.mxu0 %v111
  %5428 = vmatprep.subr.mxu0 0.0
  %5429 = vmatpush1.msra.mxu0 %v112
  %5430 = vmatprep.subr.mxu0 0.0
  %5431 = vmatpush1.msra.mxu0 %v113
  %5432 = vmatprep.subr.mxu0 0.0
  %5433 = vmatpush1.msra.mxu0 %v114
  %5434 = vmatprep.subr.mxu0 0.0
  %5435 = vmatpush1.msra.mxu0 %v115
  %5436 = vmatprep.subr.mxu0 0.0
  %5437 = vmatpush1.msra.mxu0 %v116
  %5438 = vmatprep.subr.mxu0 0.0
  %5439 = vmatpush1.msra.mxu0 %v117
  %5440 = vmatprep.subr.mxu0 0.0
  %5441 = vmatpush1.msra.mxu0 %v118
  %5442 = vmatprep.subr.mxu0 0.0
  %5443 = vmatpush1.msra.mxu0 %v119
  %5444 = vmatprep.subr.mxu0 0.0
  %5445 = vmatpush1.msra.mxu0 %v120
  %5446 = vmatprep.subr.mxu0 0.0
  %5447 = vmatpush1.msra.mxu0 %v121
  %5448 = vmatprep.subr.mxu0 0.0
  %5449 = vmatpush1.msra.mxu0 %v122
  %5450 = vmatprep.subr.mxu0 0.0
  %5451 = vmatpush1.msra.mxu0 %v123
  %5452 = vmatprep.subr.mxu0 0.0
  %5453 = vmatpush1.msra.mxu0 %v124
  %5454 = vmatprep.subr.mxu0 0.0
  %5455 = vmatpush1.msra.mxu0 %v125
  %5456 = vmatprep.subr.mxu0 0.0
  %5457 = vmatpush1.msra.mxu0 %v126
  %5458 = vmatprep.subr.mxu0 0.0
  %5459 = vmatpush1.msra.mxu0 %v127
  %5460 = vmatprep.subr.mxu0 0.0
  %5461 = vmatpush1.msra.mxu0 %v128
  %5462 = vmatprep.subr.mxu0 0.0
  %5463 = vmatpush1.msra.mxu0 %v129
  %5464 = vmatprep.subr.mxu0 0.0
  %5465 = vmatpush1.msra.mxu0 %v130
  %5466 = vmatprep.subr.mxu0 0.0
  %5467 = vmatpush1.msra.mxu0 %v131
  %5468 = vmatprep.subr.mxu0 0.0
  %5469 = vmatpush1.msra.mxu0 %v132
  %5470 = vmatprep.subr.mxu0 0.0
  %5471 = vmatpush1.msra.mxu0 %v133
  %5472 = vmatprep.subr.mxu0 0.0
  %5473 = vmatpush1.msra.mxu0 %v134
  %5474 = vmatprep.subr.mxu0 0.0
  %5475 = vmatpush1.msra.mxu0 %v135
  %5476 = vmatprep.subr.mxu0 0.0
  %5477 = vmatpush1.msra.mxu0 %v136
  %5478 = vmatprep.subr.mxu0 0.0
  %5479 = vmatpush1.msra.mxu0 %v137
  %5480 = vmatprep.subr.mxu0 0.0
  %5481 = vmatpush1.msra.mxu0 %v138
  %5482 = vmatprep.subr.mxu0 0.0
  %5483 = vmatpush1.msra.mxu0 %v139
  %5484 = vmatprep.mubr.f32.mxu0 %v5335
  %5485 = vmatmul.mubr.f32.gmra.mrb[0].mxu0 %v5333
  %v5486 = vpop.f32.mrb[0].mxu0
  %v5487 = vadd.f32 %v5417, %v5486
  %v5488 = vpop.f32.mrb[0].mxu0
  %5489 = vdwg.mxu0
  %5490 = vmatprep.subr.mxu0 0.0
  %5491 = vmatpush1.msra.mxu0 %v140
  %5492 = vmatprep.subr.mxu0 0.0
  %5493 = vmatpush1.msra.mxu0 %v141
  %5494 = vmatprep.subr.mxu0 0.0
  %5495 = vmatpush1.msra.mxu0 %v142
  %5496 = vmatprep.subr.mxu0 0.0
  %5497 = vmatpush1.msra.mxu0 %v143
  %5498 = vmatprep.subr.mxu0 0.0
  %5499 = vmatpush1.msra.mxu0 %v144
  %5500 = vmatprep.subr.mxu0 0.0
  %5501 = vmatpush1.msra.mxu0 %v145
  %5502 = vmatprep.subr.mxu0 0.0
  %5503 = vmatpush1.msra.mxu0 %v146
  %5504 = vmatprep.subr.mxu0 0.0
  %5505 = vmatpush1.msra.mxu0 %v147
  %5506 = vmatprep.subr.mxu0 0.0
  %5507 = vmatpush1.msra.mxu0 %v148
  %5508 = vmatprep.subr.mxu0 0.0
  %5509 = vmatpush1.msra.mxu0 %v149
  %5510 = vmatprep.subr.mxu0 0.0
  %5511 = vmatpush1.msra.mxu0 %v150
  %5512 = vmatprep.subr.mxu0 0.0
  %5513 = vmatpush1.msra.mxu0 %v151
  %5514 = vmatprep.subr.mxu0 0.0
  %5515 = vmatpush1.msra.mxu0 %v152
  %5516 = vmatprep.subr.mxu0 0.0
  %5517 = vmatpush1.msra.mxu0 %v153
  %5518 = vmatprep.subr.mxu0 0.0
  %5519 = vmatpush1.msra.mxu0 %v154
  %5520 = vmatprep.subr.mxu0 0.0
  %5521 = vmatpush1.msra.mxu0 %v155
  %5522 = vmatprep.subr.mxu0 0.0
  %5523 = vmatpush1.msra.mxu0 %v156
  %5524 = vmatprep.subr.mxu0 0.0
  %5525 = vmatpush1.msra.mxu0 %v157
  %5526 = vmatprep.subr.mxu0 0.0
  %5527 = vmatpush1.msra.mxu0 %v158
  %5528 = vmatprep.subr.mxu0 0.0
  %5529 = vmatpush1.msra.mxu0 %v159
  %5530 = vmatprep.subr.mxu0 0.0
  %5531 = vmatpush1.msra.mxu0 %v160
  %5532 = vmatprep.subr.mxu0 0.0
  %5533 = vmatpush1.msra.mxu0 %v161
  %5534 = vmatprep.subr.mxu0 0.0
  %5535 = vmatpush1.msra.mxu0 %v162
  %5536 = vmatprep.subr.mxu0 0.0
  %5537 = vmatpush1.msra.mxu0 %v163
  %5538 = vmatprep.subr.mxu0 0.0
  %5539 = vmatpush1.msra.mxu0 %v164
  %5540 = vmatprep.subr.mxu0 0.0
  %5541 = vmatpush1.msra.mxu0 %v165
  %5542 = vmatprep.subr.mxu0 0.0
  %5543 = vmatpush1.msra.mxu0 %v166
  %5544 = vmatprep.subr.mxu0 0.0
  %5545 = vmatpush1.msra.mxu0 %v167
  %5546 = vmatprep.subr.mxu0 0.0
  %5547 = vmatpush1.msra.mxu0 %v168
  %5548 = vmatprep.subr.mxu0 0.0
  %5549 = vmatpush1.msra.mxu0 %v169
  %5550 = vmatprep.subr.mxu0 0.0
  %5551 = vmatpush1.msra.mxu0 %v170
  %5552 = vmatprep.subr.mxu0 0.0
  %5553 = vmatpush1.msra.mxu0 %v171
  %5554 = vmatprep.mubr.f32.mxu0 %v5343
  %5555 = vmatmul.mubr.f32.gmra.mrb[0].mxu0 %v5342
  %v5556 = vpop.f32.mrb[0].mxu0
  %v5557 = vadd.f32 %v5487, %v5556
  %v5558 = vpop.f32.mrb[0].mxu0
  %5559 = vdwg.mxu0
  %v5560 = vmax.f32 %v5557, 0.0
  %5561 = vmatprep.subr.mxu0 0.0
  %5562 = vmatpush1.msra.mxu0 %v57
  %5563 = vmatprep.subr.mxu0 0.0
  %5564 = vmatpush1.msra.mxu0 %v58
  %5565 = vmatprep.subr.mxu0 0.0
  %5566 = vmatpush1.msra.mxu0 %v59
  %5567 = vmatprep.subr.mxu0 0.0
  %5568 = vmatpush1.msra.mxu0 %v60
  %5569 = vmatprep.subr.mxu0 0.0
  %5570 = vmatpush1.msra.mxu0 %v61
  %5571 = vmatprep.subr.mxu0 0.0
  %5572 = vmatpush1.msra.mxu0 %v62
  %5573 = vmatprep.subr.mxu0 0.0
  %5574 = vmatpush1.msra.mxu0 %v63
  %5575 = vmatprep.subr.mxu0 0.0
  %5576 = vmatpush1.msra.mxu0 %v64
  %5577 = vmatprep.subr.mxu0 0.0
  %5578 = vmatpush1.msra.mxu0 %v65
  %5579 = vmatprep.subr.mxu0 0.0
  %5580 = vmatpush1.msra.mxu0 %v66
  %5581 = vmatprep.subr.mxu0 0.0
  %5582 = vmatpush1.msra.mxu0 %v67
  %5583 = vmatprep.subr.mxu0 0.0
  %5584 = vmatpush1.msra.mxu0 %v68
  %5585 = vmatprep.subr.mxu0 0.0
  %5586 = vmatpush1.msra.mxu0 %v69
  %5587 = vmatprep.subr.mxu0 0.0
  %5588 = vmatpush1.msra.mxu0 %v70
  %5589 = vmatprep.subr.mxu0 0.0
  %5590 = vmatpush1.msra.mxu0 %v71
  %5591 = vmatprep.subr.mxu0 0.0
  %5592 = vmatpush1.msra.mxu0 %v72
  %5593 = vmatprep.subr.mxu0 0.0
  %5594 = vmatpush1.msra.mxu0 0.0
  %5595 = vmatprep.subr.mxu0 0.0
  %5596 = vmatpush1.msra.mxu0 0.0
  %5597 = vmatprep.subr.mxu0 0.0
  %5598 = vmatpush1.msra.mxu0 0.0
  %5599 = vmatprep.subr.mxu0 0.0
  %5600 = vmatpush1.msra.mxu0 0.0
  %5601 = vmatprep.subr.mxu0 0.0
  %5602 = vmatpush1.msra.mxu0 0.0
  %5603 = vmatprep.subr.mxu0 0.0
  %5604 = vmatpush1.msra.mxu0 0.0
  %5605 = vmatprep.subr.mxu0 0.0
  %5606 = vmatpush1.msra.mxu0 0.0
  %5607 = vmatprep.subr.mxu0 0.0
  %5608 = vmatpush1.msra.mxu0 0.0
  %5609 = vmatprep.subr.mxu0 0.0
  %5610 = vmatpush1.msra.mxu0 0.0
  %5611 = vmatprep.subr.mxu0 0.0
  %5612 = vmatpush1.msra.mxu0 0.0
  %5613 = vmatprep.subr.mxu0 0.0
  %5614 = vmatpush1.msra.mxu0 0.0
  %5615 = vmatprep.subr.mxu0 0.0
  %5616 = vmatpush1.msra.mxu0 0.0
  %5617 = vmatprep.subr.mxu0 0.0
  %5618 = vmatpush1.msra.mxu0 0.0
  %5619 = vmatprep.subr.mxu0 0.0
  %5620 = vmatpush1.msra.mxu0 0.0
  %5621 = vmatprep.subr.mxu0 0.0
  %5622 = vmatpush1.msra.mxu0 0.0
  %5623 = vmatprep.subr.mxu0 0.0
  %5624 = vmatpush1.msra.mxu0 0.0
  %5625 = vmatprep.mubr.f32.mxu0 0.0
  %5626 = vmatmul.mubr.f32.gmra.mrb[0].mxu0 %v5560
  %v5627 = vpop.f32.mrb[0].mxu0
  %v5628 = vadd.f32 %v426, %v5627
  %v5629 = vpop.f32.mrb[0].mxu0
  %5630 = vdwg.mxu0
  %v5631 = vmax.f32 %v5628, 0.0
  %s5632 = scalar_lea.vmem %s6, 208
  %v5633 = vld [vmem:[%s5632] sm:$0xff]
  %v5634 = vld [vmem:[%s5632 + $0x8] sm:$0xff]
  %v5636 = vsel %vm822, %v5631, 0
  %5638 = vmatprep.subr.mxu0 0.0
  %5639 = vmatpush1.msra.mxu0 %v5633
  %5640 = vmatprep.subr.mxu0 0.0
  %5641 = vmatpush1.msra.mxu0 %v5634
  %5642 = vmatprep.subr.mxu0 0.0
  %5643 = vmatpush1.msra.mxu0 0.0
  %5644 = vmatprep.subr.mxu0 0.0
  %5645 = vmatpush1.msra.mxu0 0.0
  %5646 = vmatprep.subr.mxu0 0.0
  %5647 = vmatpush1.msra.mxu0 0.0
  %5648 = vmatprep.subr.mxu0 0.0
  %5649 = vmatpush1.msra.mxu0 0.0
  %5650 = vmatprep.subr.mxu0 0.0
  %5651 = vmatpush1.msra.mxu0 0.0
  %5652 = vmatprep.subr.mxu0 0.0
  %5653 = vmatpush1.msra.mxu0 0.0
  %5654 = vmatprep.subr.mxu0 0.0
  %5655 = vmatpush1.msra.mxu0 0.0
  %5656 = vmatprep.subr.mxu0 0.0
  %5657 = vmatpush1.msra.mxu0 0.0
  %5658 = vmatprep.subr.mxu0 0.0
  %5659 = vmatpush1.msra.mxu0 0.0
  %5660 = vmatprep.subr.mxu0 0.0
  %5661 = vmatpush1.msra.mxu0 0.0
  %5662 = vmatprep.subr.mxu0 0.0
  %5663 = vmatpush1.msra.mxu0 0.0
  %5664 = vmatprep.subr.mxu0 0.0
  %5665 = vmatpush1.msra.mxu0 0.0
  %5666 = vmatprep.subr.mxu0 0.0
  %5667 = vmatpush1.msra.mxu0 0.0
  %5668 = vmatprep.subr.mxu0 0.0
  %5669 = vmatpush1.msra.mxu0 0.0
  %5670 = vmatprep.subr.mxu0 0.0
  %5671 = vmatpush1.msra.mxu0 0.0
  %5672 = vmatprep.subr.mxu0 0.0
  %5673 = vmatpush1.msra.mxu0 0.0
  %5674 = vmatprep.subr.mxu0 0.0
  %5675 = vmatpush1.msra.mxu0 0.0
  %5676 = vmatprep.subr.mxu0 0.0
  %5677 = vmatpush1.msra.mxu0 0.0
  %5678 = vmatprep.subr.mxu0 0.0
  %5679 = vmatpush1.msra.mxu0 0.0
  %5680 = vmatprep.subr.mxu0 0.0
  %5681 = vmatpush1.msra.mxu0 0.0
  %5682 = vmatprep.subr.mxu0 0.0
  %5683 = vmatpush1.msra.mxu0 0.0
  %5684 = vmatprep.subr.mxu0 0.0
  %5685 = vmatpush1.msra.mxu0 0.0
  %5686 = vmatprep.subr.mxu0 0.0
  %5687 = vmatpush1.msra.mxu0 0.0
  %5688 = vmatprep.subr.mxu0 0.0
  %5689 = vmatpush1.msra.mxu0 0.0
  %5690 = vmatprep.subr.mxu0 0.0
  %5691 = vmatpush1.msra.mxu0 0.0
  %5692 = vmatprep.subr.mxu0 0.0
  %5693 = vmatpush1.msra.mxu0 0.0
  %5694 = vmatprep.subr.mxu0 0.0
  %5695 = vmatpush1.msra.mxu0 0.0
  %5696 = vmatprep.subr.mxu0 0.0
  %5697 = vmatpush1.msra.mxu0 0.0
  %5698 = vmatprep.subr.mxu0 0.0
  %5699 = vmatpush1.msra.mxu0 0.0
  %5700 = vmatprep.subr.mxu0 0.0
  %5701 = vmatpush1.msra.mxu0 0.0
  %5702 = vmatprep.mubr.f32.mxu0 0.0
  %5703 = vmatmul.mubr.f32.gmra.mrb[0].mxu0 %v5636
  %v5704 = vpop.f32.mrb[0].mxu0
  %v5705 = vadd.f32 0.0, %v5704
  %v5706 = vpop.f32.mrb[0].mxu0
  %5707 = vdwg.mxu0
  %v5708 = vadd.f32 %v5313, %v5705
  %s5709 = scalar_lea.vmem %s0, 168
  %v5710 = vld [vmem:[%s5709] sm:$0xff]
  %v5711 = vld [vmem:[%s5709 + $0x8] sm:$0xf]
  %v5714 = vcombine.high %v5710, %v5710
  %v5716 = vunpack.c.l.s4 1983009808
  %v5717 = vunpack.c.0.s8 %v5716
  %v5718 = vlaneseq
  %v5719 = vshrl.u32 %v5718, 7
  %v5720 = vsub.s32 %v5717, %v5719
  %v5721 = vrot.slane %v5710, %v5720
  %v5723 = vunpack.c.l.s4 1983009808
  %v5724 = vunpack.c.0.s8 %v5723
  %v5725 = vlaneseq
  %v5726 = vshrl.u32 %v5725, 7
  %v5727 = vsub.s32 %v5724, %v5726
  %v5728 = vrot.slane %v5714, %v5727
  %v5729 = vcombine.high %v5721, %v5721
  %v5730 = vcombine.high %v5728, %v5728
  %v5732 = vunpack.c.l.s4 1983009808
  %v5733 = vunpack.c.0.s8 %v5732
  %v5734 = vlaneseq
  %v5735 = vshrl.u32 %v5734, 7
  %v5736 = vsub.s32 %v5733, %v5735
  %v5737 = vrot.slane %v5711, %v5736
  %v5738 = vcombine.high %v5737, %v5737
  %5745 = vmatprep.subr.mxu0 0.0
  %5746 = vmatpush1.msra.mxu0 %v76
  %5747 = vmatprep.subr.mxu0 0.0
  %5748 = vmatpush1.msra.mxu0 %v77
  %5749 = vmatprep.subr.mxu0 0.0
  %5750 = vmatpush1.msra.mxu0 %v78
  %5751 = vmatprep.subr.mxu0 0.0
  %5752 = vmatpush1.msra.mxu0 %v79
  %5753 = vmatprep.subr.mxu0 0.0
  %5754 = vmatpush1.msra.mxu0 %v80
  %5755 = vmatprep.subr.mxu0 0.0
  %5756 = vmatpush1.msra.mxu0 %v81
  %5757 = vmatprep.subr.mxu0 0.0
  %5758 = vmatpush1.msra.mxu0 %v82
  %5759 = vmatprep.subr.mxu0 0.0
  %5760 = vmatpush1.msra.mxu0 %v83
  %5761 = vmatprep.subr.mxu0 0.0
  %5762 = vmatpush1.msra.mxu0 %v84
  %5763 = vmatprep.subr.mxu0 0.0
  %5764 = vmatpush1.msra.mxu0 %v85
  %5765 = vmatprep.subr.mxu0 0.0
  %5766 = vmatpush1.msra.mxu0 %v86
  %5767 = vmatprep.subr.mxu0 0.0
  %5768 = vmatpush1.msra.mxu0 %v87
  %5769 = vmatprep.subr.mxu0 0.0
  %5770 = vmatpush1.msra.mxu0 %v88
  %5771 = vmatprep.subr.mxu0 0.0
  %5772 = vmatpush1.msra.mxu0 %v89
  %5773 = vmatprep.subr.mxu0 0.0
  %5774 = vmatpush1.msra.mxu0 %v90
  %5775 = vmatprep.subr.mxu0 0.0
  %5776 = vmatpush1.msra.mxu0 %v91
  %5777 = vmatprep.subr.mxu0 0.0
  %5778 = vmatpush1.msra.mxu0 %v92
  %5779 = vmatprep.subr.mxu0 0.0
  %5780 = vmatpush1.msra.mxu0 %v93
  %5781 = vmatprep.subr.mxu0 0.0
  %5782 = vmatpush1.msra.mxu0 %v94
  %5783 = vmatprep.subr.mxu0 0.0
  %5784 = vmatpush1.msra.mxu0 %v95
  %5785 = vmatprep.subr.mxu0 0.0
  %5786 = vmatpush1.msra.mxu0 %v96
  %5787 = vmatprep.subr.mxu0 0.0
  %5788 = vmatpush1.msra.mxu0 %v97
  %5789 = vmatprep.subr.mxu0 0.0
  %5790 = vmatpush1.msra.mxu0 %v98
  %5791 = vmatprep.subr.mxu0 0.0
  %5792 = vmatpush1.msra.mxu0 %v99
  %5793 = vmatprep.subr.mxu0 0.0
  %5794 = vmatpush1.msra.mxu0 %v100
  %5795 = vmatprep.subr.mxu0 0.0
  %5796 = vmatpush1.msra.mxu0 %v101
  %5797 = vmatprep.subr.mxu0 0.0
  %5798 = vmatpush1.msra.mxu0 %v102
  %5799 = vmatprep.subr.mxu0 0.0
  %5800 = vmatpush1.msra.mxu0 %v103
  %5801 = vmatprep.subr.mxu0 0.0
  %5802 = vmatpush1.msra.mxu0 %v104
  %5803 = vmatprep.subr.mxu0 0.0
  %5804 = vmatpush1.msra.mxu0 %v105
  %5805 = vmatprep.subr.mxu0 0.0
  %5806 = vmatpush1.msra.mxu0 %v106
  %5807 = vmatprep.subr.mxu0 0.0
  %5808 = vmatpush1.msra.mxu0 %v107
  %5809 = vmatprep.mubr.f32.mxu0 %v5729
  %5810 = vmatmul.mubr.f32.gmra.mrb[0].mxu0 %v5721
  %v5811 = vpop.f32.mrb[0].mxu0
  %v5812 = vadd.f32 %v176, %v5811
  %v5813 = vpop.f32.mrb[0].mxu0
  %5814 = vdwg.mxu0
  %5815 = vmatprep.subr.mxu0 0.0
  %5816 = vmatpush1.msra.mxu0 %v108
  %5817 = vmatprep.subr.mxu0 0.0
  %5818 = vmatpush1.msra.mxu0 %v109
  %5819 = vmatprep.subr.mxu0 0.0
  %5820 = vmatpush1.msra.mxu0 %v110
  %5821 = vmatprep.subr.mxu0 0.0
  %5822 = vmatpush1.msra.mxu0 %v111
  %5823 = vmatprep.subr.mxu0 0.0
  %5824 = vmatpush1.msra.mxu0 %v112
  %5825 = vmatprep.subr.mxu0 0.0
  %5826 = vmatpush1.msra.mxu0 %v113
  %5827 = vmatprep.subr.mxu0 0.0
  %5828 = vmatpush1.msra.mxu0 %v114
  %5829 = vmatprep.subr.mxu0 0.0
  %5830 = vmatpush1.msra.mxu0 %v115
  %5831 = vmatprep.subr.mxu0 0.0
  %5832 = vmatpush1.msra.mxu0 %v116
  %5833 = vmatprep.subr.mxu0 0.0
  %5834 = vmatpush1.msra.mxu0 %v117
  %5835 = vmatprep.subr.mxu0 0.0
  %5836 = vmatpush1.msra.mxu0 %v118
  %5837 = vmatprep.subr.mxu0 0.0
  %5838 = vmatpush1.msra.mxu0 %v119
  %5839 = vmatprep.subr.mxu0 0.0
  %5840 = vmatpush1.msra.mxu0 %v120
  %5841 = vmatprep.subr.mxu0 0.0
  %5842 = vmatpush1.msra.mxu0 %v121
  %5843 = vmatprep.subr.mxu0 0.0
  %5844 = vmatpush1.msra.mxu0 %v122
  %5845 = vmatprep.subr.mxu0 0.0
  %5846 = vmatpush1.msra.mxu0 %v123
  %5847 = vmatprep.subr.mxu0 0.0
  %5848 = vmatpush1.msra.mxu0 %v124
  %5849 = vmatprep.subr.mxu0 0.0
  %5850 = vmatpush1.msra.mxu0 %v125
  %5851 = vmatprep.subr.mxu0 0.0
  %5852 = vmatpush1.msra.mxu0 %v126
  %5853 = vmatprep.subr.mxu0 0.0
  %5854 = vmatpush1.msra.mxu0 %v127
  %5855 = vmatprep.subr.mxu0 0.0
  %5856 = vmatpush1.msra.mxu0 %v128
  %5857 = vmatprep.subr.mxu0 0.0
  %5858 = vmatpush1.msra.mxu0 %v129
  %5859 = vmatprep.subr.mxu0 0.0
  %5860 = vmatpush1.msra.mxu0 %v130
  %5861 = vmatprep.subr.mxu0 0.0
  %5862 = vmatpush1.msra.mxu0 %v131
  %5863 = vmatprep.subr.mxu0 0.0
  %5864 = vmatpush1.msra.mxu0 %v132
  %5865 = vmatprep.subr.mxu0 0.0
  %5866 = vmatpush1.msra.mxu0 %v133
  %5867 = vmatprep.subr.mxu0 0.0
  %5868 = vmatpush1.msra.mxu0 %v134
  %5869 = vmatprep.subr.mxu0 0.0
  %5870 = vmatpush1.msra.mxu0 %v135
  %5871 = vmatprep.subr.mxu0 0.0
  %5872 = vmatpush1.msra.mxu0 %v136
  %5873 = vmatprep.subr.mxu0 0.0
  %5874 = vmatpush1.msra.mxu0 %v137
  %5875 = vmatprep.subr.mxu0 0.0
  %5876 = vmatpush1.msra.mxu0 %v138
  %5877 = vmatprep.subr.mxu0 0.0
  %5878 = vmatpush1.msra.mxu0 %v139
  %5879 = vmatprep.mubr.f32.mxu0 %v5730
  %5880 = vmatmul.mubr.f32.gmra.mrb[0].mxu0 %v5728
  %v5881 = vpop.f32.mrb[0].mxu0
  %v5882 = vadd.f32 %v5812, %v5881
  %v5883 = vpop.f32.mrb[0].mxu0
  %5884 = vdwg.mxu0
  %5885 = vmatprep.subr.mxu0 0.0
  %5886 = vmatpush1.msra.mxu0 %v140
  %5887 = vmatprep.subr.mxu0 0.0
  %5888 = vmatpush1.msra.mxu0 %v141
  %5889 = vmatprep.subr.mxu0 0.0
  %5890 = vmatpush1.msra.mxu0 %v142
  %5891 = vmatprep.subr.mxu0 0.0
  %5892 = vmatpush1.msra.mxu0 %v143
  %5893 = vmatprep.subr.mxu0 0.0
  %5894 = vmatpush1.msra.mxu0 %v144
  %5895 = vmatprep.subr.mxu0 0.0
  %5896 = vmatpush1.msra.mxu0 %v145
  %5897 = vmatprep.subr.mxu0 0.0
  %5898 = vmatpush1.msra.mxu0 %v146
  %5899 = vmatprep.subr.mxu0 0.0
  %5900 = vmatpush1.msra.mxu0 %v147
  %5901 = vmatprep.subr.mxu0 0.0
  %5902 = vmatpush1.msra.mxu0 %v148
  %5903 = vmatprep.subr.mxu0 0.0
  %5904 = vmatpush1.msra.mxu0 %v149
  %5905 = vmatprep.subr.mxu0 0.0
  %5906 = vmatpush1.msra.mxu0 %v150
  %5907 = vmatprep.subr.mxu0 0.0
  %5908 = vmatpush1.msra.mxu0 %v151
  %5909 = vmatprep.subr.mxu0 0.0
  %5910 = vmatpush1.msra.mxu0 %v152
  %5911 = vmatprep.subr.mxu0 0.0
  %5912 = vmatpush1.msra.mxu0 %v153
  %5913 = vmatprep.subr.mxu0 0.0
  %5914 = vmatpush1.msra.mxu0 %v154
  %5915 = vmatprep.subr.mxu0 0.0
  %5916 = vmatpush1.msra.mxu0 %v155
  %5917 = vmatprep.subr.mxu0 0.0
  %5918 = vmatpush1.msra.mxu0 %v156
  %5919 = vmatprep.subr.mxu0 0.0
  %5920 = vmatpush1.msra.mxu0 %v157
  %5921 = vmatprep.subr.mxu0 0.0
  %5922 = vmatpush1.msra.mxu0 %v158
  %5923 = vmatprep.subr.mxu0 0.0
  %5924 = vmatpush1.msra.mxu0 %v159
  %5925 = vmatprep.subr.mxu0 0.0
  %5926 = vmatpush1.msra.mxu0 %v160
  %5927 = vmatprep.subr.mxu0 0.0
  %5928 = vmatpush1.msra.mxu0 %v161
  %5929 = vmatprep.subr.mxu0 0.0
  %5930 = vmatpush1.msra.mxu0 %v162
  %5931 = vmatprep.subr.mxu0 0.0
  %5932 = vmatpush1.msra.mxu0 %v163
  %5933 = vmatprep.subr.mxu0 0.0
  %5934 = vmatpush1.msra.mxu0 %v164
  %5935 = vmatprep.subr.mxu0 0.0
  %5936 = vmatpush1.msra.mxu0 %v165
  %5937 = vmatprep.subr.mxu0 0.0
  %5938 = vmatpush1.msra.mxu0 %v166
  %5939 = vmatprep.subr.mxu0 0.0
  %5940 = vmatpush1.msra.mxu0 %v167
  %5941 = vmatprep.subr.mxu0 0.0
  %5942 = vmatpush1.msra.mxu0 %v168
  %5943 = vmatprep.subr.mxu0 0.0
  %5944 = vmatpush1.msra.mxu0 %v169
  %5945 = vmatprep.subr.mxu0 0.0
  %5946 = vmatpush1.msra.mxu0 %v170
  %5947 = vmatprep.subr.mxu0 0.0
  %5948 = vmatpush1.msra.mxu0 %v171
  %5949 = vmatprep.mubr.f32.mxu0 %v5738
  %5950 = vmatmul.mubr.f32.gmra.mrb[0].mxu0 %v5737
  %v5951 = vpop.f32.mrb[0].mxu0
  %v5952 = vadd.f32 %v5882, %v5951
  %v5953 = vpop.f32.mrb[0].mxu0
  %5954 = vdwg.mxu0
  %v5955 = vmax.f32 %v5952, 0.0
  %5956 = vmatprep.subr.mxu0 0.0
  %5957 = vmatpush1.msra.mxu0 %v57
  %5958 = vmatprep.subr.mxu0 0.0
  %5959 = vmatpush1.msra.mxu0 %v58
  %5960 = vmatprep.subr.mxu0 0.0
  %5961 = vmatpush1.msra.mxu0 %v59
  %5962 = vmatprep.subr.mxu0 0.0
  %5963 = vmatpush1.msra.mxu0 %v60
  %5964 = vmatprep.subr.mxu0 0.0
  %5965 = vmatpush1.msra.mxu0 %v61
  %5966 = vmatprep.subr.mxu0 0.0
  %5967 = vmatpush1.msra.mxu0 %v62
  %5968 = vmatprep.subr.mxu0 0.0
  %5969 = vmatpush1.msra.mxu0 %v63
  %5970 = vmatprep.subr.mxu0 0.0
  %5971 = vmatpush1.msra.mxu0 %v64
  %5972 = vmatprep.subr.mxu0 0.0
  %5973 = vmatpush1.msra.mxu0 %v65
  %5974 = vmatprep.subr.mxu0 0.0
  %5975 = vmatpush1.msra.mxu0 %v66
  %5976 = vmatprep.subr.mxu0 0.0
  %5977 = vmatpush1.msra.mxu0 %v67
  %5978 = vmatprep.subr.mxu0 0.0
  %5979 = vmatpush1.msra.mxu0 %v68
  %5980 = vmatprep.subr.mxu0 0.0
  %5981 = vmatpush1.msra.mxu0 %v69
  %5982 = vmatprep.subr.mxu0 0.0
  %5983 = vmatpush1.msra.mxu0 %v70
  %5984 = vmatprep.subr.mxu0 0.0
  %5985 = vmatpush1.msra.mxu0 %v71
  %5986 = vmatprep.subr.mxu0 0.0
  %5987 = vmatpush1.msra.mxu0 %v72
  %5988 = vmatprep.subr.mxu0 0.0
  %5989 = vmatpush1.msra.mxu0 0.0
  %5990 = vmatprep.subr.mxu0 0.0
  %5991 = vmatpush1.msra.mxu0 0.0
  %5992 = vmatprep.subr.mxu0 0.0
  %5993 = vmatpush1.msra.mxu0 0.0
  %5994 = vmatprep.subr.mxu0 0.0
  %5995 = vmatpush1.msra.mxu0 0.0
  %5996 = vmatprep.subr.mxu0 0.0
  %5997 = vmatpush1.msra.mxu0 0.0
  %5998 = vmatprep.subr.mxu0 0.0
  %5999 = vmatpush1.msra.mxu0 0.0
  %6000 = vmatprep.subr.mxu0 0.0
  %6001 = vmatpush1.msra.mxu0 0.0
  %6002 = vmatprep.subr.mxu0 0.0
  %6003 = vmatpush1.msra.mxu0 0.0
  %6004 = vmatprep.subr.mxu0 0.0
  %6005 = vmatpush1.msra.mxu0 0.0
  %6006 = vmatprep.subr.mxu0 0.0
  %6007 = vmatpush1.msra.mxu0 0.0
  %6008 = vmatprep.subr.mxu0 0.0
  %6009 = vmatpush1.msra.mxu0 0.0
  %6010 = vmatprep.subr.mxu0 0.0
  %6011 = vmatpush1.msra.mxu0 0.0
  %6012 = vmatprep.subr.mxu0 0.0
  %6013 = vmatpush1.msra.mxu0 0.0
  %6014 = vmatprep.subr.mxu0 0.0
  %6015 = vmatpush1.msra.mxu0 0.0
  %6016 = vmatprep.subr.mxu0 0.0
  %6017 = vmatpush1.msra.mxu0 0.0
  %6018 = vmatprep.subr.mxu0 0.0
  %6019 = vmatpush1.msra.mxu0 0.0
  %6020 = vmatprep.mubr.f32.mxu0 0.0
  %6021 = vmatmul.mubr.f32.gmra.mrb[0].mxu0 %v5955
  %v6022 = vpop.f32.mrb[0].mxu0
  %v6023 = vadd.f32 %v426, %v6022
  %v6024 = vpop.f32.mrb[0].mxu0
  %6025 = vdwg.mxu0
  %v6026 = vmax.f32 %v6023, 0.0
  %s6027 = scalar_lea.vmem %s6, 224
  %v6028 = vld [vmem:[%s6027] sm:$0xff]
  %v6029 = vld [vmem:[%s6027 + $0x8] sm:$0xff]
  %v6031 = vsel %vm822, %v6026, 0
  %6033 = vmatprep.subr.mxu0 0.0
  %6034 = vmatpush1.msra.mxu0 %v6028
  %6035 = vmatprep.subr.mxu0 0.0
  %6036 = vmatpush1.msra.mxu0 %v6029
  %6037 = vmatprep.subr.mxu0 0.0
  %6038 = vmatpush1.msra.mxu0 0.0
  %6039 = vmatprep.subr.mxu0 0.0
  %6040 = vmatpush1.msra.mxu0 0.0
  %6041 = vmatprep.subr.mxu0 0.0
  %6042 = vmatpush1.msra.mxu0 0.0
  %6043 = vmatprep.subr.mxu0 0.0
  %6044 = vmatpush1.msra.mxu0 0.0
  %6045 = vmatprep.subr.mxu0 0.0
  %6046 = vmatpush1.msra.mxu0 0.0
  %6047 = vmatprep.subr.mxu0 0.0
  %6048 = vmatpush1.msra.mxu0 0.0
  %6049 = vmatprep.subr.mxu0 0.0
  %6050 = vmatpush1.msra.mxu0 0.0
  %6051 = vmatprep.subr.mxu0 0.0
  %6052 = vmatpush1.msra.mxu0 0.0
  %6053 = vmatprep.subr.mxu0 0.0
  %6054 = vmatpush1.msra.mxu0 0.0
  %6055 = vmatprep.subr.mxu0 0.0
  %6056 = vmatpush1.msra.mxu0 0.0
  %6057 = vmatprep.subr.mxu0 0.0
  %6058 = vmatpush1.msra.mxu0 0.0
  %6059 = vmatprep.subr.mxu0 0.0
  %6060 = vmatpush1.msra.mxu0 0.0
  %6061 = vmatprep.subr.mxu0 0.0
  %6062 = vmatpush1.msra.mxu0 0.0
  %6063 = vmatprep.subr.mxu0 0.0
  %6064 = vmatpush1.msra.mxu0 0.0
  %6065 = vmatprep.subr.mxu0 0.0
  %6066 = vmatpush1.msra.mxu0 0.0
  %6067 = vmatprep.subr.mxu0 0.0
  %6068 = vmatpush1.msra.mxu0 0.0
  %6069 = vmatprep.subr.mxu0 0.0
  %6070 = vmatpush1.msra.mxu0 0.0
  %6071 = vmatprep.subr.mxu0 0.0
  %6072 = vmatpush1.msra.mxu0 0.0
  %6073 = vmatprep.subr.mxu0 0.0
  %6074 = vmatpush1.msra.mxu0 0.0
  %6075 = vmatprep.subr.mxu0 0.0
  %6076 = vmatpush1.msra.mxu0 0.0
  %6077 = vmatprep.subr.mxu0 0.0
  %6078 = vmatpush1.msra.mxu0 0.0
  %6079 = vmatprep.subr.mxu0 0.0
  %6080 = vmatpush1.msra.mxu0 0.0
  %6081 = vmatprep.subr.mxu0 0.0
  %6082 = vmatpush1.msra.mxu0 0.0
  %6083 = vmatprep.subr.mxu0 0.0
  %6084 = vmatpush1.msra.mxu0 0.0
  %6085 = vmatprep.subr.mxu0 0.0
  %6086 = vmatpush1.msra.mxu0 0.0
  %6087 = vmatprep.subr.mxu0 0.0
  %6088 = vmatpush1.msra.mxu0 0.0
  %6089 = vmatprep.subr.mxu0 0.0
  %6090 = vmatpush1.msra.mxu0 0.0
  %6091 = vmatprep.subr.mxu0 0.0
  %6092 = vmatpush1.msra.mxu0 0.0
  %6093 = vmatprep.subr.mxu0 0.0
  %6094 = vmatpush1.msra.mxu0 0.0
  %6095 = vmatprep.subr.mxu0 0.0
  %6096 = vmatpush1.msra.mxu0 0.0
  %6097 = vmatprep.mubr.f32.mxu0 0.0
  %6098 = vmatmul.mubr.f32.gmra.mrb[0].mxu0 %v6031
  %v6099 = vpop.f32.mrb[0].mxu0
  %v6100 = vadd.f32 0.0, %v6099
  %v6101 = vpop.f32.mrb[0].mxu0
  %6102 = vdwg.mxu0
  %v6103 = vadd.f32 %v5708, %v6100
  %s6104 = scalar_lea.vmem %s0, 180
  %v6105 = vld [vmem:[%s6104] sm:$0xff]
  %v6106 = vld [vmem:[%s6104 + $0x8] sm:$0xf]
  %v6109 = vcombine.high %v6105, %v6105
  %v6111 = vunpack.c.l.s4 1983009808
  %v6112 = vunpack.c.0.s8 %v6111
  %v6113 = vlaneseq
  %v6114 = vshrl.u32 %v6113, 7
  %v6115 = vsub.s32 %v6112, %v6114
  %v6116 = vrot.slane %v6105, %v6115
  %v6118 = vunpack.c.l.s4 1983009808
  %v6119 = vunpack.c.0.s8 %v6118
  %v6120 = vlaneseq
  %v6121 = vshrl.u32 %v6120, 7
  %v6122 = vsub.s32 %v6119, %v6121
  %v6123 = vrot.slane %v6109, %v6122
  %v6124 = vcombine.high %v6116, %v6116
  %v6125 = vcombine.high %v6123, %v6123
  %v6127 = vunpack.c.l.s4 1983009808
  %v6128 = vunpack.c.0.s8 %v6127
  %v6129 = vlaneseq
  %v6130 = vshrl.u32 %v6129, 7
  %v6131 = vsub.s32 %v6128, %v6130
  %v6132 = vrot.slane %v6106, %v6131
  %v6133 = vcombine.high %v6132, %v6132
  %6140 = vmatprep.subr.mxu0 0.0
  %6141 = vmatpush1.msra.mxu0 %v76
  %6142 = vmatprep.subr.mxu0 0.0
  %6143 = vmatpush1.msra.mxu0 %v77
  %6144 = vmatprep.subr.mxu0 0.0
  %6145 = vmatpush1.msra.mxu0 %v78
  %6146 = vmatprep.subr.mxu0 0.0
  %6147 = vmatpush1.msra.mxu0 %v79
  %6148 = vmatprep.subr.mxu0 0.0
  %6149 = vmatpush1.msra.mxu0 %v80
  %6150 = vmatprep.subr.mxu0 0.0
  %6151 = vmatpush1.msra.mxu0 %v81
  %6152 = vmatprep.subr.mxu0 0.0
  %6153 = vmatpush1.msra.mxu0 %v82
  %6154 = vmatprep.subr.mxu0 0.0
  %6155 = vmatpush1.msra.mxu0 %v83
  %6156 = vmatprep.subr.mxu0 0.0
  %6157 = vmatpush1.msra.mxu0 %v84
  %6158 = vmatprep.subr.mxu0 0.0
  %6159 = vmatpush1.msra.mxu0 %v85
  %6160 = vmatprep.subr.mxu0 0.0
  %6161 = vmatpush1.msra.mxu0 %v86
  %6162 = vmatprep.subr.mxu0 0.0
  %6163 = vmatpush1.msra.mxu0 %v87
  %6164 = vmatprep.subr.mxu0 0.0
  %6165 = vmatpush1.msra.mxu0 %v88
  %6166 = vmatprep.subr.mxu0 0.0
  %6167 = vmatpush1.msra.mxu0 %v89
  %6168 = vmatprep.subr.mxu0 0.0
  %6169 = vmatpush1.msra.mxu0 %v90
  %6170 = vmatprep.subr.mxu0 0.0
  %6171 = vmatpush1.msra.mxu0 %v91
  %6172 = vmatprep.subr.mxu0 0.0
  %6173 = vmatpush1.msra.mxu0 %v92
  %6174 = vmatprep.subr.mxu0 0.0
  %6175 = vmatpush1.msra.mxu0 %v93
  %6176 = vmatprep.subr.mxu0 0.0
  %6177 = vmatpush1.msra.mxu0 %v94
  %6178 = vmatprep.subr.mxu0 0.0
  %6179 = vmatpush1.msra.mxu0 %v95
  %6180 = vmatprep.subr.mxu0 0.0
  %6181 = vmatpush1.msra.mxu0 %v96
  %6182 = vmatprep.subr.mxu0 0.0
  %6183 = vmatpush1.msra.mxu0 %v97
  %6184 = vmatprep.subr.mxu0 0.0
  %6185 = vmatpush1.msra.mxu0 %v98
  %6186 = vmatprep.subr.mxu0 0.0
  %6187 = vmatpush1.msra.mxu0 %v99
  %6188 = vmatprep.subr.mxu0 0.0
  %6189 = vmatpush1.msra.mxu0 %v100
  %6190 = vmatprep.subr.mxu0 0.0
  %6191 = vmatpush1.msra.mxu0 %v101
  %6192 = vmatprep.subr.mxu0 0.0
  %6193 = vmatpush1.msra.mxu0 %v102
  %6194 = vmatprep.subr.mxu0 0.0
  %6195 = vmatpush1.msra.mxu0 %v103
  %6196 = vmatprep.subr.mxu0 0.0
  %6197 = vmatpush1.msra.mxu0 %v104
  %6198 = vmatprep.subr.mxu0 0.0
  %6199 = vmatpush1.msra.mxu0 %v105
  %6200 = vmatprep.subr.mxu0 0.0
  %6201 = vmatpush1.msra.mxu0 %v106
  %6202 = vmatprep.subr.mxu0 0.0
  %6203 = vmatpush1.msra.mxu0 %v107
  %6204 = vmatprep.mubr.f32.mxu0 %v6124
  %6205 = vmatmul.mubr.f32.gmra.mrb[0].mxu0 %v6116
  %v6206 = vpop.f32.mrb[0].mxu0
  %v6207 = vadd.f32 %v176, %v6206
  %v6208 = vpop.f32.mrb[0].mxu0
  %6209 = vdwg.mxu0
  %6210 = vmatprep.subr.mxu0 0.0
  %6211 = vmatpush1.msra.mxu0 %v108
  %6212 = vmatprep.subr.mxu0 0.0
  %6213 = vmatpush1.msra.mxu0 %v109
  %6214 = vmatprep.subr.mxu0 0.0
  %6215 = vmatpush1.msra.mxu0 %v110
  %6216 = vmatprep.subr.mxu0 0.0
  %6217 = vmatpush1.msra.mxu0 %v111
  %6218 = vmatprep.subr.mxu0 0.0
  %6219 = vmatpush1.msra.mxu0 %v112
  %6220 = vmatprep.subr.mxu0 0.0
  %6221 = vmatpush1.msra.mxu0 %v113
  %6222 = vmatprep.subr.mxu0 0.0
  %6223 = vmatpush1.msra.mxu0 %v114
  %6224 = vmatprep.subr.mxu0 0.0
  %6225 = vmatpush1.msra.mxu0 %v115
  %6226 = vmatprep.subr.mxu0 0.0
  %6227 = vmatpush1.msra.mxu0 %v116
  %6228 = vmatprep.subr.mxu0 0.0
  %6229 = vmatpush1.msra.mxu0 %v117
  %6230 = vmatprep.subr.mxu0 0.0
  %6231 = vmatpush1.msra.mxu0 %v118
  %6232 = vmatprep.subr.mxu0 0.0
  %6233 = vmatpush1.msra.mxu0 %v119
  %6234 = vmatprep.subr.mxu0 0.0
  %6235 = vmatpush1.msra.mxu0 %v120
  %6236 = vmatprep.subr.mxu0 0.0
  %6237 = vmatpush1.msra.mxu0 %v121
  %6238 = vmatprep.subr.mxu0 0.0
  %6239 = vmatpush1.msra.mxu0 %v122
  %6240 = vmatprep.subr.mxu0 0.0
  %6241 = vmatpush1.msra.mxu0 %v123
  %6242 = vmatprep.subr.mxu0 0.0
  %6243 = vmatpush1.msra.mxu0 %v124
  %6244 = vmatprep.subr.mxu0 0.0
  %6245 = vmatpush1.msra.mxu0 %v125
  %6246 = vmatprep.subr.mxu0 0.0
  %6247 = vmatpush1.msra.mxu0 %v126
  %6248 = vmatprep.subr.mxu0 0.0
  %6249 = vmatpush1.msra.mxu0 %v127
  %6250 = vmatprep.subr.mxu0 0.0
  %6251 = vmatpush1.msra.mxu0 %v128
  %6252 = vmatprep.subr.mxu0 0.0
  %6253 = vmatpush1.msra.mxu0 %v129
  %6254 = vmatprep.subr.mxu0 0.0
  %6255 = vmatpush1.msra.mxu0 %v130
  %6256 = vmatprep.subr.mxu0 0.0
  %6257 = vmatpush1.msra.mxu0 %v131
  %6258 = vmatprep.subr.mxu0 0.0
  %6259 = vmatpush1.msra.mxu0 %v132
  %6260 = vmatprep.subr.mxu0 0.0
  %6261 = vmatpush1.msra.mxu0 %v133
  %6262 = vmatprep.subr.mxu0 0.0
  %6263 = vmatpush1.msra.mxu0 %v134
  %6264 = vmatprep.subr.mxu0 0.0
  %6265 = vmatpush1.msra.mxu0 %v135
  %6266 = vmatprep.subr.mxu0 0.0
  %6267 = vmatpush1.msra.mxu0 %v136
  %6268 = vmatprep.subr.mxu0 0.0
  %6269 = vmatpush1.msra.mxu0 %v137
  %6270 = vmatprep.subr.mxu0 0.0
  %6271 = vmatpush1.msra.mxu0 %v138
  %6272 = vmatprep.subr.mxu0 0.0
  %6273 = vmatpush1.msra.mxu0 %v139
  %6274 = vmatprep.mubr.f32.mxu0 %v6125
  %6275 = vmatmul.mubr.f32.gmra.mrb[0].mxu0 %v6123
  %v6276 = vpop.f32.mrb[0].mxu0
  %v6277 = vadd.f32 %v6207, %v6276
  %v6278 = vpop.f32.mrb[0].mxu0
  %6279 = vdwg.mxu0
  %6280 = vmatprep.subr.mxu0 0.0
  %6281 = vmatpush1.msra.mxu0 %v140
  %6282 = vmatprep.subr.mxu0 0.0
  %6283 = vmatpush1.msra.mxu0 %v141
  %6284 = vmatprep.subr.mxu0 0.0
  %6285 = vmatpush1.msra.mxu0 %v142
  %6286 = vmatprep.subr.mxu0 0.0
  %6287 = vmatpush1.msra.mxu0 %v143
  %6288 = vmatprep.subr.mxu0 0.0
  %6289 = vmatpush1.msra.mxu0 %v144
  %6290 = vmatprep.subr.mxu0 0.0
  %6291 = vmatpush1.msra.mxu0 %v145
  %6292 = vmatprep.subr.mxu0 0.0
  %6293 = vmatpush1.msra.mxu0 %v146
  %6294 = vmatprep.subr.mxu0 0.0
  %6295 = vmatpush1.msra.mxu0 %v147
  %6296 = vmatprep.subr.mxu0 0.0
  %6297 = vmatpush1.msra.mxu0 %v148
  %6298 = vmatprep.subr.mxu0 0.0
  %6299 = vmatpush1.msra.mxu0 %v149
  %6300 = vmatprep.subr.mxu0 0.0
  %6301 = vmatpush1.msra.mxu0 %v150
  %6302 = vmatprep.subr.mxu0 0.0
  %6303 = vmatpush1.msra.mxu0 %v151
  %6304 = vmatprep.subr.mxu0 0.0
  %6305 = vmatpush1.msra.mxu0 %v152
  %6306 = vmatprep.subr.mxu0 0.0
  %6307 = vmatpush1.msra.mxu0 %v153
  %6308 = vmatprep.subr.mxu0 0.0
  %6309 = vmatpush1.msra.mxu0 %v154
  %6310 = vmatprep.subr.mxu0 0.0
  %6311 = vmatpush1.msra.mxu0 %v155
  %6312 = vmatprep.subr.mxu0 0.0
  %6313 = vmatpush1.msra.mxu0 %v156
  %6314 = vmatprep.subr.mxu0 0.0
  %6315 = vmatpush1.msra.mxu0 %v157
  %6316 = vmatprep.subr.mxu0 0.0
  %6317 = vmatpush1.msra.mxu0 %v158
  %6318 = vmatprep.subr.mxu0 0.0
  %6319 = vmatpush1.msra.mxu0 %v159
  %6320 = vmatprep.subr.mxu0 0.0
  %6321 = vmatpush1.msra.mxu0 %v160
  %6322 = vmatprep.subr.mxu0 0.0
  %6323 = vmatpush1.msra.mxu0 %v161
  %6324 = vmatprep.subr.mxu0 0.0
  %6325 = vmatpush1.msra.mxu0 %v162
  %6326 = vmatprep.subr.mxu0 0.0
  %6327 = vmatpush1.msra.mxu0 %v163
  %6328 = vmatprep.subr.mxu0 0.0
  %6329 = vmatpush1.msra.mxu0 %v164
  %6330 = vmatprep.subr.mxu0 0.0
  %6331 = vmatpush1.msra.mxu0 %v165
  %6332 = vmatprep.subr.mxu0 0.0
  %6333 = vmatpush1.msra.mxu0 %v166
  %6334 = vmatprep.subr.mxu0 0.0
  %6335 = vmatpush1.msra.mxu0 %v167
  %6336 = vmatprep.subr.mxu0 0.0
  %6337 = vmatpush1.msra.mxu0 %v168
  %6338 = vmatprep.subr.mxu0 0.0
  %6339 = vmatpush1.msra.mxu0 %v169
  %6340 = vmatprep.subr.mxu0 0.0
  %6341 = vmatpush1.msra.mxu0 %v170
  %6342 = vmatprep.subr.mxu0 0.0
  %6343 = vmatpush1.msra.mxu0 %v171
  %6344 = vmatprep.mubr.f32.mxu0 %v6133
  %6345 = vmatmul.mubr.f32.gmra.mrb[0].mxu0 %v6132
  %v6346 = vpop.f32.mrb[0].mxu0
  %v6347 = vadd.f32 %v6277, %v6346
  %v6348 = vpop.f32.mrb[0].mxu0
  %6349 = vdwg.mxu0
  %v6350 = vmax.f32 %v6347, 0.0
  %6351 = vmatprep.subr.mxu0 0.0
  %6352 = vmatpush1.msra.mxu0 %v57
  %6353 = vmatprep.subr.mxu0 0.0
  %6354 = vmatpush1.msra.mxu0 %v58
  %6355 = vmatprep.subr.mxu0 0.0
  %6356 = vmatpush1.msra.mxu0 %v59
  %6357 = vmatprep.subr.mxu0 0.0
  %6358 = vmatpush1.msra.mxu0 %v60
  %6359 = vmatprep.subr.mxu0 0.0
  %6360 = vmatpush1.msra.mxu0 %v61
  %6361 = vmatprep.subr.mxu0 0.0
  %6362 = vmatpush1.msra.mxu0 %v62
  %6363 = vmatprep.subr.mxu0 0.0
  %6364 = vmatpush1.msra.mxu0 %v63
  %6365 = vmatprep.subr.mxu0 0.0
  %6366 = vmatpush1.msra.mxu0 %v64
  %6367 = vmatprep.subr.mxu0 0.0
  %6368 = vmatpush1.msra.mxu0 %v65
  %6369 = vmatprep.subr.mxu0 0.0
  %6370 = vmatpush1.msra.mxu0 %v66
  %6371 = vmatprep.subr.mxu0 0.0
  %6372 = vmatpush1.msra.mxu0 %v67
  %6373 = vmatprep.subr.mxu0 0.0
  %6374 = vmatpush1.msra.mxu0 %v68
  %6375 = vmatprep.subr.mxu0 0.0
  %6376 = vmatpush1.msra.mxu0 %v69
  %6377 = vmatprep.subr.mxu0 0.0
  %6378 = vmatpush1.msra.mxu0 %v70
  %6379 = vmatprep.subr.mxu0 0.0
  %6380 = vmatpush1.msra.mxu0 %v71
  %6381 = vmatprep.subr.mxu0 0.0
  %6382 = vmatpush1.msra.mxu0 %v72
  %6383 = vmatprep.subr.mxu0 0.0
  %6384 = vmatpush1.msra.mxu0 0.0
  %6385 = vmatprep.subr.mxu0 0.0
  %6386 = vmatpush1.msra.mxu0 0.0
  %6387 = vmatprep.subr.mxu0 0.0
  %6388 = vmatpush1.msra.mxu0 0.0
  %6389 = vmatprep.subr.mxu0 0.0
  %6390 = vmatpush1.msra.mxu0 0.0
  %6391 = vmatprep.subr.mxu0 0.0
  %6392 = vmatpush1.msra.mxu0 0.0
  %6393 = vmatprep.subr.mxu0 0.0
  %6394 = vmatpush1.msra.mxu0 0.0
  %6395 = vmatprep.subr.mxu0 0.0
  %6396 = vmatpush1.msra.mxu0 0.0
  %6397 = vmatprep.subr.mxu0 0.0
  %6398 = vmatpush1.msra.mxu0 0.0
  %6399 = vmatprep.subr.mxu0 0.0
  %6400 = vmatpush1.msra.mxu0 0.0
  %6401 = vmatprep.subr.mxu0 0.0
  %6402 = vmatpush1.msra.mxu0 0.0
  %6403 = vmatprep.subr.mxu0 0.0
  %6404 = vmatpush1.msra.mxu0 0.0
  %6405 = vmatprep.subr.mxu0 0.0
  %6406 = vmatpush1.msra.mxu0 0.0
  %6407 = vmatprep.subr.mxu0 0.0
  %6408 = vmatpush1.msra.mxu0 0.0
  %6409 = vmatprep.subr.mxu0 0.0
  %6410 = vmatpush1.msra.mxu0 0.0
  %6411 = vmatprep.subr.mxu0 0.0
  %6412 = vmatpush1.msra.mxu0 0.0
  %6413 = vmatprep.subr.mxu0 0.0
  %6414 = vmatpush1.msra.mxu0 0.0
  %6415 = vmatprep.mubr.f32.mxu0 0.0
  %6416 = vmatmul.mubr.f32.gmra.mrb[0].mxu0 %v6350
  %v6417 = vpop.f32.mrb[0].mxu0
  %v6418 = vadd.f32 %v426, %v6417
  %v6419 = vpop.f32.mrb[0].mxu0
  %6420 = vdwg.mxu0
  %v6421 = vmax.f32 %v6418, 0.0
  %s6422 = scalar_lea.vmem %s6, 240
  %v6423 = vld [vmem:[%s6422] sm:$0xff]
  %v6424 = vld [vmem:[%s6422 + $0x8] sm:$0xff]
  %v6426 = vsel %vm822, %v6421, 0
  %6428 = vmatprep.subr.mxu0 0.0
  %6429 = vmatpush1.msra.mxu0 %v6423
  %6430 = vmatprep.subr.mxu0 0.0
  %6431 = vmatpush1.msra.mxu0 %v6424
  %6432 = vmatprep.subr.mxu0 0.0
  %6433 = vmatpush1.msra.mxu0 0.0
  %6434 = vmatprep.subr.mxu0 0.0
  %6435 = vmatpush1.msra.mxu0 0.0
  %6436 = vmatprep.subr.mxu0 0.0
  %6437 = vmatpush1.msra.mxu0 0.0
  %6438 = vmatprep.subr.mxu0 0.0
  %6439 = vmatpush1.msra.mxu0 0.0
  %6440 = vmatprep.subr.mxu0 0.0
  %6441 = vmatpush1.msra.mxu0 0.0
  %6442 = vmatprep.subr.mxu0 0.0
  %6443 = vmatpush1.msra.mxu0 0.0
  %6444 = vmatprep.subr.mxu0 0.0
  %6445 = vmatpush1.msra.mxu0 0.0
  %6446 = vmatprep.subr.mxu0 0.0
  %6447 = vmatpush1.msra.mxu0 0.0
  %6448 = vmatprep.subr.mxu0 0.0
  %6449 = vmatpush1.msra.mxu0 0.0
  %6450 = vmatprep.subr.mxu0 0.0
  %6451 = vmatpush1.msra.mxu0 0.0
  %6452 = vmatprep.subr.mxu0 0.0
  %6453 = vmatpush1.msra.mxu0 0.0
  %6454 = vmatprep.subr.mxu0 0.0
  %6455 = vmatpush1.msra.mxu0 0.0
  %6456 = vmatprep.subr.mxu0 0.0
  %6457 = vmatpush1.msra.mxu0 0.0
  %6458 = vmatprep.subr.mxu0 0.0
  %6459 = vmatpush1.msra.mxu0 0.0
  %6460 = vmatprep.subr.mxu0 0.0
  %6461 = vmatpush1.msra.mxu0 0.0
  %6462 = vmatprep.subr.mxu0 0.0
  %6463 = vmatpush1.msra.mxu0 0.0
  %6464 = vmatprep.subr.mxu0 0.0
  %6465 = vmatpush1.msra.mxu0 0.0
  %6466 = vmatprep.subr.mxu0 0.0
  %6467 = vmatpush1.msra.mxu0 0.0
  %6468 = vmatprep.subr.mxu0 0.0
  %6469 = vmatpush1.msra.mxu0 0.0
  %6470 = vmatprep.subr.mxu0 0.0
  %6471 = vmatpush1.msra.mxu0 0.0
  %6472 = vmatprep.subr.mxu0 0.0
  %6473 = vmatpush1.msra.mxu0 0.0
  %6474 = vmatprep.subr.mxu0 0.0
  %6475 = vmatpush1.msra.mxu0 0.0
  %6476 = vmatprep.subr.mxu0 0.0
  %6477 = vmatpush1.msra.mxu0 0.0
  %6478 = vmatprep.subr.mxu0 0.0
  %6479 = vmatpush1.msra.mxu0 0.0
  %6480 = vmatprep.subr.mxu0 0.0
  %6481 = vmatpush1.msra.mxu0 0.0
  %6482 = vmatprep.subr.mxu0 0.0
  %6483 = vmatpush1.msra.mxu0 0.0
  %6484 = vmatprep.subr.mxu0 0.0
  %6485 = vmatpush1.msra.mxu0 0.0
  %6486 = vmatprep.subr.mxu0 0.0
  %6487 = vmatpush1.msra.mxu0 0.0
  %6488 = vmatprep.subr.mxu0 0.0
  %6489 = vmatpush1.msra.mxu0 0.0
  %6490 = vmatprep.subr.mxu0 0.0
  %6491 = vmatpush1.msra.mxu0 0.0
  %6492 = vmatprep.mubr.f32.mxu0 0.0
  %6493 = vmatmul.mubr.f32.gmra.mrb[0].mxu0 %v6426
  %v6494 = vpop.f32.mrb[0].mxu0
  %v6495 = vadd.f32 0.0, %v6494
  %v6496 = vpop.f32.mrb[0].mxu0
  %6497 = vdwg.mxu0
  %v6498 = vadd.f32 %v6103, %v6495
  %v6499 = vld [vmem:[%s7] sm:$0x1]
  %v6501 = vlaneseq
  %v6502 = vshrl.u32 %v6501, 7
  %v6503 = vsub.s32 0, %v6502
  %v6504 = vrot.slane %v6499, %v6503
  %v6506 = vadd.f32 %v6498, %v6504
  %v6507 = vmax.f32 %v6506, 0.0
  %v6508 = vld [vmem:[%s8] sm:$0xff]
  %v6509 = vld [vmem:[%s8 + $0x8] sm:$0xff]
  %v6510 = vld [vmem:[%s8 + $0x10] sm:$0xff]
  %v6511 = vld [vmem:[%s8 + $0x18] sm:$0xff]
  %v6512 = vld [vmem:[%s9] sm:$0x1]
  %v6514 = vlaneseq
  %v6515 = vshrl.u32 %v6514, 7
  %v6516 = vsub.s32 0, %v6515
  %v6517 = vrot.slane %v6512, %v6516
  %vm6519 = vcmask 261120
  %v6521 = vsel %vm6519, %v6507, 0
  %6523 = vmatprep.subr.mxu0 0.0
  %6524 = vmatpush1.msra.mxu0 %v6508
  %6525 = vmatprep.subr.mxu0 0.0
  %6526 = vmatpush1.msra.mxu0 %v6509
  %6527 = vmatprep.subr.mxu0 0.0
  %6528 = vmatpush1.msra.mxu0 %v6510
  %6529 = vmatprep.subr.mxu0 0.0
  %6530 = vmatpush1.msra.mxu0 %v6511
  %6531 = vmatprep.subr.mxu0 0.0
  %6532 = vmatpush1.msra.mxu0 0.0
  %6533 = vmatprep.subr.mxu0 0.0
  %6534 = vmatpush1.msra.mxu0 0.0
  %6535 = vmatprep.subr.mxu0 0.0
  %6536 = vmatpush1.msra.mxu0 0.0
  %6537 = vmatprep.subr.mxu0 0.0
  %6538 = vmatpush1.msra.mxu0 0.0
  %6539 = vmatprep.subr.mxu0 0.0
  %6540 = vmatpush1.msra.mxu0 0.0
  %6541 = vmatprep.subr.mxu0 0.0
  %6542 = vmatpush1.msra.mxu0 0.0
  %6543 = vmatprep.subr.mxu0 0.0
  %6544 = vmatpush1.msra.mxu0 0.0
  %6545 = vmatprep.subr.mxu0 0.0
  %6546 = vmatpush1.msra.mxu0 0.0
  %6547 = vmatprep.subr.mxu0 0.0
  %6548 = vmatpush1.msra.mxu0 0.0
  %6549 = vmatprep.subr.mxu0 0.0
  %6550 = vmatpush1.msra.mxu0 0.0
  %6551 = vmatprep.subr.mxu0 0.0
  %6552 = vmatpush1.msra.mxu0 0.0
  %6553 = vmatprep.subr.mxu0 0.0
  %6554 = vmatpush1.msra.mxu0 0.0
  %6555 = vmatprep.subr.mxu0 0.0
  %6556 = vmatpush1.msra.mxu0 0.0
  %6557 = vmatprep.subr.mxu0 0.0
  %6558 = vmatpush1.msra.mxu0 0.0
  %6559 = vmatprep.subr.mxu0 0.0
  %6560 = vmatpush1.msra.mxu0 0.0
  %6561 = vmatprep.subr.mxu0 0.0
  %6562 = vmatpush1.msra.mxu0 0.0
  %6563 = vmatprep.subr.mxu0 0.0
  %6564 = vmatpush1.msra.mxu0 0.0
  %6565 = vmatprep.subr.mxu0 0.0
  %6566 = vmatpush1.msra.mxu0 0.0
  %6567 = vmatprep.subr.mxu0 0.0
  %6568 = vmatpush1.msra.mxu0 0.0
  %6569 = vmatprep.subr.mxu0 0.0
  %6570 = vmatpush1.msra.mxu0 0.0
  %6571 = vmatprep.subr.mxu0 0.0
  %6572 = vmatpush1.msra.mxu0 0.0
  %6573 = vmatprep.subr.mxu0 0.0
  %6574 = vmatpush1.msra.mxu0 0.0
  %6575 = vmatprep.subr.mxu0 0.0
  %6576 = vmatpush1.msra.mxu0 0.0
  %6577 = vmatprep.subr.mxu0 0.0
  %6578 = vmatpush1.msra.mxu0 0.0
  %6579 = vmatprep.subr.mxu0 0.0
  %6580 = vmatpush1.msra.mxu0 0.0
  %6581 = vmatprep.subr.mxu0 0.0
  %6582 = vmatpush1.msra.mxu0 0.0
  %6583 = vmatprep.subr.mxu0 0.0
  %6584 = vmatpush1.msra.mxu0 0.0
  %6585 = vmatprep.subr.mxu0 0.0
  %6586 = vmatpush1.msra.mxu0 0.0
  %6587 = vmatprep.mubr.f32.mxu0 0.0
  %6588 = vmatmul.mubr.f32.gmra.mrb[0].mxu0 %v6521
  %v6589 = vpop.f32.mrb[0].mxu0
  %v6590 = vadd.f32 %v6517, %v6589
  %v6591 = vpop.f32.mrb[0].mxu0
  %6592 = vdwg.mxu0
  %v6593 = vmax.f32 %v6590, 0.0
  %vm6594 = vcmp.ne.f32.partialorder %v6593, %v6593
  %v6595 = vsel %vm6594, 0.0, %v6593
  %vm6596 = vcmp.eq.f32.partialorder %v6595, inf
  %v6597 = vsel %vm6596, 1.0, %v6595
  %vm6598 = vcmp.eq.f32.partialorder %v6597, -inf
  %v6599 = vsel %vm6598, -1.0, %v6597
  %v6600 = vld [vmem:[%s1] sm:$0x3]
  %v6601 = vld [vmem:[%s10] sm:$0xff]
  %v6602 = vld [vmem:[%s10 + $0x8] sm:$0xff]
  %v6603 = vld [vmem:[%s10 + $0x10] sm:$0xff]
  %v6604 = vld [vmem:[%s10 + $0x18] sm:$0xff]
  %v6605 = vld [vmem:[%s11] sm:$0xff]
  %v6606 = vld [vmem:[%s11 + $0x8] sm:$0xff]
  %v6607 = vld [vmem:[%s11 + $0x10] sm:$0xff]
  %v6608 = vld [vmem:[%s11 + $0x18] sm:$0xff]
  %v6610 = vsel %vm6519, %v6600, 0
  %6612 = vmatprep.subr.mxu0 0.0
  %6613 = vmatpush1.msra.mxu0 %v6605
  %6614 = vmatprep.subr.mxu0 0.0
  %6615 = vmatpush1.msra.mxu0 %v6606
  %6616 = vmatprep.subr.mxu0 0.0
  %6617 = vmatpush1.msra.mxu0 %v6607
  %6618 = vmatprep.subr.mxu0 0.0
  %6619 = vmatpush1.msra.mxu0 %v6608
  %6620 = vmatprep.subr.mxu0 0.0
  %6621 = vmatpush1.msra.mxu0 0.0
  %6622 = vmatprep.subr.mxu0 0.0
  %6623 = vmatpush1.msra.mxu0 0.0
  %6624 = vmatprep.subr.mxu0 0.0
  %6625 = vmatpush1.msra.mxu0 0.0
  %6626 = vmatprep.subr.mxu0 0.0
  %6627 = vmatpush1.msra.mxu0 0.0
  %6628 = vmatprep.subr.mxu0 0.0
  %6629 = vmatpush1.msra.mxu0 0.0
  %6630 = vmatprep.subr.mxu0 0.0
  %6631 = vmatpush1.msra.mxu0 0.0
  %6632 = vmatprep.subr.mxu0 0.0
  %6633 = vmatpush1.msra.mxu0 0.0
  %6634 = vmatprep.subr.mxu0 0.0
  %6635 = vmatpush1.msra.mxu0 0.0
  %6636 = vmatprep.subr.mxu0 0.0
  %6637 = vmatpush1.msra.mxu0 0.0
  %6638 = vmatprep.subr.mxu0 0.0
  %6639 = vmatpush1.msra.mxu0 0.0
  %6640 = vmatprep.subr.mxu0 0.0
  %6641 = vmatpush1.msra.mxu0 0.0
  %6642 = vmatprep.subr.mxu0 0.0
  %6643 = vmatpush1.msra.mxu0 0.0
  %6644 = vmatprep.subr.mxu0 0.0
  %6645 = vmatpush1.msra.mxu0 0.0
  %6646 = vmatprep.subr.mxu0 0.0
  %6647 = vmatpush1.msra.mxu0 0.0
  %6648 = vmatprep.subr.mxu0 0.0
  %6649 = vmatpush1.msra.mxu0 0.0
  %6650 = vmatprep.subr.mxu0 0.0
  %6651 = vmatpush1.msra.mxu0 0.0
  %6652 = vmatprep.subr.mxu0 0.0
  %6653 = vmatpush1.msra.mxu0 0.0
  %6654 = vmatprep.subr.mxu0 0.0
  %6655 = vmatpush1.msra.mxu0 0.0
  %6656 = vmatprep.subr.mxu0 0.0
  %6657 = vmatpush1.msra.mxu0 0.0
  %6658 = vmatprep.subr.mxu0 0.0
  %6659 = vmatpush1.msra.mxu0 0.0
  %6660 = vmatprep.subr.mxu0 0.0
  %6661 = vmatpush1.msra.mxu0 0.0
  %6662 = vmatprep.subr.mxu0 0.0
  %6663 = vmatpush1.msra.mxu0 0.0
  %6664 = vmatprep.subr.mxu0 0.0
  %6665 = vmatpush1.msra.mxu0 0.0
  %6666 = vmatprep.subr.mxu0 0.0
  %6667 = vmatpush1.msra.mxu0 0.0
  %6668 = vmatprep.subr.mxu0 0.0
  %6669 = vmatpush1.msra.mxu0 0.0
  %6670 = vmatprep.subr.mxu0 0.0
  %6671 = vmatpush1.msra.mxu0 0.0
  %6672 = vmatprep.subr.mxu0 0.0
  %6673 = vmatpush1.msra.mxu0 0.0
  %6674 = vmatprep.subr.mxu0 0.0
  %6675 = vmatpush1.msra.mxu0 0.0
  %6676 = vmatprep.mubr.f32.mxu0 0.0
  %6677 = vmatmul.mubr.f32.gmra.mrb[0].mxu0 %v6610
  %v6678 = vpop.f32.mrb[0].mxu0
  %v6679 = vadd.f32 0.0, %v6678
  %v6680 = vpop.f32.mrb[0].mxu0
  %6681 = vdwg.mxu0
  %v6683 = vsel %vm6519, %v6599, 0
  %6685 = vmatprep.subr.mxu0 0.0
  %6686 = vmatpush1.msra.mxu0 %v6601
  %6687 = vmatprep.subr.mxu0 0.0
  %6688 = vmatpush1.msra.mxu0 %v6602
  %6689 = vmatprep.subr.mxu0 0.0
  %6690 = vmatpush1.msra.mxu0 %v6603
  %6691 = vmatprep.subr.mxu0 0.0
  %6692 = vmatpush1.msra.mxu0 %v6604
  %6693 = vmatprep.subr.mxu0 0.0
  %6694 = vmatpush1.msra.mxu0 0.0
  %6695 = vmatprep.subr.mxu0 0.0
  %6696 = vmatpush1.msra.mxu0 0.0
  %6697 = vmatprep.subr.mxu0 0.0
  %6698 = vmatpush1.msra.mxu0 0.0
  %6699 = vmatprep.subr.mxu0 0.0
  %6700 = vmatpush1.msra.mxu0 0.0
  %6701 = vmatprep.subr.mxu0 0.0
  %6702 = vmatpush1.msra.mxu0 0.0
  %6703 = vmatprep.subr.mxu0 0.0
  %6704 = vmatpush1.msra.mxu0 0.0
  %6705 = vmatprep.subr.mxu0 0.0
  %6706 = vmatpush1.msra.mxu0 0.0
  %6707 = vmatprep.subr.mxu0 0.0
  %6708 = vmatpush1.msra.mxu0 0.0
  %6709 = vmatprep.subr.mxu0 0.0
  %6710 = vmatpush1.msra.mxu0 0.0
  %6711 = vmatprep.subr.mxu0 0.0
  %6712 = vmatpush1.msra.mxu0 0.0
  %6713 = vmatprep.subr.mxu0 0.0
  %6714 = vmatpush1.msra.mxu0 0.0
  %6715 = vmatprep.subr.mxu0 0.0
  %6716 = vmatpush1.msra.mxu0 0.0
  %6717 = vmatprep.subr.mxu0 0.0
  %6718 = vmatpush1.msra.mxu0 0.0
  %6719 = vmatprep.subr.mxu0 0.0
  %6720 = vmatpush1.msra.mxu0 0.0
  %6721 = vmatprep.subr.mxu0 0.0
  %6722 = vmatpush1.msra.mxu0 0.0
  %6723 = vmatprep.subr.mxu0 0.0
  %6724 = vmatpush1.msra.mxu0 0.0
  %6725 = vmatprep.subr.mxu0 0.0
  %6726 = vmatpush1.msra.mxu0 0.0
  %6727 = vmatprep.subr.mxu0 0.0
  %6728 = vmatpush1.msra.mxu0 0.0
  %6729 = vmatprep.subr.mxu0 0.0
  %6730 = vmatpush1.msra.mxu0 0.0
  %6731 = vmatprep.subr.mxu0 0.0
  %6732 = vmatpush1.msra.mxu0 0.0
  %6733 = vmatprep.subr.mxu0 0.0
  %6734 = vmatpush1.msra.mxu0 0.0
  %6735 = vmatprep.subr.mxu0 0.0
  %6736 = vmatpush1.msra.mxu0 0.0
  %6737 = vmatprep.subr.mxu0 0.0
  %6738 = vmatpush1.msra.mxu0 0.0
  %6739 = vmatprep.subr.mxu0 0.0
  %6740 = vmatpush1.msra.mxu0 0.0
  %6741 = vmatprep.subr.mxu0 0.0
  %6742 = vmatpush1.msra.mxu0 0.0
  %6743 = vmatprep.subr.mxu0 0.0
  %6744 = vmatpush1.msra.mxu0 0.0
  %6745 = vmatprep.subr.mxu0 0.0
  %6746 = vmatpush1.msra.mxu0 0.0
  %6747 = vmatprep.subr.mxu0 0.0
  %6748 = vmatpush1.msra.mxu0 0.0
  %6749 = vmatprep.mubr.f32.mxu0 0.0
  %6750 = vmatmul.mubr.f32.gmra.mrb[0].mxu0 %v6683
  %v6751 = vpop.f32.mrb[0].mxu0
  %v6752 = vadd.f32 %v6679, %v6751
  %v6753 = vpop.f32.mrb[0].mxu0
  %6754 = vdwg.mxu0
  %v6755 = vld [vmem:[%s13] sm:$0x1]
  %v6757 = vlaneseq
  %v6758 = vshrl.u32 %v6757, 7
  %v6759 = vsub.s32 0, %v6758
  %v6760 = vrot.slane %v6755, %v6759
  %v6762 = vadd.f32 %v6752, %v6760
  %s6763 = scalar_lea.vmem %s10, 32
  %v6764 = vld [vmem:[%s6763] sm:$0xff]
  %v6765 = vld [vmem:[%s6763 + $0x8] sm:$0xff]
  %v6766 = vld [vmem:[%s6763 + $0x10] sm:$0xff]
  %v6767 = vld [vmem:[%s6763 + $0x18] sm:$0xff]
  %s6768 = scalar_lea.vmem %s11, 32
  %v6769 = vld [vmem:[%s6768] sm:$0xff]
  %v6770 = vld [vmem:[%s6768 + $0x8] sm:$0xff]
  %v6771 = vld [vmem:[%s6768 + $0x10] sm:$0xff]
  %v6772 = vld [vmem:[%s6768 + $0x18] sm:$0xff]
  %6773 = vmatprep.subr.mxu0 0.0
  %6774 = vmatpush1.msra.mxu0 %v6769
  %6775 = vmatprep.subr.mxu0 0.0
  %6776 = vmatpush1.msra.mxu0 %v6770
  %6777 = vmatprep.subr.mxu0 0.0
  %6778 = vmatpush1.msra.mxu0 %v6771
  %6779 = vmatprep.subr.mxu0 0.0
  %6780 = vmatpush1.msra.mxu0 %v6772
  %6781 = vmatprep.subr.mxu0 0.0
  %6782 = vmatpush1.msra.mxu0 0.0
  %6783 = vmatprep.subr.mxu0 0.0
  %6784 = vmatpush1.msra.mxu0 0.0
  %6785 = vmatprep.subr.mxu0 0.0
  %6786 = vmatpush1.msra.mxu0 0.0
  %6787 = vmatprep.subr.mxu0 0.0
  %6788 = vmatpush1.msra.mxu0 0.0
  %6789 = vmatprep.subr.mxu0 0.0
  %6790 = vmatpush1.msra.mxu0 0.0
  %6791 = vmatprep.subr.mxu0 0.0
  %6792 = vmatpush1.msra.mxu0 0.0
  %6793 = vmatprep.subr.mxu0 0.0
  %6794 = vmatpush1.msra.mxu0 0.0
  %6795 = vmatprep.subr.mxu0 0.0
  %6796 = vmatpush1.msra.mxu0 0.0
  %6797 = vmatprep.subr.mxu0 0.0
  %6798 = vmatpush1.msra.mxu0 0.0
  %6799 = vmatprep.subr.mxu0 0.0
  %6800 = vmatpush1.msra.mxu0 0.0
  %6801 = vmatprep.subr.mxu0 0.0
  %6802 = vmatpush1.msra.mxu0 0.0
  %6803 = vmatprep.subr.mxu0 0.0
  %6804 = vmatpush1.msra.mxu0 0.0
  %6805 = vmatprep.subr.mxu0 0.0
  %6806 = vmatpush1.msra.mxu0 0.0
  %6807 = vmatprep.subr.mxu0 0.0
  %6808 = vmatpush1.msra.mxu0 0.0
  %6809 = vmatprep.subr.mxu0 0.0
  %6810 = vmatpush1.msra.mxu0 0.0
  %6811 = vmatprep.subr.mxu0 0.0
  %6812 = vmatpush1.msra.mxu0 0.0
  %6813 = vmatprep.subr.mxu0 0.0
  %6814 = vmatpush1.msra.mxu0 0.0
  %6815 = vmatprep.subr.mxu0 0.0
  %6816 = vmatpush1.msra.mxu0 0.0
  %6817 = vmatprep.subr.mxu0 0.0
  %6818 = vmatpush1.msra.mxu0 0.0
  %6819 = vmatprep.subr.mxu0 0.0
  %6820 = vmatpush1.msra.mxu0 0.0
  %6821 = vmatprep.subr.mxu0 0.0
  %6822 = vmatpush1.msra.mxu0 0.0
  %6823 = vmatprep.subr.mxu0 0.0
  %6824 = vmatpush1.msra.mxu0 0.0
  %6825 = vmatprep.subr.mxu0 0.0
  %6826 = vmatpush1.msra.mxu0 0.0
  %6827 = vmatprep.subr.mxu0 0.0
  %6828 = vmatpush1.msra.mxu0 0.0
  %6829 = vmatprep.subr.mxu0 0.0
  %6830 = vmatpush1.msra.mxu0 0.0
  %6831 = vmatprep.subr.mxu0 0.0
  %6832 = vmatpush1.msra.mxu0 0.0
  %6833 = vmatprep.subr.mxu0 0.0
  %6834 = vmatpush1.msra.mxu0 0.0
  %6835 = vmatprep.subr.mxu0 0.0
  %6836 = vmatpush1.msra.mxu0 0.0
  %6837 = vmatprep.mubr.f32.mxu0 0.0
  %6838 = vmatmul.mubr.f32.gmra.mrb[0].mxu0 %v6610
  %v6839 = vpop.f32.mrb[0].mxu0
  %v6840 = vadd.f32 0.0, %v6839
  %v6841 = vpop.f32.mrb[0].mxu0
  %6842 = vdwg.mxu0
  %6843 = vmatprep.subr.mxu0 0.0
  %6844 = vmatpush1.msra.mxu0 %v6764
  %6845 = vmatprep.subr.mxu0 0.0
  %6846 = vmatpush1.msra.mxu0 %v6765
  %6847 = vmatprep.subr.mxu0 0.0
  %6848 = vmatpush1.msra.mxu0 %v6766
  %6849 = vmatprep.subr.mxu0 0.0
  %6850 = vmatpush1.msra.mxu0 %v6767
  %6851 = vmatprep.subr.mxu0 0.0
  %6852 = vmatpush1.msra.mxu0 0.0
  %6853 = vmatprep.subr.mxu0 0.0
  %6854 = vmatpush1.msra.mxu0 0.0
  %6855 = vmatprep.subr.mxu0 0.0
  %6856 = vmatpush1.msra.mxu0 0.0
  %6857 = vmatprep.subr.mxu0 0.0
  %6858 = vmatpush1.msra.mxu0 0.0
  %6859 = vmatprep.subr.mxu0 0.0
  %6860 = vmatpush1.msra.mxu0 0.0
  %6861 = vmatprep.subr.mxu0 0.0
  %6862 = vmatpush1.msra.mxu0 0.0
  %6863 = vmatprep.subr.mxu0 0.0
  %6864 = vmatpush1.msra.mxu0 0.0
  %6865 = vmatprep.subr.mxu0 0.0
  %6866 = vmatpush1.msra.mxu0 0.0
  %6867 = vmatprep.subr.mxu0 0.0
  %6868 = vmatpush1.msra.mxu0 0.0
  %6869 = vmatprep.subr.mxu0 0.0
  %6870 = vmatpush1.msra.mxu0 0.0
  %6871 = vmatprep.subr.mxu0 0.0
  %6872 = vmatpush1.msra.mxu0 0.0
  %6873 = vmatprep.subr.mxu0 0.0
  %6874 = vmatpush1.msra.mxu0 0.0
  %6875 = vmatprep.subr.mxu0 0.0
  %6876 = vmatpush1.msra.mxu0 0.0
  %6877 = vmatprep.subr.mxu0 0.0
  %6878 = vmatpush1.msra.mxu0 0.0
  %6879 = vmatprep.subr.mxu0 0.0
  %6880 = vmatpush1.msra.mxu0 0.0
  %6881 = vmatprep.subr.mxu0 0.0
  %6882 = vmatpush1.msra.mxu0 0.0
  %6883 = vmatprep.subr.mxu0 0.0
  %6884 = vmatpush1.msra.mxu0 0.0
  %6885 = vmatprep.subr.mxu0 0.0
  %6886 = vmatpush1.msra.mxu0 0.0
  %6887 = vmatprep.subr.mxu0 0.0
  %6888 = vmatpush1.msra.mxu0 0.0
  %6889 = vmatprep.subr.mxu0 0.0
  %6890 = vmatpush1.msra.mxu0 0.0
  %6891 = vmatprep.subr.mxu0 0.0
  %6892 = vmatpush1.msra.mxu0 0.0
  %6893 = vmatprep.subr.mxu0 0.0
  %6894 = vmatpush1.msra.mxu0 0.0
  %6895 = vmatprep.subr.mxu0 0.0
  %6896 = vmatpush1.msra.mxu0 0.0
  %6897 = vmatprep.subr.mxu0 0.0
  %6898 = vmatpush1.msra.mxu0 0.0
  %6899 = vmatprep.subr.mxu0 0.0
  %6900 = vmatpush1.msra.mxu0 0.0
  %6901 = vmatprep.subr.mxu0 0.0
  %6902 = vmatpush1.msra.mxu0 0.0
  %6903 = vmatprep.subr.mxu0 0.0
  %6904 = vmatpush1.msra.mxu0 0.0
  %6905 = vmatprep.subr.mxu0 0.0
  %6906 = vmatpush1.msra.mxu0 0.0
  %6907 = vmatprep.mubr.f32.mxu0 0.0
  %6908 = vmatmul.mubr.f32.gmra.mrb[0].mxu0 %v6683
  %v6909 = vpop.f32.mrb[0].mxu0
  %v6910 = vadd.f32 %v6840, %v6909
  %v6911 = vpop.f32.mrb[0].mxu0
  %6912 = vdwg.mxu0
  %s6913 = scalar_lea.vmem %s13, 1
  %v6914 = vld [vmem:[%s6913] sm:$0x1]
  %v6916 = vlaneseq
  %v6917 = vshrl.u32 %v6916, 7
  %v6918 = vsub.s32 0, %v6917
  %v6919 = vrot.slane %v6914, %v6918
  %v6921 = vadd.f32 %v6910, %v6919
  %s6922 = scalar_lea.vmem %s10, 64
  %v6923 = vld [vmem:[%s6922] sm:$0xff]
  %v6924 = vld [vmem:[%s6922 + $0x8] sm:$0xff]
  %v6925 = vld [vmem:[%s6922 + $0x10] sm:$0xff]
  %v6926 = vld [vmem:[%s6922 + $0x18] sm:$0xff]
  %s6927 = scalar_lea.vmem %s11, 64
  %v6928 = vld [vmem:[%s6927] sm:$0xff]
  %v6929 = vld [vmem:[%s6927 + $0x8] sm:$0xff]
  %v6930 = vld [vmem:[%s6927 + $0x10] sm:$0xff]
  %v6931 = vld [vmem:[%s6927 + $0x18] sm:$0xff]
  %6932 = vmatprep.subr.mxu0 0.0
  %6933 = vmatpush1.msra.mxu0 %v6928
  %6934 = vmatprep.subr.mxu0 0.0
  %6935 = vmatpush1.msra.mxu0 %v6929
  %6936 = vmatprep.subr.mxu0 0.0
  %6937 = vmatpush1.msra.mxu0 %v6930
  %6938 = vmatprep.subr.mxu0 0.0
  %6939 = vmatpush1.msra.mxu0 %v6931
  %6940 = vmatprep.subr.mxu0 0.0
  %6941 = vmatpush1.msra.mxu0 0.0
  %6942 = vmatprep.subr.mxu0 0.0
  %6943 = vmatpush1.msra.mxu0 0.0
  %6944 = vmatprep.subr.mxu0 0.0
  %6945 = vmatpush1.msra.mxu0 0.0
  %6946 = vmatprep.subr.mxu0 0.0
  %6947 = vmatpush1.msra.mxu0 0.0
  %6948 = vmatprep.subr.mxu0 0.0
  %6949 = vmatpush1.msra.mxu0 0.0
  %6950 = vmatprep.subr.mxu0 0.0
  %6951 = vmatpush1.msra.mxu0 0.0
  %6952 = vmatprep.subr.mxu0 0.0
  %6953 = vmatpush1.msra.mxu0 0.0
  %6954 = vmatprep.subr.mxu0 0.0
  %6955 = vmatpush1.msra.mxu0 0.0
  %6956 = vmatprep.subr.mxu0 0.0
  %6957 = vmatpush1.msra.mxu0 0.0
  %6958 = vmatprep.subr.mxu0 0.0
  %6959 = vmatpush1.msra.mxu0 0.0
  %6960 = vmatprep.subr.mxu0 0.0
  %6961 = vmatpush1.msra.mxu0 0.0
  %6962 = vmatprep.subr.mxu0 0.0
  %6963 = vmatpush1.msra.mxu0 0.0
  %6964 = vmatprep.subr.mxu0 0.0
  %6965 = vmatpush1.msra.mxu0 0.0
  %6966 = vmatprep.subr.mxu0 0.0
  %6967 = vmatpush1.msra.mxu0 0.0
  %6968 = vmatprep.subr.mxu0 0.0
  %6969 = vmatpush1.msra.mxu0 0.0
  %6970 = vmatprep.subr.mxu0 0.0
  %6971 = vmatpush1.msra.mxu0 0.0
  %6972 = vmatprep.subr.mxu0 0.0
  %6973 = vmatpush1.msra.mxu0 0.0
  %6974 = vmatprep.subr.mxu0 0.0
  %6975 = vmatpush1.msra.mxu0 0.0
  %6976 = vmatprep.subr.mxu0 0.0
  %6977 = vmatpush1.msra.mxu0 0.0
  %6978 = vmatprep.subr.mxu0 0.0
  %6979 = vmatpush1.msra.mxu0 0.0
  %6980 = vmatprep.subr.mxu0 0.0
  %6981 = vmatpush1.msra.mxu0 0.0
  %6982 = vmatprep.subr.mxu0 0.0
  %6983 = vmatpush1.msra.mxu0 0.0
  %6984 = vmatprep.subr.mxu0 0.0
  %6985 = vmatpush1.msra.mxu0 0.0
  %6986 = vmatprep.subr.mxu0 0.0
  %6987 = vmatpush1.msra.mxu0 0.0
  %6988 = vmatprep.subr.mxu0 0.0
  %6989 = vmatpush1.msra.mxu0 0.0
  %6990 = vmatprep.subr.mxu0 0.0
  %6991 = vmatpush1.msra.mxu0 0.0
  %6992 = vmatprep.subr.mxu0 0.0
  %6993 = vmatpush1.msra.mxu0 0.0
  %6994 = vmatprep.subr.mxu0 0.0
  %6995 = vmatpush1.msra.mxu0 0.0
  %6996 = vmatprep.mubr.f32.mxu0 0.0
  %6997 = vmatmul.mubr.f32.gmra.mrb[0].mxu0 %v6610
  %v6998 = vpop.f32.mrb[0].mxu0
  %v6999 = vadd.f32 0.0, %v6998
  %v7000 = vpop.f32.mrb[0].mxu0
  %7001 = vdwg.mxu0
  %7002 = vmatprep.subr.mxu0 0.0
  %7003 = vmatpush1.msra.mxu0 %v6923
  %7004 = vmatprep.subr.mxu0 0.0
  %7005 = vmatpush1.msra.mxu0 %v6924
  %7006 = vmatprep.subr.mxu0 0.0
  %7007 = vmatpush1.msra.mxu0 %v6925
  %7008 = vmatprep.subr.mxu0 0.0
  %7009 = vmatpush1.msra.mxu0 %v6926
  %7010 = vmatprep.subr.mxu0 0.0
  %7011 = vmatpush1.msra.mxu0 0.0
  %7012 = vmatprep.subr.mxu0 0.0
  %7013 = vmatpush1.msra.mxu0 0.0
  %7014 = vmatprep.subr.mxu0 0.0
  %7015 = vmatpush1.msra.mxu0 0.0
  %7016 = vmatprep.subr.mxu0 0.0
  %7017 = vmatpush1.msra.mxu0 0.0
  %7018 = vmatprep.subr.mxu0 0.0
  %7019 = vmatpush1.msra.mxu0 0.0
  %7020 = vmatprep.subr.mxu0 0.0
  %7021 = vmatpush1.msra.mxu0 0.0
  %7022 = vmatprep.subr.mxu0 0.0
  %7023 = vmatpush1.msra.mxu0 0.0
  %7024 = vmatprep.subr.mxu0 0.0
  %7025 = vmatpush1.msra.mxu0 0.0
  %7026 = vmatprep.subr.mxu0 0.0
  %7027 = vmatpush1.msra.mxu0 0.0
  %7028 = vmatprep.subr.mxu0 0.0
  %7029 = vmatpush1.msra.mxu0 0.0
  %7030 = vmatprep.subr.mxu0 0.0
  %7031 = vmatpush1.msra.mxu0 0.0
  %7032 = vmatprep.subr.mxu0 0.0
  %7033 = vmatpush1.msra.mxu0 0.0
  %7034 = vmatprep.subr.mxu0 0.0
  %7035 = vmatpush1.msra.mxu0 0.0
  %7036 = vmatprep.subr.mxu0 0.0
  %7037 = vmatpush1.msra.mxu0 0.0
  %7038 = vmatprep.subr.mxu0 0.0
  %7039 = vmatpush1.msra.mxu0 0.0
  %7040 = vmatprep.subr.mxu0 0.0
  %7041 = vmatpush1.msra.mxu0 0.0
  %7042 = vmatprep.subr.mxu0 0.0
  %7043 = vmatpush1.msra.mxu0 0.0
  %7044 = vmatprep.subr.mxu0 0.0
  %7045 = vmatpush1.msra.mxu0 0.0
  %7046 = vmatprep.subr.mxu0 0.0
  %7047 = vmatpush1.msra.mxu0 0.0
  %7048 = vmatprep.subr.mxu0 0.0
  %7049 = vmatpush1.msra.mxu0 0.0
  %7050 = vmatprep.subr.mxu0 0.0
  %7051 = vmatpush1.msra.mxu0 0.0
  %7052 = vmatprep.subr.mxu0 0.0
  %7053 = vmatpush1.msra.mxu0 0.0
  %7054 = vmatprep.subr.mxu0 0.0
  %7055 = vmatpush1.msra.mxu0 0.0
  %7056 = vmatprep.subr.mxu0 0.0
  %7057 = vmatpush1.msra.mxu0 0.0
  %7058 = vmatprep.subr.mxu0 0.0
  %7059 = vmatpush1.msra.mxu0 0.0
  %7060 = vmatprep.subr.mxu0 0.0
  %7061 = vmatpush1.msra.mxu0 0.0
  %7062 = vmatprep.subr.mxu0 0.0
  %7063 = vmatpush1.msra.mxu0 0.0
  %7064 = vmatprep.subr.mxu0 0.0
  %7065 = vmatpush1.msra.mxu0 0.0
  %7066 = vmatprep.mubr.f32.mxu0 0.0
  %7067 = vmatmul.mubr.f32.gmra.mrb[0].mxu0 %v6683
  %v7068 = vpop.f32.mrb[0].mxu0
  %v7069 = vadd.f32 %v6999, %v7068
  %v7070 = vpop.f32.mrb[0].mxu0
  %7071 = vdwg.mxu0
  %s7072 = scalar_lea.vmem %s13, 2
  %v7073 = vld [vmem:[%s7072] sm:$0x1]
  %v7075 = vlaneseq
  %v7076 = vshrl.u32 %v7075, 7
  %v7077 = vsub.s32 0, %v7076
  %v7078 = vrot.slane %v7073, %v7077
  %v7080 = vadd.f32 %v7069, %v7078
  %v7081 = vld [vmem:[%s12] sm:$0xff]
  %v7082 = vld [vmem:[%s12 + $0x8] sm:$0xff]
  %v7083 = vld [vmem:[%s12 + $0x10] sm:$0xff]
  %v7084 = vld [vmem:[%s12 + $0x18] sm:$0xff]
  %s7085 = scalar_lea.vmem %s12, 32
  %v7086 = vld [vmem:[%s7085] sm:$0xff]
  %v7087 = vld [vmem:[%s7085 + $0x8] sm:$0xff]
  %v7088 = vld [vmem:[%s7085 + $0x10] sm:$0xff]
  %v7089 = vld [vmem:[%s7085 + $0x18] sm:$0xff]
  %s7090 = scalar_lea.vmem %s12, 64
  %v7091 = vld [vmem:[%s7090] sm:$0xff]
  %v7092 = vld [vmem:[%s7090 + $0x8] sm:$0xff]
  %v7093 = vld [vmem:[%s7090 + $0x10] sm:$0xff]
  %v7094 = vld [vmem:[%s7090 + $0x18] sm:$0xff]
  %v7095 = vld [vmem:[%s14] sm:$0x1]
  %s7096 = scalar_lea.vmem %s14, 1
  %v7097 = vld [vmem:[%s7096] sm:$0x1]
  %s7098 = scalar_lea.vmem %s14, 2
  %v7099 = vld [vmem:[%s7098] sm:$0x1]
  %v7100 = vld [vmem:[%s15] sm:$0xff]
  %v7101 = vld [vmem:[%s15 + $0x8] sm:$0xff]
  %v7102 = vld [vmem:[%s15 + $0x10] sm:$0xff]
  %v7103 = vld [vmem:[%s15 + $0x18] sm:$0xff]
  %v7104 = vld [vmem:[%s16] sm:$0x1]
  %v7106 = vsel %vm6519, 0.0, 0
  %7108 = vmatprep.subr.mxu0 0.0
  %7109 = vmatpush1.msra.mxu0 %v7081
  %7110 = vmatprep.subr.mxu0 0.0
  %7111 = vmatpush1.msra.mxu0 %v7082
  %7112 = vmatprep.subr.mxu0 0.0
  %7113 = vmatpush1.msra.mxu0 %v7083
  %7114 = vmatprep.subr.mxu0 0.0
  %7115 = vmatpush1.msra.mxu0 %v7084
  %7116 = vmatprep.subr.mxu0 0.0
  %7117 = vmatpush1.msra.mxu0 0.0
  %7118 = vmatprep.subr.mxu0 0.0
  %7119 = vmatpush1.msra.mxu0 0.0
  %7120 = vmatprep.subr.mxu0 0.0
  %7121 = vmatpush1.msra.mxu0 0.0
  %7122 = vmatprep.subr.mxu0 0.0
  %7123 = vmatpush1.msra.mxu0 0.0
  %7124 = vmatprep.subr.mxu0 0.0
  %7125 = vmatpush1.msra.mxu0 0.0
  %7126 = vmatprep.subr.mxu0 0.0
  %7127 = vmatpush1.msra.mxu0 0.0
  %7128 = vmatprep.subr.mxu0 0.0
  %7129 = vmatpush1.msra.mxu0 0.0
  %7130 = vmatprep.subr.mxu0 0.0
  %7131 = vmatpush1.msra.mxu0 0.0
  %7132 = vmatprep.subr.mxu0 0.0
  %7133 = vmatpush1.msra.mxu0 0.0
  %7134 = vmatprep.subr.mxu0 0.0
  %7135 = vmatpush1.msra.mxu0 0.0
  %7136 = vmatprep.subr.mxu0 0.0
  %7137 = vmatpush1.msra.mxu0 0.0
  %7138 = vmatprep.subr.mxu0 0.0
  %7139 = vmatpush1.msra.mxu0 0.0
  %7140 = vmatprep.subr.mxu0 0.0
  %7141 = vmatpush1.msra.mxu0 0.0
  %7142 = vmatprep.subr.mxu0 0.0
  %7143 = vmatpush1.msra.mxu0 0.0
  %7144 = vmatprep.subr.mxu0 0.0
  %7145 = vmatpush1.msra.mxu0 0.0
  %7146 = vmatprep.subr.mxu0 0.0
  %7147 = vmatpush1.msra.mxu0 0.0
  %7148 = vmatprep.subr.mxu0 0.0
  %7149 = vmatpush1.msra.mxu0 0.0
  %7150 = vmatprep.subr.mxu0 0.0
  %7151 = vmatpush1.msra.mxu0 0.0
  %7152 = vmatprep.subr.mxu0 0.0
  %7153 = vmatpush1.msra.mxu0 0.0
  %7154 = vmatprep.subr.mxu0 0.0
  %7155 = vmatpush1.msra.mxu0 0.0
  %7156 = vmatprep.subr.mxu0 0.0
  %7157 = vmatpush1.msra.mxu0 0.0
  %7158 = vmatprep.subr.mxu0 0.0
  %7159 = vmatpush1.msra.mxu0 0.0
  %7160 = vmatprep.subr.mxu0 0.0
  %7161 = vmatpush1.msra.mxu0 0.0
  %7162 = vmatprep.subr.mxu0 0.0
  %7163 = vmatpush1.msra.mxu0 0.0
  %7164 = vmatprep.subr.mxu0 0.0
  %7165 = vmatpush1.msra.mxu0 0.0
  %7166 = vmatprep.subr.mxu0 0.0
  %7167 = vmatpush1.msra.mxu0 0.0
  %7168 = vmatprep.subr.mxu0 0.0
  %7169 = vmatpush1.msra.mxu0 0.0
  %7170 = vmatprep.subr.mxu0 0.0
  %7171 = vmatpush1.msra.mxu0 0.0
  %7172 = vmatprep.mubr.f32.mxu0 0.0
  %7173 = vmatmul.mubr.f32.gmra.mrb[0].mxu0 %v7106
  %v7174 = vpop.f32.mrb[0].mxu0
  %v7175 = vadd.f32 0.0, %v7174
  %v7176 = vpop.f32.mrb[0].mxu0
  %7177 = vdwg.mxu0
  %v7178 = vadd.f32 %v6762, %v7175
  %v7180 = vlaneseq
  %v7181 = vshrl.u32 %v7180, 7
  %v7182 = vsub.s32 0, %v7181
  %v7183 = vrot.slane %v7095, %v7182
  %v7185 = vadd.f32 %v7178, %v7183
  %v7186 = vxor.u32 %v7185, 2147483648
  %v7187 = vmul.f32 %v7186, 1.442695
  %v7188 = vpow.pop %v7187
  %v7189 = vadd.f32 %v7188, 1.0
  %v7190 = vrcp.pop %v7189
  %v7191 = vmul.f32 1.0, %v7190
  %7192 = vmatprep.subr.mxu0 0.0
  %7193 = vmatpush1.msra.mxu0 %v7086
  %7194 = vmatprep.subr.mxu0 0.0
  %7195 = vmatpush1.msra.mxu0 %v7087
  %7196 = vmatprep.subr.mxu0 0.0
  %7197 = vmatpush1.msra.mxu0 %v7088
  %7198 = vmatprep.subr.mxu0 0.0
  %7199 = vmatpush1.msra.mxu0 %v7089
  %7200 = vmatprep.subr.mxu0 0.0
  %7201 = vmatpush1.msra.mxu0 0.0
  %7202 = vmatprep.subr.mxu0 0.0
  %7203 = vmatpush1.msra.mxu0 0.0
  %7204 = vmatprep.subr.mxu0 0.0
  %7205 = vmatpush1.msra.mxu0 0.0
  %7206 = vmatprep.subr.mxu0 0.0
  %7207 = vmatpush1.msra.mxu0 0.0
  %7208 = vmatprep.subr.mxu0 0.0
  %7209 = vmatpush1.msra.mxu0 0.0
  %7210 = vmatprep.subr.mxu0 0.0
  %7211 = vmatpush1.msra.mxu0 0.0
  %7212 = vmatprep.subr.mxu0 0.0
  %7213 = vmatpush1.msra.mxu0 0.0
  %7214 = vmatprep.subr.mxu0 0.0
  %7215 = vmatpush1.msra.mxu0 0.0
  %7216 = vmatprep.subr.mxu0 0.0
  %7217 = vmatpush1.msra.mxu0 0.0
  %7218 = vmatprep.subr.mxu0 0.0
  %7219 = vmatpush1.msra.mxu0 0.0
  %7220 = vmatprep.subr.mxu0 0.0
  %7221 = vmatpush1.msra.mxu0 0.0
  %7222 = vmatprep.subr.mxu0 0.0
  %7223 = vmatpush1.msra.mxu0 0.0
  %7224 = vmatprep.subr.mxu0 0.0
  %7225 = vmatpush1.msra.mxu0 0.0
  %7226 = vmatprep.subr.mxu0 0.0
  %7227 = vmatpush1.msra.mxu0 0.0
  %7228 = vmatprep.subr.mxu0 0.0
  %7229 = vmatpush1.msra.mxu0 0.0
  %7230 = vmatprep.subr.mxu0 0.0
  %7231 = vmatpush1.msra.mxu0 0.0
  %7232 = vmatprep.subr.mxu0 0.0
  %7233 = vmatpush1.msra.mxu0 0.0
  %7234 = vmatprep.subr.mxu0 0.0
  %7235 = vmatpush1.msra.mxu0 0.0
  %7236 = vmatprep.subr.mxu0 0.0
  %7237 = vmatpush1.msra.mxu0 0.0
  %7238 = vmatprep.subr.mxu0 0.0
  %7239 = vmatpush1.msra.mxu0 0.0
  %7240 = vmatprep.subr.mxu0 0.0
  %7241 = vmatpush1.msra.mxu0 0.0
  %7242 = vmatprep.subr.mxu0 0.0
  %7243 = vmatpush1.msra.mxu0 0.0
  %7244 = vmatprep.subr.mxu0 0.0
  %7245 = vmatpush1.msra.mxu0 0.0
  %7246 = vmatprep.subr.mxu0 0.0
  %7247 = vmatpush1.msra.mxu0 0.0
  %7248 = vmatprep.subr.mxu0 0.0
  %7249 = vmatpush1.msra.mxu0 0.0
  %7250 = vmatprep.subr.mxu0 0.0
  %7251 = vmatpush1.msra.mxu0 0.0
  %7252 = vmatprep.subr.mxu0 0.0
  %7253 = vmatpush1.msra.mxu0 0.0
  %7254 = vmatprep.subr.mxu0 0.0
  %7255 = vmatpush1.msra.mxu0 0.0
  %7256 = vmatprep.mubr.f32.mxu0 0.0
  %7257 = vmatmul.mubr.f32.gmra.mrb[0].mxu0 %v7106
  %v7258 = vpop.f32.mrb[0].mxu0
  %v7259 = vadd.f32 0.0, %v7258
  %v7260 = vpop.f32.mrb[0].mxu0
  %7261 = vdwg.mxu0
  %v7262 = vadd.f32 %v6921, %v7259
  %v7264 = vlaneseq
  %v7265 = vshrl.u32 %v7264, 7
  %v7266 = vsub.s32 0, %v7265
  %v7267 = vrot.slane %v7097, %v7266
  %v7269 = vadd.f32 %v7262, %v7267
  %v7270 = vxor.u32 %v7269, 2147483648
  %v7271 = vmul.f32 %v7270, 1.442695
  %v7272 = vpow.pop %v7271
  %v7273 = vadd.f32 %v7272, 1.0
  %v7274 = vrcp.pop %v7273
  %v7275 = vmul.f32 1.0, %v7274
  %v7277 = vlaneseq
  %v7278 = vshrl.u32 %v7277, 7
  %v7279 = vsub.s32 0, %v7278
  %v7280 = vrot.slane %v7099, %v7279
  %7282 = vmatprep.subr.mxu0 0.0
  %7283 = vmatpush1.msra.mxu0 %v7091
  %7284 = vmatprep.subr.mxu0 0.0
  %7285 = vmatpush1.msra.mxu0 %v7092
  %7286 = vmatprep.subr.mxu0 0.0
  %7287 = vmatpush1.msra.mxu0 %v7093
  %7288 = vmatprep.subr.mxu0 0.0
  %7289 = vmatpush1.msra.mxu0 %v7094
  %7290 = vmatprep.subr.mxu0 0.0
  %7291 = vmatpush1.msra.mxu0 0.0
  %7292 = vmatprep.subr.mxu0 0.0
  %7293 = vmatpush1.msra.mxu0 0.0
  %7294 = vmatprep.subr.mxu0 0.0
  %7295 = vmatpush1.msra.mxu0 0.0
  %7296 = vmatprep.subr.mxu0 0.0
  %7297 = vmatpush1.msra.mxu0 0.0
  %7298 = vmatprep.subr.mxu0 0.0
  %7299 = vmatpush1.msra.mxu0 0.0
  %7300 = vmatprep.subr.mxu0 0.0
  %7301 = vmatpush1.msra.mxu0 0.0
  %7302 = vmatprep.subr.mxu0 0.0
  %7303 = vmatpush1.msra.mxu0 0.0
  %7304 = vmatprep.subr.mxu0 0.0
  %7305 = vmatpush1.msra.mxu0 0.0
  %7306 = vmatprep.subr.mxu0 0.0
  %7307 = vmatpush1.msra.mxu0 0.0
  %7308 = vmatprep.subr.mxu0 0.0
  %7309 = vmatpush1.msra.mxu0 0.0
  %7310 = vmatprep.subr.mxu0 0.0
  %7311 = vmatpush1.msra.mxu0 0.0
  %7312 = vmatprep.subr.mxu0 0.0
  %7313 = vmatpush1.msra.mxu0 0.0
  %7314 = vmatprep.subr.mxu0 0.0
  %7315 = vmatpush1.msra.mxu0 0.0
  %7316 = vmatprep.subr.mxu0 0.0
  %7317 = vmatpush1.msra.mxu0 0.0
  %7318 = vmatprep.subr.mxu0 0.0
  %7319 = vmatpush1.msra.mxu0 0.0
  %7320 = vmatprep.subr.mxu0 0.0
  %7321 = vmatpush1.msra.mxu0 0.0
  %7322 = vmatprep.subr.mxu0 0.0
  %7323 = vmatpush1.msra.mxu0 0.0
  %7324 = vmatprep.subr.mxu0 0.0
  %7325 = vmatpush1.msra.mxu0 0.0
  %7326 = vmatprep.subr.mxu0 0.0
  %7327 = vmatpush1.msra.mxu0 0.0
  %7328 = vmatprep.subr.mxu0 0.0
  %7329 = vmatpush1.msra.mxu0 0.0
  %7330 = vmatprep.subr.mxu0 0.0
  %7331 = vmatpush1.msra.mxu0 0.0
  %7332 = vmatprep.subr.mxu0 0.0
  %7333 = vmatpush1.msra.mxu0 0.0
  %7334 = vmatprep.subr.mxu0 0.0
  %7335 = vmatpush1.msra.mxu0 0.0
  %7336 = vmatprep.subr.mxu0 0.0
  %7337 = vmatpush1.msra.mxu0 0.0
  %7338 = vmatprep.subr.mxu0 0.0
  %7339 = vmatpush1.msra.mxu0 0.0
  %7340 = vmatprep.subr.mxu0 0.0
  %7341 = vmatpush1.msra.mxu0 0.0
  %7342 = vmatprep.subr.mxu0 0.0
  %7343 = vmatpush1.msra.mxu0 0.0
  %7344 = vmatprep.subr.mxu0 0.0
  %7345 = vmatpush1.msra.mxu0 0.0
  %7346 = vmatprep.mubr.f32.mxu0 0.0
  %7347 = vmatmul.mubr.f32.gmra.mrb[0].mxu0 %v7106
  %v7348 = vpop.f32.mrb[0].mxu0
  %v7349 = vadd.f32 %v7280, %v7348
  %v7350 = vpop.f32.mrb[0].mxu0
  %7351 = vdwg.mxu0
  %v7352 = vmul.f32 %v7191, %v7349
  %v7353 = vadd.f32 %v7080, %v7352
  %v7354 = vtanh.pop %v7353
  %v7355 = vsub.f32 1.0, %v7275
  %v7356 = vmul.f32 %v7355, %v7354
  %v7357 = vmul.f32 %v7275, 0.0
  %v7358 = vadd.f32 %v7356, %v7357
  %v7360 = vlaneseq
  %v7361 = vshrl.u32 %v7360, 7
  %v7362 = vsub.s32 0, %v7361
  %v7363 = vrot.slane %v7104, %v7362
  %v7366 = vsel %vm6519, %v7358, 0
  %7368 = vmatprep.subr.mxu0 0.0
  %7369 = vmatpush1.msra.mxu0 %v7100
  %7370 = vmatprep.subr.mxu0 0.0
  %7371 = vmatpush1.msra.mxu0 %v7101
  %7372 = vmatprep.subr.mxu0 0.0
  %7373 = vmatpush1.msra.mxu0 %v7102
  %7374 = vmatprep.subr.mxu0 0.0
  %7375 = vmatpush1.msra.mxu0 %v7103
  %7376 = vmatprep.subr.mxu0 0.0
  %7377 = vmatpush1.msra.mxu0 0.0
  %7378 = vmatprep.subr.mxu0 0.0
  %7379 = vmatpush1.msra.mxu0 0.0
  %7380 = vmatprep.subr.mxu0 0.0
  %7381 = vmatpush1.msra.mxu0 0.0
  %7382 = vmatprep.subr.mxu0 0.0
  %7383 = vmatpush1.msra.mxu0 0.0
  %7384 = vmatprep.subr.mxu0 0.0
  %7385 = vmatpush1.msra.mxu0 0.0
  %7386 = vmatprep.subr.mxu0 0.0
  %7387 = vmatpush1.msra.mxu0 0.0
  %7388 = vmatprep.subr.mxu0 0.0
  %7389 = vmatpush1.msra.mxu0 0.0
  %7390 = vmatprep.subr.mxu0 0.0
  %7391 = vmatpush1.msra.mxu0 0.0
  %7392 = vmatprep.subr.mxu0 0.0
  %7393 = vmatpush1.msra.mxu0 0.0
  %7394 = vmatprep.subr.mxu0 0.0
  %7395 = vmatpush1.msra.mxu0 0.0
  %7396 = vmatprep.subr.mxu0 0.0
  %7397 = vmatpush1.msra.mxu0 0.0
  %7398 = vmatprep.subr.mxu0 0.0
  %7399 = vmatpush1.msra.mxu0 0.0
  %7400 = vmatprep.subr.mxu0 0.0
  %7401 = vmatpush1.msra.mxu0 0.0
  %7402 = vmatprep.subr.mxu0 0.0
  %7403 = vmatpush1.msra.mxu0 0.0
  %7404 = vmatprep.subr.mxu0 0.0
  %7405 = vmatpush1.msra.mxu0 0.0
  %7406 = vmatprep.subr.mxu0 0.0
  %7407 = vmatpush1.msra.mxu0 0.0
  %7408 = vmatprep.subr.mxu0 0.0
  %7409 = vmatpush1.msra.mxu0 0.0
  %7410 = vmatprep.subr.mxu0 0.0
  %7411 = vmatpush1.msra.mxu0 0.0
  %7412 = vmatprep.subr.mxu0 0.0
  %7413 = vmatpush1.msra.mxu0 0.0
  %7414 = vmatprep.subr.mxu0 0.0
  %7415 = vmatpush1.msra.mxu0 0.0
  %7416 = vmatprep.subr.mxu0 0.0
  %7417 = vmatpush1.msra.mxu0 0.0
  %7418 = vmatprep.subr.mxu0 0.0
  %7419 = vmatpush1.msra.mxu0 0.0
  %7420 = vmatprep.subr.mxu0 0.0
  %7421 = vmatpush1.msra.mxu0 0.0
  %7422 = vmatprep.subr.mxu0 0.0
  %7423 = vmatpush1.msra.mxu0 0.0
  %7424 = vmatprep.subr.mxu0 0.0
  %7425 = vmatpush1.msra.mxu0 0.0
  %7426 = vmatprep.subr.mxu0 0.0
  %7427 = vmatpush1.msra.mxu0 0.0
  %7428 = vmatprep.subr.mxu0 0.0
  %7429 = vmatpush1.msra.mxu0 0.0
  %7430 = vmatprep.subr.mxu0 0.0
  %7431 = vmatpush1.msra.mxu0 0.0
  %7432 = vmatprep.mubr.f32.mxu0 0.0
  %7433 = vmatmul.mubr.f32.gmra.mrb[0].mxu0 %v7366
  %v7434 = vpop.f32.mrb[0].mxu0
  %v7435 = vadd.f32 %v7363, %v7434
  %v7436 = vpop.f32.mrb[0].mxu0
  %7437 = vdwg.mxu0
  %vm7438 = vcmask 25600
  %7439 = vst.msk [vmem:[%s17] sm:$0x3] %vm7438, %v7435
  %7440 = vmatprep.subr.mxu0 0.0
  %7441 = vmatpush1.msra.mxu0 %v7081
  %7442 = vmatprep.subr.mxu0 0.0
  %7443 = vmatpush1.msra.mxu0 %v7082
  %7444 = vmatprep.subr.mxu0 0.0
  %7445 = vmatpush1.msra.mxu0 %v7083
  %7446 = vmatprep.subr.mxu0 0.0
  %7447 = vmatpush1.msra.mxu0 %v7084
  %7448 = vmatprep.subr.mxu0 0.0
  %7449 = vmatpush1.msra.mxu0 0.0
  %7450 = vmatprep.subr.mxu0 0.0
  %7451 = vmatpush1.msra.mxu0 0.0
  %7452 = vmatprep.subr.mxu0 0.0
  %7453 = vmatpush1.msra.mxu0 0.0
  %7454 = vmatprep.subr.mxu0 0.0
  %7455 = vmatpush1.msra.mxu0 0.0
  %7456 = vmatprep.subr.mxu0 0.0
  %7457 = vmatpush1.msra.mxu0 0.0
  %7458 = vmatprep.subr.mxu0 0.0
  %7459 = vmatpush1.msra.mxu0 0.0
  %7460 = vmatprep.subr.mxu0 0.0
  %7461 = vmatpush1.msra.mxu0 0.0
  %7462 = vmatprep.subr.mxu0 0.0
  %7463 = vmatpush1.msra.mxu0 0.0
  %7464 = vmatprep.subr.mxu0 0.0
  %7465 = vmatpush1.msra.mxu0 0.0
  %7466 = vmatprep.subr.mxu0 0.0
  %7467 = vmatpush1.msra.mxu0 0.0
  %7468 = vmatprep.subr.mxu0 0.0
  %7469 = vmatpush1.msra.mxu0 0.0
  %7470 = vmatprep.subr.mxu0 0.0
  %7471 = vmatpush1.msra.mxu0 0.0
  %7472 = vmatprep.subr.mxu0 0.0
  %7473 = vmatpush1.msra.mxu0 0.0
  %7474 = vmatprep.subr.mxu0 0.0
  %7475 = vmatpush1.msra.mxu0 0.0
  %7476 = vmatprep.subr.mxu0 0.0
  %7477 = vmatpush1.msra.mxu0 0.0
  %7478 = vmatprep.subr.mxu0 0.0
  %7479 = vmatpush1.msra.mxu0 0.0
  %7480 = vmatprep.subr.mxu0 0.0
  %7481 = vmatpush1.msra.mxu0 0.0
  %7482 = vmatprep.subr.mxu0 0.0
  %7483 = vmatpush1.msra.mxu0 0.0
  %7484 = vmatprep.subr.mxu0 0.0
  %7485 = vmatpush1.msra.mxu0 0.0
  %7486 = vmatprep.subr.mxu0 0.0
  %7487 = vmatpush1.msra.mxu0 0.0
  %7488 = vmatprep.subr.mxu0 0.0
  %7489 = vmatpush1.msra.mxu0 0.0
  %7490 = vmatprep.subr.mxu0 0.0
  %7491 = vmatpush1.msra.mxu0 0.0
  %7492 = vmatprep.subr.mxu0 0.0
  %7493 = vmatpush1.msra.mxu0 0.0
  %7494 = vmatprep.subr.mxu0 0.0
  %7495 = vmatpush1.msra.mxu0 0.0
  %7496 = vmatprep.subr.mxu0 0.0
  %7497 = vmatpush1.msra.mxu0 0.0
  %7498 = vmatprep.subr.mxu0 0.0
  %7499 = vmatpush1.msra.mxu0 0.0
  %7500 = vmatprep.subr.mxu0 0.0
  %7501 = vmatpush1.msra.mxu0 0.0
  %7502 = vmatprep.subr.mxu0 0.0
  %7503 = vmatpush1.msra.mxu0 0.0
  %7504 = vmatprep.mubr.f32.mxu0 0.0
  %7505 = vmatmul.mubr.f32.gmra.mrb[0].mxu0 %v7366
  %v7506 = vpop.f32.mrb[0].mxu0
  %v7507 = vadd.f32 0.0, %v7506
  %v7508 = vpop.f32.mrb[0].mxu0
  %7509 = vdwg.mxu0
  %v7510 = vadd.f32 %v6762, %v7507
  %v7511 = vadd.f32 %v7510, %v7183
  %v7512 = vxor.u32 %v7511, 2147483648
  %v7513 = vmul.f32 %v7512, 1.442695
  %v7514 = vpow.pop %v7513
  %v7515 = vadd.f32 %v7514, 1.0
  %v7516 = vrcp.pop %v7515
  %v7517 = vmul.f32 1.0, %v7516
  %7518 = vmatprep.subr.mxu0 0.0
  %7519 = vmatpush1.msra.mxu0 %v7086
  %7520 = vmatprep.subr.mxu0 0.0
  %7521 = vmatpush1.msra.mxu0 %v7087
  %7522 = vmatprep.subr.mxu0 0.0
  %7523 = vmatpush1.msra.mxu0 %v7088
  %7524 = vmatprep.subr.mxu0 0.0
  %7525 = vmatpush1.msra.mxu0 %v7089
  %7526 = vmatprep.subr.mxu0 0.0
  %7527 = vmatpush1.msra.mxu0 0.0
  %7528 = vmatprep.subr.mxu0 0.0
  %7529 = vmatpush1.msra.mxu0 0.0
  %7530 = vmatprep.subr.mxu0 0.0
  %7531 = vmatpush1.msra.mxu0 0.0
  %7532 = vmatprep.subr.mxu0 0.0
  %7533 = vmatpush1.msra.mxu0 0.0
  %7534 = vmatprep.subr.mxu0 0.0
  %7535 = vmatpush1.msra.mxu0 0.0
  %7536 = vmatprep.subr.mxu0 0.0
  %7537 = vmatpush1.msra.mxu0 0.0
  %7538 = vmatprep.subr.mxu0 0.0
  %7539 = vmatpush1.msra.mxu0 0.0
  %7540 = vmatprep.subr.mxu0 0.0
  %7541 = vmatpush1.msra.mxu0 0.0
  %7542 = vmatprep.subr.mxu0 0.0
  %7543 = vmatpush1.msra.mxu0 0.0
  %7544 = vmatprep.subr.mxu0 0.0
  %7545 = vmatpush1.msra.mxu0 0.0
  %7546 = vmatprep.subr.mxu0 0.0
  %7547 = vmatpush1.msra.mxu0 0.0
  %7548 = vmatprep.subr.mxu0 0.0
  %7549 = vmatpush1.msra.mxu0 0.0
  %7550 = vmatprep.subr.mxu0 0.0
  %7551 = vmatpush1.msra.mxu0 0.0
  %7552 = vmatprep.subr.mxu0 0.0
  %7553 = vmatpush1.msra.mxu0 0.0
  %7554 = vmatprep.subr.mxu0 0.0
  %7555 = vmatpush1.msra.mxu0 0.0
  %7556 = vmatprep.subr.mxu0 0.0
  %7557 = vmatpush1.msra.mxu0 0.0
  %7558 = vmatprep.subr.mxu0 0.0
  %7559 = vmatpush1.msra.mxu0 0.0
  %7560 = vmatprep.subr.mxu0 0.0
  %7561 = vmatpush1.msra.mxu0 0.0
  %7562 = vmatprep.subr.mxu0 0.0
  %7563 = vmatpush1.msra.mxu0 0.0
  %7564 = vmatprep.subr.mxu0 0.0
  %7565 = vmatpush1.msra.mxu0 0.0
  %7566 = vmatprep.subr.mxu0 0.0
  %7567 = vmatpush1.msra.mxu0 0.0
  %7568 = vmatprep.subr.mxu0 0.0
  %7569 = vmatpush1.msra.mxu0 0.0
  %7570 = vmatprep.subr.mxu0 0.0
  %7571 = vmatpush1.msra.mxu0 0.0
  %7572 = vmatprep.subr.mxu0 0.0
  %7573 = vmatpush1.msra.mxu0 0.0
  %7574 = vmatprep.subr.mxu0 0.0
  %7575 = vmatpush1.msra.mxu0 0.0
  %7576 = vmatprep.subr.mxu0 0.0
  %7577 = vmatpush1.msra.mxu0 0.0
  %7578 = vmatprep.subr.mxu0 0.0
  %7579 = vmatpush1.msra.mxu0 0.0
  %7580 = vmatprep.subr.mxu0 0.0
  %7581 = vmatpush1.msra.mxu0 0.0
  %7582 = vmatprep.mubr.f32.mxu0 0.0
  %7583 = vmatmul.mubr.f32.gmra.mrb[0].mxu0 %v7366
  %v7584 = vpop.f32.mrb[0].mxu0
  %v7585 = vadd.f32 0.0, %v7584
  %v7586 = vpop.f32.mrb[0].mxu0
  %7587 = vdwg.mxu0
  %v7588 = vadd.f32 %v6921, %v7585
  %v7589 = vadd.f32 %v7588, %v7267
  %v7590 = vxor.u32 %v7589, 2147483648
  %v7591 = vmul.f32 %v7590, 1.442695
  %v7592 = vpow.pop %v7591
  %v7593 = vadd.f32 %v7592, 1.0
  %v7594 = vrcp.pop %v7593
  %v7595 = vmul.f32 1.0, %v7594
  %7596 = vmatprep.subr.mxu0 0.0
  %7597 = vmatpush1.msra.mxu0 %v7091
  %7598 = vmatprep.subr.mxu0 0.0
  %7599 = vmatpush1.msra.mxu0 %v7092
  %7600 = vmatprep.subr.mxu0 0.0
  %7601 = vmatpush1.msra.mxu0 %v7093
  %7602 = vmatprep.subr.mxu0 0.0
  %7603 = vmatpush1.msra.mxu0 %v7094
  %7604 = vmatprep.subr.mxu0 0.0
  %7605 = vmatpush1.msra.mxu0 0.0
  %7606 = vmatprep.subr.mxu0 0.0
  %7607 = vmatpush1.msra.mxu0 0.0
  %7608 = vmatprep.subr.mxu0 0.0
  %7609 = vmatpush1.msra.mxu0 0.0
  %7610 = vmatprep.subr.mxu0 0.0
  %7611 = vmatpush1.msra.mxu0 0.0
  %7612 = vmatprep.subr.mxu0 0.0
  %7613 = vmatpush1.msra.mxu0 0.0
  %7614 = vmatprep.subr.mxu0 0.0
  %7615 = vmatpush1.msra.mxu0 0.0
  %7616 = vmatprep.subr.mxu0 0.0
  %7617 = vmatpush1.msra.mxu0 0.0
  %7618 = vmatprep.subr.mxu0 0.0
  %7619 = vmatpush1.msra.mxu0 0.0
  %7620 = vmatprep.subr.mxu0 0.0
  %7621 = vmatpush1.msra.mxu0 0.0
  %7622 = vmatprep.subr.mxu0 0.0
  %7623 = vmatpush1.msra.mxu0 0.0
  %7624 = vmatprep.subr.mxu0 0.0
  %7625 = vmatpush1.msra.mxu0 0.0
  %7626 = vmatprep.subr.mxu0 0.0
  %7627 = vmatpush1.msra.mxu0 0.0
  %7628 = vmatprep.subr.mxu0 0.0
  %7629 = vmatpush1.msra.mxu0 0.0
  %7630 = vmatprep.subr.mxu0 0.0
  %7631 = vmatpush1.msra.mxu0 0.0
  %7632 = vmatprep.subr.mxu0 0.0
  %7633 = vmatpush1.msra.mxu0 0.0
  %7634 = vmatprep.subr.mxu0 0.0
  %7635 = vmatpush1.msra.mxu0 0.0
  %7636 = vmatprep.subr.mxu0 0.0
  %7637 = vmatpush1.msra.mxu0 0.0
  %7638 = vmatprep.subr.mxu0 0.0
  %7639 = vmatpush1.msra.mxu0 0.0
  %7640 = vmatprep.subr.mxu0 0.0
  %7641 = vmatpush1.msra.mxu0 0.0
  %7642 = vmatprep.subr.mxu0 0.0
  %7643 = vmatpush1.msra.mxu0 0.0
  %7644 = vmatprep.subr.mxu0 0.0
  %7645 = vmatpush1.msra.mxu0 0.0
  %7646 = vmatprep.subr.mxu0 0.0
  %7647 = vmatpush1.msra.mxu0 0.0
  %7648 = vmatprep.subr.mxu0 0.0
  %7649 = vmatpush1.msra.mxu0 0.0
  %7650 = vmatprep.subr.mxu0 0.0
  %7651 = vmatpush1.msra.mxu0 0.0
  %7652 = vmatprep.subr.mxu0 0.0
  %7653 = vmatpush1.msra.mxu0 0.0
  %7654 = vmatprep.subr.mxu0 0.0
  %7655 = vmatpush1.msra.mxu0 0.0
  %7656 = vmatprep.subr.mxu0 0.0
  %7657 = vmatpush1.msra.mxu0 0.0
  %7658 = vmatprep.subr.mxu0 0.0
  %7659 = vmatpush1.msra.mxu0 0.0
  %7660 = vmatprep.mubr.f32.mxu0 0.0
  %7661 = vmatmul.mubr.f32.gmra.mrb[0].mxu0 %v7366
  %v7662 = vpop.f32.mrb[0].mxu0
  %v7663 = vadd.f32 %v7280, %v7662
  %v7664 = vpop.f32.mrb[0].mxu0
  %7665 = vdwg.mxu0
  %v7666 = vmul.f32 %v7517, %v7663
  %v7667 = vadd.f32 %v7080, %v7666
  %v7668 = vtanh.pop %v7667
  %v7669 = vsub.f32 1.0, %v7595
  %v7670 = vmul.f32 %v7669, %v7668
  %v7671 = vmul.f32 %v7595, %v7358
  %v7672 = vadd.f32 %v7670, %v7671
  %v7674 = vsel %vm6519, %v7672, 0
  %7676 = vmatprep.subr.mxu0 0.0
  %7677 = vmatpush1.msra.mxu0 %v7100
  %7678 = vmatprep.subr.mxu0 0.0
  %7679 = vmatpush1.msra.mxu0 %v7101
  %7680 = vmatprep.subr.mxu0 0.0
  %7681 = vmatpush1.msra.mxu0 %v7102
  %7682 = vmatprep.subr.mxu0 0.0
  %7683 = vmatpush1.msra.mxu0 %v7103
  %7684 = vmatprep.subr.mxu0 0.0
  %7685 = vmatpush1.msra.mxu0 0.0
  %7686 = vmatprep.subr.mxu0 0.0
  %7687 = vmatpush1.msra.mxu0 0.0
  %7688 = vmatprep.subr.mxu0 0.0
  %7689 = vmatpush1.msra.mxu0 0.0
  %7690 = vmatprep.subr.mxu0 0.0
  %7691 = vmatpush1.msra.mxu0 0.0
  %7692 = vmatprep.subr.mxu0 0.0
  %7693 = vmatpush1.msra.mxu0 0.0
  %7694 = vmatprep.subr.mxu0 0.0
  %7695 = vmatpush1.msra.mxu0 0.0
  %7696 = vmatprep.subr.mxu0 0.0
  %7697 = vmatpush1.msra.mxu0 0.0
  %7698 = vmatprep.subr.mxu0 0.0
  %7699 = vmatpush1.msra.mxu0 0.0
  %7700 = vmatprep.subr.mxu0 0.0
  %7701 = vmatpush1.msra.mxu0 0.0
  %7702 = vmatprep.subr.mxu0 0.0
  %7703 = vmatpush1.msra.mxu0 0.0
  %7704 = vmatprep.subr.mxu0 0.0
  %7705 = vmatpush1.msra.mxu0 0.0
  %7706 = vmatprep.subr.mxu0 0.0
  %7707 = vmatpush1.msra.mxu0 0.0
  %7708 = vmatprep.subr.mxu0 0.0
  %7709 = vmatpush1.msra.mxu0 0.0
  %7710 = vmatprep.subr.mxu0 0.0
  %7711 = vmatpush1.msra.mxu0 0.0
  %7712 = vmatprep.subr.mxu0 0.0
  %7713 = vmatpush1.msra.mxu0 0.0
  %7714 = vmatprep.subr.mxu0 0.0
  %7715 = vmatpush1.msra.mxu0 0.0
  %7716 = vmatprep.subr.mxu0 0.0
  %7717 = vmatpush1.msra.mxu0 0.0
  %7718 = vmatprep.subr.mxu0 0.0
  %7719 = vmatpush1.msra.mxu0 0.0
  %7720 = vmatprep.subr.mxu0 0.0
  %7721 = vmatpush1.msra.mxu0 0.0
  %7722 = vmatprep.subr.mxu0 0.0
  %7723 = vmatpush1.msra.mxu0 0.0
  %7724 = vmatprep.subr.mxu0 0.0
  %7725 = vmatpush1.msra.mxu0 0.0
  %7726 = vmatprep.subr.mxu0 0.0
  %7727 = vmatpush1.msra.mxu0 0.0
  %7728 = vmatprep.subr.mxu0 0.0
  %7729 = vmatpush1.msra.mxu0 0.0
  %7730 = vmatprep.subr.mxu0 0.0
  %7731 = vmatpush1.msra.mxu0 0.0
  %7732 = vmatprep.subr.mxu0 0.0
  %7733 = vmatpush1.msra.mxu0 0.0
  %7734 = vmatprep.subr.mxu0 0.0
  %7735 = vmatpush1.msra.mxu0 0.0
  %7736 = vmatprep.subr.mxu0 0.0
  %7737 = vmatpush1.msra.mxu0 0.0
  %7738 = vmatprep.subr.mxu0 0.0
  %7739 = vmatpush1.msra.mxu0 0.0
  %7740 = vmatprep.mubr.f32.mxu0 0.0
  %7741 = vmatmul.mubr.f32.gmra.mrb[0].mxu0 %v7674
  %v7742 = vpop.f32.mrb[0].mxu0
  %v7743 = vadd.f32 %v7363, %v7742
  %v7744 = vpop.f32.mrb[0].mxu0
  %7745 = vdwg.mxu0
  %s7746 = scalar_lea.vmem %s17, 2
  %7747 = vst.msk [vmem:[%s7746] sm:$0x3] %vm7438, %v7743
  %7748 = vmatprep.subr.mxu0 0.0
  %7749 = vmatpush1.msra.mxu0 %v7081
  %7750 = vmatprep.subr.mxu0 0.0
  %7751 = vmatpush1.msra.mxu0 %v7082
  %7752 = vmatprep.subr.mxu0 0.0
  %7753 = vmatpush1.msra.mxu0 %v7083
  %7754 = vmatprep.subr.mxu0 0.0
  %7755 = vmatpush1.msra.mxu0 %v7084
  %7756 = vmatprep.subr.mxu0 0.0
  %7757 = vmatpush1.msra.mxu0 0.0
  %7758 = vmatprep.subr.mxu0 0.0
  %7759 = vmatpush1.msra.mxu0 0.0
  %7760 = vmatprep.subr.mxu0 0.0
  %7761 = vmatpush1.msra.mxu0 0.0
  %7762 = vmatprep.subr.mxu0 0.0
  %7763 = vmatpush1.msra.mxu0 0.0
  %7764 = vmatprep.subr.mxu0 0.0
  %7765 = vmatpush1.msra.mxu0 0.0
  %7766 = vmatprep.subr.mxu0 0.0
  %7767 = vmatpush1.msra.mxu0 0.0
  %7768 = vmatprep.subr.mxu0 0.0
  %7769 = vmatpush1.msra.mxu0 0.0
  %7770 = vmatprep.subr.mxu0 0.0
  %7771 = vmatpush1.msra.mxu0 0.0
  %7772 = vmatprep.subr.mxu0 0.0
  %7773 = vmatpush1.msra.mxu0 0.0
  %7774 = vmatprep.subr.mxu0 0.0
  %7775 = vmatpush1.msra.mxu0 0.0
  %7776 = vmatprep.subr.mxu0 0.0
  %7777 = vmatpush1.msra.mxu0 0.0
  %7778 = vmatprep.subr.mxu0 0.0
  %7779 = vmatpush1.msra.mxu0 0.0
  %7780 = vmatprep.subr.mxu0 0.0
  %7781 = vmatpush1.msra.mxu0 0.0
  %7782 = vmatprep.subr.mxu0 0.0
  %7783 = vmatpush1.msra.mxu0 0.0
  %7784 = vmatprep.subr.mxu0 0.0
  %7785 = vmatpush1.msra.mxu0 0.0
  %7786 = vmatprep.subr.mxu0 0.0
  %7787 = vmatpush1.msra.mxu0 0.0
  %7788 = vmatprep.subr.mxu0 0.0
  %7789 = vmatpush1.msra.mxu0 0.0
  %7790 = vmatprep.subr.mxu0 0.0
  %7791 = vmatpush1.msra.mxu0 0.0
  %7792 = vmatprep.subr.mxu0 0.0
  %7793 = vmatpush1.msra.mxu0 0.0
  %7794 = vmatprep.subr.mxu0 0.0
  %7795 = vmatpush1.msra.mxu0 0.0
  %7796 = vmatprep.subr.mxu0 0.0
  %7797 = vmatpush1.msra.mxu0 0.0
  %7798 = vmatprep.subr.mxu0 0.0
  %7799 = vmatpush1.msra.mxu0 0.0
  %7800 = vmatprep.subr.mxu0 0.0
  %7801 = vmatpush1.msra.mxu0 0.0
  %7802 = vmatprep.subr.mxu0 0.0
  %7803 = vmatpush1.msra.mxu0 0.0
  %7804 = vmatprep.subr.mxu0 0.0
  %7805 = vmatpush1.msra.mxu0 0.0
  %7806 = vmatprep.subr.mxu0 0.0
  %7807 = vmatpush1.msra.mxu0 0.0
  %7808 = vmatprep.subr.mxu0 0.0
  %7809 = vmatpush1.msra.mxu0 0.0
  %7810 = vmatprep.subr.mxu0 0.0
  %7811 = vmatpush1.msra.mxu0 0.0
  %7812 = vmatprep.mubr.f32.mxu0 0.0
  %7813 = vmatmul.mubr.f32.gmra.mrb[0].mxu0 %v7674
  %v7814 = vpop.f32.mrb[0].mxu0
  %v7815 = vadd.f32 0.0, %v7814
  %v7816 = vpop.f32.mrb[0].mxu0
  %7817 = vdwg.mxu0
  %v7818 = vadd.f32 %v6762, %v7815
  %v7819 = vadd.f32 %v7818, %v7183
  %v7820 = vxor.u32 %v7819, 2147483648
  %v7821 = vmul.f32 %v7820, 1.442695
  %v7822 = vpow.pop %v7821
  %v7823 = vadd.f32 %v7822, 1.0
  %v7824 = vrcp.pop %v7823
  %v7825 = vmul.f32 1.0, %v7824
  %7826 = vmatprep.subr.mxu0 0.0
  %7827 = vmatpush1.msra.mxu0 %v7086
  %7828 = vmatprep.subr.mxu0 0.0
  %7829 = vmatpush1.msra.mxu0 %v7087
  %7830 = vmatprep.subr.mxu0 0.0
  %7831 = vmatpush1.msra.mxu0 %v7088
  %7832 = vmatprep.subr.mxu0 0.0
  %7833 = vmatpush1.msra.mxu0 %v7089
  %7834 = vmatprep.subr.mxu0 0.0
  %7835 = vmatpush1.msra.mxu0 0.0
  %7836 = vmatprep.subr.mxu0 0.0
  %7837 = vmatpush1.msra.mxu0 0.0
  %7838 = vmatprep.subr.mxu0 0.0
  %7839 = vmatpush1.msra.mxu0 0.0
  %7840 = vmatprep.subr.mxu0 0.0
  %7841 = vmatpush1.msra.mxu0 0.0
  %7842 = vmatprep.subr.mxu0 0.0
  %7843 = vmatpush1.msra.mxu0 0.0
  %7844 = vmatprep.subr.mxu0 0.0
  %7845 = vmatpush1.msra.mxu0 0.0
  %7846 = vmatprep.subr.mxu0 0.0
  %7847 = vmatpush1.msra.mxu0 0.0
  %7848 = vmatprep.subr.mxu0 0.0
  %7849 = vmatpush1.msra.mxu0 0.0
  %7850 = vmatprep.subr.mxu0 0.0
  %7851 = vmatpush1.msra.mxu0 0.0
  %7852 = vmatprep.subr.mxu0 0.0
  %7853 = vmatpush1.msra.mxu0 0.0
  %7854 = vmatprep.subr.mxu0 0.0
  %7855 = vmatpush1.msra.mxu0 0.0
  %7856 = vmatprep.subr.mxu0 0.0
  %7857 = vmatpush1.msra.mxu0 0.0
  %7858 = vmatprep.subr.mxu0 0.0
  %7859 = vmatpush1.msra.mxu0 0.0
  %7860 = vmatprep.subr.mxu0 0.0
  %7861 = vmatpush1.msra.mxu0 0.0
  %7862 = vmatprep.subr.mxu0 0.0
  %7863 = vmatpush1.msra.mxu0 0.0
  %7864 = vmatprep.subr.mxu0 0.0
  %7865 = vmatpush1.msra.mxu0 0.0
  %7866 = vmatprep.subr.mxu0 0.0
  %7867 = vmatpush1.msra.mxu0 0.0
  %7868 = vmatprep.subr.mxu0 0.0
  %7869 = vmatpush1.msra.mxu0 0.0
  %7870 = vmatprep.subr.mxu0 0.0
  %7871 = vmatpush1.msra.mxu0 0.0
  %7872 = vmatprep.subr.mxu0 0.0
  %7873 = vmatpush1.msra.mxu0 0.0
  %7874 = vmatprep.subr.mxu0 0.0
  %7875 = vmatpush1.msra.mxu0 0.0
  %7876 = vmatprep.subr.mxu0 0.0
  %7877 = vmatpush1.msra.mxu0 0.0
  %7878 = vmatprep.subr.mxu0 0.0
  %7879 = vmatpush1.msra.mxu0 0.0
  %7880 = vmatprep.subr.mxu0 0.0
  %7881 = vmatpush1.msra.mxu0 0.0
  %7882 = vmatprep.subr.mxu0 0.0
  %7883 = vmatpush1.msra.mxu0 0.0
  %7884 = vmatprep.subr.mxu0 0.0
  %7885 = vmatpush1.msra.mxu0 0.0
  %7886 = vmatprep.subr.mxu0 0.0
  %7887 = vmatpush1.msra.mxu0 0.0
  %7888 = vmatprep.subr.mxu0 0.0
  %7889 = vmatpush1.msra.mxu0 0.0
  %7890 = vmatprep.mubr.f32.mxu0 0.0
  %7891 = vmatmul.mubr.f32.gmra.mrb[0].mxu0 %v7674
  %v7892 = vpop.f32.mrb[0].mxu0
  %v7893 = vadd.f32 0.0, %v7892
  %v7894 = vpop.f32.mrb[0].mxu0
  %7895 = vdwg.mxu0
  %v7896 = vadd.f32 %v6921, %v7893
  %v7897 = vadd.f32 %v7896, %v7267
  %v7898 = vxor.u32 %v7897, 2147483648
  %v7899 = vmul.f32 %v7898, 1.442695
  %v7900 = vpow.pop %v7899
  %v7901 = vadd.f32 %v7900, 1.0
  %v7902 = vrcp.pop %v7901
  %v7903 = vmul.f32 1.0, %v7902
  %7904 = vmatprep.subr.mxu0 0.0
  %7905 = vmatpush1.msra.mxu0 %v7091
  %7906 = vmatprep.subr.mxu0 0.0
  %7907 = vmatpush1.msra.mxu0 %v7092
  %7908 = vmatprep.subr.mxu0 0.0
  %7909 = vmatpush1.msra.mxu0 %v7093
  %7910 = vmatprep.subr.mxu0 0.0
  %7911 = vmatpush1.msra.mxu0 %v7094
  %7912 = vmatprep.subr.mxu0 0.0
  %7913 = vmatpush1.msra.mxu0 0.0
  %7914 = vmatprep.subr.mxu0 0.0
  %7915 = vmatpush1.msra.mxu0 0.0
  %7916 = vmatprep.subr.mxu0 0.0
  %7917 = vmatpush1.msra.mxu0 0.0
  %7918 = vmatprep.subr.mxu0 0.0
  %7919 = vmatpush1.msra.mxu0 0.0
  %7920 = vmatprep.subr.mxu0 0.0
  %7921 = vmatpush1.msra.mxu0 0.0
  %7922 = vmatprep.subr.mxu0 0.0
  %7923 = vmatpush1.msra.mxu0 0.0
  %7924 = vmatprep.subr.mxu0 0.0
  %7925 = vmatpush1.msra.mxu0 0.0
  %7926 = vmatprep.subr.mxu0 0.0
  %7927 = vmatpush1.msra.mxu0 0.0
  %7928 = vmatprep.subr.mxu0 0.0
  %7929 = vmatpush1.msra.mxu0 0.0
  %7930 = vmatprep.subr.mxu0 0.0
  %7931 = vmatpush1.msra.mxu0 0.0
  %7932 = vmatprep.subr.mxu0 0.0
  %7933 = vmatpush1.msra.mxu0 0.0
  %7934 = vmatprep.subr.mxu0 0.0
  %7935 = vmatpush1.msra.mxu0 0.0
  %7936 = vmatprep.subr.mxu0 0.0
  %7937 = vmatpush1.msra.mxu0 0.0
  %7938 = vmatprep.subr.mxu0 0.0
  %7939 = vmatpush1.msra.mxu0 0.0
  %7940 = vmatprep.subr.mxu0 0.0
  %7941 = vmatpush1.msra.mxu0 0.0
  %7942 = vmatprep.subr.mxu0 0.0
  %7943 = vmatpush1.msra.mxu0 0.0
  %7944 = vmatprep.subr.mxu0 0.0
  %7945 = vmatpush1.msra.mxu0 0.0
  %7946 = vmatprep.subr.mxu0 0.0
  %7947 = vmatpush1.msra.mxu0 0.0
  %7948 = vmatprep.subr.mxu0 0.0
  %7949 = vmatpush1.msra.mxu0 0.0
  %7950 = vmatprep.subr.mxu0 0.0
  %7951 = vmatpush1.msra.mxu0 0.0
  %7952 = vmatprep.subr.mxu0 0.0
  %7953 = vmatpush1.msra.mxu0 0.0
  %7954 = vmatprep.subr.mxu0 0.0
  %7955 = vmatpush1.msra.mxu0 0.0
  %7956 = vmatprep.subr.mxu0 0.0
  %7957 = vmatpush1.msra.mxu0 0.0
  %7958 = vmatprep.subr.mxu0 0.0
  %7959 = vmatpush1.msra.mxu0 0.0
  %7960 = vmatprep.subr.mxu0 0.0
  %7961 = vmatpush1.msra.mxu0 0.0
  %7962 = vmatprep.subr.mxu0 0.0
  %7963 = vmatpush1.msra.mxu0 0.0
  %7964 = vmatprep.subr.mxu0 0.0
  %7965 = vmatpush1.msra.mxu0 0.0
  %7966 = vmatprep.subr.mxu0 0.0
  %7967 = vmatpush1.msra.mxu0 0.0
  %7968 = vmatprep.mubr.f32.mxu0 0.0
  %7969 = vmatmul.mubr.f32.gmra.mrb[0].mxu0 %v7674
  %v7970 = vpop.f32.mrb[0].mxu0
  %v7971 = vadd.f32 %v7280, %v7970
  %v7972 = vpop.f32.mrb[0].mxu0
  %7973 = vdwg.mxu0
  %v7974 = vmul.f32 %v7825, %v7971
  %v7975 = vadd.f32 %v7080, %v7974
  %v7976 = vtanh.pop %v7975
  %v7977 = vsub.f32 1.0, %v7903
  %v7978 = vmul.f32 %v7977, %v7976
  %v7979 = vmul.f32 %v7903, %v7672
  %v7980 = vadd.f32 %v7978, %v7979
  %v7982 = vsel %vm6519, %v7980, 0
  %7984 = vmatprep.subr.mxu0 0.0
  %7985 = vmatpush1.msra.mxu0 %v7100
  %7986 = vmatprep.subr.mxu0 0.0
  %7987 = vmatpush1.msra.mxu0 %v7101
  %7988 = vmatprep.subr.mxu0 0.0
  %7989 = vmatpush1.msra.mxu0 %v7102
  %7990 = vmatprep.subr.mxu0 0.0
  %7991 = vmatpush1.msra.mxu0 %v7103
  %7992 = vmatprep.subr.mxu0 0.0
  %7993 = vmatpush1.msra.mxu0 0.0
  %7994 = vmatprep.subr.mxu0 0.0
  %7995 = vmatpush1.msra.mxu0 0.0
  %7996 = vmatprep.subr.mxu0 0.0
  %7997 = vmatpush1.msra.mxu0 0.0
  %7998 = vmatprep.subr.mxu0 0.0
  %7999 = vmatpush1.msra.mxu0 0.0
  %8000 = vmatprep.subr.mxu0 0.0
  %8001 = vmatpush1.msra.mxu0 0.0
  %8002 = vmatprep.subr.mxu0 0.0
  %8003 = vmatpush1.msra.mxu0 0.0
  %8004 = vmatprep.subr.mxu0 0.0
  %8005 = vmatpush1.msra.mxu0 0.0
  %8006 = vmatprep.subr.mxu0 0.0
  %8007 = vmatpush1.msra.mxu0 0.0
  %8008 = vmatprep.subr.mxu0 0.0
  %8009 = vmatpush1.msra.mxu0 0.0
  %8010 = vmatprep.subr.mxu0 0.0
  %8011 = vmatpush1.msra.mxu0 0.0
  %8012 = vmatprep.subr.mxu0 0.0
  %8013 = vmatpush1.msra.mxu0 0.0
  %8014 = vmatprep.subr.mxu0 0.0
  %8015 = vmatpush1.msra.mxu0 0.0
  %8016 = vmatprep.subr.mxu0 0.0
  %8017 = vmatpush1.msra.mxu0 0.0
  %8018 = vmatprep.subr.mxu0 0.0
  %8019 = vmatpush1.msra.mxu0 0.0
  %8020 = vmatprep.subr.mxu0 0.0
  %8021 = vmatpush1.msra.mxu0 0.0
  %8022 = vmatprep.subr.mxu0 0.0
  %8023 = vmatpush1.msra.mxu0 0.0
  %8024 = vmatprep.subr.mxu0 0.0
  %8025 = vmatpush1.msra.mxu0 0.0
  %8026 = vmatprep.subr.mxu0 0.0
  %8027 = vmatpush1.msra.mxu0 0.0
  %8028 = vmatprep.subr.mxu0 0.0
  %8029 = vmatpush1.msra.mxu0 0.0
  %8030 = vmatprep.subr.mxu0 0.0
  %8031 = vmatpush1.msra.mxu0 0.0
  %8032 = vmatprep.subr.mxu0 0.0
  %8033 = vmatpush1.msra.mxu0 0.0
  %8034 = vmatprep.subr.mxu0 0.0
  %8035 = vmatpush1.msra.mxu0 0.0
  %8036 = vmatprep.subr.mxu0 0.0
  %8037 = vmatpush1.msra.mxu0 0.0
  %8038 = vmatprep.subr.mxu0 0.0
  %8039 = vmatpush1.msra.mxu0 0.0
  %8040 = vmatprep.subr.mxu0 0.0
  %8041 = vmatpush1.msra.mxu0 0.0
  %8042 = vmatprep.subr.mxu0 0.0
  %8043 = vmatpush1.msra.mxu0 0.0
  %8044 = vmatprep.subr.mxu0 0.0
  %8045 = vmatpush1.msra.mxu0 0.0
  %8046 = vmatprep.subr.mxu0 0.0
  %8047 = vmatpush1.msra.mxu0 0.0
  %8048 = vmatprep.mubr.f32.mxu0 0.0
  %8049 = vmatmul.mubr.f32.gmra.mrb[0].mxu0 %v7982
  %v8050 = vpop.f32.mrb[0].mxu0
  %v8051 = vadd.f32 %v7363, %v8050
  %v8052 = vpop.f32.mrb[0].mxu0
  %8053 = vdwg.mxu0
  %s8054 = scalar_lea.vmem %s17, 4
  %8055 = vst.msk [vmem:[%s8054] sm:$0x3] %vm7438, %v8051
  %8056 = vmatprep.subr.mxu0 0.0
  %8057 = vmatpush1.msra.mxu0 %v7081
  %8058 = vmatprep.subr.mxu0 0.0
  %8059 = vmatpush1.msra.mxu0 %v7082
  %8060 = vmatprep.subr.mxu0 0.0
  %8061 = vmatpush1.msra.mxu0 %v7083
  %8062 = vmatprep.subr.mxu0 0.0
  %8063 = vmatpush1.msra.mxu0 %v7084
  %8064 = vmatprep.subr.mxu0 0.0
  %8065 = vmatpush1.msra.mxu0 0.0
  %8066 = vmatprep.subr.mxu0 0.0
  %8067 = vmatpush1.msra.mxu0 0.0
  %8068 = vmatprep.subr.mxu0 0.0
  %8069 = vmatpush1.msra.mxu0 0.0
  %8070 = vmatprep.subr.mxu0 0.0
  %8071 = vmatpush1.msra.mxu0 0.0
  %8072 = vmatprep.subr.mxu0 0.0
  %8073 = vmatpush1.msra.mxu0 0.0
  %8074 = vmatprep.subr.mxu0 0.0
  %8075 = vmatpush1.msra.mxu0 0.0
  %8076 = vmatprep.subr.mxu0 0.0
  %8077 = vmatpush1.msra.mxu0 0.0
  %8078 = vmatprep.subr.mxu0 0.0
  %8079 = vmatpush1.msra.mxu0 0.0
  %8080 = vmatprep.subr.mxu0 0.0
  %8081 = vmatpush1.msra.mxu0 0.0
  %8082 = vmatprep.subr.mxu0 0.0
  %8083 = vmatpush1.msra.mxu0 0.0
  %8084 = vmatprep.subr.mxu0 0.0
  %8085 = vmatpush1.msra.mxu0 0.0
  %8086 = vmatprep.subr.mxu0 0.0
  %8087 = vmatpush1.msra.mxu0 0.0
  %8088 = vmatprep.subr.mxu0 0.0
  %8089 = vmatpush1.msra.mxu0 0.0
  %8090 = vmatprep.subr.mxu0 0.0
  %8091 = vmatpush1.msra.mxu0 0.0
  %8092 = vmatprep.subr.mxu0 0.0
  %8093 = vmatpush1.msra.mxu0 0.0
  %8094 = vmatprep.subr.mxu0 0.0
  %8095 = vmatpush1.msra.mxu0 0.0
  %8096 = vmatprep.subr.mxu0 0.0
  %8097 = vmatpush1.msra.mxu0 0.0
  %8098 = vmatprep.subr.mxu0 0.0
  %8099 = vmatpush1.msra.mxu0 0.0
  %8100 = vmatprep.subr.mxu0 0.0
  %8101 = vmatpush1.msra.mxu0 0.0
  %8102 = vmatprep.subr.mxu0 0.0
  %8103 = vmatpush1.msra.mxu0 0.0
  %8104 = vmatprep.subr.mxu0 0.0
  %8105 = vmatpush1.msra.mxu0 0.0
  %8106 = vmatprep.subr.mxu0 0.0
  %8107 = vmatpush1.msra.mxu0 0.0
  %8108 = vmatprep.subr.mxu0 0.0
  %8109 = vmatpush1.msra.mxu0 0.0
  %8110 = vmatprep.subr.mxu0 0.0
  %8111 = vmatpush1.msra.mxu0 0.0
  %8112 = vmatprep.subr.mxu0 0.0
  %8113 = vmatpush1.msra.mxu0 0.0
  %8114 = vmatprep.subr.mxu0 0.0
  %8115 = vmatpush1.msra.mxu0 0.0
  %8116 = vmatprep.subr.mxu0 0.0
  %8117 = vmatpush1.msra.mxu0 0.0
  %8118 = vmatprep.subr.mxu0 0.0
  %8119 = vmatpush1.msra.mxu0 0.0
  %8120 = vmatprep.mubr.f32.mxu0 0.0
  %8121 = vmatmul.mubr.f32.gmra.mrb[0].mxu0 %v7982
  %v8122 = vpop.f32.mrb[0].mxu0
  %v8123 = vadd.f32 0.0, %v8122
  %v8124 = vpop.f32.mrb[0].mxu0
  %8125 = vdwg.mxu0
  %v8126 = vadd.f32 %v6762, %v8123
  %v8127 = vadd.f32 %v8126, %v7183
  %v8128 = vxor.u32 %v8127, 2147483648
  %v8129 = vmul.f32 %v8128, 1.442695
  %v8130 = vpow.pop %v8129
  %v8131 = vadd.f32 %v8130, 1.0
  %v8132 = vrcp.pop %v8131
  %v8133 = vmul.f32 1.0, %v8132
  %8134 = vmatprep.subr.mxu0 0.0
  %8135 = vmatpush1.msra.mxu0 %v7086
  %8136 = vmatprep.subr.mxu0 0.0
  %8137 = vmatpush1.msra.mxu0 %v7087
  %8138 = vmatprep.subr.mxu0 0.0
  %8139 = vmatpush1.msra.mxu0 %v7088
  %8140 = vmatprep.subr.mxu0 0.0
  %8141 = vmatpush1.msra.mxu0 %v7089
  %8142 = vmatprep.subr.mxu0 0.0
  %8143 = vmatpush1.msra.mxu0 0.0
  %8144 = vmatprep.subr.mxu0 0.0
  %8145 = vmatpush1.msra.mxu0 0.0
  %8146 = vmatprep.subr.mxu0 0.0
  %8147 = vmatpush1.msra.mxu0 0.0
  %8148 = vmatprep.subr.mxu0 0.0
  %8149 = vmatpush1.msra.mxu0 0.0
  %8150 = vmatprep.subr.mxu0 0.0
  %8151 = vmatpush1.msra.mxu0 0.0
  %8152 = vmatprep.subr.mxu0 0.0
  %8153 = vmatpush1.msra.mxu0 0.0
  %8154 = vmatprep.subr.mxu0 0.0
  %8155 = vmatpush1.msra.mxu0 0.0
  %8156 = vmatprep.subr.mxu0 0.0
  %8157 = vmatpush1.msra.mxu0 0.0
  %8158 = vmatprep.subr.mxu0 0.0
  %8159 = vmatpush1.msra.mxu0 0.0
  %8160 = vmatprep.subr.mxu0 0.0
  %8161 = vmatpush1.msra.mxu0 0.0
  %8162 = vmatprep.subr.mxu0 0.0
  %8163 = vmatpush1.msra.mxu0 0.0
  %8164 = vmatprep.subr.mxu0 0.0
  %8165 = vmatpush1.msra.mxu0 0.0
  %8166 = vmatprep.subr.mxu0 0.0
  %8167 = vmatpush1.msra.mxu0 0.0
  %8168 = vmatprep.subr.mxu0 0.0
  %8169 = vmatpush1.msra.mxu0 0.0
  %8170 = vmatprep.subr.mxu0 0.0
  %8171 = vmatpush1.msra.mxu0 0.0
  %8172 = vmatprep.subr.mxu0 0.0
  %8173 = vmatpush1.msra.mxu0 0.0
  %8174 = vmatprep.subr.mxu0 0.0
  %8175 = vmatpush1.msra.mxu0 0.0
  %8176 = vmatprep.subr.mxu0 0.0
  %8177 = vmatpush1.msra.mxu0 0.0
  %8178 = vmatprep.subr.mxu0 0.0
  %8179 = vmatpush1.msra.mxu0 0.0
  %8180 = vmatprep.subr.mxu0 0.0
  %8181 = vmatpush1.msra.mxu0 0.0
  %8182 = vmatprep.subr.mxu0 0.0
  %8183 = vmatpush1.msra.mxu0 0.0
  %8184 = vmatprep.subr.mxu0 0.0
  %8185 = vmatpush1.msra.mxu0 0.0
  %8186 = vmatprep.subr.mxu0 0.0
  %8187 = vmatpush1.msra.mxu0 0.0
  %8188 = vmatprep.subr.mxu0 0.0
  %8189 = vmatpush1.msra.mxu0 0.0
  %8190 = vmatprep.subr.mxu0 0.0
  %8191 = vmatpush1.msra.mxu0 0.0
  %8192 = vmatprep.subr.mxu0 0.0
  %8193 = vmatpush1.msra.mxu0 0.0
  %8194 = vmatprep.subr.mxu0 0.0
  %8195 = vmatpush1.msra.mxu0 0.0
  %8196 = vmatprep.subr.mxu0 0.0
  %8197 = vmatpush1.msra.mxu0 0.0
  %8198 = vmatprep.mubr.f32.mxu0 0.0
  %8199 = vmatmul.mubr.f32.gmra.mrb[0].mxu0 %v7982
  %v8200 = vpop.f32.mrb[0].mxu0
  %v8201 = vadd.f32 0.0, %v8200
  %v8202 = vpop.f32.mrb[0].mxu0
  %8203 = vdwg.mxu0
  %v8204 = vadd.f32 %v6921, %v8201
  %v8205 = vadd.f32 %v8204, %v7267
  %v8206 = vxor.u32 %v8205, 2147483648
  %v8207 = vmul.f32 %v8206, 1.442695
  %v8208 = vpow.pop %v8207
  %v8209 = vadd.f32 %v8208, 1.0
  %v8210 = vrcp.pop %v8209
  %v8211 = vmul.f32 1.0, %v8210
  %8212 = vmatprep.subr.mxu0 0.0
  %8213 = vmatpush1.msra.mxu0 %v7091
  %8214 = vmatprep.subr.mxu0 0.0
  %8215 = vmatpush1.msra.mxu0 %v7092
  %8216 = vmatprep.subr.mxu0 0.0
  %8217 = vmatpush1.msra.mxu0 %v7093
  %8218 = vmatprep.subr.mxu0 0.0
  %8219 = vmatpush1.msra.mxu0 %v7094
  %8220 = vmatprep.subr.mxu0 0.0
  %8221 = vmatpush1.msra.mxu0 0.0
  %8222 = vmatprep.subr.mxu0 0.0
  %8223 = vmatpush1.msra.mxu0 0.0
  %8224 = vmatprep.subr.mxu0 0.0
  %8225 = vmatpush1.msra.mxu0 0.0
  %8226 = vmatprep.subr.mxu0 0.0
  %8227 = vmatpush1.msra.mxu0 0.0
  %8228 = vmatprep.subr.mxu0 0.0
  %8229 = vmatpush1.msra.mxu0 0.0
  %8230 = vmatprep.subr.mxu0 0.0
  %8231 = vmatpush1.msra.mxu0 0.0
  %8232 = vmatprep.subr.mxu0 0.0
  %8233 = vmatpush1.msra.mxu0 0.0
  %8234 = vmatprep.subr.mxu0 0.0
  %8235 = vmatpush1.msra.mxu0 0.0
  %8236 = vmatprep.subr.mxu0 0.0
  %8237 = vmatpush1.msra.mxu0 0.0
  %8238 = vmatprep.subr.mxu0 0.0
  %8239 = vmatpush1.msra.mxu0 0.0
  %8240 = vmatprep.subr.mxu0 0.0
  %8241 = vmatpush1.msra.mxu0 0.0
  %8242 = vmatprep.subr.mxu0 0.0
  %8243 = vmatpush1.msra.mxu0 0.0
  %8244 = vmatprep.subr.mxu0 0.0
  %8245 = vmatpush1.msra.mxu0 0.0
  %8246 = vmatprep.subr.mxu0 0.0
  %8247 = vmatpush1.msra.mxu0 0.0
  %8248 = vmatprep.subr.mxu0 0.0
  %8249 = vmatpush1.msra.mxu0 0.0
  %8250 = vmatprep.subr.mxu0 0.0
  %8251 = vmatpush1.msra.mxu0 0.0
  %8252 = vmatprep.subr.mxu0 0.0
  %8253 = vmatpush1.msra.mxu0 0.0
  %8254 = vmatprep.subr.mxu0 0.0
  %8255 = vmatpush1.msra.mxu0 0.0
  %8256 = vmatprep.subr.mxu0 0.0
  %8257 = vmatpush1.msra.mxu0 0.0
  %8258 = vmatprep.subr.mxu0 0.0
  %8259 = vmatpush1.msra.mxu0 0.0
  %8260 = vmatprep.subr.mxu0 0.0
  %8261 = vmatpush1.msra.mxu0 0.0
  %8262 = vmatprep.subr.mxu0 0.0
  %8263 = vmatpush1.msra.mxu0 0.0
  %8264 = vmatprep.subr.mxu0 0.0
  %8265 = vmatpush1.msra.mxu0 0.0
  %8266 = vmatprep.subr.mxu0 0.0
  %8267 = vmatpush1.msra.mxu0 0.0
  %8268 = vmatprep.subr.mxu0 0.0
  %8269 = vmatpush1.msra.mxu0 0.0
  %8270 = vmatprep.subr.mxu0 0.0
  %8271 = vmatpush1.msra.mxu0 0.0
  %8272 = vmatprep.subr.mxu0 0.0
  %8273 = vmatpush1.msra.mxu0 0.0
  %8274 = vmatprep.subr.mxu0 0.0
  %8275 = vmatpush1.msra.mxu0 0.0
  %8276 = vmatprep.mubr.f32.mxu0 0.0
  %8277 = vmatmul.mubr.f32.gmra.mrb[0].mxu0 %v7982
  %v8278 = vpop.f32.mrb[0].mxu0
  %v8279 = vadd.f32 %v7280, %v8278
  %v8280 = vpop.f32.mrb[0].mxu0
  %8281 = vdwg.mxu0
  %v8282 = vmul.f32 %v8133, %v8279
  %v8283 = vadd.f32 %v7080, %v8282
  %v8284 = vtanh.pop %v8283
  %v8285 = vsub.f32 1.0, %v8211
  %v8286 = vmul.f32 %v8285, %v8284
  %v8287 = vmul.f32 %v8211, %v7980
  %v8288 = vadd.f32 %v8286, %v8287
  %v8290 = vsel %vm6519, %v8288, 0
  %8292 = vmatprep.subr.mxu0 0.0
  %8293 = vmatpush1.msra.mxu0 %v7100
  %8294 = vmatprep.subr.mxu0 0.0
  %8295 = vmatpush1.msra.mxu0 %v7101
  %8296 = vmatprep.subr.mxu0 0.0
  %8297 = vmatpush1.msra.mxu0 %v7102
  %8298 = vmatprep.subr.mxu0 0.0
  %8299 = vmatpush1.msra.mxu0 %v7103
  %8300 = vmatprep.subr.mxu0 0.0
  %8301 = vmatpush1.msra.mxu0 0.0
  %8302 = vmatprep.subr.mxu0 0.0
  %8303 = vmatpush1.msra.mxu0 0.0
  %8304 = vmatprep.subr.mxu0 0.0
  %8305 = vmatpush1.msra.mxu0 0.0
  %8306 = vmatprep.subr.mxu0 0.0
  %8307 = vmatpush1.msra.mxu0 0.0
  %8308 = vmatprep.subr.mxu0 0.0
  %8309 = vmatpush1.msra.mxu0 0.0
  %8310 = vmatprep.subr.mxu0 0.0
  %8311 = vmatpush1.msra.mxu0 0.0
  %8312 = vmatprep.subr.mxu0 0.0
  %8313 = vmatpush1.msra.mxu0 0.0
  %8314 = vmatprep.subr.mxu0 0.0
  %8315 = vmatpush1.msra.mxu0 0.0
  %8316 = vmatprep.subr.mxu0 0.0
  %8317 = vmatpush1.msra.mxu0 0.0
  %8318 = vmatprep.subr.mxu0 0.0
  %8319 = vmatpush1.msra.mxu0 0.0
  %8320 = vmatprep.subr.mxu0 0.0
  %8321 = vmatpush1.msra.mxu0 0.0
  %8322 = vmatprep.subr.mxu0 0.0
  %8323 = vmatpush1.msra.mxu0 0.0
  %8324 = vmatprep.subr.mxu0 0.0
  %8325 = vmatpush1.msra.mxu0 0.0
  %8326 = vmatprep.subr.mxu0 0.0
  %8327 = vmatpush1.msra.mxu0 0.0
  %8328 = vmatprep.subr.mxu0 0.0
  %8329 = vmatpush1.msra.mxu0 0.0
  %8330 = vmatprep.subr.mxu0 0.0
  %8331 = vmatpush1.msra.mxu0 0.0
  %8332 = vmatprep.subr.mxu0 0.0
  %8333 = vmatpush1.msra.mxu0 0.0
  %8334 = vmatprep.subr.mxu0 0.0
  %8335 = vmatpush1.msra.mxu0 0.0
  %8336 = vmatprep.subr.mxu0 0.0
  %8337 = vmatpush1.msra.mxu0 0.0
  %8338 = vmatprep.subr.mxu0 0.0
  %8339 = vmatpush1.msra.mxu0 0.0
  %8340 = vmatprep.subr.mxu0 0.0
  %8341 = vmatpush1.msra.mxu0 0.0
  %8342 = vmatprep.subr.mxu0 0.0
  %8343 = vmatpush1.msra.mxu0 0.0
  %8344 = vmatprep.subr.mxu0 0.0
  %8345 = vmatpush1.msra.mxu0 0.0
  %8346 = vmatprep.subr.mxu0 0.0
  %8347 = vmatpush1.msra.mxu0 0.0
  %8348 = vmatprep.subr.mxu0 0.0
  %8349 = vmatpush1.msra.mxu0 0.0
  %8350 = vmatprep.subr.mxu0 0.0
  %8351 = vmatpush1.msra.mxu0 0.0
  %8352 = vmatprep.subr.mxu0 0.0
  %8353 = vmatpush1.msra.mxu0 0.0
  %8354 = vmatprep.subr.mxu0 0.0
  %8355 = vmatpush1.msra.mxu0 0.0
  %8356 = vmatprep.mubr.f32.mxu0 0.0
  %8357 = vmatmul.mubr.f32.gmra.mrb[0].mxu0 %v8290
  %v8358 = vpop.f32.mrb[0].mxu0
  %v8359 = vadd.f32 %v7363, %v8358
  %v8360 = vpop.f32.mrb[0].mxu0
  %8361 = vdwg.mxu0
  %s8362 = scalar_lea.vmem %s17, 6
  %8363 = vst.msk [vmem:[%s8362] sm:$0x3] %vm7438, %v8359
  %8364 = vmatprep.subr.mxu0 0.0
  %8365 = vmatpush1.msra.mxu0 %v7081
  %8366 = vmatprep.subr.mxu0 0.0
  %8367 = vmatpush1.msra.mxu0 %v7082
  %8368 = vmatprep.subr.mxu0 0.0
  %8369 = vmatpush1.msra.mxu0 %v7083
  %8370 = vmatprep.subr.mxu0 0.0
  %8371 = vmatpush1.msra.mxu0 %v7084
  %8372 = vmatprep.subr.mxu0 0.0
  %8373 = vmatpush1.msra.mxu0 0.0
  %8374 = vmatprep.subr.mxu0 0.0
  %8375 = vmatpush1.msra.mxu0 0.0
  %8376 = vmatprep.subr.mxu0 0.0
  %8377 = vmatpush1.msra.mxu0 0.0
  %8378 = vmatprep.subr.mxu0 0.0
  %8379 = vmatpush1.msra.mxu0 0.0
  %8380 = vmatprep.subr.mxu0 0.0
  %8381 = vmatpush1.msra.mxu0 0.0
  %8382 = vmatprep.subr.mxu0 0.0
  %8383 = vmatpush1.msra.mxu0 0.0
  %8384 = vmatprep.subr.mxu0 0.0
  %8385 = vmatpush1.msra.mxu0 0.0
  %8386 = vmatprep.subr.mxu0 0.0
  %8387 = vmatpush1.msra.mxu0 0.0
  %8388 = vmatprep.subr.mxu0 0.0
  %8389 = vmatpush1.msra.mxu0 0.0
  %8390 = vmatprep.subr.mxu0 0.0
  %8391 = vmatpush1.msra.mxu0 0.0
  %8392 = vmatprep.subr.mxu0 0.0
  %8393 = vmatpush1.msra.mxu0 0.0
  %8394 = vmatprep.subr.mxu0 0.0
  %8395 = vmatpush1.msra.mxu0 0.0
  %8396 = vmatprep.subr.mxu0 0.0
  %8397 = vmatpush1.msra.mxu0 0.0
  %8398 = vmatprep.subr.mxu0 0.0
  %8399 = vmatpush1.msra.mxu0 0.0
  %8400 = vmatprep.subr.mxu0 0.0
  %8401 = vmatpush1.msra.mxu0 0.0
  %8402 = vmatprep.subr.mxu0 0.0
  %8403 = vmatpush1.msra.mxu0 0.0
  %8404 = vmatprep.subr.mxu0 0.0
  %8405 = vmatpush1.msra.mxu0 0.0
  %8406 = vmatprep.subr.mxu0 0.0
  %8407 = vmatpush1.msra.mxu0 0.0
  %8408 = vmatprep.subr.mxu0 0.0
  %8409 = vmatpush1.msra.mxu0 0.0
  %8410 = vmatprep.subr.mxu0 0.0
  %8411 = vmatpush1.msra.mxu0 0.0
  %8412 = vmatprep.subr.mxu0 0.0
  %8413 = vmatpush1.msra.mxu0 0.0
  %8414 = vmatprep.subr.mxu0 0.0
  %8415 = vmatpush1.msra.mxu0 0.0
  %8416 = vmatprep.subr.mxu0 0.0
  %8417 = vmatpush1.msra.mxu0 0.0
  %8418 = vmatprep.subr.mxu0 0.0
  %8419 = vmatpush1.msra.mxu0 0.0
  %8420 = vmatprep.subr.mxu0 0.0
  %8421 = vmatpush1.msra.mxu0 0.0
  %8422 = vmatprep.subr.mxu0 0.0
  %8423 = vmatpush1.msra.mxu0 0.0
  %8424 = vmatprep.subr.mxu0 0.0
  %8425 = vmatpush1.msra.mxu0 0.0
  %8426 = vmatprep.subr.mxu0 0.0
  %8427 = vmatpush1.msra.mxu0 0.0
  %8428 = vmatprep.mubr.f32.mxu0 0.0
  %8429 = vmatmul.mubr.f32.gmra.mrb[0].mxu0 %v8290
  %v8430 = vpop.f32.mrb[0].mxu0
  %v8431 = vadd.f32 0.0, %v8430
  %v8432 = vpop.f32.mrb[0].mxu0
  %8433 = vdwg.mxu0
  %v8434 = vadd.f32 %v6762, %v8431
  %v8435 = vadd.f32 %v8434, %v7183
  %v8436 = vxor.u32 %v8435, 2147483648
  %v8437 = vmul.f32 %v8436, 1.442695
  %v8438 = vpow.pop %v8437
  %v8439 = vadd.f32 %v8438, 1.0
  %v8440 = vrcp.pop %v8439
  %v8441 = vmul.f32 1.0, %v8440
  %8442 = vmatprep.subr.mxu0 0.0
  %8443 = vmatpush1.msra.mxu0 %v7086
  %8444 = vmatprep.subr.mxu0 0.0
  %8445 = vmatpush1.msra.mxu0 %v7087
  %8446 = vmatprep.subr.mxu0 0.0
  %8447 = vmatpush1.msra.mxu0 %v7088
  %8448 = vmatprep.subr.mxu0 0.0
  %8449 = vmatpush1.msra.mxu0 %v7089
  %8450 = vmatprep.subr.mxu0 0.0
  %8451 = vmatpush1.msra.mxu0 0.0
  %8452 = vmatprep.subr.mxu0 0.0
  %8453 = vmatpush1.msra.mxu0 0.0
  %8454 = vmatprep.subr.mxu0 0.0
  %8455 = vmatpush1.msra.mxu0 0.0
  %8456 = vmatprep.subr.mxu0 0.0
  %8457 = vmatpush1.msra.mxu0 0.0
  %8458 = vmatprep.subr.mxu0 0.0
  %8459 = vmatpush1.msra.mxu0 0.0
  %8460 = vmatprep.subr.mxu0 0.0
  %8461 = vmatpush1.msra.mxu0 0.0
  %8462 = vmatprep.subr.mxu0 0.0
  %8463 = vmatpush1.msra.mxu0 0.0
  %8464 = vmatprep.subr.mxu0 0.0
  %8465 = vmatpush1.msra.mxu0 0.0
  %8466 = vmatprep.subr.mxu0 0.0
  %8467 = vmatpush1.msra.mxu0 0.0
  %8468 = vmatprep.subr.mxu0 0.0
  %8469 = vmatpush1.msra.mxu0 0.0
  %8470 = vmatprep.subr.mxu0 0.0
  %8471 = vmatpush1.msra.mxu0 0.0
  %8472 = vmatprep.subr.mxu0 0.0
  %8473 = vmatpush1.msra.mxu0 0.0
  %8474 = vmatprep.subr.mxu0 0.0
  %8475 = vmatpush1.msra.mxu0 0.0
  %8476 = vmatprep.subr.mxu0 0.0
  %8477 = vmatpush1.msra.mxu0 0.0
  %8478 = vmatprep.subr.mxu0 0.0
  %8479 = vmatpush1.msra.mxu0 0.0
  %8480 = vmatprep.subr.mxu0 0.0
  %8481 = vmatpush1.msra.mxu0 0.0
  %8482 = vmatprep.subr.mxu0 0.0
  %8483 = vmatpush1.msra.mxu0 0.0
  %8484 = vmatprep.subr.mxu0 0.0
  %8485 = vmatpush1.msra.mxu0 0.0
  %8486 = vmatprep.subr.mxu0 0.0
  %8487 = vmatpush1.msra.mxu0 0.0
  %8488 = vmatprep.subr.mxu0 0.0
  %8489 = vmatpush1.msra.mxu0 0.0
  %8490 = vmatprep.subr.mxu0 0.0
  %8491 = vmatpush1.msra.mxu0 0.0
  %8492 = vmatprep.subr.mxu0 0.0
  %8493 = vmatpush1.msra.mxu0 0.0
  %8494 = vmatprep.subr.mxu0 0.0
  %8495 = vmatpush1.msra.mxu0 0.0
  %8496 = vmatprep.subr.mxu0 0.0
  %8497 = vmatpush1.msra.mxu0 0.0
  %8498 = vmatprep.subr.mxu0 0.0
  %8499 = vmatpush1.msra.mxu0 0.0
  %8500 = vmatprep.subr.mxu0 0.0
  %8501 = vmatpush1.msra.mxu0 0.0
  %8502 = vmatprep.subr.mxu0 0.0
  %8503 = vmatpush1.msra.mxu0 0.0
  %8504 = vmatprep.subr.mxu0 0.0
  %8505 = vmatpush1.msra.mxu0 0.0
  %8506 = vmatprep.mubr.f32.mxu0 0.0
  %8507 = vmatmul.mubr.f32.gmra.mrb[0].mxu0 %v8290
  %v8508 = vpop.f32.mrb[0].mxu0
  %v8509 = vadd.f32 0.0, %v8508
  %v8510 = vpop.f32.mrb[0].mxu0
  %8511 = vdwg.mxu0
  %v8512 = vadd.f32 %v6921, %v8509
  %v8513 = vadd.f32 %v8512, %v7267
  %v8514 = vxor.u32 %v8513, 2147483648
  %v8515 = vmul.f32 %v8514, 1.442695
  %v8516 = vpow.pop %v8515
  %v8517 = vadd.f32 %v8516, 1.0
  %v8518 = vrcp.pop %v8517
  %v8519 = vmul.f32 1.0, %v8518
  %8520 = vmatprep.subr.mxu0 0.0
  %8521 = vmatpush1.msra.mxu0 %v7091
  %8522 = vmatprep.subr.mxu0 0.0
  %8523 = vmatpush1.msra.mxu0 %v7092
  %8524 = vmatprep.subr.mxu0 0.0
  %8525 = vmatpush1.msra.mxu0 %v7093
  %8526 = vmatprep.subr.mxu0 0.0
  %8527 = vmatpush1.msra.mxu0 %v7094
  %8528 = vmatprep.subr.mxu0 0.0
  %8529 = vmatpush1.msra.mxu0 0.0
  %8530 = vmatprep.subr.mxu0 0.0
  %8531 = vmatpush1.msra.mxu0 0.0
  %8532 = vmatprep.subr.mxu0 0.0
  %8533 = vmatpush1.msra.mxu0 0.0
  %8534 = vmatprep.subr.mxu0 0.0
  %8535 = vmatpush1.msra.mxu0 0.0
  %8536 = vmatprep.subr.mxu0 0.0
  %8537 = vmatpush1.msra.mxu0 0.0
  %8538 = vmatprep.subr.mxu0 0.0
  %8539 = vmatpush1.msra.mxu0 0.0
  %8540 = vmatprep.subr.mxu0 0.0
  %8541 = vmatpush1.msra.mxu0 0.0
  %8542 = vmatprep.subr.mxu0 0.0
  %8543 = vmatpush1.msra.mxu0 0.0
  %8544 = vmatprep.subr.mxu0 0.0
  %8545 = vmatpush1.msra.mxu0 0.0
  %8546 = vmatprep.subr.mxu0 0.0
  %8547 = vmatpush1.msra.mxu0 0.0
  %8548 = vmatprep.subr.mxu0 0.0
  %8549 = vmatpush1.msra.mxu0 0.0
  %8550 = vmatprep.subr.mxu0 0.0
  %8551 = vmatpush1.msra.mxu0 0.0
  %8552 = vmatprep.subr.mxu0 0.0
  %8553 = vmatpush1.msra.mxu0 0.0
  %8554 = vmatprep.subr.mxu0 0.0
  %8555 = vmatpush1.msra.mxu0 0.0
  %8556 = vmatprep.subr.mxu0 0.0
  %8557 = vmatpush1.msra.mxu0 0.0
  %8558 = vmatprep.subr.mxu0 0.0
  %8559 = vmatpush1.msra.mxu0 0.0
  %8560 = vmatprep.subr.mxu0 0.0
  %8561 = vmatpush1.msra.mxu0 0.0
  %8562 = vmatprep.subr.mxu0 0.0
  %8563 = vmatpush1.msra.mxu0 0.0
  %8564 = vmatprep.subr.mxu0 0.0
  %8565 = vmatpush1.msra.mxu0 0.0
  %8566 = vmatprep.subr.mxu0 0.0
  %8567 = vmatpush1.msra.mxu0 0.0
  %8568 = vmatprep.subr.mxu0 0.0
  %8569 = vmatpush1.msra.mxu0 0.0
  %8570 = vmatprep.subr.mxu0 0.0
  %8571 = vmatpush1.msra.mxu0 0.0
  %8572 = vmatprep.subr.mxu0 0.0
  %8573 = vmatpush1.msra.mxu0 0.0
  %8574 = vmatprep.subr.mxu0 0.0
  %8575 = vmatpush1.msra.mxu0 0.0
  %8576 = vmatprep.subr.mxu0 0.0
  %8577 = vmatpush1.msra.mxu0 0.0
  %8578 = vmatprep.subr.mxu0 0.0
  %8579 = vmatpush1.msra.mxu0 0.0
  %8580 = vmatprep.subr.mxu0 0.0
  %8581 = vmatpush1.msra.mxu0 0.0
  %8582 = vmatprep.subr.mxu0 0.0
  %8583 = vmatpush1.msra.mxu0 0.0
  %8584 = vmatprep.mubr.f32.mxu0 0.0
  %8585 = vmatmul.mubr.f32.gmra.mrb[0].mxu0 %v8290
  %v8586 = vpop.f32.mrb[0].mxu0
  %v8587 = vadd.f32 %v7280, %v8586
  %v8588 = vpop.f32.mrb[0].mxu0
  %8589 = vdwg.mxu0
  %v8590 = vmul.f32 %v8441, %v8587
  %v8591 = vadd.f32 %v7080, %v8590
  %v8592 = vtanh.pop %v8591
  %v8593 = vsub.f32 1.0, %v8519
  %v8594 = vmul.f32 %v8593, %v8592
  %v8595 = vmul.f32 %v8519, %v8288
  %v8596 = vadd.f32 %v8594, %v8595
  %v8598 = vsel %vm6519, %v8596, 0
  %8600 = vmatprep.subr.mxu0 0.0
  %8601 = vmatpush1.msra.mxu0 %v7100
  %8602 = vmatprep.subr.mxu0 0.0
  %8603 = vmatpush1.msra.mxu0 %v7101
  %8604 = vmatprep.subr.mxu0 0.0
  %8605 = vmatpush1.msra.mxu0 %v7102
  %8606 = vmatprep.subr.mxu0 0.0
  %8607 = vmatpush1.msra.mxu0 %v7103
  %8608 = vmatprep.subr.mxu0 0.0
  %8609 = vmatpush1.msra.mxu0 0.0
  %8610 = vmatprep.subr.mxu0 0.0
  %8611 = vmatpush1.msra.mxu0 0.0
  %8612 = vmatprep.subr.mxu0 0.0
  %8613 = vmatpush1.msra.mxu0 0.0
  %8614 = vmatprep.subr.mxu0 0.0
  %8615 = vmatpush1.msra.mxu0 0.0
  %8616 = vmatprep.subr.mxu0 0.0
  %8617 = vmatpush1.msra.mxu0 0.0
  %8618 = vmatprep.subr.mxu0 0.0
  %8619 = vmatpush1.msra.mxu0 0.0
  %8620 = vmatprep.subr.mxu0 0.0
  %8621 = vmatpush1.msra.mxu0 0.0
  %8622 = vmatprep.subr.mxu0 0.0
  %8623 = vmatpush1.msra.mxu0 0.0
  %8624 = vmatprep.subr.mxu0 0.0
  %8625 = vmatpush1.msra.mxu0 0.0
  %8626 = vmatprep.subr.mxu0 0.0
  %8627 = vmatpush1.msra.mxu0 0.0
  %8628 = vmatprep.subr.mxu0 0.0
  %8629 = vmatpush1.msra.mxu0 0.0
  %8630 = vmatprep.subr.mxu0 0.0
  %8631 = vmatpush1.msra.mxu0 0.0
  %8632 = vmatprep.subr.mxu0 0.0
  %8633 = vmatpush1.msra.mxu0 0.0
  %8634 = vmatprep.subr.mxu0 0.0
  %8635 = vmatpush1.msra.mxu0 0.0
  %8636 = vmatprep.subr.mxu0 0.0
  %8637 = vmatpush1.msra.mxu0 0.0
  %8638 = vmatprep.subr.mxu0 0.0
  %8639 = vmatpush1.msra.mxu0 0.0
  %8640 = vmatprep.subr.mxu0 0.0
  %8641 = vmatpush1.msra.mxu0 0.0
  %8642 = vmatprep.subr.mxu0 0.0
  %8643 = vmatpush1.msra.mxu0 0.0
  %8644 = vmatprep.subr.mxu0 0.0
  %8645 = vmatpush1.msra.mxu0 0.0
  %8646 = vmatprep.subr.mxu0 0.0
  %8647 = vmatpush1.msra.mxu0 0.0
  %8648 = vmatprep.subr.mxu0 0.0
  %8649 = vmatpush1.msra.mxu0 0.0
  %8650 = vmatprep.subr.mxu0 0.0
  %8651 = vmatpush1.msra.mxu0 0.0
  %8652 = vmatprep.subr.mxu0 0.0
  %8653 = vmatpush1.msra.mxu0 0.0
  %8654 = vmatprep.subr.mxu0 0.0
  %8655 = vmatpush1.msra.mxu0 0.0
  %8656 = vmatprep.subr.mxu0 0.0
  %8657 = vmatpush1.msra.mxu0 0.0
  %8658 = vmatprep.subr.mxu0 0.0
  %8659 = vmatpush1.msra.mxu0 0.0
  %8660 = vmatprep.subr.mxu0 0.0
  %8661 = vmatpush1.msra.mxu0 0.0
  %8662 = vmatprep.subr.mxu0 0.0
  %8663 = vmatpush1.msra.mxu0 0.0
  %8664 = vmatprep.mubr.f32.mxu0 0.0
  %8665 = vmatmul.mubr.f32.gmra.mrb[0].mxu0 %v8598
  %v8666 = vpop.f32.mrb[0].mxu0
  %v8667 = vadd.f32 %v7363, %v8666
  %v8668 = vpop.f32.mrb[0].mxu0
  %8669 = vdwg.mxu0
  %s8670 = scalar_lea.vmem %s17, 8
  %8671 = vst.msk [vmem:[%s8670] sm:$0x3] %vm7438, %v8667
  %8672 = vmatprep.subr.mxu0 0.0
  %8673 = vmatpush1.msra.mxu0 %v7081
  %8674 = vmatprep.subr.mxu0 0.0
  %8675 = vmatpush1.msra.mxu0 %v7082
  %8676 = vmatprep.subr.mxu0 0.0
  %8677 = vmatpush1.msra.mxu0 %v7083
  %8678 = vmatprep.subr.mxu0 0.0
  %8679 = vmatpush1.msra.mxu0 %v7084
  %8680 = vmatprep.subr.mxu0 0.0
  %8681 = vmatpush1.msra.mxu0 0.0
  %8682 = vmatprep.subr.mxu0 0.0
  %8683 = vmatpush1.msra.mxu0 0.0
  %8684 = vmatprep.subr.mxu0 0.0
  %8685 = vmatpush1.msra.mxu0 0.0
  %8686 = vmatprep.subr.mxu0 0.0
  %8687 = vmatpush1.msra.mxu0 0.0
  %8688 = vmatprep.subr.mxu0 0.0
  %8689 = vmatpush1.msra.mxu0 0.0
  %8690 = vmatprep.subr.mxu0 0.0
  %8691 = vmatpush1.msra.mxu0 0.0
  %8692 = vmatprep.subr.mxu0 0.0
  %8693 = vmatpush1.msra.mxu0 0.0
  %8694 = vmatprep.subr.mxu0 0.0
  %8695 = vmatpush1.msra.mxu0 0.0
  %8696 = vmatprep.subr.mxu0 0.0
  %8697 = vmatpush1.msra.mxu0 0.0
  %8698 = vmatprep.subr.mxu0 0.0
  %8699 = vmatpush1.msra.mxu0 0.0
  %8700 = vmatprep.subr.mxu0 0.0
  %8701 = vmatpush1.msra.mxu0 0.0
  %8702 = vmatprep.subr.mxu0 0.0
  %8703 = vmatpush1.msra.mxu0 0.0
  %8704 = vmatprep.subr.mxu0 0.0
  %8705 = vmatpush1.msra.mxu0 0.0
  %8706 = vmatprep.subr.mxu0 0.0
  %8707 = vmatpush1.msra.mxu0 0.0
  %8708 = vmatprep.subr.mxu0 0.0
  %8709 = vmatpush1.msra.mxu0 0.0
  %8710 = vmatprep.subr.mxu0 0.0
  %8711 = vmatpush1.msra.mxu0 0.0
  %8712 = vmatprep.subr.mxu0 0.0
  %8713 = vmatpush1.msra.mxu0 0.0
  %8714 = vmatprep.subr.mxu0 0.0
  %8715 = vmatpush1.msra.mxu0 0.0
  %8716 = vmatprep.subr.mxu0 0.0
  %8717 = vmatpush1.msra.mxu0 0.0
  %8718 = vmatprep.subr.mxu0 0.0
  %8719 = vmatpush1.msra.mxu0 0.0
  %8720 = vmatprep.subr.mxu0 0.0
  %8721 = vmatpush1.msra.mxu0 0.0
  %8722 = vmatprep.subr.mxu0 0.0
  %8723 = vmatpush1.msra.mxu0 0.0
  %8724 = vmatprep.subr.mxu0 0.0
  %8725 = vmatpush1.msra.mxu0 0.0
  %8726 = vmatprep.subr.mxu0 0.0
  %8727 = vmatpush1.msra.mxu0 0.0
  %8728 = vmatprep.subr.mxu0 0.0
  %8729 = vmatpush1.msra.mxu0 0.0
  %8730 = vmatprep.subr.mxu0 0.0
  %8731 = vmatpush1.msra.mxu0 0.0
  %8732 = vmatprep.subr.mxu0 0.0
  %8733 = vmatpush1.msra.mxu0 0.0
  %8734 = vmatprep.subr.mxu0 0.0
  %8735 = vmatpush1.msra.mxu0 0.0
  %8736 = vmatprep.mubr.f32.mxu0 0.0
  %8737 = vmatmul.mubr.f32.gmra.mrb[0].mxu0 %v8598
  %v8738 = vpop.f32.mrb[0].mxu0
  %v8739 = vadd.f32 0.0, %v8738
  %v8740 = vpop.f32.mrb[0].mxu0
  %8741 = vdwg.mxu0
  %v8742 = vadd.f32 %v6762, %v8739
  %v8743 = vadd.f32 %v8742, %v7183
  %v8744 = vxor.u32 %v8743, 2147483648
  %v8745 = vmul.f32 %v8744, 1.442695
  %v8746 = vpow.pop %v8745
  %v8747 = vadd.f32 %v8746, 1.0
  %v8748 = vrcp.pop %v8747
  %v8749 = vmul.f32 1.0, %v8748
  %8750 = vmatprep.subr.mxu0 0.0
  %8751 = vmatpush1.msra.mxu0 %v7086
  %8752 = vmatprep.subr.mxu0 0.0
  %8753 = vmatpush1.msra.mxu0 %v7087
  %8754 = vmatprep.subr.mxu0 0.0
  %8755 = vmatpush1.msra.mxu0 %v7088
  %8756 = vmatprep.subr.mxu0 0.0
  %8757 = vmatpush1.msra.mxu0 %v7089
  %8758 = vmatprep.subr.mxu0 0.0
  %8759 = vmatpush1.msra.mxu0 0.0
  %8760 = vmatprep.subr.mxu0 0.0
  %8761 = vmatpush1.msra.mxu0 0.0
  %8762 = vmatprep.subr.mxu0 0.0
  %8763 = vmatpush1.msra.mxu0 0.0
  %8764 = vmatprep.subr.mxu0 0.0
  %8765 = vmatpush1.msra.mxu0 0.0
  %8766 = vmatprep.subr.mxu0 0.0
  %8767 = vmatpush1.msra.mxu0 0.0
  %8768 = vmatprep.subr.mxu0 0.0
  %8769 = vmatpush1.msra.mxu0 0.0
  %8770 = vmatprep.subr.mxu0 0.0
  %8771 = vmatpush1.msra.mxu0 0.0
  %8772 = vmatprep.subr.mxu0 0.0
  %8773 = vmatpush1.msra.mxu0 0.0
  %8774 = vmatprep.subr.mxu0 0.0
  %8775 = vmatpush1.msra.mxu0 0.0
  %8776 = vmatprep.subr.mxu0 0.0
  %8777 = vmatpush1.msra.mxu0 0.0
  %8778 = vmatprep.subr.mxu0 0.0
  %8779 = vmatpush1.msra.mxu0 0.0
  %8780 = vmatprep.subr.mxu0 0.0
  %8781 = vmatpush1.msra.mxu0 0.0
  %8782 = vmatprep.subr.mxu0 0.0
  %8783 = vmatpush1.msra.mxu0 0.0
  %8784 = vmatprep.subr.mxu0 0.0
  %8785 = vmatpush1.msra.mxu0 0.0
  %8786 = vmatprep.subr.mxu0 0.0
  %8787 = vmatpush1.msra.mxu0 0.0
  %8788 = vmatprep.subr.mxu0 0.0
  %8789 = vmatpush1.msra.mxu0 0.0
  %8790 = vmatprep.subr.mxu0 0.0
  %8791 = vmatpush1.msra.mxu0 0.0
  %8792 = vmatprep.subr.mxu0 0.0
  %8793 = vmatpush1.msra.mxu0 0.0
  %8794 = vmatprep.subr.mxu0 0.0
  %8795 = vmatpush1.msra.mxu0 0.0
  %8796 = vmatprep.subr.mxu0 0.0
  %8797 = vmatpush1.msra.mxu0 0.0
  %8798 = vmatprep.subr.mxu0 0.0
  %8799 = vmatpush1.msra.mxu0 0.0
  %8800 = vmatprep.subr.mxu0 0.0
  %8801 = vmatpush1.msra.mxu0 0.0
  %8802 = vmatprep.subr.mxu0 0.0
  %8803 = vmatpush1.msra.mxu0 0.0
  %8804 = vmatprep.subr.mxu0 0.0
  %8805 = vmatpush1.msra.mxu0 0.0
  %8806 = vmatprep.subr.mxu0 0.0
  %8807 = vmatpush1.msra.mxu0 0.0
  %8808 = vmatprep.subr.mxu0 0.0
  %8809 = vmatpush1.msra.mxu0 0.0
  %8810 = vmatprep.subr.mxu0 0.0
  %8811 = vmatpush1.msra.mxu0 0.0
  %8812 = vmatprep.subr.mxu0 0.0
  %8813 = vmatpush1.msra.mxu0 0.0
  %8814 = vmatprep.mubr.f32.mxu0 0.0
  %8815 = vmatmul.mubr.f32.gmra.mrb[0].mxu0 %v8598
  %v8816 = vpop.f32.mrb[0].mxu0
  %v8817 = vadd.f32 0.0, %v8816
  %v8818 = vpop.f32.mrb[0].mxu0
  %8819 = vdwg.mxu0
  %v8820 = vadd.f32 %v6921, %v8817
  %v8821 = vadd.f32 %v8820, %v7267
  %v8822 = vxor.u32 %v8821, 2147483648
  %v8823 = vmul.f32 %v8822, 1.442695
  %v8824 = vpow.pop %v8823
  %v8825 = vadd.f32 %v8824, 1.0
  %v8826 = vrcp.pop %v8825
  %v8827 = vmul.f32 1.0, %v8826
  %8828 = vmatprep.subr.mxu0 0.0
  %8829 = vmatpush1.msra.mxu0 %v7091
  %8830 = vmatprep.subr.mxu0 0.0
  %8831 = vmatpush1.msra.mxu0 %v7092
  %8832 = vmatprep.subr.mxu0 0.0
  %8833 = vmatpush1.msra.mxu0 %v7093
  %8834 = vmatprep.subr.mxu0 0.0
  %8835 = vmatpush1.msra.mxu0 %v7094
  %8836 = vmatprep.subr.mxu0 0.0
  %8837 = vmatpush1.msra.mxu0 0.0
  %8838 = vmatprep.subr.mxu0 0.0
  %8839 = vmatpush1.msra.mxu0 0.0
  %8840 = vmatprep.subr.mxu0 0.0
  %8841 = vmatpush1.msra.mxu0 0.0
  %8842 = vmatprep.subr.mxu0 0.0
  %8843 = vmatpush1.msra.mxu0 0.0
  %8844 = vmatprep.subr.mxu0 0.0
  %8845 = vmatpush1.msra.mxu0 0.0
  %8846 = vmatprep.subr.mxu0 0.0
  %8847 = vmatpush1.msra.mxu0 0.0
  %8848 = vmatprep.subr.mxu0 0.0
  %8849 = vmatpush1.msra.mxu0 0.0
  %8850 = vmatprep.subr.mxu0 0.0
  %8851 = vmatpush1.msra.mxu0 0.0
  %8852 = vmatprep.subr.mxu0 0.0
  %8853 = vmatpush1.msra.mxu0 0.0
  %8854 = vmatprep.subr.mxu0 0.0
  %8855 = vmatpush1.msra.mxu0 0.0
  %8856 = vmatprep.subr.mxu0 0.0
  %8857 = vmatpush1.msra.mxu0 0.0
  %8858 = vmatprep.subr.mxu0 0.0
  %8859 = vmatpush1.msra.mxu0 0.0
  %8860 = vmatprep.subr.mxu0 0.0
  %8861 = vmatpush1.msra.mxu0 0.0
  %8862 = vmatprep.subr.mxu0 0.0
  %8863 = vmatpush1.msra.mxu0 0.0
  %8864 = vmatprep.subr.mxu0 0.0
  %8865 = vmatpush1.msra.mxu0 0.0
  %8866 = vmatprep.subr.mxu0 0.0
  %8867 = vmatpush1.msra.mxu0 0.0
  %8868 = vmatprep.subr.mxu0 0.0
  %8869 = vmatpush1.msra.mxu0 0.0
  %8870 = vmatprep.subr.mxu0 0.0
  %8871 = vmatpush1.msra.mxu0 0.0
  %8872 = vmatprep.subr.mxu0 0.0
  %8873 = vmatpush1.msra.mxu0 0.0
  %8874 = vmatprep.subr.mxu0 0.0
  %8875 = vmatpush1.msra.mxu0 0.0
  %8876 = vmatprep.subr.mxu0 0.0
  %8877 = vmatpush1.msra.mxu0 0.0
  %8878 = vmatprep.subr.mxu0 0.0
  %8879 = vmatpush1.msra.mxu0 0.0
  %8880 = vmatprep.subr.mxu0 0.0
  %8881 = vmatpush1.msra.mxu0 0.0
  %8882 = vmatprep.subr.mxu0 0.0
  %8883 = vmatpush1.msra.mxu0 0.0
  %8884 = vmatprep.subr.mxu0 0.0
  %8885 = vmatpush1.msra.mxu0 0.0
  %8886 = vmatprep.subr.mxu0 0.0
  %8887 = vmatpush1.msra.mxu0 0.0
  %8888 = vmatprep.subr.mxu0 0.0
  %8889 = vmatpush1.msra.mxu0 0.0
  %8890 = vmatprep.subr.mxu0 0.0
  %8891 = vmatpush1.msra.mxu0 0.0
  %8892 = vmatprep.mubr.f32.mxu0 0.0
  %8893 = vmatmul.mubr.f32.gmra.mrb[0].mxu0 %v8598
  %v8894 = vpop.f32.mrb[0].mxu0
  %v8895 = vadd.f32 %v7280, %v8894
  %v8896 = vpop.f32.mrb[0].mxu0
  %8897 = vdwg.mxu0
  %v8898 = vmul.f32 %v8749, %v8895
  %v8899 = vadd.f32 %v7080, %v8898
  %v8900 = vtanh.pop %v8899
  %v8901 = vsub.f32 1.0, %v8827
  %v8902 = vmul.f32 %v8901, %v8900
  %v8903 = vmul.f32 %v8827, %v8596
  %v8904 = vadd.f32 %v8902, %v8903
  %v8906 = vsel %vm6519, %v8904, 0
  %8908 = vmatprep.subr.mxu0 0.0
  %8909 = vmatpush1.msra.mxu0 %v7100
  %8910 = vmatprep.subr.mxu0 0.0
  %8911 = vmatpush1.msra.mxu0 %v7101
  %8912 = vmatprep.subr.mxu0 0.0
  %8913 = vmatpush1.msra.mxu0 %v7102
  %8914 = vmatprep.subr.mxu0 0.0
  %8915 = vmatpush1.msra.mxu0 %v7103
  %8916 = vmatprep.subr.mxu0 0.0
  %8917 = vmatpush1.msra.mxu0 0.0
  %8918 = vmatprep.subr.mxu0 0.0
  %8919 = vmatpush1.msra.mxu0 0.0
  %8920 = vmatprep.subr.mxu0 0.0
  %8921 = vmatpush1.msra.mxu0 0.0
  %8922 = vmatprep.subr.mxu0 0.0
  %8923 = vmatpush1.msra.mxu0 0.0
  %8924 = vmatprep.subr.mxu0 0.0
  %8925 = vmatpush1.msra.mxu0 0.0
  %8926 = vmatprep.subr.mxu0 0.0
  %8927 = vmatpush1.msra.mxu0 0.0
  %8928 = vmatprep.subr.mxu0 0.0
  %8929 = vmatpush1.msra.mxu0 0.0
  %8930 = vmatprep.subr.mxu0 0.0
  %8931 = vmatpush1.msra.mxu0 0.0
  %8932 = vmatprep.subr.mxu0 0.0
  %8933 = vmatpush1.msra.mxu0 0.0
  %8934 = vmatprep.subr.mxu0 0.0
  %8935 = vmatpush1.msra.mxu0 0.0
  %8936 = vmatprep.subr.mxu0 0.0
  %8937 = vmatpush1.msra.mxu0 0.0
  %8938 = vmatprep.subr.mxu0 0.0
  %8939 = vmatpush1.msra.mxu0 0.0
  %8940 = vmatprep.subr.mxu0 0.0
  %8941 = vmatpush1.msra.mxu0 0.0
  %8942 = vmatprep.subr.mxu0 0.0
  %8943 = vmatpush1.msra.mxu0 0.0
  %8944 = vmatprep.subr.mxu0 0.0
  %8945 = vmatpush1.msra.mxu0 0.0
  %8946 = vmatprep.subr.mxu0 0.0
  %8947 = vmatpush1.msra.mxu0 0.0
  %8948 = vmatprep.subr.mxu0 0.0
  %8949 = vmatpush1.msra.mxu0 0.0
  %8950 = vmatprep.subr.mxu0 0.0
  %8951 = vmatpush1.msra.mxu0 0.0
  %8952 = vmatprep.subr.mxu0 0.0
  %8953 = vmatpush1.msra.mxu0 0.0
  %8954 = vmatprep.subr.mxu0 0.0
  %8955 = vmatpush1.msra.mxu0 0.0
  %8956 = vmatprep.subr.mxu0 0.0
  %8957 = vmatpush1.msra.mxu0 0.0
  %8958 = vmatprep.subr.mxu0 0.0
  %8959 = vmatpush1.msra.mxu0 0.0
  %8960 = vmatprep.subr.mxu0 0.0
  %8961 = vmatpush1.msra.mxu0 0.0
  %8962 = vmatprep.subr.mxu0 0.0
  %8963 = vmatpush1.msra.mxu0 0.0
  %8964 = vmatprep.subr.mxu0 0.0
  %8965 = vmatpush1.msra.mxu0 0.0
  %8966 = vmatprep.subr.mxu0 0.0
  %8967 = vmatpush1.msra.mxu0 0.0
  %8968 = vmatprep.subr.mxu0 0.0
  %8969 = vmatpush1.msra.mxu0 0.0
  %8970 = vmatprep.subr.mxu0 0.0
  %8971 = vmatpush1.msra.mxu0 0.0
  %8972 = vmatprep.mubr.f32.mxu0 0.0
  %8973 = vmatmul.mubr.f32.gmra.mrb[0].mxu0 %v8906
  %v8974 = vpop.f32.mrb[0].mxu0
  %v8975 = vadd.f32 %v7363, %v8974
  %v8976 = vpop.f32.mrb[0].mxu0
  %8977 = vdwg.mxu0
  %s8978 = scalar_lea.vmem %s17, 10
  %8979 = vst.msk [vmem:[%s8978] sm:$0x3] %vm7438, %v8975
  %8980 = vmatprep.subr.mxu0 0.0
  %8981 = vmatpush1.msra.mxu0 %v7081
  %8982 = vmatprep.subr.mxu0 0.0
  %8983 = vmatpush1.msra.mxu0 %v7082
  %8984 = vmatprep.subr.mxu0 0.0
  %8985 = vmatpush1.msra.mxu0 %v7083
  %8986 = vmatprep.subr.mxu0 0.0
  %8987 = vmatpush1.msra.mxu0 %v7084
  %8988 = vmatprep.subr.mxu0 0.0
  %8989 = vmatpush1.msra.mxu0 0.0
  %8990 = vmatprep.subr.mxu0 0.0
  %8991 = vmatpush1.msra.mxu0 0.0
  %8992 = vmatprep.subr.mxu0 0.0
  %8993 = vmatpush1.msra.mxu0 0.0
  %8994 = vmatprep.subr.mxu0 0.0
  %8995 = vmatpush1.msra.mxu0 0.0
  %8996 = vmatprep.subr.mxu0 0.0
  %8997 = vmatpush1.msra.mxu0 0.0
  %8998 = vmatprep.subr.mxu0 0.0
  %8999 = vmatpush1.msra.mxu0 0.0
  %9000 = vmatprep.subr.mxu0 0.0
  %9001 = vmatpush1.msra.mxu0 0.0
  %9002 = vmatprep.subr.mxu0 0.0
  %9003 = vmatpush1.msra.mxu0 0.0
  %9004 = vmatprep.subr.mxu0 0.0
  %9005 = vmatpush1.msra.mxu0 0.0
  %9006 = vmatprep.subr.mxu0 0.0
  %9007 = vmatpush1.msra.mxu0 0.0
  %9008 = vmatprep.subr.mxu0 0.0
  %9009 = vmatpush1.msra.mxu0 0.0
  %9010 = vmatprep.subr.mxu0 0.0
  %9011 = vmatpush1.msra.mxu0 0.0
  %9012 = vmatprep.subr.mxu0 0.0
  %9013 = vmatpush1.msra.mxu0 0.0
  %9014 = vmatprep.subr.mxu0 0.0
  %9015 = vmatpush1.msra.mxu0 0.0
  %9016 = vmatprep.subr.mxu0 0.0
  %9017 = vmatpush1.msra.mxu0 0.0
  %9018 = vmatprep.subr.mxu0 0.0
  %9019 = vmatpush1.msra.mxu0 0.0
  %9020 = vmatprep.subr.mxu0 0.0
  %9021 = vmatpush1.msra.mxu0 0.0
  %9022 = vmatprep.subr.mxu0 0.0
  %9023 = vmatpush1.msra.mxu0 0.0
  %9024 = vmatprep.subr.mxu0 0.0
  %9025 = vmatpush1.msra.mxu0 0.0
  %9026 = vmatprep.subr.mxu0 0.0
  %9027 = vmatpush1.msra.mxu0 0.0
  %9028 = vmatprep.subr.mxu0 0.0
  %9029 = vmatpush1.msra.mxu0 0.0
  %9030 = vmatprep.subr.mxu0 0.0
  %9031 = vmatpush1.msra.mxu0 0.0
  %9032 = vmatprep.subr.mxu0 0.0
  %9033 = vmatpush1.msra.mxu0 0.0
  %9034 = vmatprep.subr.mxu0 0.0
  %9035 = vmatpush1.msra.mxu0 0.0
  %9036 = vmatprep.subr.mxu0 0.0
  %9037 = vmatpush1.msra.mxu0 0.0
  %9038 = vmatprep.subr.mxu0 0.0
  %9039 = vmatpush1.msra.mxu0 0.0
  %9040 = vmatprep.subr.mxu0 0.0
  %9041 = vmatpush1.msra.mxu0 0.0
  %9042 = vmatprep.subr.mxu0 0.0
  %9043 = vmatpush1.msra.mxu0 0.0
  %9044 = vmatprep.mubr.f32.mxu0 0.0
  %9045 = vmatmul.mubr.f32.gmra.mrb[0].mxu0 %v8906
  %v9046 = vpop.f32.mrb[0].mxu0
  %v9047 = vadd.f32 0.0, %v9046
  %v9048 = vpop.f32.mrb[0].mxu0
  %9049 = vdwg.mxu0
  %v9050 = vadd.f32 %v6762, %v9047
  %v9051 = vadd.f32 %v9050, %v7183
  %v9052 = vxor.u32 %v9051, 2147483648
  %v9053 = vmul.f32 %v9052, 1.442695
  %v9054 = vpow.pop %v9053
  %v9055 = vadd.f32 %v9054, 1.0
  %v9056 = vrcp.pop %v9055
  %v9057 = vmul.f32 1.0, %v9056
  %9058 = vmatprep.subr.mxu0 0.0
  %9059 = vmatpush1.msra.mxu0 %v7086
  %9060 = vmatprep.subr.mxu0 0.0
  %9061 = vmatpush1.msra.mxu0 %v7087
  %9062 = vmatprep.subr.mxu0 0.0
  %9063 = vmatpush1.msra.mxu0 %v7088
  %9064 = vmatprep.subr.mxu0 0.0
  %9065 = vmatpush1.msra.mxu0 %v7089
  %9066 = vmatprep.subr.mxu0 0.0
  %9067 = vmatpush1.msra.mxu0 0.0
  %9068 = vmatprep.subr.mxu0 0.0
  %9069 = vmatpush1.msra.mxu0 0.0
  %9070 = vmatprep.subr.mxu0 0.0
  %9071 = vmatpush1.msra.mxu0 0.0
  %9072 = vmatprep.subr.mxu0 0.0
  %9073 = vmatpush1.msra.mxu0 0.0
  %9074 = vmatprep.subr.mxu0 0.0
  %9075 = vmatpush1.msra.mxu0 0.0
  %9076 = vmatprep.subr.mxu0 0.0
  %9077 = vmatpush1.msra.mxu0 0.0
  %9078 = vmatprep.subr.mxu0 0.0
  %9079 = vmatpush1.msra.mxu0 0.0
  %9080 = vmatprep.subr.mxu0 0.0
  %9081 = vmatpush1.msra.mxu0 0.0
  %9082 = vmatprep.subr.mxu0 0.0
  %9083 = vmatpush1.msra.mxu0 0.0
  %9084 = vmatprep.subr.mxu0 0.0
  %9085 = vmatpush1.msra.mxu0 0.0
  %9086 = vmatprep.subr.mxu0 0.0
  %9087 = vmatpush1.msra.mxu0 0.0
  %9088 = vmatprep.subr.mxu0 0.0
  %9089 = vmatpush1.msra.mxu0 0.0
  %9090 = vmatprep.subr.mxu0 0.0
  %9091 = vmatpush1.msra.mxu0 0.0
  %9092 = vmatprep.subr.mxu0 0.0
  %9093 = vmatpush1.msra.mxu0 0.0
  %9094 = vmatprep.subr.mxu0 0.0
  %9095 = vmatpush1.msra.mxu0 0.0
  %9096 = vmatprep.subr.mxu0 0.0
  %9097 = vmatpush1.msra.mxu0 0.0
  %9098 = vmatprep.subr.mxu0 0.0
  %9099 = vmatpush1.msra.mxu0 0.0
  %9100 = vmatprep.subr.mxu0 0.0
  %9101 = vmatpush1.msra.mxu0 0.0
  %9102 = vmatprep.subr.mxu0 0.0
  %9103 = vmatpush1.msra.mxu0 0.0
  %9104 = vmatprep.subr.mxu0 0.0
  %9105 = vmatpush1.msra.mxu0 0.0
  %9106 = vmatprep.subr.mxu0 0.0
  %9107 = vmatpush1.msra.mxu0 0.0
  %9108 = vmatprep.subr.mxu0 0.0
  %9109 = vmatpush1.msra.mxu0 0.0
  %9110 = vmatprep.subr.mxu0 0.0
  %9111 = vmatpush1.msra.mxu0 0.0
  %9112 = vmatprep.subr.mxu0 0.0
  %9113 = vmatpush1.msra.mxu0 0.0
  %9114 = vmatprep.subr.mxu0 0.0
  %9115 = vmatpush1.msra.mxu0 0.0
  %9116 = vmatprep.subr.mxu0 0.0
  %9117 = vmatpush1.msra.mxu0 0.0
  %9118 = vmatprep.subr.mxu0 0.0
  %9119 = vmatpush1.msra.mxu0 0.0
  %9120 = vmatprep.subr.mxu0 0.0
  %9121 = vmatpush1.msra.mxu0 0.0
  %9122 = vmatprep.mubr.f32.mxu0 0.0
  %9123 = vmatmul.mubr.f32.gmra.mrb[0].mxu0 %v8906
  %v9124 = vpop.f32.mrb[0].mxu0
  %v9125 = vadd.f32 0.0, %v9124
  %v9126 = vpop.f32.mrb[0].mxu0
  %9127 = vdwg.mxu0
  %v9128 = vadd.f32 %v6921, %v9125
  %v9129 = vadd.f32 %v9128, %v7267
  %v9130 = vxor.u32 %v9129, 2147483648
  %v9131 = vmul.f32 %v9130, 1.442695
  %v9132 = vpow.pop %v9131
  %v9133 = vadd.f32 %v9132, 1.0
  %v9134 = vrcp.pop %v9133
  %v9135 = vmul.f32 1.0, %v9134
  %9136 = vmatprep.subr.mxu0 0.0
  %9137 = vmatpush1.msra.mxu0 %v7091
  %9138 = vmatprep.subr.mxu0 0.0
  %9139 = vmatpush1.msra.mxu0 %v7092
  %9140 = vmatprep.subr.mxu0 0.0
  %9141 = vmatpush1.msra.mxu0 %v7093
  %9142 = vmatprep.subr.mxu0 0.0
  %9143 = vmatpush1.msra.mxu0 %v7094
  %9144 = vmatprep.subr.mxu0 0.0
  %9145 = vmatpush1.msra.mxu0 0.0
  %9146 = vmatprep.subr.mxu0 0.0
  %9147 = vmatpush1.msra.mxu0 0.0
  %9148 = vmatprep.subr.mxu0 0.0
  %9149 = vmatpush1.msra.mxu0 0.0
  %9150 = vmatprep.subr.mxu0 0.0
  %9151 = vmatpush1.msra.mxu0 0.0
  %9152 = vmatprep.subr.mxu0 0.0
  %9153 = vmatpush1.msra.mxu0 0.0
  %9154 = vmatprep.subr.mxu0 0.0
  %9155 = vmatpush1.msra.mxu0 0.0
  %9156 = vmatprep.subr.mxu0 0.0
  %9157 = vmatpush1.msra.mxu0 0.0
  %9158 = vmatprep.subr.mxu0 0.0
  %9159 = vmatpush1.msra.mxu0 0.0
  %9160 = vmatprep.subr.mxu0 0.0
  %9161 = vmatpush1.msra.mxu0 0.0
  %9162 = vmatprep.subr.mxu0 0.0
  %9163 = vmatpush1.msra.mxu0 0.0
  %9164 = vmatprep.subr.mxu0 0.0
  %9165 = vmatpush1.msra.mxu0 0.0
  %9166 = vmatprep.subr.mxu0 0.0
  %9167 = vmatpush1.msra.mxu0 0.0
  %9168 = vmatprep.subr.mxu0 0.0
  %9169 = vmatpush1.msra.mxu0 0.0
  %9170 = vmatprep.subr.mxu0 0.0
  %9171 = vmatpush1.msra.mxu0 0.0
  %9172 = vmatprep.subr.mxu0 0.0
  %9173 = vmatpush1.msra.mxu0 0.0
  %9174 = vmatprep.subr.mxu0 0.0
  %9175 = vmatpush1.msra.mxu0 0.0
  %9176 = vmatprep.subr.mxu0 0.0
  %9177 = vmatpush1.msra.mxu0 0.0
  %9178 = vmatprep.subr.mxu0 0.0
  %9179 = vmatpush1.msra.mxu0 0.0
  %9180 = vmatprep.subr.mxu0 0.0
  %9181 = vmatpush1.msra.mxu0 0.0
  %9182 = vmatprep.subr.mxu0 0.0
  %9183 = vmatpush1.msra.mxu0 0.0
  %9184 = vmatprep.subr.mxu0 0.0
  %9185 = vmatpush1.msra.mxu0 0.0
  %9186 = vmatprep.subr.mxu0 0.0
  %9187 = vmatpush1.msra.mxu0 0.0
  %9188 = vmatprep.subr.mxu0 0.0
  %9189 = vmatpush1.msra.mxu0 0.0
  %9190 = vmatprep.subr.mxu0 0.0
  %9191 = vmatpush1.msra.mxu0 0.0
  %9192 = vmatprep.subr.mxu0 0.0
  %9193 = vmatpush1.msra.mxu0 0.0
  %9194 = vmatprep.subr.mxu0 0.0
  %9195 = vmatpush1.msra.mxu0 0.0
  %9196 = vmatprep.subr.mxu0 0.0
  %9197 = vmatpush1.msra.mxu0 0.0
  %9198 = vmatprep.subr.mxu0 0.0
  %9199 = vmatpush1.msra.mxu0 0.0
  %9200 = vmatprep.mubr.f32.mxu0 0.0
  %9201 = vmatmul.mubr.f32.gmra.mrb[0].mxu0 %v8906
  %v9202 = vpop.f32.mrb[0].mxu0
  %v9203 = vadd.f32 %v7280, %v9202
  %v9204 = vpop.f32.mrb[0].mxu0
  %9205 = vdwg.mxu0
  %v9206 = vmul.f32 %v9057, %v9203
  %v9207 = vadd.f32 %v7080, %v9206
  %v9208 = vtanh.pop %v9207
  %v9209 = vsub.f32 1.0, %v9135
  %v9210 = vmul.f32 %v9209, %v9208
  %v9211 = vmul.f32 %v9135, %v8904
  %v9212 = vadd.f32 %v9210, %v9211
  %v9214 = vsel %vm6519, %v9212, 0
  %9216 = vmatprep.subr.mxu0 0.0
  %9217 = vmatpush1.msra.mxu0 %v7100
  %9218 = vmatprep.subr.mxu0 0.0
  %9219 = vmatpush1.msra.mxu0 %v7101
  %9220 = vmatprep.subr.mxu0 0.0
  %9221 = vmatpush1.msra.mxu0 %v7102
  %9222 = vmatprep.subr.mxu0 0.0
  %9223 = vmatpush1.msra.mxu0 %v7103
  %9224 = vmatprep.subr.mxu0 0.0
  %9225 = vmatpush1.msra.mxu0 0.0
  %9226 = vmatprep.subr.mxu0 0.0
  %9227 = vmatpush1.msra.mxu0 0.0
  %9228 = vmatprep.subr.mxu0 0.0
  %9229 = vmatpush1.msra.mxu0 0.0
  %9230 = vmatprep.subr.mxu0 0.0
  %9231 = vmatpush1.msra.mxu0 0.0
  %9232 = vmatprep.subr.mxu0 0.0
  %9233 = vmatpush1.msra.mxu0 0.0
  %9234 = vmatprep.subr.mxu0 0.0
  %9235 = vmatpush1.msra.mxu0 0.0
  %9236 = vmatprep.subr.mxu0 0.0
  %9237 = vmatpush1.msra.mxu0 0.0
  %9238 = vmatprep.subr.mxu0 0.0
  %9239 = vmatpush1.msra.mxu0 0.0
  %9240 = vmatprep.subr.mxu0 0.0
  %9241 = vmatpush1.msra.mxu0 0.0
  %9242 = vmatprep.subr.mxu0 0.0
  %9243 = vmatpush1.msra.mxu0 0.0
  %9244 = vmatprep.subr.mxu0 0.0
  %9245 = vmatpush1.msra.mxu0 0.0
  %9246 = vmatprep.subr.mxu0 0.0
  %9247 = vmatpush1.msra.mxu0 0.0
  %9248 = vmatprep.subr.mxu0 0.0
  %9249 = vmatpush1.msra.mxu0 0.0
  %9250 = vmatprep.subr.mxu0 0.0
  %9251 = vmatpush1.msra.mxu0 0.0
  %9252 = vmatprep.subr.mxu0 0.0
  %9253 = vmatpush1.msra.mxu0 0.0
  %9254 = vmatprep.subr.mxu0 0.0
  %9255 = vmatpush1.msra.mxu0 0.0
  %9256 = vmatprep.subr.mxu0 0.0
  %9257 = vmatpush1.msra.mxu0 0.0
  %9258 = vmatprep.subr.mxu0 0.0
  %9259 = vmatpush1.msra.mxu0 0.0
  %9260 = vmatprep.subr.mxu0 0.0
  %9261 = vmatpush1.msra.mxu0 0.0
  %9262 = vmatprep.subr.mxu0 0.0
  %9263 = vmatpush1.msra.mxu0 0.0
  %9264 = vmatprep.subr.mxu0 0.0
  %9265 = vmatpush1.msra.mxu0 0.0
  %9266 = vmatprep.subr.mxu0 0.0
  %9267 = vmatpush1.msra.mxu0 0.0
  %9268 = vmatprep.subr.mxu0 0.0
  %9269 = vmatpush1.msra.mxu0 0.0
  %9270 = vmatprep.subr.mxu0 0.0
  %9271 = vmatpush1.msra.mxu0 0.0
  %9272 = vmatprep.subr.mxu0 0.0
  %9273 = vmatpush1.msra.mxu0 0.0
  %9274 = vmatprep.subr.mxu0 0.0
  %9275 = vmatpush1.msra.mxu0 0.0
  %9276 = vmatprep.subr.mxu0 0.0
  %9277 = vmatpush1.msra.mxu0 0.0
  %9278 = vmatprep.subr.mxu0 0.0
  %9279 = vmatpush1.msra.mxu0 0.0
  %9280 = vmatprep.mubr.f32.mxu0 0.0
  %9281 = vmatmul.mubr.f32.gmra.mrb[0].mxu0 %v9214
  %v9282 = vpop.f32.mrb[0].mxu0
  %v9283 = vadd.f32 %v7363, %v9282
  %v9284 = vpop.f32.mrb[0].mxu0
  %9285 = vdwg.mxu0
  %s9286 = scalar_lea.vmem %s17, 12
  %9287 = vst.msk [vmem:[%s9286] sm:$0x3] %vm7438, %v9283
  %9288 = vmatprep.subr.mxu0 0.0
  %9289 = vmatpush1.msra.mxu0 %v7081
  %9290 = vmatprep.subr.mxu0 0.0
  %9291 = vmatpush1.msra.mxu0 %v7082
  %9292 = vmatprep.subr.mxu0 0.0
  %9293 = vmatpush1.msra.mxu0 %v7083
  %9294 = vmatprep.subr.mxu0 0.0
  %9295 = vmatpush1.msra.mxu0 %v7084
  %9296 = vmatprep.subr.mxu0 0.0
  %9297 = vmatpush1.msra.mxu0 0.0
  %9298 = vmatprep.subr.mxu0 0.0
  %9299 = vmatpush1.msra.mxu0 0.0
  %9300 = vmatprep.subr.mxu0 0.0
  %9301 = vmatpush1.msra.mxu0 0.0
  %9302 = vmatprep.subr.mxu0 0.0
  %9303 = vmatpush1.msra.mxu0 0.0
  %9304 = vmatprep.subr.mxu0 0.0
  %9305 = vmatpush1.msra.mxu0 0.0
  %9306 = vmatprep.subr.mxu0 0.0
  %9307 = vmatpush1.msra.mxu0 0.0
  %9308 = vmatprep.subr.mxu0 0.0
  %9309 = vmatpush1.msra.mxu0 0.0
  %9310 = vmatprep.subr.mxu0 0.0
  %9311 = vmatpush1.msra.mxu0 0.0
  %9312 = vmatprep.subr.mxu0 0.0
  %9313 = vmatpush1.msra.mxu0 0.0
  %9314 = vmatprep.subr.mxu0 0.0
  %9315 = vmatpush1.msra.mxu0 0.0
  %9316 = vmatprep.subr.mxu0 0.0
  %9317 = vmatpush1.msra.mxu0 0.0
  %9318 = vmatprep.subr.mxu0 0.0
  %9319 = vmatpush1.msra.mxu0 0.0
  %9320 = vmatprep.subr.mxu0 0.0
  %9321 = vmatpush1.msra.mxu0 0.0
  %9322 = vmatprep.subr.mxu0 0.0
  %9323 = vmatpush1.msra.mxu0 0.0
  %9324 = vmatprep.subr.mxu0 0.0
  %9325 = vmatpush1.msra.mxu0 0.0
  %9326 = vmatprep.subr.mxu0 0.0
  %9327 = vmatpush1.msra.mxu0 0.0
  %9328 = vmatprep.subr.mxu0 0.0
  %9329 = vmatpush1.msra.mxu0 0.0
  %9330 = vmatprep.subr.mxu0 0.0
  %9331 = vmatpush1.msra.mxu0 0.0
  %9332 = vmatprep.subr.mxu0 0.0
  %9333 = vmatpush1.msra.mxu0 0.0
  %9334 = vmatprep.subr.mxu0 0.0
  %9335 = vmatpush1.msra.mxu0 0.0
  %9336 = vmatprep.subr.mxu0 0.0
  %9337 = vmatpush1.msra.mxu0 0.0
  %9338 = vmatprep.subr.mxu0 0.0
  %9339 = vmatpush1.msra.mxu0 0.0
  %9340 = vmatprep.subr.mxu0 0.0
  %9341 = vmatpush1.msra.mxu0 0.0
  %9342 = vmatprep.subr.mxu0 0.0
  %9343 = vmatpush1.msra.mxu0 0.0
  %9344 = vmatprep.subr.mxu0 0.0
  %9345 = vmatpush1.msra.mxu0 0.0
  %9346 = vmatprep.subr.mxu0 0.0
  %9347 = vmatpush1.msra.mxu0 0.0
  %9348 = vmatprep.subr.mxu0 0.0
  %9349 = vmatpush1.msra.mxu0 0.0
  %9350 = vmatprep.subr.mxu0 0.0
  %9351 = vmatpush1.msra.mxu0 0.0
  %9352 = vmatprep.mubr.f32.mxu0 0.0
  %9353 = vmatmul.mubr.f32.gmra.mrb[0].mxu0 %v9214
  %v9354 = vpop.f32.mrb[0].mxu0
  %v9355 = vadd.f32 0.0, %v9354
  %v9356 = vpop.f32.mrb[0].mxu0
  %9357 = vdwg.mxu0
  %v9358 = vadd.f32 %v6762, %v9355
  %v9359 = vadd.f32 %v9358, %v7183
  %v9360 = vxor.u32 %v9359, 2147483648
  %v9361 = vmul.f32 %v9360, 1.442695
  %v9362 = vpow.pop %v9361
  %v9363 = vadd.f32 %v9362, 1.0
  %v9364 = vrcp.pop %v9363
  %v9365 = vmul.f32 1.0, %v9364
  %9366 = vmatprep.subr.mxu0 0.0
  %9367 = vmatpush1.msra.mxu0 %v7086
  %9368 = vmatprep.subr.mxu0 0.0
  %9369 = vmatpush1.msra.mxu0 %v7087
  %9370 = vmatprep.subr.mxu0 0.0
  %9371 = vmatpush1.msra.mxu0 %v7088
  %9372 = vmatprep.subr.mxu0 0.0
  %9373 = vmatpush1.msra.mxu0 %v7089
  %9374 = vmatprep.subr.mxu0 0.0
  %9375 = vmatpush1.msra.mxu0 0.0
  %9376 = vmatprep.subr.mxu0 0.0
  %9377 = vmatpush1.msra.mxu0 0.0
  %9378 = vmatprep.subr.mxu0 0.0
  %9379 = vmatpush1.msra.mxu0 0.0
  %9380 = vmatprep.subr.mxu0 0.0
  %9381 = vmatpush1.msra.mxu0 0.0
  %9382 = vmatprep.subr.mxu0 0.0
  %9383 = vmatpush1.msra.mxu0 0.0
  %9384 = vmatprep.subr.mxu0 0.0
  %9385 = vmatpush1.msra.mxu0 0.0
  %9386 = vmatprep.subr.mxu0 0.0
  %9387 = vmatpush1.msra.mxu0 0.0
  %9388 = vmatprep.subr.mxu0 0.0
  %9389 = vmatpush1.msra.mxu0 0.0
  %9390 = vmatprep.subr.mxu0 0.0
  %9391 = vmatpush1.msra.mxu0 0.0
  %9392 = vmatprep.subr.mxu0 0.0
  %9393 = vmatpush1.msra.mxu0 0.0
  %9394 = vmatprep.subr.mxu0 0.0
  %9395 = vmatpush1.msra.mxu0 0.0
  %9396 = vmatprep.subr.mxu0 0.0
  %9397 = vmatpush1.msra.mxu0 0.0
  %9398 = vmatprep.subr.mxu0 0.0
  %9399 = vmatpush1.msra.mxu0 0.0
  %9400 = vmatprep.subr.mxu0 0.0
  %9401 = vmatpush1.msra.mxu0 0.0
  %9402 = vmatprep.subr.mxu0 0.0
  %9403 = vmatpush1.msra.mxu0 0.0
  %9404 = vmatprep.subr.mxu0 0.0
  %9405 = vmatpush1.msra.mxu0 0.0
  %9406 = vmatprep.subr.mxu0 0.0
  %9407 = vmatpush1.msra.mxu0 0.0
  %9408 = vmatprep.subr.mxu0 0.0
  %9409 = vmatpush1.msra.mxu0 0.0
  %9410 = vmatprep.subr.mxu0 0.0
  %9411 = vmatpush1.msra.mxu0 0.0
  %9412 = vmatprep.subr.mxu0 0.0
  %9413 = vmatpush1.msra.mxu0 0.0
  %9414 = vmatprep.subr.mxu0 0.0
  %9415 = vmatpush1.msra.mxu0 0.0
  %9416 = vmatprep.subr.mxu0 0.0
  %9417 = vmatpush1.msra.mxu0 0.0
  %9418 = vmatprep.subr.mxu0 0.0
  %9419 = vmatpush1.msra.mxu0 0.0
  %9420 = vmatprep.subr.mxu0 0.0
  %9421 = vmatpush1.msra.mxu0 0.0
  %9422 = vmatprep.subr.mxu0 0.0
  %9423 = vmatpush1.msra.mxu0 0.0
  %9424 = vmatprep.subr.mxu0 0.0
  %9425 = vmatpush1.msra.mxu0 0.0
  %9426 = vmatprep.subr.mxu0 0.0
  %9427 = vmatpush1.msra.mxu0 0.0
  %9428 = vmatprep.subr.mxu0 0.0
  %9429 = vmatpush1.msra.mxu0 0.0
  %9430 = vmatprep.mubr.f32.mxu0 0.0
  %9431 = vmatmul.mubr.f32.gmra.mrb[0].mxu0 %v9214
  %v9432 = vpop.f32.mrb[0].mxu0
  %v9433 = vadd.f32 0.0, %v9432
  %v9434 = vpop.f32.mrb[0].mxu0
  %9435 = vdwg.mxu0
  %v9436 = vadd.f32 %v6921, %v9433
  %v9437 = vadd.f32 %v9436, %v7267
  %v9438 = vxor.u32 %v9437, 2147483648
  %v9439 = vmul.f32 %v9438, 1.442695
  %v9440 = vpow.pop %v9439
  %v9441 = vadd.f32 %v9440, 1.0
  %v9442 = vrcp.pop %v9441
  %v9443 = vmul.f32 1.0, %v9442
  %9444 = vmatprep.subr.mxu0 0.0
  %9445 = vmatpush1.msra.mxu0 %v7091
  %9446 = vmatprep.subr.mxu0 0.0
  %9447 = vmatpush1.msra.mxu0 %v7092
  %9448 = vmatprep.subr.mxu0 0.0
  %9449 = vmatpush1.msra.mxu0 %v7093
  %9450 = vmatprep.subr.mxu0 0.0
  %9451 = vmatpush1.msra.mxu0 %v7094
  %9452 = vmatprep.subr.mxu0 0.0
  %9453 = vmatpush1.msra.mxu0 0.0
  %9454 = vmatprep.subr.mxu0 0.0
  %9455 = vmatpush1.msra.mxu0 0.0
  %9456 = vmatprep.subr.mxu0 0.0
  %9457 = vmatpush1.msra.mxu0 0.0
  %9458 = vmatprep.subr.mxu0 0.0
  %9459 = vmatpush1.msra.mxu0 0.0
  %9460 = vmatprep.subr.mxu0 0.0
  %9461 = vmatpush1.msra.mxu0 0.0
  %9462 = vmatprep.subr.mxu0 0.0
  %9463 = vmatpush1.msra.mxu0 0.0
  %9464 = vmatprep.subr.mxu0 0.0
  %9465 = vmatpush1.msra.mxu0 0.0
  %9466 = vmatprep.subr.mxu0 0.0
  %9467 = vmatpush1.msra.mxu0 0.0
  %9468 = vmatprep.subr.mxu0 0.0
  %9469 = vmatpush1.msra.mxu0 0.0
  %9470 = vmatprep.subr.mxu0 0.0
  %9471 = vmatpush1.msra.mxu0 0.0
  %9472 = vmatprep.subr.mxu0 0.0
  %9473 = vmatpush1.msra.mxu0 0.0
  %9474 = vmatprep.subr.mxu0 0.0
  %9475 = vmatpush1.msra.mxu0 0.0
  %9476 = vmatprep.subr.mxu0 0.0
  %9477 = vmatpush1.msra.mxu0 0.0
  %9478 = vmatprep.subr.mxu0 0.0
  %9479 = vmatpush1.msra.mxu0 0.0
  %9480 = vmatprep.subr.mxu0 0.0
  %9481 = vmatpush1.msra.mxu0 0.0
  %9482 = vmatprep.subr.mxu0 0.0
  %9483 = vmatpush1.msra.mxu0 0.0
  %9484 = vmatprep.subr.mxu0 0.0
  %9485 = vmatpush1.msra.mxu0 0.0
  %9486 = vmatprep.subr.mxu0 0.0
  %9487 = vmatpush1.msra.mxu0 0.0
  %9488 = vmatprep.subr.mxu0 0.0
  %9489 = vmatpush1.msra.mxu0 0.0
  %9490 = vmatprep.subr.mxu0 0.0
  %9491 = vmatpush1.msra.mxu0 0.0
  %9492 = vmatprep.subr.mxu0 0.0
  %9493 = vmatpush1.msra.mxu0 0.0
  %9494 = vmatprep.subr.mxu0 0.0
  %9495 = vmatpush1.msra.mxu0 0.0
  %9496 = vmatprep.subr.mxu0 0.0
  %9497 = vmatpush1.msra.mxu0 0.0
  %9498 = vmatprep.subr.mxu0 0.0
  %9499 = vmatpush1.msra.mxu0 0.0
  %9500 = vmatprep.subr.mxu0 0.0
  %9501 = vmatpush1.msra.mxu0 0.0
  %9502 = vmatprep.subr.mxu0 0.0
  %9503 = vmatpush1.msra.mxu0 0.0
  %9504 = vmatprep.subr.mxu0 0.0
  %9505 = vmatpush1.msra.mxu0 0.0
  %9506 = vmatprep.subr.mxu0 0.0
  %9507 = vmatpush1.msra.mxu0 0.0
  %9508 = vmatprep.mubr.f32.mxu0 0.0
  %9509 = vmatmul.mubr.f32.gmra.mrb[0].mxu0 %v9214
  %v9510 = vpop.f32.mrb[0].mxu0
  %v9511 = vadd.f32 %v7280, %v9510
  %v9512 = vpop.f32.mrb[0].mxu0
  %9513 = vdwg.mxu0
  %v9514 = vmul.f32 %v9365, %v9511
  %v9515 = vadd.f32 %v7080, %v9514
  %v9516 = vtanh.pop %v9515
  %v9517 = vsub.f32 1.0, %v9443
  %v9518 = vmul.f32 %v9517, %v9516
  %v9519 = vmul.f32 %v9443, %v9212
  %v9520 = vadd.f32 %v9518, %v9519
  %v9522 = vsel %vm6519, %v9520, 0
  %9524 = vmatprep.subr.mxu0 0.0
  %9525 = vmatpush1.msra.mxu0 %v7100
  %9526 = vmatprep.subr.mxu0 0.0
  %9527 = vmatpush1.msra.mxu0 %v7101
  %9528 = vmatprep.subr.mxu0 0.0
  %9529 = vmatpush1.msra.mxu0 %v7102
  %9530 = vmatprep.subr.mxu0 0.0
  %9531 = vmatpush1.msra.mxu0 %v7103
  %9532 = vmatprep.subr.mxu0 0.0
  %9533 = vmatpush1.msra.mxu0 0.0
  %9534 = vmatprep.subr.mxu0 0.0
  %9535 = vmatpush1.msra.mxu0 0.0
  %9536 = vmatprep.subr.mxu0 0.0
  %9537 = vmatpush1.msra.mxu0 0.0
  %9538 = vmatprep.subr.mxu0 0.0
  %9539 = vmatpush1.msra.mxu0 0.0
  %9540 = vmatprep.subr.mxu0 0.0
  %9541 = vmatpush1.msra.mxu0 0.0
  %9542 = vmatprep.subr.mxu0 0.0
  %9543 = vmatpush1.msra.mxu0 0.0
  %9544 = vmatprep.subr.mxu0 0.0
  %9545 = vmatpush1.msra.mxu0 0.0
  %9546 = vmatprep.subr.mxu0 0.0
  %9547 = vmatpush1.msra.mxu0 0.0
  %9548 = vmatprep.subr.mxu0 0.0
  %9549 = vmatpush1.msra.mxu0 0.0
  %9550 = vmatprep.subr.mxu0 0.0
  %9551 = vmatpush1.msra.mxu0 0.0
  %9552 = vmatprep.subr.mxu0 0.0
  %9553 = vmatpush1.msra.mxu0 0.0
  %9554 = vmatprep.subr.mxu0 0.0
  %9555 = vmatpush1.msra.mxu0 0.0
  %9556 = vmatprep.subr.mxu0 0.0
  %9557 = vmatpush1.msra.mxu0 0.0
  %9558 = vmatprep.subr.mxu0 0.0
  %9559 = vmatpush1.msra.mxu0 0.0
  %9560 = vmatprep.subr.mxu0 0.0
  %9561 = vmatpush1.msra.mxu0 0.0
  %9562 = vmatprep.subr.mxu0 0.0
  %9563 = vmatpush1.msra.mxu0 0.0
  %9564 = vmatprep.subr.mxu0 0.0
  %9565 = vmatpush1.msra.mxu0 0.0
  %9566 = vmatprep.subr.mxu0 0.0
  %9567 = vmatpush1.msra.mxu0 0.0
  %9568 = vmatprep.subr.mxu0 0.0
  %9569 = vmatpush1.msra.mxu0 0.0
  %9570 = vmatprep.subr.mxu0 0.0
  %9571 = vmatpush1.msra.mxu0 0.0
  %9572 = vmatprep.subr.mxu0 0.0
  %9573 = vmatpush1.msra.mxu0 0.0
  %9574 = vmatprep.subr.mxu0 0.0
  %9575 = vmatpush1.msra.mxu0 0.0
  %9576 = vmatprep.subr.mxu0 0.0
  %9577 = vmatpush1.msra.mxu0 0.0
  %9578 = vmatprep.subr.mxu0 0.0
  %9579 = vmatpush1.msra.mxu0 0.0
  %9580 = vmatprep.subr.mxu0 0.0
  %9581 = vmatpush1.msra.mxu0 0.0
  %9582 = vmatprep.subr.mxu0 0.0
  %9583 = vmatpush1.msra.mxu0 0.0
  %9584 = vmatprep.subr.mxu0 0.0
  %9585 = vmatpush1.msra.mxu0 0.0
  %9586 = vmatprep.subr.mxu0 0.0
  %9587 = vmatpush1.msra.mxu0 0.0
  %9588 = vmatprep.mubr.f32.mxu0 0.0
  %9589 = vmatmul.mubr.f32.gmra.mrb[0].mxu0 %v9522
  %v9590 = vpop.f32.mrb[0].mxu0
  %v9591 = vadd.f32 %v7363, %v9590
  %v9592 = vpop.f32.mrb[0].mxu0
  %9593 = vdwg.mxu0
  %s9594 = scalar_lea.vmem %s17, 14
  %9595 = vst.msk [vmem:[%s9594] sm:$0x3] %vm7438, %v9591
  // Predicated region
  $region70: #{decoder_forward.1} parent=0 // pred_check
    _
  $region71: #{decoder_forward.1} parent=0 // pred_check_branch
    %9597 = sbr.rel (0) target = $region73
  $region72: #{decoder_forward.1} parent=0 // pred_region
    _
  $region73: #{decoder_forward.1} parent=0 // pred_fallthru
    _
  // Predicated region
  $region74: #{decoder_forward.1} parent=0 // pred_check
    _
  $region75: #{decoder_forward.1} parent=0 // pred_check_branch
    %9599 = sbr.rel (0) target = $region77
  $region76: #{decoder_forward.1} parent=0 // pred_region
    _
  $region77: #{decoder_forward.1} parent=0 // pred_fallthru
    _

</llo_original>
